<compile_context>
chip_gen: v6e
topology: v6e:2x2x1
jax: 0.10.0
libtpu: 0.0.40
codegen_flags: <defaults>
</compile_context>

<pallas_src>
import functools

import jax
import jax.numpy as jnp
from jax import lax
from jax.experimental import pallas as pl
from jax.experimental.pallas import tpu as pltpu

CONTEXT_SIZE = 128
QUERY_SIZE = 128
HIDDEN = 256          # SPELLER_HIDDEN_SIZE
LAYERS = 3            # SPELLER_LAYERS
NUM_CHARS = 33        # len(char_list)
VPAD = 128            # vocab padded to a full lane width


def _round_up(x, m):
    return ((x + m - 1) // m) * m


def speller_kernel(
    # weights / constants (all grid-invariant, VMEM resident)
    embed_ref,                                   # (VPAD, H)
    wih0e_ref, wih0c_ref, whh0_ref, b0_ref,      # layer 0 (input split: embed / ctx)
    wih1_ref, whh1_ref, b1_ref,                  # layer 1
    wih2_ref, whh2_ref, b2_ref,                  # layer 2
    wq_ref, bq_ref,                              # query layer
    ws1h_ref, ws1c_ref, bs1_ref,                 # scoring[0] (input split: h / ctx)
    ws2_ref, bs2_ref,                            # scoring[2] (vocab-padded)
    key_ref, value_ref, mask_ref,                # (B,TP,Q), (B,TP,C), (B,TP)
    h0_ref, c0_ref, con_ref,                     # learned initial states
    # outputs (written once per decode step, VMEM-resident, one HBM writeback)
    score_out_ref,                               # (S, B, TP)
    pred_out_ref,                                # (S, B, VPAD)
):
    S, B, TP = score_out_ref.shape
    VP = pred_out_ref.shape[2]

    iota_v = lax.broadcasted_iota(jnp.int32, (B, VP), 1)
    valid_v = iota_v < NUM_CHARS
    neg_big = jnp.float32(-1e30)

    def lstm_gates(gates, c):
        H = HIDDEN
        i_g = jax.nn.sigmoid(gates[:, 0:H])
        f_g = jax.nn.sigmoid(gates[:, H:2 * H])
        g_g = jnp.tanh(gates[:, 2 * H:3 * H])
        o_g = jax.nn.sigmoid(gates[:, 3 * H:4 * H])
        c_new = f_g * c + i_g * g_g
        h_new = o_g * jnp.tanh(c_new)
        return h_new, c_new

    def step(i, carry):
        h0, c0, h1, c1, h2, c2, ctx, oh = carry

        # ---- embedding (one-hot @ table == nn.Embedding lookup) ----
        char_embed = jnp.dot(oh, embed_ref[...],
                             preferred_element_type=jnp.float32)        # (B, H)

        # ---- 3 stacked LSTM cells (concat removed: two dots summed) ----
        gates0 = (jnp.dot(char_embed, wih0e_ref[...], preferred_element_type=jnp.float32)
                  + jnp.dot(ctx, wih0c_ref[...], preferred_element_type=jnp.float32)
                  + jnp.dot(h0, whh0_ref[...], preferred_element_type=jnp.float32)
                  + b0_ref[...])
        h0n, c0n = lstm_gates(gates0, c0)

        gates1 = (jnp.dot(h0n, wih1_ref[...], preferred_element_type=jnp.float32)
                  + jnp.dot(h1, whh1_ref[...], preferred_element_type=jnp.float32)
                  + b1_ref[...])
        h1n, c1n = lstm_gates(gates1, c1)

        gates2 = (jnp.dot(h1n, wih2_ref[...], preferred_element_type=jnp.float32)
                  + jnp.dot(h2, whh2_ref[...], preferred_element_type=jnp.float32)
                  + b2_ref[...])
        h2n, c2n = lstm_gates(gates2, c2)

        # ---- attention (batched MXU contractions, key layout (B, T, Q)) ----
        query = (jnp.dot(h2n, wq_ref[...], preferred_element_type=jnp.float32)
                 + bq_ref[...])                                          # (B, Q)
        energy = jnp.einsum(
            'bxq,btq->bxt', query.reshape(B, 1, QUERY_SIZE), key_ref[...],
            preferred_element_type=jnp.float32).reshape(B, TP)           # (B, TP)
        energy = energy - jnp.max(energy, axis=1, keepdims=True)
        p = jnp.exp(energy)
        # softmax denom via EUP reciprocal; any error cancels in the L1 renorm
        p = p * pl.reciprocal(jnp.sum(p, axis=1, keepdims=True), approx=True)
        p = p * mask_ref[...]                                            # length mask
        denom = jnp.maximum(jnp.sum(p, axis=1, keepdims=True), 1e-12)
        score = p * pl.reciprocal(denom)                                 # L1 renorm
        new_ctx = jnp.einsum(
            'bxt,btd->bxd', score.reshape(B, 1, TP), value_ref[...],
            preferred_element_type=jnp.float32).reshape(B, CONTEXT_SIZE)  # (B, C)

        # ---- scoring MLP (concat removed: two dots summed) ----
        hid = jnp.maximum(
            jnp.dot(h2n, ws1h_ref[...], preferred_element_type=jnp.float32)
            + jnp.dot(new_ctx, ws1c_ref[...], preferred_element_type=jnp.float32)
            + bs1_ref[...], 0.0)
        predict = (jnp.dot(hid, ws2_ref[...], preferred_element_type=jnp.float32)
                   + bs2_ref[...])                                       # (B, VPAD)

        # lane-dense (B, 128) stores; stay in VMEM until the kernel finishes
        score_out_ref[i] = score
        pred_out_ref[i] = predict

        # ---- greedy next char (torch.max -> first max index) as one-hot ----
        masked_pred = jnp.where(valid_v, predict, neg_big)
        mx = jnp.max(masked_pred, axis=1, keepdims=True)
        idx = jnp.min(jnp.where(masked_pred >= mx, iota_v, VP),
                      axis=1, keepdims=True)
        oh_new = (iota_v == idx).astype(jnp.float32)

        return (h0n, c0n, h1n, c1n, h2n, c2n, new_ctx, oh_new)

    # initial state: learned (zero) h_0/c_0/con, char = 0 ('<eos>')
    init = (
        jnp.broadcast_to(h0_ref[0], (B, HIDDEN)),
        jnp.broadcast_to(c0_ref[0], (B, HIDDEN)),
        jnp.broadcast_to(h0_ref[1], (B, HIDDEN)),
        jnp.broadcast_to(c0_ref[1], (B, HIDDEN)),
        jnp.broadcast_to(h0_ref[2], (B, HIDDEN)),
        jnp.broadcast_to(c0_ref[2], (B, HIDDEN)),
        jnp.broadcast_to(con_ref[...], (B, CONTEXT_SIZE)),
        (iota_v == 0).astype(jnp.float32),
    )
    lax.fori_loop(0, S, step, init)


def _full_spec(shape):
    n = len(shape)
    return pl.BlockSpec(shape, lambda i, _n=n: (0,) * _n)


@functools.partial(jax.jit, static_argnames=("max_steps",))
def speller_forward(params, seq_sizes, att_key, att_value, max_steps):
    """Returns (scores (S, B, T), predicts (B, S, NUM_CHARS)) like the torch model
    (score_list stacked along step axis, predict_list stacked on dim=1)."""
    B = seq_sizes.shape[0]
    T = att_key.shape[2]
    BP = _round_up(max(B, 8), 8)         # sublane fill
    TP = _round_up(max(T, 128), 128)     # lane-dense attention axis

    # lane-friendly layouts + zero padding (padded frames are masked, padded
    # batch rows are sliced off; softmax-then-mask-then-renorm is invariant to
    # the extra zero-energy columns).
    key_t = jnp.transpose(att_key, (0, 2, 1))                       # (B, T, Q)
    key_p = jnp.zeros((BP, TP, QUERY_SIZE), jnp.float32).at[:B, :T, :].set(key_t)
    val_p = jnp.zeros((BP, TP, CONTEXT_SIZE), jnp.float32).at[:B, :T, :].set(att_value)
    seq_p = jnp.zeros((BP,), jnp.int32).at[:B].set(seq_sizes.astype(jnp.int32))
    mask = (jnp.arange(TP, dtype=jnp.int32)[None, :]
            < seq_p[:, None]).astype(jnp.float32)                   # (BP, TP)

    # split concatenated-input weights (removes in-kernel concats)
    wih0_e = params["wih0"][:HIDDEN]
    wih0_c = params["wih0"][HIDDEN:]
    ws1_h = params["ws1"][:HIDDEN]
    ws1_c = params["ws1"][HIDDEN:]
    # pad vocab dim to 128 lanes (extra rows/cols are zero; argmax masks them)
    embed_p = jnp.zeros((VPAD, HIDDEN), jnp.float32).at[:NUM_CHARS].set(params["embed"])
    ws2_p = jnp.zeros((HIDDEN, VPAD), jnp.float32).at[:, :NUM_CHARS].set(params["ws2"])
    bs2_p = jnp.zeros((1, VPAD), jnp.float32).at[:, :NUM_CHARS].set(params["bs2"])

    ins = [
        embed_p,
        wih0_e, wih0_c, params["whh0"], params["b0"],
        params["wih1"], params["whh1"], params["b1"],
        params["wih2"], params["whh2"], params["b2"],
        params["wq"], params["bq"],
        ws1_h, ws1_c, params["bs1"],
        ws2_p, bs2_p,
        key_p, val_p, mask,
        params["h0"], params["c0"], params["con"],
    ]
    in_specs = [_full_spec(a.shape) for a in ins]

    out_shape = (
        jax.ShapeDtypeStruct((max_steps, BP, TP), jnp.float32),
        jax.ShapeDtypeStruct((max_steps, BP, VPAD), jnp.float32),
    )
    out_specs = [
        pl.BlockSpec((max_steps, BP, TP), lambda i: (0, 0, 0)),
        pl.BlockSpec((max_steps, BP, VPAD), lambda i: (0, 0, 0)),
    ]

    scores, preds = pl.pallas_call(
        speller_kernel,
        out_shape=out_shape,
        grid_spec=pltpu.PrefetchScalarGridSpec(
            num_scalar_prefetch=0,
            grid=(1,),                      # whole decode loop runs in-kernel
            in_specs=in_specs,
            out_specs=out_specs,
        ),
        compiler_params=pltpu.CompilerParams(
            dimension_semantics=("arbitrary",),
            vmem_limit_bytes=32 << 20,       # fits v5e/v6e/v7x budgets
        ),
    )(*ins)

    scores = scores[:, :B, :T]                                         # (S, B, T)
    predicts = jnp.transpose(preds[:, :B, :NUM_CHARS], (1, 0, 2))      # (B, S, V)
    return scores, predicts


def init_params(rng):
    ks = jax.random.split(rng, 24)
    H, C, Q, V = HIDDEN, CONTEXT_SIZE, QUERY_SIZE, NUM_CHARS

    def uni(k, shape, bound):
        return jax.random.uniform(k, shape, minval=-bound, maxval=bound,
                                  dtype=jnp.float32)

    kb = 1.0 / (H ** 0.5)  # PyTorch LSTMCell init bound
    p = {
        "embed": 0.1 * jax.random.normal(ks[0], (V, H), dtype=jnp.float32),
        # LSTM layer 0: input = H + CTX
        "wih0": uni(ks[1], (H + C, 4 * H), kb),
        "whh0": uni(ks[2], (H, 4 * H), kb),
        "b0": uni(ks[3], (1, 4 * H), kb) + uni(ks[4], (1, 4 * H), kb),  # b_ih+b_hh
        # LSTM layers 1, 2: input = H
        "wih1": uni(ks[5], (H, 4 * H), kb),
        "whh1": uni(ks[6], (H, 4 * H), kb),
        "b1": uni(ks[7], (1, 4 * H), kb) + uni(ks[8], (1, 4 * H), kb),
        "wih2": uni(ks[9], (H, 4 * H), kb),
        "whh2": uni(ks[10], (H, 4 * H), kb),
        "b2": uni(ks[11], (1, 4 * H), kb) + uni(ks[12], (1, 4 * H), kb),
        # query_layer: Linear(H -> Q)
        "wq": uni(ks[13], (H, Q), 1.0 / (H ** 0.5)),
        "bq": uni(ks[14], (1, Q), 1.0 / (H ** 0.5)),
        # scoring: Linear(H+C -> H), ReLU, Linear(H -> V)
        "ws1": uni(ks[15], (H + C, H), 1.0 / ((H + C) ** 0.5)),
        "bs1": uni(ks[16], (1, H), 1.0 / ((H + C) ** 0.5)),
        "ws2": uni(ks[17], (H, V), 1.0 / (H ** 0.5)),
        "bs2": uni(ks[18], (1, V), 1.0 / (H ** 0.5)),
        # learned initial states (zeros, as in init_state())
        "h0": jnp.zeros((LAYERS, 1, H), jnp.float32),
        "c0": jnp.zeros((LAYERS, 1, H), jnp.float32),
        "con": jnp.zeros((1, C), jnp.float32),
    }
    return p


if __name__ == "__main__":
    rng = jax.random.PRNGKey(0)
    k_p, k_k, k_v = jax.random.split(rng, 3)

    B = 2          # batch
    T = 16         # encoder time steps
    MAX_STEPS = 8  # decode steps (stands in for MAX_LEN / labels.shape[1])

    params = init_params(k_p)
    att_key = jax.random.normal(k_k, (B, QUERY_SIZE, T), dtype=jnp.float32)
    att_value = jax.random.normal(k_v, (B, T, CONTEXT_SIZE), dtype=jnp.float32)
    seq_sizes = jnp.array([16, 11], dtype=jnp.int32)

    scores, predicts = speller_forward(params, seq_sizes, att_key, att_value,
                                       MAX_STEPS)
    scores = jax.block_until_ready(scores)
    predicts = jax.block_until_ready(predicts)

    assert scores.shape == (MAX_STEPS, B, T)
    assert predicts.shape == (B, MAX_STEPS, NUM_CHARS)
    assert bool(jnp.all(jnp.isfinite(scores))) and bool(jnp.all(jnp.isfinite(predicts)))
    # attention weights are masked + L1-normalized -> rows sum to 1
    assert bool(jnp.allclose(jnp.sum(scores, axis=-1), 1.0, atol=1e-4))
    print("KERNEL_OK")
</pallas_src>

<mosaic_0001>
module attributes {stable_mosaic.version = 11 : i64} {
  func.func @speller_kernel(%arg0: i32, %arg1: memref<128x256xf32, #tpu.memory_space<vmem>>, %arg2: memref<256x1024xf32, #tpu.memory_space<vmem>>, %arg3: memref<128x1024xf32, #tpu.memory_space<vmem>>, %arg4: memref<256x1024xf32, #tpu.memory_space<vmem>>, %arg5: memref<1x1024xf32, #tpu.memory_space<vmem>>, %arg6: memref<256x1024xf32, #tpu.memory_space<vmem>>, %arg7: memref<256x1024xf32, #tpu.memory_space<vmem>>, %arg8: memref<1x1024xf32, #tpu.memory_space<vmem>>, %arg9: memref<256x1024xf32, #tpu.memory_space<vmem>>, %arg10: memref<256x1024xf32, #tpu.memory_space<vmem>>, %arg11: memref<1x1024xf32, #tpu.memory_space<vmem>>, %arg12: memref<256x128xf32, #tpu.memory_space<vmem>>, %arg13: memref<1x128xf32, #tpu.memory_space<vmem>>, %arg14: memref<256x256xf32, #tpu.memory_space<vmem>>, %arg15: memref<128x256xf32, #tpu.memory_space<vmem>>, %arg16: memref<1x256xf32, #tpu.memory_space<vmem>>, %arg17: memref<256x128xf32, #tpu.memory_space<vmem>>, %arg18: memref<1x128xf32, #tpu.memory_space<vmem>>, %arg19: memref<8x128x128xf32, #tpu.memory_space<vmem>>, %arg20: memref<8x128x128xf32, #tpu.memory_space<vmem>>, %arg21: memref<8x128xf32, #tpu.memory_space<vmem>>, %arg22: memref<3x1x256xf32, #tpu.memory_space<vmem>>, %arg23: memref<3x1x256xf32, #tpu.memory_space<vmem>>, %arg24: memref<1x128xf32, #tpu.memory_space<vmem>>, %arg25: memref<8x8x128xf32, #tpu.memory_space<vmem>>, %arg26: memref<8x8x128xf32, #tpu.memory_space<vmem>>) attributes {dimension_semantics = [#tpu.dimension_semantics<arbitrary>], iteration_bounds = array<i64: 1>, scalar_prefetch = 0 : i64, scratch_operands = 0 : i64, tpu.core_type = #tpu.core_type<tc>, window_params = [{pipeline_mode = #tpu.pipeline_mode<synchronous>, transform_indices = @transform_0, window_bounds = array<i64: 128, 256>}, {pipeline_mode = #tpu.pipeline_mode<synchronous>, transform_indices = @transform_1, window_bounds = array<i64: 256, 1024>}, {pipeline_mode = #tpu.pipeline_mode<synchronous>, transform_indices = @transform_2, window_bounds = array<i64: 128, 1024>}, {pipeline_mode = #tpu.pipeline_mode<synchronous>, transform_indices = @transform_3, window_bounds = array<i64: 256, 1024>}, {pipeline_mode = #tpu.pipeline_mode<synchronous>, transform_indices = @transform_4, window_bounds = array<i64: 1, 1024>}, {pipeline_mode = #tpu.pipeline_mode<synchronous>, transform_indices = @transform_5, window_bounds = array<i64: 256, 1024>}, {pipeline_mode = #tpu.pipeline_mode<synchronous>, transform_indices = @transform_6, window_bounds = array<i64: 256, 1024>}, {pipeline_mode = #tpu.pipeline_mode<synchronous>, transform_indices = @transform_7, window_bounds = array<i64: 1, 1024>}, {pipeline_mode = #tpu.pipeline_mode<synchronous>, transform_indices = @transform_8, window_bounds = array<i64: 256, 1024>}, {pipeline_mode = #tpu.pipeline_mode<synchronous>, transform_indices = @transform_9, window_bounds = array<i64: 256, 1024>}, {pipeline_mode = #tpu.pipeline_mode<synchronous>, transform_indices = @transform_10, window_bounds = array<i64: 1, 1024>}, {pipeline_mode = #tpu.pipeline_mode<synchronous>, transform_indices = @transform_11, window_bounds = array<i64: 256, 128>}, {pipeline_mode = #tpu.pipeline_mode<synchronous>, transform_indices = @transform_12, window_bounds = array<i64: 1, 128>}, {pipeline_mode = #tpu.pipeline_mode<synchronous>, transform_indices = @transform_13, window_bounds = array<i64: 256, 256>}, {pipeline_mode = #tpu.pipeline_mode<synchronous>, transform_indices = @transform_14, window_bounds = array<i64: 128, 256>}, {pipeline_mode = #tpu.pipeline_mode<synchronous>, transform_indices = @transform_15, window_bounds = array<i64: 1, 256>}, {pipeline_mode = #tpu.pipeline_mode<synchronous>, transform_indices = @transform_16, window_bounds = array<i64: 256, 128>}, {pipeline_mode = #tpu.pipeline_mode<synchronous>, transform_indices = @transform_17, window_bounds = array<i64: 1, 128>}, {pipeline_mode = #tpu.pipeline_mode<synchronous>, transform_indices = @transform_18, window_bounds = array<i64: 8, 128, 128>}, {pipeline_mode = #tpu.pipeline_mode<synchronous>, transform_indices = @transform_19, window_bounds = array<i64: 8, 128, 128>}, {pipeline_mode = #tpu.pipeline_mode<synchronous>, transform_indices = @transform_20, window_bounds = array<i64: 8, 128>}, {pipeline_mode = #tpu.pipeline_mode<synchronous>, transform_indices = @transform_21, window_bounds = array<i64: 3, 1, 256>}, {pipeline_mode = #tpu.pipeline_mode<synchronous>, transform_indices = @transform_22, window_bounds = array<i64: 3, 1, 256>}, {pipeline_mode = #tpu.pipeline_mode<synchronous>, transform_indices = @transform_23, window_bounds = array<i64: 1, 128>}, {pipeline_mode = #tpu.pipeline_mode<synchronous>, transform_indices = @transform_24, window_bounds = array<i64: 8, 8, 128>}, {pipeline_mode = #tpu.pipeline_mode<synchronous>, transform_indices = @transform_25, window_bounds = array<i64: 8, 8, 128>}]} {
    %0 = tpu.iota {dimensions = array<i32: 1>} : vector<8x128xi32>
    %c33_i32 = arith.constant 33 : i32
    %1 = vector.broadcast %c33_i32 : i32 to vector<8x128xi32>
    %2 = arith.cmpi slt, %0, %1 : vector<8x128xi32>
    %c0 = arith.constant 0 : index
    %c0_0 = arith.constant 0 : index
    %c0_1 = arith.constant 0 : index
    %3 = vector.load %arg22[%c0, %c0_0, %c0_1] : memref<3x1x256xf32, #tpu.memory_space<vmem>>, vector<1x1x256xf32>
    %4 = vector.shape_cast %3 : vector<1x1x256xf32> to vector<1x256xf32>
    %5 = vector.shape_cast %4 : vector<1x256xf32> to vector<1x256xf32>
    %6 = vector.broadcast %5 : vector<1x256xf32> to vector<8x256xf32>
    %c0_2 = arith.constant 0 : index
    %c0_3 = arith.constant 0 : index
    %c0_4 = arith.constant 0 : index
    %7 = vector.load %arg23[%c0_2, %c0_3, %c0_4] : memref<3x1x256xf32, #tpu.memory_space<vmem>>, vector<1x1x256xf32>
    %8 = vector.shape_cast %7 : vector<1x1x256xf32> to vector<1x256xf32>
    %9 = vector.shape_cast %8 : vector<1x256xf32> to vector<1x256xf32>
    %10 = vector.broadcast %9 : vector<1x256xf32> to vector<8x256xf32>
    %c1 = arith.constant 1 : index
    %c0_5 = arith.constant 0 : index
    %c0_6 = arith.constant 0 : index
    %11 = vector.load %arg22[%c1, %c0_5, %c0_6] : memref<3x1x256xf32, #tpu.memory_space<vmem>>, vector<1x1x256xf32>
    %12 = vector.shape_cast %11 : vector<1x1x256xf32> to vector<1x256xf32>
    %13 = vector.shape_cast %12 : vector<1x256xf32> to vector<1x256xf32>
    %14 = vector.broadcast %13 : vector<1x256xf32> to vector<8x256xf32>
    %c1_7 = arith.constant 1 : index
    %c0_8 = arith.constant 0 : index
    %c0_9 = arith.constant 0 : index
    %15 = vector.load %arg23[%c1_7, %c0_8, %c0_9] : memref<3x1x256xf32, #tpu.memory_space<vmem>>, vector<1x1x256xf32>
    %16 = vector.shape_cast %15 : vector<1x1x256xf32> to vector<1x256xf32>
    %17 = vector.shape_cast %16 : vector<1x256xf32> to vector<1x256xf32>
    %18 = vector.broadcast %17 : vector<1x256xf32> to vector<8x256xf32>
    %c2 = arith.constant 2 : index
    %c0_10 = arith.constant 0 : index
    %c0_11 = arith.constant 0 : index
    %19 = vector.load %arg22[%c2, %c0_10, %c0_11] : memref<3x1x256xf32, #tpu.memory_space<vmem>>, vector<1x1x256xf32>
    %20 = vector.shape_cast %19 : vector<1x1x256xf32> to vector<1x256xf32>
    %21 = vector.shape_cast %20 : vector<1x256xf32> to vector<1x256xf32>
    %22 = vector.broadcast %21 : vector<1x256xf32> to vector<8x256xf32>
    %c2_12 = arith.constant 2 : index
    %c0_13 = arith.constant 0 : index
    %c0_14 = arith.constant 0 : index
    %23 = vector.load %arg23[%c2_12, %c0_13, %c0_14] : memref<3x1x256xf32, #tpu.memory_space<vmem>>, vector<1x1x256xf32>
    %24 = vector.shape_cast %23 : vector<1x1x256xf32> to vector<1x256xf32>
    %25 = vector.shape_cast %24 : vector<1x256xf32> to vector<1x256xf32>
    %26 = vector.broadcast %25 : vector<1x256xf32> to vector<8x256xf32>
    %c0_15 = arith.constant 0 : index
    %c0_16 = arith.constant 0 : index
    %27 = vector.load %arg24[%c0_15, %c0_16] : memref<1x128xf32, #tpu.memory_space<vmem>>, vector<1x128xf32>
    %28 = vector.shape_cast %27 : vector<1x128xf32> to vector<1x128xf32>
    %29 = vector.broadcast %28 : vector<1x128xf32> to vector<8x128xf32>
    %c0_i32 = arith.constant 0 : i32
    %30 = vector.broadcast %c0_i32 : i32 to vector<8x128xi32>
    %31 = arith.cmpi eq, %0, %30 : vector<8x128xi32>
    %32 = arith.extui %31 : vector<8x128xi1> to vector<8x128xi32>
    %33 = arith.sitofp %32 : vector<8x128xi32> to vector<8x128xf32>
    %cst = arith.constant -1.000000e+30 : f32
    %c0_i32_17 = arith.constant 0 : i32
    %c8_i32 = arith.constant 8 : i32
    %34 = arith.addi %c0_i32_17, %c8_i32 : i32
    %c1_i32 = arith.constant 1 : i32
    %35:8 = scf.for %arg27 = %c0_i32_17 to %34 step %c1_i32 iter_args(%arg28 = %6, %arg29 = %10, %arg30 = %14, %arg31 = %18, %arg32 = %22, %arg33 = %26, %arg34 = %29, %arg35 = %33) -> (vector<8x256xf32>, vector<8x256xf32>, vector<8x256xf32>, vector<8x256xf32>, vector<8x256xf32>, vector<8x256xf32>, vector<8x128xf32>, vector<8x128xf32>)  : i32 {
      %c0_19 = arith.constant 0 : index
      %c0_20 = arith.constant 0 : index
      %36 = vector.load %arg1[%c0_19, %c0_20] : memref<128x256xf32, #tpu.memory_space<vmem>>, vector<128x256xf32>
      %cst_21 = arith.constant dense<0.000000e+00> : vector<8x256xf32>
      %37 = tpu.matmul %arg35, %36, %cst_21 {dimension_numbers = #tpu.dot_dimension_numbers<[1], [0], [0], [1], [0, 0, 1, 1], [], []>} : vector<8x128xf32>, vector<128x256xf32>, vector<8x256xf32> -> vector<8x256xf32>
      %c0_22 = arith.constant 0 : index
      %c0_23 = arith.constant 0 : index
      %38 = vector.load %arg2[%c0_22, %c0_23] : memref<256x1024xf32, #tpu.memory_space<vmem>>, vector<256x1024xf32>
      %cst_24 = arith.constant dense<0.000000e+00> : vector<8x1024xf32>
      %39 = tpu.matmul %37, %38, %cst_24 {dimension_numbers = #tpu.dot_dimension_numbers<[1], [0], [0], [1], [0, 0, 1, 1], [], []>} : vector<8x256xf32>, vector<256x1024xf32>, vector<8x1024xf32> -> vector<8x1024xf32>
      %c0_25 = arith.constant 0 : index
      %c0_26 = arith.constant 0 : index
      %40 = vector.load %arg3[%c0_25, %c0_26] : memref<128x1024xf32, #tpu.memory_space<vmem>>, vector<128x1024xf32>
      %cst_27 = arith.constant dense<0.000000e+00> : vector<8x1024xf32>
      %41 = tpu.matmul %arg34, %40, %cst_27 {dimension_numbers = #tpu.dot_dimension_numbers<[1], [0], [0], [1], [0, 0, 1, 1], [], []>} : vector<8x128xf32>, vector<128x1024xf32>, vector<8x1024xf32> -> vector<8x1024xf32>
      %42 = arith.addf %39, %41 : vector<8x1024xf32>
      %c0_28 = arith.constant 0 : index
      %c0_29 = arith.constant 0 : index
      %43 = vector.load %arg4[%c0_28, %c0_29] : memref<256x1024xf32, #tpu.memory_space<vmem>>, vector<256x1024xf32>
      %cst_30 = arith.constant dense<0.000000e+00> : vector<8x1024xf32>
      %44 = tpu.matmul %arg28, %43, %cst_30 {dimension_numbers = #tpu.dot_dimension_numbers<[1], [0], [0], [1], [0, 0, 1, 1], [], []>} : vector<8x256xf32>, vector<256x1024xf32>, vector<8x1024xf32> -> vector<8x1024xf32>
      %45 = arith.addf %42, %44 : vector<8x1024xf32>
      %c0_31 = arith.constant 0 : index
      %c0_32 = arith.constant 0 : index
      %46 = vector.load %arg5[%c0_31, %c0_32] : memref<1x1024xf32, #tpu.memory_space<vmem>>, vector<1x1024xf32>
      %47 = vector.broadcast %46 : vector<1x1024xf32> to vector<8x1024xf32>
      %48 = arith.addf %45, %47 : vector<8x1024xf32>
      %49 = vector.extract_strided_slice %48 {offsets = [0, 0], sizes = [8, 256], strides = [1, 1]} : vector<8x1024xf32> to vector<8x256xf32>
      %50 = arith.negf %49 : vector<8x256xf32>
      %51 = math.exp %50 : vector<8x256xf32>
      %cst_33 = arith.constant 1.000000e+00 : f32
      %52 = vector.broadcast %cst_33 : f32 to vector<8x256xf32>
      %53 = arith.addf %52, %51 : vector<8x256xf32>
      %54 = arith.divf %52, %53 : vector<8x256xf32>
      %55 = vector.extract_strided_slice %48 {offsets = [0, 256], sizes = [8, 256], strides = [1, 1]} : vector<8x1024xf32> to vector<8x256xf32>
      %56 = arith.negf %55 : vector<8x256xf32>
      %57 = math.exp %56 : vector<8x256xf32>
      %cst_34 = arith.constant 1.000000e+00 : f32
      %58 = vector.broadcast %cst_34 : f32 to vector<8x256xf32>
      %59 = arith.addf %58, %57 : vector<8x256xf32>
      %60 = arith.divf %58, %59 : vector<8x256xf32>
      %61 = vector.extract_strided_slice %48 {offsets = [0, 512], sizes = [8, 256], strides = [1, 1]} : vector<8x1024xf32> to vector<8x256xf32>
      %62 = math.tanh %61 : vector<8x256xf32>
      %63 = vector.extract_strided_slice %48 {offsets = [0, 768], sizes = [8, 256], strides = [1, 1]} : vector<8x1024xf32> to vector<8x256xf32>
      %64 = arith.negf %63 : vector<8x256xf32>
      %65 = math.exp %64 : vector<8x256xf32>
      %cst_35 = arith.constant 1.000000e+00 : f32
      %66 = vector.broadcast %cst_35 : f32 to vector<8x256xf32>
      %67 = arith.addf %66, %65 : vector<8x256xf32>
      %68 = arith.divf %66, %67 : vector<8x256xf32>
      %69 = arith.mulf %60, %arg29 : vector<8x256xf32>
      %70 = arith.mulf %54, %62 : vector<8x256xf32>
      %71 = arith.addf %69, %70 : vector<8x256xf32>
      %72 = math.tanh %71 : vector<8x256xf32>
      %73 = arith.mulf %68, %72 : vector<8x256xf32>
      %c0_36 = arith.constant 0 : index
      %c0_37 = arith.constant 0 : index
      %74 = vector.load %arg6[%c0_36, %c0_37] : memref<256x1024xf32, #tpu.memory_space<vmem>>, vector<256x1024xf32>
      %cst_38 = arith.constant dense<0.000000e+00> : vector<8x1024xf32>
      %75 = tpu.matmul %73, %74, %cst_38 {dimension_numbers = #tpu.dot_dimension_numbers<[1], [0], [0], [1], [0, 0, 1, 1], [], []>} : vector<8x256xf32>, vector<256x1024xf32>, vector<8x1024xf32> -> vector<8x1024xf32>
      %c0_39 = arith.constant 0 : index
      %c0_40 = arith.constant 0 : index
      %76 = vector.load %arg7[%c0_39, %c0_40] : memref<256x1024xf32, #tpu.memory_space<vmem>>, vector<256x1024xf32>
      %cst_41 = arith.constant dense<0.000000e+00> : vector<8x1024xf32>
      %77 = tpu.matmul %arg30, %76, %cst_41 {dimension_numbers = #tpu.dot_dimension_numbers<[1], [0], [0], [1], [0, 0, 1, 1], [], []>} : vector<8x256xf32>, vector<256x1024xf32>, vector<8x1024xf32> -> vector<8x1024xf32>
      %78 = arith.addf %75, %77 : vector<8x1024xf32>
      %c0_42 = arith.constant 0 : index
      %c0_43 = arith.constant 0 : index
      %79 = vector.load %arg8[%c0_42, %c0_43] : memref<1x1024xf32, #tpu.memory_space<vmem>>, vector<1x1024xf32>
      %80 = vector.broadcast %79 : vector<1x1024xf32> to vector<8x1024xf32>
      %81 = arith.addf %78, %80 : vector<8x1024xf32>
      %82 = vector.extract_strided_slice %81 {offsets = [0, 0], sizes = [8, 256], strides = [1, 1]} : vector<8x1024xf32> to vector<8x256xf32>
      %83 = arith.negf %82 : vector<8x256xf32>
      %84 = math.exp %83 : vector<8x256xf32>
      %cst_44 = arith.constant 1.000000e+00 : f32
      %85 = vector.broadcast %cst_44 : f32 to vector<8x256xf32>
      %86 = arith.addf %85, %84 : vector<8x256xf32>
      %87 = arith.divf %85, %86 : vector<8x256xf32>
      %88 = vector.extract_strided_slice %81 {offsets = [0, 256], sizes = [8, 256], strides = [1, 1]} : vector<8x1024xf32> to vector<8x256xf32>
      %89 = arith.negf %88 : vector<8x256xf32>
      %90 = math.exp %89 : vector<8x256xf32>
      %cst_45 = arith.constant 1.000000e+00 : f32
      %91 = vector.broadcast %cst_45 : f32 to vector<8x256xf32>
      %92 = arith.addf %91, %90 : vector<8x256xf32>
      %93 = arith.divf %91, %92 : vector<8x256xf32>
      %94 = vector.extract_strided_slice %81 {offsets = [0, 512], sizes = [8, 256], strides = [1, 1]} : vector<8x1024xf32> to vector<8x256xf32>
      %95 = math.tanh %94 : vector<8x256xf32>
      %96 = vector.extract_strided_slice %81 {offsets = [0, 768], sizes = [8, 256], strides = [1, 1]} : vector<8x1024xf32> to vector<8x256xf32>
      %97 = arith.negf %96 : vector<8x256xf32>
      %98 = math.exp %97 : vector<8x256xf32>
      %cst_46 = arith.constant 1.000000e+00 : f32
      %99 = vector.broadcast %cst_46 : f32 to vector<8x256xf32>
      %100 = arith.addf %99, %98 : vector<8x256xf32>
      %101 = arith.divf %99, %100 : vector<8x256xf32>
      %102 = arith.mulf %93, %arg31 : vector<8x256xf32>
      %103 = arith.mulf %87, %95 : vector<8x256xf32>
      %104 = arith.addf %102, %103 : vector<8x256xf32>
      %105 = math.tanh %104 : vector<8x256xf32>
      %106 = arith.mulf %101, %105 : vector<8x256xf32>
      %c0_47 = arith.constant 0 : index
      %c0_48 = arith.constant 0 : index
      %107 = vector.load %arg9[%c0_47, %c0_48] : memref<256x1024xf32, #tpu.memory_space<vmem>>, vector<256x1024xf32>
      %cst_49 = arith.constant dense<0.000000e+00> : vector<8x1024xf32>
      %108 = tpu.matmul %106, %107, %cst_49 {dimension_numbers = #tpu.dot_dimension_numbers<[1], [0], [0], [1], [0, 0, 1, 1], [], []>} : vector<8x256xf32>, vector<256x1024xf32>, vector<8x1024xf32> -> vector<8x1024xf32>
      %c0_50 = arith.constant 0 : index
      %c0_51 = arith.constant 0 : index
      %109 = vector.load %arg10[%c0_50, %c0_51] : memref<256x1024xf32, #tpu.memory_space<vmem>>, vector<256x1024xf32>
      %cst_52 = arith.constant dense<0.000000e+00> : vector<8x1024xf32>
      %110 = tpu.matmul %arg32, %109, %cst_52 {dimension_numbers = #tpu.dot_dimension_numbers<[1], [0], [0], [1], [0, 0, 1, 1], [], []>} : vector<8x256xf32>, vector<256x1024xf32>, vector<8x1024xf32> -> vector<8x1024xf32>
      %111 = arith.addf %108, %110 : vector<8x1024xf32>
      %c0_53 = arith.constant 0 : index
      %c0_54 = arith.constant 0 : index
      %112 = vector.load %arg11[%c0_53, %c0_54] : memref<1x1024xf32, #tpu.memory_space<vmem>>, vector<1x1024xf32>
      %113 = vector.broadcast %112 : vector<1x1024xf32> to vector<8x1024xf32>
      %114 = arith.addf %111, %113 : vector<8x1024xf32>
      %115 = vector.extract_strided_slice %114 {offsets = [0, 0], sizes = [8, 256], strides = [1, 1]} : vector<8x1024xf32> to vector<8x256xf32>
      %116 = arith.negf %115 : vector<8x256xf32>
      %117 = math.exp %116 : vector<8x256xf32>
      %cst_55 = arith.constant 1.000000e+00 : f32
      %118 = vector.broadcast %cst_55 : f32 to vector<8x256xf32>
      %119 = arith.addf %118, %117 : vector<8x256xf32>
      %120 = arith.divf %118, %119 : vector<8x256xf32>
      %121 = vector.extract_strided_slice %114 {offsets = [0, 256], sizes = [8, 256], strides = [1, 1]} : vector<8x1024xf32> to vector<8x256xf32>
      %122 = arith.negf %121 : vector<8x256xf32>
      %123 = math.exp %122 : vector<8x256xf32>
      %cst_56 = arith.constant 1.000000e+00 : f32
      %124 = vector.broadcast %cst_56 : f32 to vector<8x256xf32>
      %125 = arith.addf %124, %123 : vector<8x256xf32>
      %126 = arith.divf %124, %125 : vector<8x256xf32>
      %127 = vector.extract_strided_slice %114 {offsets = [0, 512], sizes = [8, 256], strides = [1, 1]} : vector<8x1024xf32> to vector<8x256xf32>
      %128 = math.tanh %127 : vector<8x256xf32>
      %129 = vector.extract_strided_slice %114 {offsets = [0, 768], sizes = [8, 256], strides = [1, 1]} : vector<8x1024xf32> to vector<8x256xf32>
      %130 = arith.negf %129 : vector<8x256xf32>
      %131 = math.exp %130 : vector<8x256xf32>
      %cst_57 = arith.constant 1.000000e+00 : f32
      %132 = vector.broadcast %cst_57 : f32 to vector<8x256xf32>
      %133 = arith.addf %132, %131 : vector<8x256xf32>
      %134 = arith.divf %132, %133 : vector<8x256xf32>
      %135 = arith.mulf %126, %arg33 : vector<8x256xf32>
      %136 = arith.mulf %120, %128 : vector<8x256xf32>
      %137 = arith.addf %135, %136 : vector<8x256xf32>
      %138 = math.tanh %137 : vector<8x256xf32>
      %139 = arith.mulf %134, %138 : vector<8x256xf32>
      %c0_58 = arith.constant 0 : index
      %c0_59 = arith.constant 0 : index
      %140 = vector.load %arg12[%c0_58, %c0_59] : memref<256x128xf32, #tpu.memory_space<vmem>>, vector<256x128xf32>
      %cst_60 = arith.constant dense<0.000000e+00> : vector<8x128xf32>
      %141 = tpu.matmul %139, %140, %cst_60 {dimension_numbers = #tpu.dot_dimension_numbers<[1], [0], [0], [1], [0, 0, 1, 1], [], []>} : vector<8x256xf32>, vector<256x128xf32>, vector<8x128xf32> -> vector<8x128xf32>
      %c0_61 = arith.constant 0 : index
      %c0_62 = arith.constant 0 : index
      %142 = vector.load %arg13[%c0_61, %c0_62] : memref<1x128xf32, #tpu.memory_space<vmem>>, vector<1x128xf32>
      %143 = vector.broadcast %142 : vector<1x128xf32> to vector<8x128xf32>
      %144 = arith.addf %141, %143 : vector<8x128xf32>
      %145 = vector.shape_cast %144 : vector<8x128xf32> to vector<8x1x128xf32>
      %c0_63 = arith.constant 0 : index
      %c0_64 = arith.constant 0 : index
      %c0_65 = arith.constant 0 : index
      %146 = vector.load %arg19[%c0_63, %c0_64, %c0_65] : memref<8x128x128xf32, #tpu.memory_space<vmem>>, vector<8x128x128xf32>
      "tpu.trace_start"() <{level = 10 : i32, message = "bxq,btq->bxt"}> : () -> ()
      %cst_66 = arith.constant dense<0.000000e+00> : vector<8x1x128xf32>
      %147 = tpu.matmul %145, %146, %cst_66 {dimension_numbers = #tpu.dot_dimension_numbers<[2], [2], [1], [1], [0, 0, 0, 1, 1, 1], [0], [0]>} : vector<8x1x128xf32>, vector<8x128x128xf32>, vector<8x1x128xf32> -> vector<8x1x128xf32>
      "tpu.trace_stop"() : () -> ()
      %148 = vector.shape_cast %147 : vector<8x1x128xf32> to vector<8x128xf32>
      %cst_67 = arith.constant dense<0xFF800000> : vector<8xf32>
      %149 = vector.multi_reduction <maximumf>, %148, %cst_67 [1] : vector<8x128xf32> to vector<8xf32>
      %150 = vector.shape_cast %149 : vector<8xf32> to vector<8x1xf32>
      %151 = vector.broadcast %150 : vector<8x1xf32> to vector<8x128xf32>
      %152 = arith.subf %148, %151 : vector<8x128xf32>
      %153 = math.exp %152 : vector<8x128xf32>
      %cst_68 = arith.constant dense<0.000000e+00> : vector<8xf32>
      %154 = vector.multi_reduction <add>, %153, %cst_68 [1] : vector<8x128xf32> to vector<8xf32>
      %155 = vector.shape_cast %154 : vector<8xf32> to vector<8x1xf32>
      %156 = tpu.reciprocal %155 {approx = true} : vector<8x1xf32> -> vector<8x1xf32>
      %157 = vector.broadcast %156 : vector<8x1xf32> to vector<8x128xf32>
      %158 = arith.mulf %153, %157 : vector<8x128xf32>
      %c0_69 = arith.constant 0 : index
      %c0_70 = arith.constant 0 : index
      %159 = vector.load %arg21[%c0_69, %c0_70] : memref<8x128xf32, #tpu.memory_space<vmem>>, vector<8x128xf32>
      %160 = arith.mulf %158, %159 : vector<8x128xf32>
      %cst_71 = arith.constant dense<0.000000e+00> : vector<8xf32>
      %161 = vector.multi_reduction <add>, %160, %cst_71 [1] : vector<8x128xf32> to vector<8xf32>
      %162 = vector.shape_cast %161 : vector<8xf32> to vector<8x1xf32>
      %cst_72 = arith.constant 9.99999996E-13 : f32
      %163 = vector.broadcast %cst_72 : f32 to vector<8x1xf32>
      %164 = arith.maximumf %162, %163 : vector<8x1xf32>
      %165 = tpu.reciprocal %164 : vector<8x1xf32> -> vector<8x1xf32>
      %166 = vector.broadcast %165 : vector<8x1xf32> to vector<8x128xf32>
      %167 = arith.mulf %160, %166 : vector<8x128xf32>
      %168 = vector.shape_cast %167 : vector<8x128xf32> to vector<8x1x128xf32>
      %c0_73 = arith.constant 0 : index
      %c0_74 = arith.constant 0 : index
      %c0_75 = arith.constant 0 : index
      %169 = vector.load %arg20[%c0_73, %c0_74, %c0_75] : memref<8x128x128xf32, #tpu.memory_space<vmem>>, vector<8x128x128xf32>
      "tpu.trace_start"() <{level = 10 : i32, message = "bxt,btd->bxd"}> : () -> ()
      %cst_76 = arith.constant dense<0.000000e+00> : vector<8x1x128xf32>
      %170 = tpu.matmul %168, %169, %cst_76 {dimension_numbers = #tpu.dot_dimension_numbers<[2], [1], [1], [2], [0, 0, 0, 1, 1, 2], [0], [0]>} : vector<8x1x128xf32>, vector<8x128x128xf32>, vector<8x1x128xf32> -> vector<8x1x128xf32>
      "tpu.trace_stop"() : () -> ()
      %171 = vector.shape_cast %170 : vector<8x1x128xf32> to vector<8x128xf32>
      %c0_77 = arith.constant 0 : index
      %c0_78 = arith.constant 0 : index
      %172 = vector.load %arg14[%c0_77, %c0_78] : memref<256x256xf32, #tpu.memory_space<vmem>>, vector<256x256xf32>
      %cst_79 = arith.constant dense<0.000000e+00> : vector<8x256xf32>
      %173 = tpu.matmul %139, %172, %cst_79 {dimension_numbers = #tpu.dot_dimension_numbers<[1], [0], [0], [1], [0, 0, 1, 1], [], []>} : vector<8x256xf32>, vector<256x256xf32>, vector<8x256xf32> -> vector<8x256xf32>
      %c0_80 = arith.constant 0 : index
      %c0_81 = arith.constant 0 : index
      %174 = vector.load %arg15[%c0_80, %c0_81] : memref<128x256xf32, #tpu.memory_space<vmem>>, vector<128x256xf32>
      %cst_82 = arith.constant dense<0.000000e+00> : vector<8x256xf32>
      %175 = tpu.matmul %171, %174, %cst_82 {dimension_numbers = #tpu.dot_dimension_numbers<[1], [0], [0], [1], [0, 0, 1, 1], [], []>} : vector<8x128xf32>, vector<128x256xf32>, vector<8x256xf32> -> vector<8x256xf32>
      %176 = arith.addf %173, %175 : vector<8x256xf32>
      %c0_83 = arith.constant 0 : index
      %c0_84 = arith.constant 0 : index
      %177 = vector.load %arg16[%c0_83, %c0_84] : memref<1x256xf32, #tpu.memory_space<vmem>>, vector<1x256xf32>
      %178 = vector.broadcast %177 : vector<1x256xf32> to vector<8x256xf32>
      %179 = arith.addf %176, %178 : vector<8x256xf32>
      %cst_85 = arith.constant 0.000000e+00 : f32
      %180 = vector.broadcast %cst_85 : f32 to vector<8x256xf32>
      %181 = arith.maximumf %179, %180 : vector<8x256xf32>
      %c0_86 = arith.constant 0 : index
      %c0_87 = arith.constant 0 : index
      %182 = vector.load %arg17[%c0_86, %c0_87] : memref<256x128xf32, #tpu.memory_space<vmem>>, vector<256x128xf32>
      %cst_88 = arith.constant dense<0.000000e+00> : vector<8x128xf32>
      %183 = tpu.matmul %181, %182, %cst_88 {dimension_numbers = #tpu.dot_dimension_numbers<[1], [0], [0], [1], [0, 0, 1, 1], [], []>} : vector<8x256xf32>, vector<256x128xf32>, vector<8x128xf32> -> vector<8x128xf32>
      %c0_89 = arith.constant 0 : index
      %c0_90 = arith.constant 0 : index
      %184 = vector.load %arg18[%c0_89, %c0_90] : memref<1x128xf32, #tpu.memory_space<vmem>>, vector<1x128xf32>
      %185 = vector.broadcast %184 : vector<1x128xf32> to vector<8x128xf32>
      %186 = arith.addf %183, %185 : vector<8x128xf32>
      %187 = arith.index_cast %arg27 : i32 to index
      %c0_91 = arith.constant 0 : index
      %c0_92 = arith.constant 0 : index
      %188 = vector.load %arg25[%187, %c0_91, %c0_92] : memref<8x8x128xf32, #tpu.memory_space<vmem>>, vector<1x8x128xf32>
      %189 = vector.shape_cast %188 : vector<1x8x128xf32> to vector<8x128xf32>
      %190 = vector.shape_cast %167 : vector<8x128xf32> to vector<1x8x128xf32>
      tpu.vector_store %arg25[%187, %c0_91, %c0_92], %190 {strides = array<i32>} : memref<8x8x128xf32, #tpu.memory_space<vmem>>, vector<1x8x128xf32>,
      %191 = arith.index_cast %arg27 : i32 to index
      %c0_93 = arith.constant 0 : index
      %c0_94 = arith.constant 0 : index
      %192 = vector.load %arg26[%191, %c0_93, %c0_94] : memref<8x8x128xf32, #tpu.memory_space<vmem>>, vector<1x8x128xf32>
      %193 = vector.shape_cast %192 : vector<1x8x128xf32> to vector<8x128xf32>
      %194 = vector.shape_cast %186 : vector<8x128xf32> to vector<1x8x128xf32>
      tpu.vector_store %arg26[%191, %c0_93, %c0_94], %194 {strides = array<i32>} : memref<8x8x128xf32, #tpu.memory_space<vmem>>, vector<1x8x128xf32>,
      %195 = vector.broadcast %cst : f32 to vector<8x128xf32>
      %196 = arith.select %2, %186, %195 : vector<8x128xi1>, vector<8x128xf32>
      %cst_95 = arith.constant dense<0xFF800000> : vector<8xf32>
      %197 = vector.multi_reduction <maximumf>, %196, %cst_95 [1] : vector<8x128xf32> to vector<8xf32>
      %198 = vector.shape_cast %197 : vector<8xf32> to vector<8x1xf32>
      %199 = vector.broadcast %198 : vector<8x1xf32> to vector<8x128xf32>
      %200 = arith.cmpf oge, %196, %199 : vector<8x128xf32>
      %c128_i32 = arith.constant 128 : i32
      %201 = vector.broadcast %c128_i32 : i32 to vector<8x128xi32>
      %202 = arith.select %200, %0, %201 : vector<8x128xi1>, vector<8x128xi32>
      %cst_96 = arith.constant dense<2147483647> : vector<8xi32>
      %203 = vector.multi_reduction <minsi>, %202, %cst_96 [1] : vector<8x128xi32> to vector<8xi32>
      %204 = vector.shape_cast %203 : vector<8xi32> to vector<8x1xi32>
      %205 = vector.broadcast %204 : vector<8x1xi32> to vector<8x128xi32>
      %206 = arith.cmpi eq, %0, %205 : vector<8x128xi32>
      %207 = arith.extui %206 : vector<8x128xi1> to vector<8x128xi32>
      %208 = arith.sitofp %207 : vector<8x128xi32> to vector<8x128xf32>
      scf.yield %73, %71, %106, %104, %139, %137, %171, %208 : vector<8x256xf32>, vector<8x256xf32>, vector<8x256xf32>, vector<8x256xf32>, vector<8x256xf32>, vector<8x256xf32>, vector<8x128xf32>, vector<8x128xf32>
    }
    %c8_i32_18 = arith.constant 8 : i32
    return
  }
  func.func @transform_0(%arg0: i32) -> (i32, i32) {
    %c0_i32 = arith.constant 0 : i32
    %c0_i32_0 = arith.constant 0 : i32
    %c0_i32_1 = arith.constant 0 : i32
    return %c0_i32, %c0_i32_0 : i32, i32
  }
  func.func @transform_1(%arg0: i32) -> (i32, i32) {
    %c0_i32 = arith.constant 0 : i32
    %c0_i32_0 = arith.constant 0 : i32
    %c0_i32_1 = arith.constant 0 : i32
    return %c0_i32, %c0_i32_0 : i32, i32
  }
  func.func @transform_2(%arg0: i32) -> (i32, i32) {
    %c0_i32 = arith.constant 0 : i32
    %c0_i32_0 = arith.constant 0 : i32
    %c0_i32_1 = arith.constant 0 : i32
    return %c0_i32, %c0_i32_0 : i32, i32
  }
  func.func @transform_3(%arg0: i32) -> (i32, i32) {
    %c0_i32 = arith.constant 0 : i32
    %c0_i32_0 = arith.constant 0 : i32
    %c0_i32_1 = arith.constant 0 : i32
    return %c0_i32, %c0_i32_0 : i32, i32
  }
  func.func @transform_4(%arg0: i32) -> (i32, i32) {
    %c0_i32 = arith.constant 0 : i32
    %c0_i32_0 = arith.constant 0 : i32
    %c0_i32_1 = arith.constant 0 : i32
    return %c0_i32, %c0_i32_0 : i32, i32
  }
  func.func @transform_5(%arg0: i32) -> (i32, i32) {
    %c0_i32 = arith.constant 0 : i32
    %c0_i32_0 = arith.constant 0 : i32
    %c0_i32_1 = arith.constant 0 : i32
    return %c0_i32, %c0_i32_0 : i32, i32
  }
  func.func @transform_6(%arg0: i32) -> (i32, i32) {
    %c0_i32 = arith.constant 0 : i32
    %c0_i32_0 = arith.constant 0 : i32
    %c0_i32_1 = arith.constant 0 : i32
    return %c0_i32, %c0_i32_0 : i32, i32
  }
  func.func @transform_7(%arg0: i32) -> (i32, i32) {
    %c0_i32 = arith.constant 0 : i32
    %c0_i32_0 = arith.constant 0 : i32
    %c0_i32_1 = arith.constant 0 : i32
    return %c0_i32, %c0_i32_0 : i32, i32
  }
  func.func @transform_8(%arg0: i32) -> (i32, i32) {
    %c0_i32 = arith.constant 0 : i32
    %c0_i32_0 = arith.constant 0 : i32
    %c0_i32_1 = arith.constant 0 : i32
    return %c0_i32, %c0_i32_0 : i32, i32
  }
  func.func @transform_9(%arg0: i32) -> (i32, i32) {
    %c0_i32 = arith.constant 0 : i32
    %c0_i32_0 = arith.constant 0 : i32
    %c0_i32_1 = arith.constant 0 : i32
    return %c0_i32, %c0_i32_0 : i32, i32
  }
  func.func @transform_10(%arg0: i32) -> (i32, i32) {
    %c0_i32 = arith.constant 0 : i32
    %c0_i32_0 = arith.constant 0 : i32
    %c0_i32_1 = arith.constant 0 : i32
    return %c0_i32, %c0_i32_0 : i32, i32
  }
  func.func @transform_11(%arg0: i32) -> (i32, i32) {
    %c0_i32 = arith.constant 0 : i32
    %c0_i32_0 = arith.constant 0 : i32
    %c0_i32_1 = arith.constant 0 : i32
    return %c0_i32, %c0_i32_0 : i32, i32
  }
  func.func @transform_12(%arg0: i32) -> (i32, i32) {
    %c0_i32 = arith.constant 0 : i32
    %c0_i32_0 = arith.constant 0 : i32
    %c0_i32_1 = arith.constant 0 : i32
    return %c0_i32, %c0_i32_0 : i32, i32
  }
  func.func @transform_13(%arg0: i32) -> (i32, i32) {
    %c0_i32 = arith.constant 0 : i32
    %c0_i32_0 = arith.constant 0 : i32
    %c0_i32_1 = arith.constant 0 : i32
    return %c0_i32, %c0_i32_0 : i32, i32
  }
  func.func @transform_14(%arg0: i32) -> (i32, i32) {
    %c0_i32 = arith.constant 0 : i32
    %c0_i32_0 = arith.constant 0 : i32
    %c0_i32_1 = arith.constant 0 : i32
    return %c0_i32, %c0_i32_0 : i32, i32
  }
  func.func @transform_15(%arg0: i32) -> (i32, i32) {
    %c0_i32 = arith.constant 0 : i32
    %c0_i32_0 = arith.constant 0 : i32
    %c0_i32_1 = arith.constant 0 : i32
    return %c0_i32, %c0_i32_0 : i32, i32
  }
  func.func @transform_16(%arg0: i32) -> (i32, i32) {
    %c0_i32 = arith.constant 0 : i32
    %c0_i32_0 = arith.constant 0 : i32
    %c0_i32_1 = arith.constant 0 : i32
    return %c0_i32, %c0_i32_0 : i32, i32
  }
  func.func @transform_17(%arg0: i32) -> (i32, i32) {
    %c0_i32 = arith.constant 0 : i32
    %c0_i32_0 = arith.constant 0 : i32
    %c0_i32_1 = arith.constant 0 : i32
    return %c0_i32, %c0_i32_0 : i32, i32
  }
  func.func @transform_18(%arg0: i32) -> (i32, i32, i32) {
    %c0_i32 = arith.constant 0 : i32
    %c0_i32_0 = arith.constant 0 : i32
    %c0_i32_1 = arith.constant 0 : i32
    %c0_i32_2 = arith.constant 0 : i32
    return %c0_i32, %c0_i32_0, %c0_i32_1 : i32, i32, i32
  }
  func.func @transform_19(%arg0: i32) -> (i32, i32, i32) {
    %c0_i32 = arith.constant 0 : i32
    %c0_i32_0 = arith.constant 0 : i32
    %c0_i32_1 = arith.constant 0 : i32
    %c0_i32_2 = arith.constant 0 : i32
    return %c0_i32, %c0_i32_0, %c0_i32_1 : i32, i32, i32
  }
  func.func @transform_20(%arg0: i32) -> (i32, i32) {
    %c0_i32 = arith.constant 0 : i32
    %c0_i32_0 = arith.constant 0 : i32
    %c0_i32_1 = arith.constant 0 : i32
    return %c0_i32, %c0_i32_0 : i32, i32
  }
  func.func @transform_21(%arg0: i32) -> (i32, i32, i32) {
    %c0_i32 = arith.constant 0 : i32
    %c0_i32_0 = arith.constant 0 : i32
    %c0_i32_1 = arith.constant 0 : i32
    %c0_i32_2 = arith.constant 0 : i32
    return %c0_i32, %c0_i32_0, %c0_i32_1 : i32, i32, i32
  }
  func.func @transform_22(%arg0: i32) -> (i32, i32, i32) {
    %c0_i32 = arith.constant 0 : i32
    %c0_i32_0 = arith.constant 0 : i32
    %c0_i32_1 = arith.constant 0 : i32
    %c0_i32_2 = arith.constant 0 : i32
    return %c0_i32, %c0_i32_0, %c0_i32_1 : i32, i32, i32
  }
  func.func @transform_23(%arg0: i32) -> (i32, i32) {
    %c0_i32 = arith.constant 0 : i32
    %c0_i32_0 = arith.constant 0 : i32
    %c0_i32_1 = arith.constant 0 : i32
    return %c0_i32, %c0_i32_0 : i32, i32
  }
  func.func @transform_24(%arg0: i32) -> (i32, i32, i32) {
    %c0_i32 = arith.constant 0 : i32
    %c0_i32_0 = arith.constant 0 : i32
    %c0_i32_1 = arith.constant 0 : i32
    %c0_i32_2 = arith.constant 0 : i32
    return %c0_i32, %c0_i32_0, %c0_i32_1 : i32, i32, i32
  }
  func.func @transform_25(%arg0: i32) -> (i32, i32, i32) {
    %c0_i32 = arith.constant 0 : i32
    %c0_i32_0 = arith.constant 0 : i32
    %c0_i32_1 = arith.constant 0 : i32
    %c0_i32_2 = arith.constant 0 : i32
    return %c0_i32, %c0_i32_0, %c0_i32_1 : i32, i32, i32
  }
}

</mosaic_0001>

<llo_original>
// kernel: speller_forward.1
$region0: #{speller_forward.1}
  #allocation0 [shape = 'u32[]', space=smem, size = 0x4, offset = 0x4, fixed_abs, tag = 'smem constant byte address 0x4 - core index']
  #allocation1 [shape = 'u32[144,128]{1,0:T(1,128)}', space=vmem, size = 0x12000, scoped, tag = 'internal scratch']
  %s0 = inlined_call_operand.vmem [shape: f32[128,256], index: 0, kind: input, shape index: {}]
  %s1 = inlined_call_operand.vmem [shape: f32[256,1024], index: 1, kind: input, shape index: {}]
  %s2 = inlined_call_operand.vmem [shape: f32[128,1024], index: 2, kind: input, shape index: {}]
  %s3 = inlined_call_operand.vmem [shape: f32[256,1024], index: 3, kind: input, shape index: {}]
  %s4 = inlined_call_operand.vmem [shape: f32[1,1024], index: 4, kind: input, shape index: {}]
  %s5 = inlined_call_operand.vmem [shape: f32[256,1024], index: 5, kind: input, shape index: {}]
  %s6 = inlined_call_operand.vmem [shape: f32[256,1024], index: 6, kind: input, shape index: {}]
  %s7 = inlined_call_operand.vmem [shape: f32[1,1024], index: 7, kind: input, shape index: {}]
  %s8 = inlined_call_operand.vmem [shape: f32[256,1024], index: 8, kind: input, shape index: {}]
  %s9 = inlined_call_operand.hbm [shape: f32[256,1024], index: 9, kind: input, shape index: {}]
  %s10 = inlined_call_operand.vmem [shape: f32[1,1024], index: 10, kind: input, shape index: {}]
  %s11 = inlined_call_operand.hbm [shape: f32[256,128], index: 11, kind: input, shape index: {}]
  %s12 = inlined_call_operand.vmem [shape: f32[1,128], index: 12, kind: input, shape index: {}]
  %s13 = inlined_call_operand.vmem [shape: f32[256,256], index: 13, kind: input, shape index: {}]
  %s14 = inlined_call_operand.vmem [shape: f32[128,256], index: 14, kind: input, shape index: {}]
  %s15 = inlined_call_operand.vmem [shape: f32[1,256], index: 15, kind: input, shape index: {}]
  %s16 = inlined_call_operand.vmem [shape: f32[256,128], index: 16, kind: input, shape index: {}]
  %s17 = inlined_call_operand.vmem [shape: f32[1,128], index: 17, kind: input, shape index: {}]
  %s18 = inlined_call_operand.vmem [shape: f32[8,128,128], index: 18, kind: input, shape index: {}]
  %s19 = inlined_call_operand.vmem [shape: f32[8,128,128], index: 19, kind: input, shape index: {}]
  %s20 = inlined_call_operand.vmem [shape: f32[8,128], index: 20, kind: input, shape index: {}]
  %s21 = inlined_call_operand.vmem [shape: f32[3,1,256], index: 21, kind: input, shape index: {}]
  %s22 = inlined_call_operand.vmem [shape: f32[3,1,256], index: 22, kind: input, shape index: {}]
  %s23 = inlined_call_operand.vmem [shape: f32[1,128], index: 23, kind: input, shape index: {}]
  %s24 = inlined_call_operand.vmem [shape: f32[8,8,128], index: 24, kind: output, shape index: {0}]
  %s25 = inlined_call_operand.vmem [shape: f32[8,8,128], index: 25, kind: output, shape index: {1}]
  %26 = xla_tuple %s24, %s25
  %s27 = sld [smem:[#allocation0]]
  $region129: #{speller_forward.1} parent=0
    _
  %s29 = ssub.s32 1, %s27
  %s30 = scalar_select 0, %s29, %s27
  $region1: #{speller_forward.1} parent=0
    #allocation2 [shape = 'u8[1048576]{0}', space=vmem, size = 0x100000, scoped, tag = 'input window, operand 9, single buffered']
    #allocation3 [shape = 's32[1]{0}', space=sflag, size = 0x4, scoped, tag = 'scoped memory for speller_forward.1']
    #allocation4 [shape = 'u8[131072]{0}', space=vmem, size = 0x20000, scoped, tag = 'input window, operand 11, single buffered']
    #allocation5 [shape = 's32[1]{0}', space=sflag, size = 0x4, scoped, tag = 'scoped memory for speller_forward.1']
    %31 = vsyncpa [#allocation3], 0
    %32 = vsyncpa [#allocation5], 0
    // Predicated region
    $region2: #{speller_forward.1} parent=1 // pred_check
      _
    $region3: #{speller_forward.1} parent=1 // pred_check_branch
      %34 = sbr.rel (0) target = $region5
    $region4: #{speller_forward.1} parent=1 // pred_region
      _
    $region5: #{speller_forward.1} parent=1 // pred_fallthru
      _
    // Predicated region
    $region6: #{speller_forward.1} parent=1 // pred_check
      _
    $region7: #{speller_forward.1} parent=1 // pred_check_branch
      %36 = sbr.rel (0) target = $region9
    $region8: #{speller_forward.1} parent=1 // pred_region
      _
    $region9: #{speller_forward.1} parent=1 // pred_fallthru
      _
    // Predicated region
    $region10: #{speller_forward.1} parent=1 // pred_check
      _
    $region11: #{speller_forward.1} parent=1 // pred_check_branch
      %38 = sbr.rel (0) target = $region13
    $region12: #{speller_forward.1} parent=1 // pred_region
      _
    $region13: #{speller_forward.1} parent=1 // pred_fallthru
      _
    // Predicated region
    $region14: #{speller_forward.1} parent=1 // pred_check
      _
    $region15: #{speller_forward.1} parent=1 // pred_check_branch
      %40 = sbr.rel (0) target = $region17
    $region16: #{speller_forward.1} parent=1 // pred_region
      _
    $region17: #{speller_forward.1} parent=1 // pred_fallthru
      _
    // Predicated region
    $region18: #{speller_forward.1} parent=1 // pred_check
      _
    $region19: #{speller_forward.1} parent=1 // pred_check_branch
      %42 = sbr.rel (0) target = $region21
    $region20: #{speller_forward.1} parent=1 // pred_region
      _
    $region21: #{speller_forward.1} parent=1 // pred_fallthru
      _
    // Predicated region
    $region22: #{speller_forward.1} parent=1 // pred_check
      _
    $region23: #{speller_forward.1} parent=1 // pred_check_branch
      %44 = sbr.rel (0) target = $region25
    $region24: #{speller_forward.1} parent=1 // pred_region
      _
    $region25: #{speller_forward.1} parent=1 // pred_fallthru
      _
    // Predicated region
    $region26: #{speller_forward.1} parent=1 // pred_check
      _
    $region27: #{speller_forward.1} parent=1 // pred_check_branch
      %46 = sbr.rel (0) target = $region29
    $region28: #{speller_forward.1} parent=1 // pred_region
      _
    $region29: #{speller_forward.1} parent=1 // pred_fallthru
      _
    // Predicated region
    $region30: #{speller_forward.1} parent=1 // pred_check
      _
    $region31: #{speller_forward.1} parent=1 // pred_check_branch
      %48 = sbr.rel (0) target = $region33
    $region32: #{speller_forward.1} parent=1 // pred_region
      _
    $region33: #{speller_forward.1} parent=1 // pred_fallthru
      _
    // Predicated region
    $region34: #{speller_forward.1} parent=1 // pred_check
      _
    $region35: #{speller_forward.1} parent=1 // pred_check_branch
      %50 = sbr.rel (0) target = $region37
    $region36: #{speller_forward.1} parent=1 // pred_region
      _
    $region37: #{speller_forward.1} parent=1 // pred_fallthru
      _
    // Predicated region
    $region38: #{speller_forward.1} parent=1 // pred_check
      _
    $region39: #{speller_forward.1} parent=1 // pred_check_branch
      %52 = sbr.rel (0) target = $region41
    $region40: #{speller_forward.1} parent=1 // pred_region
      %s54 = ssub.s32 32768, 32768
      %55 = vsyncadd [#allocation3], %s54
      %s56 = sshll.u32 [#allocation2], 4
      %s57 = int_to_ptr.vmem [resolvable:$true] %s56
      %62 = dma.hbm_to_vmem [thread:$0]  %s9, 32768, %s57, [#allocation3], 1024, 1024, 64
    $region41: #{speller_forward.1} parent=1 // pred_fallthru
      _
    // Predicated region
    $region42: #{speller_forward.1} parent=1 // pred_check
      _
    $region43: #{speller_forward.1} parent=1 // pred_check_branch
      %64 = sbr.rel (0) target = $region45
    $region44: #{speller_forward.1} parent=1 // pred_region
      _
    $region45: #{speller_forward.1} parent=1 // pred_fallthru
      _
    // Predicated region
    $region46: #{speller_forward.1} parent=1 // pred_check
      _
    $region47: #{speller_forward.1} parent=1 // pred_check_branch
      %66 = sbr.rel (0) target = $region49
    $region48: #{speller_forward.1} parent=1 // pred_region
      %s68 = ssub.s32 4096, 4096
      %69 = vsyncadd [#allocation5], %s68
      %s70 = sshll.u32 [#allocation4], 4
      %s71 = int_to_ptr.vmem [resolvable:$true] %s70
      %76 = dma.hbm_to_vmem [thread:$0]  %s11, 4096, %s71, [#allocation5], 128, 128, 8
    $region49: #{speller_forward.1} parent=1 // pred_fallthru
      _
    // Predicated region
    $region50: #{speller_forward.1} parent=1 // pred_check
      _
    $region51: #{speller_forward.1} parent=1 // pred_check_branch
      %78 = sbr.rel (0) target = $region53
    $region52: #{speller_forward.1} parent=1 // pred_region
      _
    $region53: #{speller_forward.1} parent=1 // pred_fallthru
      _
    // Predicated region
    $region54: #{speller_forward.1} parent=1 // pred_check
      _
    $region55: #{speller_forward.1} parent=1 // pred_check_branch
      %80 = sbr.rel (0) target = $region57
    $region56: #{speller_forward.1} parent=1 // pred_region
      _
    $region57: #{speller_forward.1} parent=1 // pred_fallthru
      _
    // Predicated region
    $region58: #{speller_forward.1} parent=1 // pred_check
      _
    $region59: #{speller_forward.1} parent=1 // pred_check_branch
      %82 = sbr.rel (0) target = $region61
    $region60: #{speller_forward.1} parent=1 // pred_region
      _
    $region61: #{speller_forward.1} parent=1 // pred_fallthru
      _
    // Predicated region
    $region62: #{speller_forward.1} parent=1 // pred_check
      _
    $region63: #{speller_forward.1} parent=1 // pred_check_branch
      %84 = sbr.rel (0) target = $region65
    $region64: #{speller_forward.1} parent=1 // pred_region
      _
    $region65: #{speller_forward.1} parent=1 // pred_fallthru
      _
    // Predicated region
    $region66: #{speller_forward.1} parent=1 // pred_check
      _
    $region67: #{speller_forward.1} parent=1 // pred_check_branch
      %86 = sbr.rel (0) target = $region69
    $region68: #{speller_forward.1} parent=1 // pred_region
      _
    $region69: #{speller_forward.1} parent=1 // pred_fallthru
      _
    // Predicated region
    $region70: #{speller_forward.1} parent=1 // pred_check
      _
    $region71: #{speller_forward.1} parent=1 // pred_check_branch
      %88 = sbr.rel (0) target = $region73
    $region72: #{speller_forward.1} parent=1 // pred_region
      _
    $region73: #{speller_forward.1} parent=1 // pred_fallthru
      _
    // Predicated region
    $region74: #{speller_forward.1} parent=1 // pred_check
      _
    $region75: #{speller_forward.1} parent=1 // pred_check_branch
      %90 = sbr.rel (0) target = $region77
    $region76: #{speller_forward.1} parent=1 // pred_region
      _
    $region77: #{speller_forward.1} parent=1 // pred_fallthru
      _
    // Predicated region
    $region78: #{speller_forward.1} parent=1 // pred_check
      _
    $region79: #{speller_forward.1} parent=1 // pred_check_branch
      %92 = sbr.rel (0) target = $region81
    $region80: #{speller_forward.1} parent=1 // pred_region
      _
    $region81: #{speller_forward.1} parent=1 // pred_fallthru
      _
    // Predicated region
    $region82: #{speller_forward.1} parent=1 // pred_check
      _
    $region83: #{speller_forward.1} parent=1 // pred_check_branch
      %94 = sbr.rel (0) target = $region85
    $region84: #{speller_forward.1} parent=1 // pred_region
      _
    $region85: #{speller_forward.1} parent=1 // pred_fallthru
      _
    // Predicated region
    $region86: #{speller_forward.1} parent=1 // pred_check
      _
    $region87: #{speller_forward.1} parent=1 // pred_check_branch
      %96 = sbr.rel (0) target = $region89
    $region88: #{speller_forward.1} parent=1 // pred_region
      _
    $region89: #{speller_forward.1} parent=1 // pred_fallthru
      _
    // Predicated region
    $region90: #{speller_forward.1} parent=1 // pred_check
      _
    $region91: #{speller_forward.1} parent=1 // pred_check_branch
      %98 = sbr.rel (0) target = $region93
    $region92: #{speller_forward.1} parent=1 // pred_region
      _
    $region93: #{speller_forward.1} parent=1 // pred_fallthru
      _
    // Predicated region
    $region94: #{speller_forward.1} parent=1 // pred_check
      _
    $region95: #{speller_forward.1} parent=1 // pred_check_branch
      %100 = sbr.rel (0) target = $region97
    $region96: #{speller_forward.1} parent=1 // pred_region
      _
    $region97: #{speller_forward.1} parent=1 // pred_fallthru
      _
    // Predicated region
    $region98: #{speller_forward.1} parent=1 // pred_check
      _
    $region99: #{speller_forward.1} parent=1 // pred_check_branch
      %102 = sbr.rel (0) target = $region101
    $region100: #{speller_forward.1} parent=1 // pred_region
      %103 = dma.done [#allocation3], 32768
    $region101: #{speller_forward.1} parent=1 // pred_fallthru
      _
    // Predicated region
    $region102: #{speller_forward.1} parent=1 // pred_check
      _
    $region103: #{speller_forward.1} parent=1 // pred_check_branch
      %105 = sbr.rel (0) target = $region105
    $region104: #{speller_forward.1} parent=1 // pred_region
      %106 = dma.done [#allocation5], 4096
    $region105: #{speller_forward.1} parent=1 // pred_fallthru
      _
    %v107 = vlaneseq
    %v108 = vand.u32 %v107, 127
    %vm109 = vcmp.lt.s32.totalorder %v108, 33
    %v110 = vld [vmem:[%s21] sm:$0x3]
    %v112 = vlaneseq
    %v113 = vshrl.u32 %v112, 7
    %v114 = vsub.s32 0, %v113
    %v115 = vrot.slane %v110, %v114
    %v116 = vlaneseq
    %v117 = vshrl.u32 %v116, 7
    %v118 = vsub.s32 1, %v117
    %v119 = vrot.slane %v110, %v118
    %v122 = vld [vmem:[%s22] sm:$0x3]
    %v124 = vlaneseq
    %v125 = vshrl.u32 %v124, 7
    %v126 = vsub.s32 0, %v125
    %v127 = vrot.slane %v122, %v126
    %v128 = vlaneseq
    %v129 = vshrl.u32 %v128, 7
    %v130 = vsub.s32 1, %v129
    %v131 = vrot.slane %v122, %v130
    %s134 = scalar_lea.vmem %s21, 2
    %v135 = vld [vmem:[%s134] sm:$0x3]
    %v137 = vlaneseq
    %v138 = vshrl.u32 %v137, 7
    %v139 = vsub.s32 0, %v138
    %v140 = vrot.slane %v135, %v139
    %v141 = vlaneseq
    %v142 = vshrl.u32 %v141, 7
    %v143 = vsub.s32 1, %v142
    %v144 = vrot.slane %v135, %v143
    %s147 = scalar_lea.vmem %s22, 2
    %v148 = vld [vmem:[%s147] sm:$0x3]
    %v150 = vlaneseq
    %v151 = vshrl.u32 %v150, 7
    %v152 = vsub.s32 0, %v151
    %v153 = vrot.slane %v148, %v152
    %v154 = vlaneseq
    %v155 = vshrl.u32 %v154, 7
    %v156 = vsub.s32 1, %v155
    %v157 = vrot.slane %v148, %v156
    %s160 = scalar_lea.vmem %s21, 4
    %v161 = vld [vmem:[%s160] sm:$0x3]
    %v163 = vlaneseq
    %v164 = vshrl.u32 %v163, 7
    %v165 = vsub.s32 0, %v164
    %v166 = vrot.slane %v161, %v165
    %v167 = vlaneseq
    %v168 = vshrl.u32 %v167, 7
    %v169 = vsub.s32 1, %v168
    %v170 = vrot.slane %v161, %v169
    %s173 = scalar_lea.vmem %s22, 4
    %v174 = vld [vmem:[%s173] sm:$0x3]
    %v176 = vlaneseq
    %v177 = vshrl.u32 %v176, 7
    %v178 = vsub.s32 0, %v177
    %v179 = vrot.slane %v174, %v178
    %v180 = vlaneseq
    %v181 = vshrl.u32 %v180, 7
    %v182 = vsub.s32 1, %v181
    %v183 = vrot.slane %v174, %v182
    %v186 = vld [vmem:[%s23] sm:$0x1]
    %v188 = vlaneseq
    %v189 = vshrl.u32 %v188, 7
    %v190 = vsub.s32 0, %v189
    %v191 = vrot.slane %v186, %v190
    %vm193 = vcmp.eq.s32.totalorder %v108, 0
    %v194 = vsel %vm193, 1, 0
    %v195 = vcvt.s32.f32 %v194
    loop: start=0, step=1, limit=8
    $region106: #{speller_forward.1} parent=1 // loop_pre_header
      _
    $region107: #{speller_forward.1} parent=1 // loop_header
      %s197 = sphi 0, %s201
      %p198 = scmp.ge.s32.totalorder %s197, 8
      %v202 = vphi %v115, %v1915
      %v203 = vphi %v119, %v1916
      %v204 = vphi %v127, %v1911
      %v205 = vphi %v131, %v1912
      %v206 = vphi %v140, %v3093
      %v207 = vphi %v144, %v3094
      %v208 = vphi %v153, %v3089
      %v209 = vphi %v157, %v3090
      %v210 = vphi %v166, %v4271
      %v211 = vphi %v170, %v4272
      %v212 = vphi %v179, %v4267
      %v213 = vphi %v183, %v4268
      %v214 = vphi %v191, %v6131
      %v215 = vphi %v195, %v6449
    $region108: #{speller_forward.1} parent=1 // loop_header_branch
      %200 = sbr.rel (%p198) target = $region112
    $region109: #{speller_forward.1} parent=1 // loop_body
      %v216 = vld [vmem:[%s0] sm:$0xff]
      %v217 = vld [vmem:[%s0 + $0x8] sm:$0xff]
      %v218 = vld [vmem:[%s0 + $0x10] sm:$0xff]
      %v219 = vld [vmem:[%s0 + $0x18] sm:$0xff]
      %v220 = vld [vmem:[%s0 + $0x20] sm:$0xff]
      %v221 = vld [vmem:[%s0 + $0x28] sm:$0xff]
      %v222 = vld [vmem:[%s0 + $0x30] sm:$0xff]
      %v223 = vld [vmem:[%s0 + $0x38] sm:$0xff]
      %v224 = vld [vmem:[%s0 + $0x40] sm:$0xff]
      %v225 = vld [vmem:[%s0 + $0x48] sm:$0xff]
      %v226 = vld [vmem:[%s0 + $0x50] sm:$0xff]
      %v227 = vld [vmem:[%s0 + $0x58] sm:$0xff]
      %v228 = vld [vmem:[%s0 + $0x60] sm:$0xff]
      %v229 = vld [vmem:[%s0 + $0x68] sm:$0xff]
      %v230 = vld [vmem:[%s0 + $0x70] sm:$0xff]
      %v231 = vld [vmem:[%s0 + $0x78] sm:$0xff]
      %v232 = vld [vmem:[%s0 + $0x80] sm:$0xff]
      %v233 = vld [vmem:[%s0 + $0x88] sm:$0xff]
      %v234 = vld [vmem:[%s0 + $0x90] sm:$0xff]
      %v235 = vld [vmem:[%s0 + $0x98] sm:$0xff]
      %v236 = vld [vmem:[%s0 + $0xa0] sm:$0xff]
      %v237 = vld [vmem:[%s0 + $0xa8] sm:$0xff]
      %v238 = vld [vmem:[%s0 + $0xb0] sm:$0xff]
      %v239 = vld [vmem:[%s0 + $0xb8] sm:$0xff]
      %v240 = vld [vmem:[%s0 + $0xc0] sm:$0xff]
      %v241 = vld [vmem:[%s0 + $0xc8] sm:$0xff]
      %v242 = vld [vmem:[%s0 + $0xd0] sm:$0xff]
      %v243 = vld [vmem:[%s0 + $0xd8] sm:$0xff]
      %v244 = vld [vmem:[%s0 + $0xe0] sm:$0xff]
      %v245 = vld [vmem:[%s0 + $0xe8] sm:$0xff]
      %v246 = vld [vmem:[%s0 + $0xf0] sm:$0xff]
      %v247 = vld [vmem:[%s0 + $0xf8] sm:$0xff]
      %248 = vmatprep.subr.mxu0 %v247
      %249 = vmatpush1.msra.mxu0 %v246
      %250 = vmatprep.subr.mxu0 %v245
      %251 = vmatpush1.msra.mxu0 %v244
      %252 = vmatprep.subr.mxu0 %v243
      %253 = vmatpush1.msra.mxu0 %v242
      %254 = vmatprep.subr.mxu0 %v241
      %255 = vmatpush1.msra.mxu0 %v240
      %256 = vmatprep.subr.mxu0 %v239
      %257 = vmatpush1.msra.mxu0 %v238
      %258 = vmatprep.subr.mxu0 %v237
      %259 = vmatpush1.msra.mxu0 %v236
      %260 = vmatprep.subr.mxu0 %v235
      %261 = vmatpush1.msra.mxu0 %v234
      %262 = vmatprep.subr.mxu0 %v233
      %263 = vmatpush1.msra.mxu0 %v232
      %264 = vmatprep.subr.mxu0 %v231
      %265 = vmatpush1.msra.mxu0 %v230
      %266 = vmatprep.subr.mxu0 %v229
      %267 = vmatpush1.msra.mxu0 %v228
      %268 = vmatprep.subr.mxu0 %v227
      %269 = vmatpush1.msra.mxu0 %v226
      %270 = vmatprep.subr.mxu0 %v225
      %271 = vmatpush1.msra.mxu0 %v224
      %272 = vmatprep.subr.mxu0 %v223
      %273 = vmatpush1.msra.mxu0 %v222
      %274 = vmatprep.subr.mxu0 %v221
      %275 = vmatpush1.msra.mxu0 %v220
      %276 = vmatprep.subr.mxu0 %v219
      %277 = vmatpush1.msra.mxu0 %v218
      %278 = vmatprep.subr.mxu0 %v217
      %279 = vmatpush1.msra.mxu0 %v216
      %280 = vmatprep.subr.mxu0 0.0
      %281 = vmatpush2.msra.mxu0 0.0
      %282 = vmatprep.subr.mxu0 0.0
      %283 = vmatpush2.msra.mxu0 0.0
      %284 = vmatprep.subr.mxu0 0.0
      %285 = vmatpush2.msra.mxu0 0.0
      %286 = vmatprep.subr.mxu0 0.0
      %287 = vmatpush2.msra.mxu0 0.0
      %288 = vmatprep.subr.mxu0 0.0
      %289 = vmatpush2.msra.mxu0 0.0
      %290 = vmatprep.subr.mxu0 0.0
      %291 = vmatpush2.msra.mxu0 0.0
      %292 = vmatprep.subr.mxu0 0.0
      %293 = vmatpush2.msra.mxu0 0.0
      %294 = vmatprep.subr.mxu0 0.0
      %295 = vmatpush2.msra.mxu0 0.0
      %296 = vmatprep.subr.mxu0 0.0
      %297 = vmatpush2.msra.mxu0 0.0
      %298 = vmatprep.subr.mxu0 0.0
      %299 = vmatpush2.msra.mxu0 0.0
      %300 = vmatprep.subr.mxu0 0.0
      %301 = vmatpush2.msra.mxu0 0.0
      %302 = vmatprep.subr.mxu0 0.0
      %303 = vmatpush2.msra.mxu0 0.0
      %304 = vmatprep.subr.mxu0 0.0
      %305 = vmatpush2.msra.mxu0 0.0
      %306 = vmatprep.subr.mxu0 0.0
      %307 = vmatpush2.msra.mxu0 0.0
      %308 = vmatprep.subr.mxu0 0.0
      %309 = vmatpush2.msra.mxu0 0.0
      %310 = vmatprep.subr.mxu0 0.0
      %311 = vmatpush2.msra.mxu0 0.0
      %312 = vmatprep.mubr.f32.mxu0 0.0
      %313 = vmatmul.mubr.f32.gmra.mxu0 %v215
      %v314 = vpop.f32.mrf.mxu0
      %v315 = vadd.f32 0.0, %v314
      %v316 = vpop.f32.mrf.mxu0
      %v317 = vadd.f32 0.0, %v316
      %318 = vdwg.mxu0
      %v319 = vld [vmem:[%s1] sm:$0xff]
      %v320 = vld [vmem:[%s1 + $0x8] sm:$0xff]
      %v321 = vld [vmem:[%s1 + $0x10] sm:$0xff]
      %v322 = vld [vmem:[%s1 + $0x18] sm:$0xff]
      %v323 = vld [vmem:[%s1 + $0x20] sm:$0xff]
      %v324 = vld [vmem:[%s1 + $0x28] sm:$0xff]
      %v325 = vld [vmem:[%s1 + $0x30] sm:$0xff]
      %v326 = vld [vmem:[%s1 + $0x38] sm:$0xff]
      %v327 = vld [vmem:[%s1 + $0x40] sm:$0xff]
      %v328 = vld [vmem:[%s1 + $0x48] sm:$0xff]
      %v329 = vld [vmem:[%s1 + $0x50] sm:$0xff]
      %v330 = vld [vmem:[%s1 + $0x58] sm:$0xff]
      %v331 = vld [vmem:[%s1 + $0x60] sm:$0xff]
      %v332 = vld [vmem:[%s1 + $0x68] sm:$0xff]
      %v333 = vld [vmem:[%s1 + $0x70] sm:$0xff]
      %v334 = vld [vmem:[%s1 + $0x78] sm:$0xff]
      %v335 = vld [vmem:[%s1 + $0x80] sm:$0xff]
      %v336 = vld [vmem:[%s1 + $0x88] sm:$0xff]
      %v337 = vld [vmem:[%s1 + $0x90] sm:$0xff]
      %v338 = vld [vmem:[%s1 + $0x98] sm:$0xff]
      %v339 = vld [vmem:[%s1 + $0xa0] sm:$0xff]
      %v340 = vld [vmem:[%s1 + $0xa8] sm:$0xff]
      %v341 = vld [vmem:[%s1 + $0xb0] sm:$0xff]
      %v342 = vld [vmem:[%s1 + $0xb8] sm:$0xff]
      %v343 = vld [vmem:[%s1 + $0xc0] sm:$0xff]
      %v344 = vld [vmem:[%s1 + $0xc8] sm:$0xff]
      %v345 = vld [vmem:[%s1 + $0xd0] sm:$0xff]
      %v346 = vld [vmem:[%s1 + $0xd8] sm:$0xff]
      %v347 = vld [vmem:[%s1 + $0xe0] sm:$0xff]
      %v348 = vld [vmem:[%s1 + $0xe8] sm:$0xff]
      %v349 = vld [vmem:[%s1 + $0xf0] sm:$0xff]
      %v350 = vld [vmem:[%s1 + $0xf8] sm:$0xff]
      %v351 = vld [vmem:[%s1 + $0x100] sm:$0xff]
      %v352 = vld [vmem:[%s1 + $0x108] sm:$0xff]
      %v353 = vld [vmem:[%s1 + $0x110] sm:$0xff]
      %v354 = vld [vmem:[%s1 + $0x118] sm:$0xff]
      %v355 = vld [vmem:[%s1 + $0x120] sm:$0xff]
      %v356 = vld [vmem:[%s1 + $0x128] sm:$0xff]
      %v357 = vld [vmem:[%s1 + $0x130] sm:$0xff]
      %v358 = vld [vmem:[%s1 + $0x138] sm:$0xff]
      %v359 = vld [vmem:[%s1 + $0x140] sm:$0xff]
      %v360 = vld [vmem:[%s1 + $0x148] sm:$0xff]
      %v361 = vld [vmem:[%s1 + $0x150] sm:$0xff]
      %v362 = vld [vmem:[%s1 + $0x158] sm:$0xff]
      %v363 = vld [vmem:[%s1 + $0x160] sm:$0xff]
      %v364 = vld [vmem:[%s1 + $0x168] sm:$0xff]
      %v365 = vld [vmem:[%s1 + $0x170] sm:$0xff]
      %v366 = vld [vmem:[%s1 + $0x178] sm:$0xff]
      %v367 = vld [vmem:[%s1 + $0x180] sm:$0xff]
      %v368 = vld [vmem:[%s1 + $0x188] sm:$0xff]
      %v369 = vld [vmem:[%s1 + $0x190] sm:$0xff]
      %v370 = vld [vmem:[%s1 + $0x198] sm:$0xff]
      %v371 = vld [vmem:[%s1 + $0x1a0] sm:$0xff]
      %v372 = vld [vmem:[%s1 + $0x1a8] sm:$0xff]
      %v373 = vld [vmem:[%s1 + $0x1b0] sm:$0xff]
      %v374 = vld [vmem:[%s1 + $0x1b8] sm:$0xff]
      %v375 = vld [vmem:[%s1 + $0x1c0] sm:$0xff]
      %v376 = vld [vmem:[%s1 + $0x1c8] sm:$0xff]
      %v377 = vld [vmem:[%s1 + $0x1d0] sm:$0xff]
      %v378 = vld [vmem:[%s1 + $0x1d8] sm:$0xff]
      %v379 = vld [vmem:[%s1 + $0x1e0] sm:$0xff]
      %v380 = vld [vmem:[%s1 + $0x1e8] sm:$0xff]
      %v381 = vld [vmem:[%s1 + $0x1f0] sm:$0xff]
      %v382 = vld [vmem:[%s1 + $0x1f8] sm:$0xff]
      %v383 = vld [vmem:[%s1 + $0x200] sm:$0xff]
      %v384 = vld [vmem:[%s1 + $0x208] sm:$0xff]
      %v385 = vld [vmem:[%s1 + $0x210] sm:$0xff]
      %v386 = vld [vmem:[%s1 + $0x218] sm:$0xff]
      %v387 = vld [vmem:[%s1 + $0x220] sm:$0xff]
      %v388 = vld [vmem:[%s1 + $0x228] sm:$0xff]
      %v389 = vld [vmem:[%s1 + $0x230] sm:$0xff]
      %v390 = vld [vmem:[%s1 + $0x238] sm:$0xff]
      %v391 = vld [vmem:[%s1 + $0x240] sm:$0xff]
      %v392 = vld [vmem:[%s1 + $0x248] sm:$0xff]
      %v393 = vld [vmem:[%s1 + $0x250] sm:$0xff]
      %v394 = vld [vmem:[%s1 + $0x258] sm:$0xff]
      %v395 = vld [vmem:[%s1 + $0x260] sm:$0xff]
      %v396 = vld [vmem:[%s1 + $0x268] sm:$0xff]
      %v397 = vld [vmem:[%s1 + $0x270] sm:$0xff]
      %v398 = vld [vmem:[%s1 + $0x278] sm:$0xff]
      %v399 = vld [vmem:[%s1 + $0x280] sm:$0xff]
      %v400 = vld [vmem:[%s1 + $0x288] sm:$0xff]
      %v401 = vld [vmem:[%s1 + $0x290] sm:$0xff]
      %v402 = vld [vmem:[%s1 + $0x298] sm:$0xff]
      %v403 = vld [vmem:[%s1 + $0x2a0] sm:$0xff]
      %v404 = vld [vmem:[%s1 + $0x2a8] sm:$0xff]
      %v405 = vld [vmem:[%s1 + $0x2b0] sm:$0xff]
      %v406 = vld [vmem:[%s1 + $0x2b8] sm:$0xff]
      %v407 = vld [vmem:[%s1 + $0x2c0] sm:$0xff]
      %v408 = vld [vmem:[%s1 + $0x2c8] sm:$0xff]
      %v409 = vld [vmem:[%s1 + $0x2d0] sm:$0xff]
      %v410 = vld [vmem:[%s1 + $0x2d8] sm:$0xff]
      %v411 = vld [vmem:[%s1 + $0x2e0] sm:$0xff]
      %v412 = vld [vmem:[%s1 + $0x2e8] sm:$0xff]
      %v413 = vld [vmem:[%s1 + $0x2f0] sm:$0xff]
      %v414 = vld [vmem:[%s1 + $0x2f8] sm:$0xff]
      %v415 = vld [vmem:[%s1 + $0x300] sm:$0xff]
      %v416 = vld [vmem:[%s1 + $0x308] sm:$0xff]
      %v417 = vld [vmem:[%s1 + $0x310] sm:$0xff]
      %v418 = vld [vmem:[%s1 + $0x318] sm:$0xff]
      %v419 = vld [vmem:[%s1 + $0x320] sm:$0xff]
      %v420 = vld [vmem:[%s1 + $0x328] sm:$0xff]
      %v421 = vld [vmem:[%s1 + $0x330] sm:$0xff]
      %v422 = vld [vmem:[%s1 + $0x338] sm:$0xff]
      %v423 = vld [vmem:[%s1 + $0x340] sm:$0xff]
      %v424 = vld [vmem:[%s1 + $0x348] sm:$0xff]
      %v425 = vld [vmem:[%s1 + $0x350] sm:$0xff]
      %v426 = vld [vmem:[%s1 + $0x358] sm:$0xff]
      %v427 = vld [vmem:[%s1 + $0x360] sm:$0xff]
      %v428 = vld [vmem:[%s1 + $0x368] sm:$0xff]
      %v429 = vld [vmem:[%s1 + $0x370] sm:$0xff]
      %v430 = vld [vmem:[%s1 + $0x378] sm:$0xff]
      %v431 = vld [vmem:[%s1 + $0x380] sm:$0xff]
      %v432 = vld [vmem:[%s1 + $0x388] sm:$0xff]
      %v433 = vld [vmem:[%s1 + $0x390] sm:$0xff]
      %v434 = vld [vmem:[%s1 + $0x398] sm:$0xff]
      %v435 = vld [vmem:[%s1 + $0x3a0] sm:$0xff]
      %v436 = vld [vmem:[%s1 + $0x3a8] sm:$0xff]
      %v437 = vld [vmem:[%s1 + $0x3b0] sm:$0xff]
      %v438 = vld [vmem:[%s1 + $0x3b8] sm:$0xff]
      %v439 = vld [vmem:[%s1 + $0x3c0] sm:$0xff]
      %v440 = vld [vmem:[%s1 + $0x3c8] sm:$0xff]
      %v441 = vld [vmem:[%s1 + $0x3d0] sm:$0xff]
      %v442 = vld [vmem:[%s1 + $0x3d8] sm:$0xff]
      %v443 = vld [vmem:[%s1 + $0x3e0] sm:$0xff]
      %v444 = vld [vmem:[%s1 + $0x3e8] sm:$0xff]
      %v445 = vld [vmem:[%s1 + $0x3f0] sm:$0xff]
      %v446 = vld [vmem:[%s1 + $0x3f8] sm:$0xff]
      %v447 = vld [vmem:[%s1 + $0x400] sm:$0xff]
      %v448 = vld [vmem:[%s1 + $0x408] sm:$0xff]
      %v449 = vld [vmem:[%s1 + $0x410] sm:$0xff]
      %v450 = vld [vmem:[%s1 + $0x418] sm:$0xff]
      %v451 = vld [vmem:[%s1 + $0x420] sm:$0xff]
      %v452 = vld [vmem:[%s1 + $0x428] sm:$0xff]
      %v453 = vld [vmem:[%s1 + $0x430] sm:$0xff]
      %v454 = vld [vmem:[%s1 + $0x438] sm:$0xff]
      %v455 = vld [vmem:[%s1 + $0x440] sm:$0xff]
      %v456 = vld [vmem:[%s1 + $0x448] sm:$0xff]
      %v457 = vld [vmem:[%s1 + $0x450] sm:$0xff]
      %v458 = vld [vmem:[%s1 + $0x458] sm:$0xff]
      %v459 = vld [vmem:[%s1 + $0x460] sm:$0xff]
      %v460 = vld [vmem:[%s1 + $0x468] sm:$0xff]
      %v461 = vld [vmem:[%s1 + $0x470] sm:$0xff]
      %v462 = vld [vmem:[%s1 + $0x478] sm:$0xff]
      %v463 = vld [vmem:[%s1 + $0x480] sm:$0xff]
      %v464 = vld [vmem:[%s1 + $0x488] sm:$0xff]
      %v465 = vld [vmem:[%s1 + $0x490] sm:$0xff]
      %v466 = vld [vmem:[%s1 + $0x498] sm:$0xff]
      %v467 = vld [vmem:[%s1 + $0x4a0] sm:$0xff]
      %v468 = vld [vmem:[%s1 + $0x4a8] sm:$0xff]
      %v469 = vld [vmem:[%s1 + $0x4b0] sm:$0xff]
      %v470 = vld [vmem:[%s1 + $0x4b8] sm:$0xff]
      %v471 = vld [vmem:[%s1 + $0x4c0] sm:$0xff]
      %v472 = vld [vmem:[%s1 + $0x4c8] sm:$0xff]
      %v473 = vld [vmem:[%s1 + $0x4d0] sm:$0xff]
      %v474 = vld [vmem:[%s1 + $0x4d8] sm:$0xff]
      %v475 = vld [vmem:[%s1 + $0x4e0] sm:$0xff]
      %v476 = vld [vmem:[%s1 + $0x4e8] sm:$0xff]
      %v477 = vld [vmem:[%s1 + $0x4f0] sm:$0xff]
      %v478 = vld [vmem:[%s1 + $0x4f8] sm:$0xff]
      %v479 = vld [vmem:[%s1 + $0x500] sm:$0xff]
      %v480 = vld [vmem:[%s1 + $0x508] sm:$0xff]
      %v481 = vld [vmem:[%s1 + $0x510] sm:$0xff]
      %v482 = vld [vmem:[%s1 + $0x518] sm:$0xff]
      %v483 = vld [vmem:[%s1 + $0x520] sm:$0xff]
      %v484 = vld [vmem:[%s1 + $0x528] sm:$0xff]
      %v485 = vld [vmem:[%s1 + $0x530] sm:$0xff]
      %v486 = vld [vmem:[%s1 + $0x538] sm:$0xff]
      %v487 = vld [vmem:[%s1 + $0x540] sm:$0xff]
      %v488 = vld [vmem:[%s1 + $0x548] sm:$0xff]
      %v489 = vld [vmem:[%s1 + $0x550] sm:$0xff]
      %v490 = vld [vmem:[%s1 + $0x558] sm:$0xff]
      %v491 = vld [vmem:[%s1 + $0x560] sm:$0xff]
      %v492 = vld [vmem:[%s1 + $0x568] sm:$0xff]
      %v493 = vld [vmem:[%s1 + $0x570] sm:$0xff]
      %v494 = vld [vmem:[%s1 + $0x578] sm:$0xff]
      %v495 = vld [vmem:[%s1 + $0x580] sm:$0xff]
      %v496 = vld [vmem:[%s1 + $0x588] sm:$0xff]
      %v497 = vld [vmem:[%s1 + $0x590] sm:$0xff]
      %v498 = vld [vmem:[%s1 + $0x598] sm:$0xff]
      %v499 = vld [vmem:[%s1 + $0x5a0] sm:$0xff]
      %v500 = vld [vmem:[%s1 + $0x5a8] sm:$0xff]
      %v501 = vld [vmem:[%s1 + $0x5b0] sm:$0xff]
      %v502 = vld [vmem:[%s1 + $0x5b8] sm:$0xff]
      %v503 = vld [vmem:[%s1 + $0x5c0] sm:$0xff]
      %v504 = vld [vmem:[%s1 + $0x5c8] sm:$0xff]
      %v505 = vld [vmem:[%s1 + $0x5d0] sm:$0xff]
      %v506 = vld [vmem:[%s1 + $0x5d8] sm:$0xff]
      %v507 = vld [vmem:[%s1 + $0x5e0] sm:$0xff]
      %v508 = vld [vmem:[%s1 + $0x5e8] sm:$0xff]
      %v509 = vld [vmem:[%s1 + $0x5f0] sm:$0xff]
      %v510 = vld [vmem:[%s1 + $0x5f8] sm:$0xff]
      %v511 = vld [vmem:[%s1 + $0x600] sm:$0xff]
      %v512 = vld [vmem:[%s1 + $0x608] sm:$0xff]
      %v513 = vld [vmem:[%s1 + $0x610] sm:$0xff]
      %v514 = vld [vmem:[%s1 + $0x618] sm:$0xff]
      %v515 = vld [vmem:[%s1 + $0x620] sm:$0xff]
      %v516 = vld [vmem:[%s1 + $0x628] sm:$0xff]
      %v517 = vld [vmem:[%s1 + $0x630] sm:$0xff]
      %v518 = vld [vmem:[%s1 + $0x638] sm:$0xff]
      %v519 = vld [vmem:[%s1 + $0x640] sm:$0xff]
      %v520 = vld [vmem:[%s1 + $0x648] sm:$0xff]
      %v521 = vld [vmem:[%s1 + $0x650] sm:$0xff]
      %v522 = vld [vmem:[%s1 + $0x658] sm:$0xff]
      %v523 = vld [vmem:[%s1 + $0x660] sm:$0xff]
      %v524 = vld [vmem:[%s1 + $0x668] sm:$0xff]
      %v525 = vld [vmem:[%s1 + $0x670] sm:$0xff]
      %v526 = vld [vmem:[%s1 + $0x678] sm:$0xff]
      %v527 = vld [vmem:[%s1 + $0x680] sm:$0xff]
      %v528 = vld [vmem:[%s1 + $0x688] sm:$0xff]
      %v529 = vld [vmem:[%s1 + $0x690] sm:$0xff]
      %v530 = vld [vmem:[%s1 + $0x698] sm:$0xff]
      %v531 = vld [vmem:[%s1 + $0x6a0] sm:$0xff]
      %v532 = vld [vmem:[%s1 + $0x6a8] sm:$0xff]
      %v533 = vld [vmem:[%s1 + $0x6b0] sm:$0xff]
      %v534 = vld [vmem:[%s1 + $0x6b8] sm:$0xff]
      %v535 = vld [vmem:[%s1 + $0x6c0] sm:$0xff]
      %v536 = vld [vmem:[%s1 + $0x6c8] sm:$0xff]
      %v537 = vld [vmem:[%s1 + $0x6d0] sm:$0xff]
      %v538 = vld [vmem:[%s1 + $0x6d8] sm:$0xff]
      %v539 = vld [vmem:[%s1 + $0x6e0] sm:$0xff]
      %v540 = vld [vmem:[%s1 + $0x6e8] sm:$0xff]
      %v541 = vld [vmem:[%s1 + $0x6f0] sm:$0xff]
      %v542 = vld [vmem:[%s1 + $0x6f8] sm:$0xff]
      %v543 = vld [vmem:[%s1 + $0x700] sm:$0xff]
      %v544 = vld [vmem:[%s1 + $0x708] sm:$0xff]
      %v545 = vld [vmem:[%s1 + $0x710] sm:$0xff]
      %v546 = vld [vmem:[%s1 + $0x718] sm:$0xff]
      %v547 = vld [vmem:[%s1 + $0x720] sm:$0xff]
      %v548 = vld [vmem:[%s1 + $0x728] sm:$0xff]
      %v549 = vld [vmem:[%s1 + $0x730] sm:$0xff]
      %v550 = vld [vmem:[%s1 + $0x738] sm:$0xff]
      %v551 = vld [vmem:[%s1 + $0x740] sm:$0xff]
      %v552 = vld [vmem:[%s1 + $0x748] sm:$0xff]
      %v553 = vld [vmem:[%s1 + $0x750] sm:$0xff]
      %v554 = vld [vmem:[%s1 + $0x758] sm:$0xff]
      %v555 = vld [vmem:[%s1 + $0x760] sm:$0xff]
      %v556 = vld [vmem:[%s1 + $0x768] sm:$0xff]
      %v557 = vld [vmem:[%s1 + $0x770] sm:$0xff]
      %v558 = vld [vmem:[%s1 + $0x778] sm:$0xff]
      %v559 = vld [vmem:[%s1 + $0x780] sm:$0xff]
      %v560 = vld [vmem:[%s1 + $0x788] sm:$0xff]
      %v561 = vld [vmem:[%s1 + $0x790] sm:$0xff]
      %v562 = vld [vmem:[%s1 + $0x798] sm:$0xff]
      %v563 = vld [vmem:[%s1 + $0x7a0] sm:$0xff]
      %v564 = vld [vmem:[%s1 + $0x7a8] sm:$0xff]
      %v565 = vld [vmem:[%s1 + $0x7b0] sm:$0xff]
      %v566 = vld [vmem:[%s1 + $0x7b8] sm:$0xff]
      %v567 = vld [vmem:[%s1 + $0x7c0] sm:$0xff]
      %v568 = vld [vmem:[%s1 + $0x7c8] sm:$0xff]
      %v569 = vld [vmem:[%s1 + $0x7d0] sm:$0xff]
      %v570 = vld [vmem:[%s1 + $0x7d8] sm:$0xff]
      %v571 = vld [vmem:[%s1 + $0x7e0] sm:$0xff]
      %v572 = vld [vmem:[%s1 + $0x7e8] sm:$0xff]
      %v573 = vld [vmem:[%s1 + $0x7f0] sm:$0xff]
      %v574 = vld [vmem:[%s1 + $0x7f8] sm:$0xff]
      %v575 = vld [vmem:[%s2] sm:$0xff]
      %v576 = vld [vmem:[%s2 + $0x8] sm:$0xff]
      %v577 = vld [vmem:[%s2 + $0x10] sm:$0xff]
      %v578 = vld [vmem:[%s2 + $0x18] sm:$0xff]
      %v579 = vld [vmem:[%s2 + $0x20] sm:$0xff]
      %v580 = vld [vmem:[%s2 + $0x28] sm:$0xff]
      %v581 = vld [vmem:[%s2 + $0x30] sm:$0xff]
      %v582 = vld [vmem:[%s2 + $0x38] sm:$0xff]
      %v583 = vld [vmem:[%s2 + $0x40] sm:$0xff]
      %v584 = vld [vmem:[%s2 + $0x48] sm:$0xff]
      %v585 = vld [vmem:[%s2 + $0x50] sm:$0xff]
      %v586 = vld [vmem:[%s2 + $0x58] sm:$0xff]
      %v587 = vld [vmem:[%s2 + $0x60] sm:$0xff]
      %v588 = vld [vmem:[%s2 + $0x68] sm:$0xff]
      %v589 = vld [vmem:[%s2 + $0x70] sm:$0xff]
      %v590 = vld [vmem:[%s2 + $0x78] sm:$0xff]
      %v591 = vld [vmem:[%s2 + $0x80] sm:$0xff]
      %v592 = vld [vmem:[%s2 + $0x88] sm:$0xff]
      %v593 = vld [vmem:[%s2 + $0x90] sm:$0xff]
      %v594 = vld [vmem:[%s2 + $0x98] sm:$0xff]
      %v595 = vld [vmem:[%s2 + $0xa0] sm:$0xff]
      %v596 = vld [vmem:[%s2 + $0xa8] sm:$0xff]
      %v597 = vld [vmem:[%s2 + $0xb0] sm:$0xff]
      %v598 = vld [vmem:[%s2 + $0xb8] sm:$0xff]
      %v599 = vld [vmem:[%s2 + $0xc0] sm:$0xff]
      %v600 = vld [vmem:[%s2 + $0xc8] sm:$0xff]
      %v601 = vld [vmem:[%s2 + $0xd0] sm:$0xff]
      %v602 = vld [vmem:[%s2 + $0xd8] sm:$0xff]
      %v603 = vld [vmem:[%s2 + $0xe0] sm:$0xff]
      %v604 = vld [vmem:[%s2 + $0xe8] sm:$0xff]
      %v605 = vld [vmem:[%s2 + $0xf0] sm:$0xff]
      %v606 = vld [vmem:[%s2 + $0xf8] sm:$0xff]
      %v607 = vld [vmem:[%s2 + $0x100] sm:$0xff]
      %v608 = vld [vmem:[%s2 + $0x108] sm:$0xff]
      %v609 = vld [vmem:[%s2 + $0x110] sm:$0xff]
      %v610 = vld [vmem:[%s2 + $0x118] sm:$0xff]
      %v611 = vld [vmem:[%s2 + $0x120] sm:$0xff]
      %v612 = vld [vmem:[%s2 + $0x128] sm:$0xff]
      %v613 = vld [vmem:[%s2 + $0x130] sm:$0xff]
      %v614 = vld [vmem:[%s2 + $0x138] sm:$0xff]
      %v615 = vld [vmem:[%s2 + $0x140] sm:$0xff]
      %v616 = vld [vmem:[%s2 + $0x148] sm:$0xff]
      %v617 = vld [vmem:[%s2 + $0x150] sm:$0xff]
      %v618 = vld [vmem:[%s2 + $0x158] sm:$0xff]
      %v619 = vld [vmem:[%s2 + $0x160] sm:$0xff]
      %v620 = vld [vmem:[%s2 + $0x168] sm:$0xff]
      %v621 = vld [vmem:[%s2 + $0x170] sm:$0xff]
      %v622 = vld [vmem:[%s2 + $0x178] sm:$0xff]
      %v623 = vld [vmem:[%s2 + $0x180] sm:$0xff]
      %v624 = vld [vmem:[%s2 + $0x188] sm:$0xff]
      %v625 = vld [vmem:[%s2 + $0x190] sm:$0xff]
      %v626 = vld [vmem:[%s2 + $0x198] sm:$0xff]
      %v627 = vld [vmem:[%s2 + $0x1a0] sm:$0xff]
      %v628 = vld [vmem:[%s2 + $0x1a8] sm:$0xff]
      %v629 = vld [vmem:[%s2 + $0x1b0] sm:$0xff]
      %v630 = vld [vmem:[%s2 + $0x1b8] sm:$0xff]
      %v631 = vld [vmem:[%s2 + $0x1c0] sm:$0xff]
      %v632 = vld [vmem:[%s2 + $0x1c8] sm:$0xff]
      %v633 = vld [vmem:[%s2 + $0x1d0] sm:$0xff]
      %v634 = vld [vmem:[%s2 + $0x1d8] sm:$0xff]
      %v635 = vld [vmem:[%s2 + $0x1e0] sm:$0xff]
      %v636 = vld [vmem:[%s2 + $0x1e8] sm:$0xff]
      %v637 = vld [vmem:[%s2 + $0x1f0] sm:$0xff]
      %v638 = vld [vmem:[%s2 + $0x1f8] sm:$0xff]
      %v639 = vld [vmem:[%s2 + $0x200] sm:$0xff]
      %v640 = vld [vmem:[%s2 + $0x208] sm:$0xff]
      %v641 = vld [vmem:[%s2 + $0x210] sm:$0xff]
      %v642 = vld [vmem:[%s2 + $0x218] sm:$0xff]
      %v643 = vld [vmem:[%s2 + $0x220] sm:$0xff]
      %v644 = vld [vmem:[%s2 + $0x228] sm:$0xff]
      %v645 = vld [vmem:[%s2 + $0x230] sm:$0xff]
      %v646 = vld [vmem:[%s2 + $0x238] sm:$0xff]
      %v647 = vld [vmem:[%s2 + $0x240] sm:$0xff]
      %v648 = vld [vmem:[%s2 + $0x248] sm:$0xff]
      %v649 = vld [vmem:[%s2 + $0x250] sm:$0xff]
      %v650 = vld [vmem:[%s2 + $0x258] sm:$0xff]
      %v651 = vld [vmem:[%s2 + $0x260] sm:$0xff]
      %v652 = vld [vmem:[%s2 + $0x268] sm:$0xff]
      %v653 = vld [vmem:[%s2 + $0x270] sm:$0xff]
      %v654 = vld [vmem:[%s2 + $0x278] sm:$0xff]
      %v655 = vld [vmem:[%s2 + $0x280] sm:$0xff]
      %v656 = vld [vmem:[%s2 + $0x288] sm:$0xff]
      %v657 = vld [vmem:[%s2 + $0x290] sm:$0xff]
      %v658 = vld [vmem:[%s2 + $0x298] sm:$0xff]
      %v659 = vld [vmem:[%s2 + $0x2a0] sm:$0xff]
      %v660 = vld [vmem:[%s2 + $0x2a8] sm:$0xff]
      %v661 = vld [vmem:[%s2 + $0x2b0] sm:$0xff]
      %v662 = vld [vmem:[%s2 + $0x2b8] sm:$0xff]
      %v663 = vld [vmem:[%s2 + $0x2c0] sm:$0xff]
      %v664 = vld [vmem:[%s2 + $0x2c8] sm:$0xff]
      %v665 = vld [vmem:[%s2 + $0x2d0] sm:$0xff]
      %v666 = vld [vmem:[%s2 + $0x2d8] sm:$0xff]
      %v667 = vld [vmem:[%s2 + $0x2e0] sm:$0xff]
      %v668 = vld [vmem:[%s2 + $0x2e8] sm:$0xff]
      %v669 = vld [vmem:[%s2 + $0x2f0] sm:$0xff]
      %v670 = vld [vmem:[%s2 + $0x2f8] sm:$0xff]
      %v671 = vld [vmem:[%s2 + $0x300] sm:$0xff]
      %v672 = vld [vmem:[%s2 + $0x308] sm:$0xff]
      %v673 = vld [vmem:[%s2 + $0x310] sm:$0xff]
      %v674 = vld [vmem:[%s2 + $0x318] sm:$0xff]
      %v675 = vld [vmem:[%s2 + $0x320] sm:$0xff]
      %v676 = vld [vmem:[%s2 + $0x328] sm:$0xff]
      %v677 = vld [vmem:[%s2 + $0x330] sm:$0xff]
      %v678 = vld [vmem:[%s2 + $0x338] sm:$0xff]
      %v679 = vld [vmem:[%s2 + $0x340] sm:$0xff]
      %v680 = vld [vmem:[%s2 + $0x348] sm:$0xff]
      %v681 = vld [vmem:[%s2 + $0x350] sm:$0xff]
      %v682 = vld [vmem:[%s2 + $0x358] sm:$0xff]
      %v683 = vld [vmem:[%s2 + $0x360] sm:$0xff]
      %v684 = vld [vmem:[%s2 + $0x368] sm:$0xff]
      %v685 = vld [vmem:[%s2 + $0x370] sm:$0xff]
      %v686 = vld [vmem:[%s2 + $0x378] sm:$0xff]
      %v687 = vld [vmem:[%s2 + $0x380] sm:$0xff]
      %v688 = vld [vmem:[%s2 + $0x388] sm:$0xff]
      %v689 = vld [vmem:[%s2 + $0x390] sm:$0xff]
      %v690 = vld [vmem:[%s2 + $0x398] sm:$0xff]
      %v691 = vld [vmem:[%s2 + $0x3a0] sm:$0xff]
      %v692 = vld [vmem:[%s2 + $0x3a8] sm:$0xff]
      %v693 = vld [vmem:[%s2 + $0x3b0] sm:$0xff]
      %v694 = vld [vmem:[%s2 + $0x3b8] sm:$0xff]
      %v695 = vld [vmem:[%s2 + $0x3c0] sm:$0xff]
      %v696 = vld [vmem:[%s2 + $0x3c8] sm:$0xff]
      %v697 = vld [vmem:[%s2 + $0x3d0] sm:$0xff]
      %v698 = vld [vmem:[%s2 + $0x3d8] sm:$0xff]
      %v699 = vld [vmem:[%s2 + $0x3e0] sm:$0xff]
      %v700 = vld [vmem:[%s2 + $0x3e8] sm:$0xff]
      %v701 = vld [vmem:[%s2 + $0x3f0] sm:$0xff]
      %v702 = vld [vmem:[%s2 + $0x3f8] sm:$0xff]
      %703 = vmatprep.subr.mxu0 %v696
      %704 = vmatpush1.msra.mxu0 %v695
      %705 = vmatprep.subr.mxu0 %v688
      %706 = vmatpush1.msra.mxu0 %v687
      %707 = vmatprep.subr.mxu0 %v680
      %708 = vmatpush1.msra.mxu0 %v679
      %709 = vmatprep.subr.mxu0 %v672
      %710 = vmatpush1.msra.mxu0 %v671
      %711 = vmatprep.subr.mxu0 %v664
      %712 = vmatpush1.msra.mxu0 %v663
      %713 = vmatprep.subr.mxu0 %v656
      %714 = vmatpush1.msra.mxu0 %v655
      %715 = vmatprep.subr.mxu0 %v648
      %716 = vmatpush1.msra.mxu0 %v647
      %717 = vmatprep.subr.mxu0 %v640
      %718 = vmatpush1.msra.mxu0 %v639
      %719 = vmatprep.subr.mxu0 %v632
      %720 = vmatpush1.msra.mxu0 %v631
      %721 = vmatprep.subr.mxu0 %v624
      %722 = vmatpush1.msra.mxu0 %v623
      %723 = vmatprep.subr.mxu0 %v616
      %724 = vmatpush1.msra.mxu0 %v615
      %725 = vmatprep.subr.mxu0 %v608
      %726 = vmatpush1.msra.mxu0 %v607
      %727 = vmatprep.subr.mxu0 %v600
      %728 = vmatpush1.msra.mxu0 %v599
      %729 = vmatprep.subr.mxu0 %v592
      %730 = vmatpush1.msra.mxu0 %v591
      %731 = vmatprep.subr.mxu0 %v584
      %732 = vmatpush1.msra.mxu0 %v583
      %733 = vmatprep.subr.mxu0 %v576
      %734 = vmatpush1.msra.mxu0 %v575
      %735 = vmatprep.subr.mxu0 0.0
      %736 = vmatpush2.msra.mxu0 0.0
      %737 = vmatprep.subr.mxu0 0.0
      %738 = vmatpush2.msra.mxu0 0.0
      %739 = vmatprep.subr.mxu0 0.0
      %740 = vmatpush2.msra.mxu0 0.0
      %741 = vmatprep.subr.mxu0 0.0
      %742 = vmatpush2.msra.mxu0 0.0
      %743 = vmatprep.subr.mxu0 0.0
      %744 = vmatpush2.msra.mxu0 0.0
      %745 = vmatprep.subr.mxu0 0.0
      %746 = vmatpush2.msra.mxu0 0.0
      %747 = vmatprep.subr.mxu0 0.0
      %748 = vmatpush2.msra.mxu0 0.0
      %749 = vmatprep.subr.mxu0 0.0
      %750 = vmatpush2.msra.mxu0 0.0
      %751 = vmatprep.subr.mxu0 0.0
      %752 = vmatpush2.msra.mxu0 0.0
      %753 = vmatprep.subr.mxu0 0.0
      %754 = vmatpush2.msra.mxu0 0.0
      %755 = vmatprep.subr.mxu0 0.0
      %756 = vmatpush2.msra.mxu0 0.0
      %757 = vmatprep.subr.mxu0 0.0
      %758 = vmatpush2.msra.mxu0 0.0
      %759 = vmatprep.subr.mxu0 0.0
      %760 = vmatpush2.msra.mxu0 0.0
      %761 = vmatprep.subr.mxu0 0.0
      %762 = vmatpush2.msra.mxu0 0.0
      %763 = vmatprep.subr.mxu0 0.0
      %764 = vmatpush2.msra.mxu0 0.0
      %765 = vmatprep.subr.mxu0 0.0
      %766 = vmatpush2.msra.mxu0 0.0
      %767 = vmatprep.mubr.f32.mxu0 0.0
      %768 = vmatmul.mubr.f32.gmra.mxu0 %v214
      %v769 = vpop.f32.mrf.mxu0
      %v770 = vadd.f32 0.0, %v769
      %v771 = vpop.f32.mrf.mxu0
      %v772 = vadd.f32 0.0, %v771
      %773 = vdwg.mxu0
      %774 = vmatprep.subr.mxu0 %v698
      %775 = vmatpush1.msra.mxu0 %v697
      %776 = vmatprep.subr.mxu0 %v690
      %777 = vmatpush1.msra.mxu0 %v689
      %778 = vmatprep.subr.mxu0 %v682
      %779 = vmatpush1.msra.mxu0 %v681
      %780 = vmatprep.subr.mxu0 %v674
      %781 = vmatpush1.msra.mxu0 %v673
      %782 = vmatprep.subr.mxu0 %v666
      %783 = vmatpush1.msra.mxu0 %v665
      %784 = vmatprep.subr.mxu0 %v658
      %785 = vmatpush1.msra.mxu0 %v657
      %786 = vmatprep.subr.mxu0 %v650
      %787 = vmatpush1.msra.mxu0 %v649
      %788 = vmatprep.subr.mxu0 %v642
      %789 = vmatpush1.msra.mxu0 %v641
      %790 = vmatprep.subr.mxu0 %v634
      %791 = vmatpush1.msra.mxu0 %v633
      %792 = vmatprep.subr.mxu0 %v626
      %793 = vmatpush1.msra.mxu0 %v625
      %794 = vmatprep.subr.mxu0 %v618
      %795 = vmatpush1.msra.mxu0 %v617
      %796 = vmatprep.subr.mxu0 %v610
      %797 = vmatpush1.msra.mxu0 %v609
      %798 = vmatprep.subr.mxu0 %v602
      %799 = vmatpush1.msra.mxu0 %v601
      %800 = vmatprep.subr.mxu0 %v594
      %801 = vmatpush1.msra.mxu0 %v593
      %802 = vmatprep.subr.mxu0 %v586
      %803 = vmatpush1.msra.mxu0 %v585
      %804 = vmatprep.subr.mxu0 %v578
      %805 = vmatpush1.msra.mxu0 %v577
      %806 = vmatprep.subr.mxu0 0.0
      %807 = vmatpush2.msra.mxu0 0.0
      %808 = vmatprep.subr.mxu0 0.0
      %809 = vmatpush2.msra.mxu0 0.0
      %810 = vmatprep.subr.mxu0 0.0
      %811 = vmatpush2.msra.mxu0 0.0
      %812 = vmatprep.subr.mxu0 0.0
      %813 = vmatpush2.msra.mxu0 0.0
      %814 = vmatprep.subr.mxu0 0.0
      %815 = vmatpush2.msra.mxu0 0.0
      %816 = vmatprep.subr.mxu0 0.0
      %817 = vmatpush2.msra.mxu0 0.0
      %818 = vmatprep.subr.mxu0 0.0
      %819 = vmatpush2.msra.mxu0 0.0
      %820 = vmatprep.subr.mxu0 0.0
      %821 = vmatpush2.msra.mxu0 0.0
      %822 = vmatprep.subr.mxu0 0.0
      %823 = vmatpush2.msra.mxu0 0.0
      %824 = vmatprep.subr.mxu0 0.0
      %825 = vmatpush2.msra.mxu0 0.0
      %826 = vmatprep.subr.mxu0 0.0
      %827 = vmatpush2.msra.mxu0 0.0
      %828 = vmatprep.subr.mxu0 0.0
      %829 = vmatpush2.msra.mxu0 0.0
      %830 = vmatprep.subr.mxu0 0.0
      %831 = vmatpush2.msra.mxu0 0.0
      %832 = vmatprep.subr.mxu0 0.0
      %833 = vmatpush2.msra.mxu0 0.0
      %834 = vmatprep.subr.mxu0 0.0
      %835 = vmatpush2.msra.mxu0 0.0
      %836 = vmatprep.subr.mxu0 0.0
      %837 = vmatpush2.msra.mxu0 0.0
      %838 = vmatprep.mubr.f32.mxu0 0.0
      %839 = vmatmul.mubr.f32.gmra.mxu0 %v214
      %v840 = vpop.f32.mrf.mxu0
      %v841 = vadd.f32 0.0, %v840
      %v842 = vpop.f32.mrf.mxu0
      %v843 = vadd.f32 0.0, %v842
      %844 = vdwg.mxu0
      %845 = vmatprep.subr.mxu0 %v700
      %846 = vmatpush1.msra.mxu0 %v699
      %847 = vmatprep.subr.mxu0 %v692
      %848 = vmatpush1.msra.mxu0 %v691
      %849 = vmatprep.subr.mxu0 %v684
      %850 = vmatpush1.msra.mxu0 %v683
      %851 = vmatprep.subr.mxu0 %v676
      %852 = vmatpush1.msra.mxu0 %v675
      %853 = vmatprep.subr.mxu0 %v668
      %854 = vmatpush1.msra.mxu0 %v667
      %855 = vmatprep.subr.mxu0 %v660
      %856 = vmatpush1.msra.mxu0 %v659
      %857 = vmatprep.subr.mxu0 %v652
      %858 = vmatpush1.msra.mxu0 %v651
      %859 = vmatprep.subr.mxu0 %v644
      %860 = vmatpush1.msra.mxu0 %v643
      %861 = vmatprep.subr.mxu0 %v636
      %862 = vmatpush1.msra.mxu0 %v635
      %863 = vmatprep.subr.mxu0 %v628
      %864 = vmatpush1.msra.mxu0 %v627
      %865 = vmatprep.subr.mxu0 %v620
      %866 = vmatpush1.msra.mxu0 %v619
      %867 = vmatprep.subr.mxu0 %v612
      %868 = vmatpush1.msra.mxu0 %v611
      %869 = vmatprep.subr.mxu0 %v604
      %870 = vmatpush1.msra.mxu0 %v603
      %871 = vmatprep.subr.mxu0 %v596
      %872 = vmatpush1.msra.mxu0 %v595
      %873 = vmatprep.subr.mxu0 %v588
      %874 = vmatpush1.msra.mxu0 %v587
      %875 = vmatprep.subr.mxu0 %v580
      %876 = vmatpush1.msra.mxu0 %v579
      %877 = vmatprep.subr.mxu0 0.0
      %878 = vmatpush2.msra.mxu0 0.0
      %879 = vmatprep.subr.mxu0 0.0
      %880 = vmatpush2.msra.mxu0 0.0
      %881 = vmatprep.subr.mxu0 0.0
      %882 = vmatpush2.msra.mxu0 0.0
      %883 = vmatprep.subr.mxu0 0.0
      %884 = vmatpush2.msra.mxu0 0.0
      %885 = vmatprep.subr.mxu0 0.0
      %886 = vmatpush2.msra.mxu0 0.0
      %887 = vmatprep.subr.mxu0 0.0
      %888 = vmatpush2.msra.mxu0 0.0
      %889 = vmatprep.subr.mxu0 0.0
      %890 = vmatpush2.msra.mxu0 0.0
      %891 = vmatprep.subr.mxu0 0.0
      %892 = vmatpush2.msra.mxu0 0.0
      %893 = vmatprep.subr.mxu0 0.0
      %894 = vmatpush2.msra.mxu0 0.0
      %895 = vmatprep.subr.mxu0 0.0
      %896 = vmatpush2.msra.mxu0 0.0
      %897 = vmatprep.subr.mxu0 0.0
      %898 = vmatpush2.msra.mxu0 0.0
      %899 = vmatprep.subr.mxu0 0.0
      %900 = vmatpush2.msra.mxu0 0.0
      %901 = vmatprep.subr.mxu0 0.0
      %902 = vmatpush2.msra.mxu0 0.0
      %903 = vmatprep.subr.mxu0 0.0
      %904 = vmatpush2.msra.mxu0 0.0
      %905 = vmatprep.subr.mxu0 0.0
      %906 = vmatpush2.msra.mxu0 0.0
      %907 = vmatprep.subr.mxu0 0.0
      %908 = vmatpush2.msra.mxu0 0.0
      %909 = vmatprep.mubr.f32.mxu0 0.0
      %910 = vmatmul.mubr.f32.gmra.mxu0 %v214
      %v911 = vpop.f32.mrf.mxu0
      %v912 = vadd.f32 0.0, %v911
      %v913 = vpop.f32.mrf.mxu0
      %v914 = vadd.f32 0.0, %v913
      %915 = vdwg.mxu0
      %916 = vmatprep.subr.mxu0 %v702
      %917 = vmatpush1.msra.mxu0 %v701
      %918 = vmatprep.subr.mxu0 %v694
      %919 = vmatpush1.msra.mxu0 %v693
      %920 = vmatprep.subr.mxu0 %v686
      %921 = vmatpush1.msra.mxu0 %v685
      %922 = vmatprep.subr.mxu0 %v678
      %923 = vmatpush1.msra.mxu0 %v677
      %924 = vmatprep.subr.mxu0 %v670
      %925 = vmatpush1.msra.mxu0 %v669
      %926 = vmatprep.subr.mxu0 %v662
      %927 = vmatpush1.msra.mxu0 %v661
      %928 = vmatprep.subr.mxu0 %v654
      %929 = vmatpush1.msra.mxu0 %v653
      %930 = vmatprep.subr.mxu0 %v646
      %931 = vmatpush1.msra.mxu0 %v645
      %932 = vmatprep.subr.mxu0 %v638
      %933 = vmatpush1.msra.mxu0 %v637
      %934 = vmatprep.subr.mxu0 %v630
      %935 = vmatpush1.msra.mxu0 %v629
      %936 = vmatprep.subr.mxu0 %v622
      %937 = vmatpush1.msra.mxu0 %v621
      %938 = vmatprep.subr.mxu0 %v614
      %939 = vmatpush1.msra.mxu0 %v613
      %940 = vmatprep.subr.mxu0 %v606
      %941 = vmatpush1.msra.mxu0 %v605
      %942 = vmatprep.subr.mxu0 %v598
      %943 = vmatpush1.msra.mxu0 %v597
      %944 = vmatprep.subr.mxu0 %v590
      %945 = vmatpush1.msra.mxu0 %v589
      %946 = vmatprep.subr.mxu0 %v582
      %947 = vmatpush1.msra.mxu0 %v581
      %948 = vmatprep.subr.mxu0 0.0
      %949 = vmatpush2.msra.mxu0 0.0
      %950 = vmatprep.subr.mxu0 0.0
      %951 = vmatpush2.msra.mxu0 0.0
      %952 = vmatprep.subr.mxu0 0.0
      %953 = vmatpush2.msra.mxu0 0.0
      %954 = vmatprep.subr.mxu0 0.0
      %955 = vmatpush2.msra.mxu0 0.0
      %956 = vmatprep.subr.mxu0 0.0
      %957 = vmatpush2.msra.mxu0 0.0
      %958 = vmatprep.subr.mxu0 0.0
      %959 = vmatpush2.msra.mxu0 0.0
      %960 = vmatprep.subr.mxu0 0.0
      %961 = vmatpush2.msra.mxu0 0.0
      %962 = vmatprep.subr.mxu0 0.0
      %963 = vmatpush2.msra.mxu0 0.0
      %964 = vmatprep.subr.mxu0 0.0
      %965 = vmatpush2.msra.mxu0 0.0
      %966 = vmatprep.subr.mxu0 0.0
      %967 = vmatpush2.msra.mxu0 0.0
      %968 = vmatprep.subr.mxu0 0.0
      %969 = vmatpush2.msra.mxu0 0.0
      %970 = vmatprep.subr.mxu0 0.0
      %971 = vmatpush2.msra.mxu0 0.0
      %972 = vmatprep.subr.mxu0 0.0
      %973 = vmatpush2.msra.mxu0 0.0
      %974 = vmatprep.subr.mxu0 0.0
      %975 = vmatpush2.msra.mxu0 0.0
      %976 = vmatprep.subr.mxu0 0.0
      %977 = vmatpush2.msra.mxu0 0.0
      %978 = vmatprep.subr.mxu0 0.0
      %979 = vmatpush2.msra.mxu0 0.0
      %980 = vmatprep.mubr.f32.mxu0 0.0
      %981 = vmatmul.mubr.f32.gmra.mxu0 %v214
      %v982 = vpop.f32.mrf.mxu0
      %v983 = vadd.f32 0.0, %v982
      %v984 = vpop.f32.mrf.mxu0
      %v985 = vadd.f32 0.0, %v984
      %986 = vdwg.mxu0
      %987 = vmatprep.subr.mxu0 %v440
      %988 = vmatpush1.msra.mxu0 %v439
      %989 = vmatprep.subr.mxu0 %v432
      %990 = vmatpush1.msra.mxu0 %v431
      %991 = vmatprep.subr.mxu0 %v424
      %992 = vmatpush1.msra.mxu0 %v423
      %993 = vmatprep.subr.mxu0 %v416
      %994 = vmatpush1.msra.mxu0 %v415
      %995 = vmatprep.subr.mxu0 %v408
      %996 = vmatpush1.msra.mxu0 %v407
      %997 = vmatprep.subr.mxu0 %v400
      %998 = vmatpush1.msra.mxu0 %v399
      %999 = vmatprep.subr.mxu0 %v392
      %1000 = vmatpush1.msra.mxu0 %v391
      %1001 = vmatprep.subr.mxu0 %v384
      %1002 = vmatpush1.msra.mxu0 %v383
      %1003 = vmatprep.subr.mxu0 %v376
      %1004 = vmatpush1.msra.mxu0 %v375
      %1005 = vmatprep.subr.mxu0 %v368
      %1006 = vmatpush1.msra.mxu0 %v367
      %1007 = vmatprep.subr.mxu0 %v360
      %1008 = vmatpush1.msra.mxu0 %v359
      %1009 = vmatprep.subr.mxu0 %v352
      %1010 = vmatpush1.msra.mxu0 %v351
      %1011 = vmatprep.subr.mxu0 %v344
      %1012 = vmatpush1.msra.mxu0 %v343
      %1013 = vmatprep.subr.mxu0 %v336
      %1014 = vmatpush1.msra.mxu0 %v335
      %1015 = vmatprep.subr.mxu0 %v328
      %1016 = vmatpush1.msra.mxu0 %v327
      %1017 = vmatprep.subr.mxu0 %v320
      %1018 = vmatpush1.msra.mxu0 %v319
      %1019 = vmatprep.subr.mxu0 %v568
      %1020 = vmatpush2.msra.mxu0 %v567
      %1021 = vmatprep.subr.mxu0 %v560
      %1022 = vmatpush2.msra.mxu0 %v559
      %1023 = vmatprep.subr.mxu0 %v552
      %1024 = vmatpush2.msra.mxu0 %v551
      %1025 = vmatprep.subr.mxu0 %v544
      %1026 = vmatpush2.msra.mxu0 %v543
      %1027 = vmatprep.subr.mxu0 %v536
      %1028 = vmatpush2.msra.mxu0 %v535
      %1029 = vmatprep.subr.mxu0 %v528
      %1030 = vmatpush2.msra.mxu0 %v527
      %1031 = vmatprep.subr.mxu0 %v520
      %1032 = vmatpush2.msra.mxu0 %v519
      %1033 = vmatprep.subr.mxu0 %v512
      %1034 = vmatpush2.msra.mxu0 %v511
      %1035 = vmatprep.subr.mxu0 %v504
      %1036 = vmatpush2.msra.mxu0 %v503
      %1037 = vmatprep.subr.mxu0 %v496
      %1038 = vmatpush2.msra.mxu0 %v495
      %1039 = vmatprep.subr.mxu0 %v488
      %1040 = vmatpush2.msra.mxu0 %v487
      %1041 = vmatprep.subr.mxu0 %v480
      %1042 = vmatpush2.msra.mxu0 %v479
      %1043 = vmatprep.subr.mxu0 %v472
      %1044 = vmatpush2.msra.mxu0 %v471
      %1045 = vmatprep.subr.mxu0 %v464
      %1046 = vmatpush2.msra.mxu0 %v463
      %1047 = vmatprep.subr.mxu0 %v456
      %1048 = vmatpush2.msra.mxu0 %v455
      %1049 = vmatprep.subr.mxu0 %v448
      %1050 = vmatpush2.msra.mxu0 %v447
      %1051 = vmatprep.mubr.f32.mxu0 %v317
      %1052 = vmatmul.mubr.f32.gmra.mxu0 %v315
      %v1053 = vpop.f32.mrf.mxu0
      %v1054 = vadd.f32 %v770, %v1053
      %v1055 = vpop.f32.mrf.mxu0
      %v1056 = vadd.f32 %v772, %v1055
      %1057 = vdwg.mxu0
      %1058 = vmatprep.subr.mxu0 %v442
      %1059 = vmatpush1.msra.mxu0 %v441
      %1060 = vmatprep.subr.mxu0 %v434
      %1061 = vmatpush1.msra.mxu0 %v433
      %1062 = vmatprep.subr.mxu0 %v426
      %1063 = vmatpush1.msra.mxu0 %v425
      %1064 = vmatprep.subr.mxu0 %v418
      %1065 = vmatpush1.msra.mxu0 %v417
      %1066 = vmatprep.subr.mxu0 %v410
      %1067 = vmatpush1.msra.mxu0 %v409
      %1068 = vmatprep.subr.mxu0 %v402
      %1069 = vmatpush1.msra.mxu0 %v401
      %1070 = vmatprep.subr.mxu0 %v394
      %1071 = vmatpush1.msra.mxu0 %v393
      %1072 = vmatprep.subr.mxu0 %v386
      %1073 = vmatpush1.msra.mxu0 %v385
      %1074 = vmatprep.subr.mxu0 %v378
      %1075 = vmatpush1.msra.mxu0 %v377
      %1076 = vmatprep.subr.mxu0 %v370
      %1077 = vmatpush1.msra.mxu0 %v369
      %1078 = vmatprep.subr.mxu0 %v362
      %1079 = vmatpush1.msra.mxu0 %v361
      %1080 = vmatprep.subr.mxu0 %v354
      %1081 = vmatpush1.msra.mxu0 %v353
      %1082 = vmatprep.subr.mxu0 %v346
      %1083 = vmatpush1.msra.mxu0 %v345
      %1084 = vmatprep.subr.mxu0 %v338
      %1085 = vmatpush1.msra.mxu0 %v337
      %1086 = vmatprep.subr.mxu0 %v330
      %1087 = vmatpush1.msra.mxu0 %v329
      %1088 = vmatprep.subr.mxu0 %v322
      %1089 = vmatpush1.msra.mxu0 %v321
      %1090 = vmatprep.subr.mxu0 %v570
      %1091 = vmatpush2.msra.mxu0 %v569
      %1092 = vmatprep.subr.mxu0 %v562
      %1093 = vmatpush2.msra.mxu0 %v561
      %1094 = vmatprep.subr.mxu0 %v554
      %1095 = vmatpush2.msra.mxu0 %v553
      %1096 = vmatprep.subr.mxu0 %v546
      %1097 = vmatpush2.msra.mxu0 %v545
      %1098 = vmatprep.subr.mxu0 %v538
      %1099 = vmatpush2.msra.mxu0 %v537
      %1100 = vmatprep.subr.mxu0 %v530
      %1101 = vmatpush2.msra.mxu0 %v529
      %1102 = vmatprep.subr.mxu0 %v522
      %1103 = vmatpush2.msra.mxu0 %v521
      %1104 = vmatprep.subr.mxu0 %v514
      %1105 = vmatpush2.msra.mxu0 %v513
      %1106 = vmatprep.subr.mxu0 %v506
      %1107 = vmatpush2.msra.mxu0 %v505
      %1108 = vmatprep.subr.mxu0 %v498
      %1109 = vmatpush2.msra.mxu0 %v497
      %1110 = vmatprep.subr.mxu0 %v490
      %1111 = vmatpush2.msra.mxu0 %v489
      %1112 = vmatprep.subr.mxu0 %v482
      %1113 = vmatpush2.msra.mxu0 %v481
      %1114 = vmatprep.subr.mxu0 %v474
      %1115 = vmatpush2.msra.mxu0 %v473
      %1116 = vmatprep.subr.mxu0 %v466
      %1117 = vmatpush2.msra.mxu0 %v465
      %1118 = vmatprep.subr.mxu0 %v458
      %1119 = vmatpush2.msra.mxu0 %v457
      %1120 = vmatprep.subr.mxu0 %v450
      %1121 = vmatpush2.msra.mxu0 %v449
      %1122 = vmatprep.mubr.f32.mxu0 %v317
      %1123 = vmatmul.mubr.f32.gmra.mxu0 %v315
      %v1124 = vpop.f32.mrf.mxu0
      %v1125 = vadd.f32 %v841, %v1124
      %v1126 = vpop.f32.mrf.mxu0
      %v1127 = vadd.f32 %v843, %v1126
      %1128 = vdwg.mxu0
      %1129 = vmatprep.subr.mxu0 %v444
      %1130 = vmatpush1.msra.mxu0 %v443
      %1131 = vmatprep.subr.mxu0 %v436
      %1132 = vmatpush1.msra.mxu0 %v435
      %1133 = vmatprep.subr.mxu0 %v428
      %1134 = vmatpush1.msra.mxu0 %v427
      %1135 = vmatprep.subr.mxu0 %v420
      %1136 = vmatpush1.msra.mxu0 %v419
      %1137 = vmatprep.subr.mxu0 %v412
      %1138 = vmatpush1.msra.mxu0 %v411
      %1139 = vmatprep.subr.mxu0 %v404
      %1140 = vmatpush1.msra.mxu0 %v403
      %1141 = vmatprep.subr.mxu0 %v396
      %1142 = vmatpush1.msra.mxu0 %v395
      %1143 = vmatprep.subr.mxu0 %v388
      %1144 = vmatpush1.msra.mxu0 %v387
      %1145 = vmatprep.subr.mxu0 %v380
      %1146 = vmatpush1.msra.mxu0 %v379
      %1147 = vmatprep.subr.mxu0 %v372
      %1148 = vmatpush1.msra.mxu0 %v371
      %1149 = vmatprep.subr.mxu0 %v364
      %1150 = vmatpush1.msra.mxu0 %v363
      %1151 = vmatprep.subr.mxu0 %v356
      %1152 = vmatpush1.msra.mxu0 %v355
      %1153 = vmatprep.subr.mxu0 %v348
      %1154 = vmatpush1.msra.mxu0 %v347
      %1155 = vmatprep.subr.mxu0 %v340
      %1156 = vmatpush1.msra.mxu0 %v339
      %1157 = vmatprep.subr.mxu0 %v332
      %1158 = vmatpush1.msra.mxu0 %v331
      %1159 = vmatprep.subr.mxu0 %v324
      %1160 = vmatpush1.msra.mxu0 %v323
      %1161 = vmatprep.subr.mxu0 %v572
      %1162 = vmatpush2.msra.mxu0 %v571
      %1163 = vmatprep.subr.mxu0 %v564
      %1164 = vmatpush2.msra.mxu0 %v563
      %1165 = vmatprep.subr.mxu0 %v556
      %1166 = vmatpush2.msra.mxu0 %v555
      %1167 = vmatprep.subr.mxu0 %v548
      %1168 = vmatpush2.msra.mxu0 %v547
      %1169 = vmatprep.subr.mxu0 %v540
      %1170 = vmatpush2.msra.mxu0 %v539
      %1171 = vmatprep.subr.mxu0 %v532
      %1172 = vmatpush2.msra.mxu0 %v531
      %1173 = vmatprep.subr.mxu0 %v524
      %1174 = vmatpush2.msra.mxu0 %v523
      %1175 = vmatprep.subr.mxu0 %v516
      %1176 = vmatpush2.msra.mxu0 %v515
      %1177 = vmatprep.subr.mxu0 %v508
      %1178 = vmatpush2.msra.mxu0 %v507
      %1179 = vmatprep.subr.mxu0 %v500
      %1180 = vmatpush2.msra.mxu0 %v499
      %1181 = vmatprep.subr.mxu0 %v492
      %1182 = vmatpush2.msra.mxu0 %v491
      %1183 = vmatprep.subr.mxu0 %v484
      %1184 = vmatpush2.msra.mxu0 %v483
      %1185 = vmatprep.subr.mxu0 %v476
      %1186 = vmatpush2.msra.mxu0 %v475
      %1187 = vmatprep.subr.mxu0 %v468
      %1188 = vmatpush2.msra.mxu0 %v467
      %1189 = vmatprep.subr.mxu0 %v460
      %1190 = vmatpush2.msra.mxu0 %v459
      %1191 = vmatprep.subr.mxu0 %v452
      %1192 = vmatpush2.msra.mxu0 %v451
      %1193 = vmatprep.mubr.f32.mxu0 %v317
      %1194 = vmatmul.mubr.f32.gmra.mxu0 %v315
      %v1195 = vpop.f32.mrf.mxu0
      %v1196 = vadd.f32 %v912, %v1195
      %v1197 = vpop.f32.mrf.mxu0
      %v1198 = vadd.f32 %v914, %v1197
      %1199 = vdwg.mxu0
      %1200 = vmatprep.subr.mxu0 %v446
      %1201 = vmatpush1.msra.mxu0 %v445
      %1202 = vmatprep.subr.mxu0 %v438
      %1203 = vmatpush1.msra.mxu0 %v437
      %1204 = vmatprep.subr.mxu0 %v430
      %1205 = vmatpush1.msra.mxu0 %v429
      %1206 = vmatprep.subr.mxu0 %v422
      %1207 = vmatpush1.msra.mxu0 %v421
      %1208 = vmatprep.subr.mxu0 %v414
      %1209 = vmatpush1.msra.mxu0 %v413
      %1210 = vmatprep.subr.mxu0 %v406
      %1211 = vmatpush1.msra.mxu0 %v405
      %1212 = vmatprep.subr.mxu0 %v398
      %1213 = vmatpush1.msra.mxu0 %v397
      %1214 = vmatprep.subr.mxu0 %v390
      %1215 = vmatpush1.msra.mxu0 %v389
      %1216 = vmatprep.subr.mxu0 %v382
      %1217 = vmatpush1.msra.mxu0 %v381
      %1218 = vmatprep.subr.mxu0 %v374
      %1219 = vmatpush1.msra.mxu0 %v373
      %1220 = vmatprep.subr.mxu0 %v366
      %1221 = vmatpush1.msra.mxu0 %v365
      %1222 = vmatprep.subr.mxu0 %v358
      %1223 = vmatpush1.msra.mxu0 %v357
      %1224 = vmatprep.subr.mxu0 %v350
      %1225 = vmatpush1.msra.mxu0 %v349
      %1226 = vmatprep.subr.mxu0 %v342
      %1227 = vmatpush1.msra.mxu0 %v341
      %1228 = vmatprep.subr.mxu0 %v334
      %1229 = vmatpush1.msra.mxu0 %v333
      %1230 = vmatprep.subr.mxu0 %v326
      %1231 = vmatpush1.msra.mxu0 %v325
      %1232 = vmatprep.subr.mxu0 %v574
      %1233 = vmatpush2.msra.mxu0 %v573
      %1234 = vmatprep.subr.mxu0 %v566
      %1235 = vmatpush2.msra.mxu0 %v565
      %1236 = vmatprep.subr.mxu0 %v558
      %1237 = vmatpush2.msra.mxu0 %v557
      %1238 = vmatprep.subr.mxu0 %v550
      %1239 = vmatpush2.msra.mxu0 %v549
      %1240 = vmatprep.subr.mxu0 %v542
      %1241 = vmatpush2.msra.mxu0 %v541
      %1242 = vmatprep.subr.mxu0 %v534
      %1243 = vmatpush2.msra.mxu0 %v533
      %1244 = vmatprep.subr.mxu0 %v526
      %1245 = vmatpush2.msra.mxu0 %v525
      %1246 = vmatprep.subr.mxu0 %v518
      %1247 = vmatpush2.msra.mxu0 %v517
      %1248 = vmatprep.subr.mxu0 %v510
      %1249 = vmatpush2.msra.mxu0 %v509
      %1250 = vmatprep.subr.mxu0 %v502
      %1251 = vmatpush2.msra.mxu0 %v501
      %1252 = vmatprep.subr.mxu0 %v494
      %1253 = vmatpush2.msra.mxu0 %v493
      %1254 = vmatprep.subr.mxu0 %v486
      %1255 = vmatpush2.msra.mxu0 %v485
      %1256 = vmatprep.subr.mxu0 %v478
      %1257 = vmatpush2.msra.mxu0 %v477
      %1258 = vmatprep.subr.mxu0 %v470
      %1259 = vmatpush2.msra.mxu0 %v469
      %1260 = vmatprep.subr.mxu0 %v462
      %1261 = vmatpush2.msra.mxu0 %v461
      %1262 = vmatprep.subr.mxu0 %v454
      %1263 = vmatpush2.msra.mxu0 %v453
      %1264 = vmatprep.mubr.f32.mxu0 %v317
      %1265 = vmatmul.mubr.f32.gmra.mxu0 %v315
      %v1266 = vpop.f32.mrf.mxu0
      %v1267 = vadd.f32 %v983, %v1266
      %v1268 = vpop.f32.mrf.mxu0
      %v1269 = vadd.f32 %v985, %v1268
      %1270 = vdwg.mxu0
      %v1271 = vld [vmem:[%s3] sm:$0xff]
      %v1272 = vld [vmem:[%s3 + $0x8] sm:$0xff]
      %v1273 = vld [vmem:[%s3 + $0x10] sm:$0xff]
      %v1274 = vld [vmem:[%s3 + $0x18] sm:$0xff]
      %v1275 = vld [vmem:[%s3 + $0x20] sm:$0xff]
      %v1276 = vld [vmem:[%s3 + $0x28] sm:$0xff]
      %v1277 = vld [vmem:[%s3 + $0x30] sm:$0xff]
      %v1278 = vld [vmem:[%s3 + $0x38] sm:$0xff]
      %v1279 = vld [vmem:[%s3 + $0x40] sm:$0xff]
      %v1280 = vld [vmem:[%s3 + $0x48] sm:$0xff]
      %v1281 = vld [vmem:[%s3 + $0x50] sm:$0xff]
      %v1282 = vld [vmem:[%s3 + $0x58] sm:$0xff]
      %v1283 = vld [vmem:[%s3 + $0x60] sm:$0xff]
      %v1284 = vld [vmem:[%s3 + $0x68] sm:$0xff]
      %v1285 = vld [vmem:[%s3 + $0x70] sm:$0xff]
      %v1286 = vld [vmem:[%s3 + $0x78] sm:$0xff]
      %v1287 = vld [vmem:[%s3 + $0x80] sm:$0xff]
      %v1288 = vld [vmem:[%s3 + $0x88] sm:$0xff]
      %v1289 = vld [vmem:[%s3 + $0x90] sm:$0xff]
      %v1290 = vld [vmem:[%s3 + $0x98] sm:$0xff]
      %v1291 = vld [vmem:[%s3 + $0xa0] sm:$0xff]
      %v1292 = vld [vmem:[%s3 + $0xa8] sm:$0xff]
      %v1293 = vld [vmem:[%s3 + $0xb0] sm:$0xff]
      %v1294 = vld [vmem:[%s3 + $0xb8] sm:$0xff]
      %v1295 = vld [vmem:[%s3 + $0xc0] sm:$0xff]
      %v1296 = vld [vmem:[%s3 + $0xc8] sm:$0xff]
      %v1297 = vld [vmem:[%s3 + $0xd0] sm:$0xff]
      %v1298 = vld [vmem:[%s3 + $0xd8] sm:$0xff]
      %v1299 = vld [vmem:[%s3 + $0xe0] sm:$0xff]
      %v1300 = vld [vmem:[%s3 + $0xe8] sm:$0xff]
      %v1301 = vld [vmem:[%s3 + $0xf0] sm:$0xff]
      %v1302 = vld [vmem:[%s3 + $0xf8] sm:$0xff]
      %v1303 = vld [vmem:[%s3 + $0x100] sm:$0xff]
      %v1304 = vld [vmem:[%s3 + $0x108] sm:$0xff]
      %v1305 = vld [vmem:[%s3 + $0x110] sm:$0xff]
      %v1306 = vld [vmem:[%s3 + $0x118] sm:$0xff]
      %v1307 = vld [vmem:[%s3 + $0x120] sm:$0xff]
      %v1308 = vld [vmem:[%s3 + $0x128] sm:$0xff]
      %v1309 = vld [vmem:[%s3 + $0x130] sm:$0xff]
      %v1310 = vld [vmem:[%s3 + $0x138] sm:$0xff]
      %v1311 = vld [vmem:[%s3 + $0x140] sm:$0xff]
      %v1312 = vld [vmem:[%s3 + $0x148] sm:$0xff]
      %v1313 = vld [vmem:[%s3 + $0x150] sm:$0xff]
      %v1314 = vld [vmem:[%s3 + $0x158] sm:$0xff]
      %v1315 = vld [vmem:[%s3 + $0x160] sm:$0xff]
      %v1316 = vld [vmem:[%s3 + $0x168] sm:$0xff]
      %v1317 = vld [vmem:[%s3 + $0x170] sm:$0xff]
      %v1318 = vld [vmem:[%s3 + $0x178] sm:$0xff]
      %v1319 = vld [vmem:[%s3 + $0x180] sm:$0xff]
      %v1320 = vld [vmem:[%s3 + $0x188] sm:$0xff]
      %v1321 = vld [vmem:[%s3 + $0x190] sm:$0xff]
      %v1322 = vld [vmem:[%s3 + $0x198] sm:$0xff]
      %v1323 = vld [vmem:[%s3 + $0x1a0] sm:$0xff]
      %v1324 = vld [vmem:[%s3 + $0x1a8] sm:$0xff]
      %v1325 = vld [vmem:[%s3 + $0x1b0] sm:$0xff]
      %v1326 = vld [vmem:[%s3 + $0x1b8] sm:$0xff]
      %v1327 = vld [vmem:[%s3 + $0x1c0] sm:$0xff]
      %v1328 = vld [vmem:[%s3 + $0x1c8] sm:$0xff]
      %v1329 = vld [vmem:[%s3 + $0x1d0] sm:$0xff]
      %v1330 = vld [vmem:[%s3 + $0x1d8] sm:$0xff]
      %v1331 = vld [vmem:[%s3 + $0x1e0] sm:$0xff]
      %v1332 = vld [vmem:[%s3 + $0x1e8] sm:$0xff]
      %v1333 = vld [vmem:[%s3 + $0x1f0] sm:$0xff]
      %v1334 = vld [vmem:[%s3 + $0x1f8] sm:$0xff]
      %v1335 = vld [vmem:[%s3 + $0x200] sm:$0xff]
      %v1336 = vld [vmem:[%s3 + $0x208] sm:$0xff]
      %v1337 = vld [vmem:[%s3 + $0x210] sm:$0xff]
      %v1338 = vld [vmem:[%s3 + $0x218] sm:$0xff]
      %v1339 = vld [vmem:[%s3 + $0x220] sm:$0xff]
      %v1340 = vld [vmem:[%s3 + $0x228] sm:$0xff]
      %v1341 = vld [vmem:[%s3 + $0x230] sm:$0xff]
      %v1342 = vld [vmem:[%s3 + $0x238] sm:$0xff]
      %v1343 = vld [vmem:[%s3 + $0x240] sm:$0xff]
      %v1344 = vld [vmem:[%s3 + $0x248] sm:$0xff]
      %v1345 = vld [vmem:[%s3 + $0x250] sm:$0xff]
      %v1346 = vld [vmem:[%s3 + $0x258] sm:$0xff]
      %v1347 = vld [vmem:[%s3 + $0x260] sm:$0xff]
      %v1348 = vld [vmem:[%s3 + $0x268] sm:$0xff]
      %v1349 = vld [vmem:[%s3 + $0x270] sm:$0xff]
      %v1350 = vld [vmem:[%s3 + $0x278] sm:$0xff]
      %v1351 = vld [vmem:[%s3 + $0x280] sm:$0xff]
      %v1352 = vld [vmem:[%s3 + $0x288] sm:$0xff]
      %v1353 = vld [vmem:[%s3 + $0x290] sm:$0xff]
      %v1354 = vld [vmem:[%s3 + $0x298] sm:$0xff]
      %v1355 = vld [vmem:[%s3 + $0x2a0] sm:$0xff]
      %v1356 = vld [vmem:[%s3 + $0x2a8] sm:$0xff]
      %v1357 = vld [vmem:[%s3 + $0x2b0] sm:$0xff]
      %v1358 = vld [vmem:[%s3 + $0x2b8] sm:$0xff]
      %v1359 = vld [vmem:[%s3 + $0x2c0] sm:$0xff]
      %v1360 = vld [vmem:[%s3 + $0x2c8] sm:$0xff]
      %v1361 = vld [vmem:[%s3 + $0x2d0] sm:$0xff]
      %v1362 = vld [vmem:[%s3 + $0x2d8] sm:$0xff]
      %v1363 = vld [vmem:[%s3 + $0x2e0] sm:$0xff]
      %v1364 = vld [vmem:[%s3 + $0x2e8] sm:$0xff]
      %v1365 = vld [vmem:[%s3 + $0x2f0] sm:$0xff]
      %v1366 = vld [vmem:[%s3 + $0x2f8] sm:$0xff]
      %v1367 = vld [vmem:[%s3 + $0x300] sm:$0xff]
      %v1368 = vld [vmem:[%s3 + $0x308] sm:$0xff]
      %v1369 = vld [vmem:[%s3 + $0x310] sm:$0xff]
      %v1370 = vld [vmem:[%s3 + $0x318] sm:$0xff]
      %v1371 = vld [vmem:[%s3 + $0x320] sm:$0xff]
      %v1372 = vld [vmem:[%s3 + $0x328] sm:$0xff]
      %v1373 = vld [vmem:[%s3 + $0x330] sm:$0xff]
      %v1374 = vld [vmem:[%s3 + $0x338] sm:$0xff]
      %v1375 = vld [vmem:[%s3 + $0x340] sm:$0xff]
      %v1376 = vld [vmem:[%s3 + $0x348] sm:$0xff]
      %v1377 = vld [vmem:[%s3 + $0x350] sm:$0xff]
      %v1378 = vld [vmem:[%s3 + $0x358] sm:$0xff]
      %v1379 = vld [vmem:[%s3 + $0x360] sm:$0xff]
      %v1380 = vld [vmem:[%s3 + $0x368] sm:$0xff]
      %v1381 = vld [vmem:[%s3 + $0x370] sm:$0xff]
      %v1382 = vld [vmem:[%s3 + $0x378] sm:$0xff]
      %v1383 = vld [vmem:[%s3 + $0x380] sm:$0xff]
      %v1384 = vld [vmem:[%s3 + $0x388] sm:$0xff]
      %v1385 = vld [vmem:[%s3 + $0x390] sm:$0xff]
      %v1386 = vld [vmem:[%s3 + $0x398] sm:$0xff]
      %v1387 = vld [vmem:[%s3 + $0x3a0] sm:$0xff]
      %v1388 = vld [vmem:[%s3 + $0x3a8] sm:$0xff]
      %v1389 = vld [vmem:[%s3 + $0x3b0] sm:$0xff]
      %v1390 = vld [vmem:[%s3 + $0x3b8] sm:$0xff]
      %v1391 = vld [vmem:[%s3 + $0x3c0] sm:$0xff]
      %v1392 = vld [vmem:[%s3 + $0x3c8] sm:$0xff]
      %v1393 = vld [vmem:[%s3 + $0x3d0] sm:$0xff]
      %v1394 = vld [vmem:[%s3 + $0x3d8] sm:$0xff]
      %v1395 = vld [vmem:[%s3 + $0x3e0] sm:$0xff]
      %v1396 = vld [vmem:[%s3 + $0x3e8] sm:$0xff]
      %v1397 = vld [vmem:[%s3 + $0x3f0] sm:$0xff]
      %v1398 = vld [vmem:[%s3 + $0x3f8] sm:$0xff]
      %v1399 = vld [vmem:[%s3 + $0x400] sm:$0xff]
      %v1400 = vld [vmem:[%s3 + $0x408] sm:$0xff]
      %v1401 = vld [vmem:[%s3 + $0x410] sm:$0xff]
      %v1402 = vld [vmem:[%s3 + $0x418] sm:$0xff]
      %v1403 = vld [vmem:[%s3 + $0x420] sm:$0xff]
      %v1404 = vld [vmem:[%s3 + $0x428] sm:$0xff]
      %v1405 = vld [vmem:[%s3 + $0x430] sm:$0xff]
      %v1406 = vld [vmem:[%s3 + $0x438] sm:$0xff]
      %v1407 = vld [vmem:[%s3 + $0x440] sm:$0xff]
      %v1408 = vld [vmem:[%s3 + $0x448] sm:$0xff]
      %v1409 = vld [vmem:[%s3 + $0x450] sm:$0xff]
      %v1410 = vld [vmem:[%s3 + $0x458] sm:$0xff]
      %v1411 = vld [vmem:[%s3 + $0x460] sm:$0xff]
      %v1412 = vld [vmem:[%s3 + $0x468] sm:$0xff]
      %v1413 = vld [vmem:[%s3 + $0x470] sm:$0xff]
      %v1414 = vld [vmem:[%s3 + $0x478] sm:$0xff]
      %v1415 = vld [vmem:[%s3 + $0x480] sm:$0xff]
      %v1416 = vld [vmem:[%s3 + $0x488] sm:$0xff]
      %v1417 = vld [vmem:[%s3 + $0x490] sm:$0xff]
      %v1418 = vld [vmem:[%s3 + $0x498] sm:$0xff]
      %v1419 = vld [vmem:[%s3 + $0x4a0] sm:$0xff]
      %v1420 = vld [vmem:[%s3 + $0x4a8] sm:$0xff]
      %v1421 = vld [vmem:[%s3 + $0x4b0] sm:$0xff]
      %v1422 = vld [vmem:[%s3 + $0x4b8] sm:$0xff]
      %v1423 = vld [vmem:[%s3 + $0x4c0] sm:$0xff]
      %v1424 = vld [vmem:[%s3 + $0x4c8] sm:$0xff]
      %v1425 = vld [vmem:[%s3 + $0x4d0] sm:$0xff]
      %v1426 = vld [vmem:[%s3 + $0x4d8] sm:$0xff]
      %v1427 = vld [vmem:[%s3 + $0x4e0] sm:$0xff]
      %v1428 = vld [vmem:[%s3 + $0x4e8] sm:$0xff]
      %v1429 = vld [vmem:[%s3 + $0x4f0] sm:$0xff]
      %v1430 = vld [vmem:[%s3 + $0x4f8] sm:$0xff]
      %v1431 = vld [vmem:[%s3 + $0x500] sm:$0xff]
      %v1432 = vld [vmem:[%s3 + $0x508] sm:$0xff]
      %v1433 = vld [vmem:[%s3 + $0x510] sm:$0xff]
      %v1434 = vld [vmem:[%s3 + $0x518] sm:$0xff]
      %v1435 = vld [vmem:[%s3 + $0x520] sm:$0xff]
      %v1436 = vld [vmem:[%s3 + $0x528] sm:$0xff]
      %v1437 = vld [vmem:[%s3 + $0x530] sm:$0xff]
      %v1438 = vld [vmem:[%s3 + $0x538] sm:$0xff]
      %v1439 = vld [vmem:[%s3 + $0x540] sm:$0xff]
      %v1440 = vld [vmem:[%s3 + $0x548] sm:$0xff]
      %v1441 = vld [vmem:[%s3 + $0x550] sm:$0xff]
      %v1442 = vld [vmem:[%s3 + $0x558] sm:$0xff]
      %v1443 = vld [vmem:[%s3 + $0x560] sm:$0xff]
      %v1444 = vld [vmem:[%s3 + $0x568] sm:$0xff]
      %v1445 = vld [vmem:[%s3 + $0x570] sm:$0xff]
      %v1446 = vld [vmem:[%s3 + $0x578] sm:$0xff]
      %v1447 = vld [vmem:[%s3 + $0x580] sm:$0xff]
      %v1448 = vld [vmem:[%s3 + $0x588] sm:$0xff]
      %v1449 = vld [vmem:[%s3 + $0x590] sm:$0xff]
      %v1450 = vld [vmem:[%s3 + $0x598] sm:$0xff]
      %v1451 = vld [vmem:[%s3 + $0x5a0] sm:$0xff]
      %v1452 = vld [vmem:[%s3 + $0x5a8] sm:$0xff]
      %v1453 = vld [vmem:[%s3 + $0x5b0] sm:$0xff]
      %v1454 = vld [vmem:[%s3 + $0x5b8] sm:$0xff]
      %v1455 = vld [vmem:[%s3 + $0x5c0] sm:$0xff]
      %v1456 = vld [vmem:[%s3 + $0x5c8] sm:$0xff]
      %v1457 = vld [vmem:[%s3 + $0x5d0] sm:$0xff]
      %v1458 = vld [vmem:[%s3 + $0x5d8] sm:$0xff]
      %v1459 = vld [vmem:[%s3 + $0x5e0] sm:$0xff]
      %v1460 = vld [vmem:[%s3 + $0x5e8] sm:$0xff]
      %v1461 = vld [vmem:[%s3 + $0x5f0] sm:$0xff]
      %v1462 = vld [vmem:[%s3 + $0x5f8] sm:$0xff]
      %v1463 = vld [vmem:[%s3 + $0x600] sm:$0xff]
      %v1464 = vld [vmem:[%s3 + $0x608] sm:$0xff]
      %v1465 = vld [vmem:[%s3 + $0x610] sm:$0xff]
      %v1466 = vld [vmem:[%s3 + $0x618] sm:$0xff]
      %v1467 = vld [vmem:[%s3 + $0x620] sm:$0xff]
      %v1468 = vld [vmem:[%s3 + $0x628] sm:$0xff]
      %v1469 = vld [vmem:[%s3 + $0x630] sm:$0xff]
      %v1470 = vld [vmem:[%s3 + $0x638] sm:$0xff]
      %v1471 = vld [vmem:[%s3 + $0x640] sm:$0xff]
      %v1472 = vld [vmem:[%s3 + $0x648] sm:$0xff]
      %v1473 = vld [vmem:[%s3 + $0x650] sm:$0xff]
      %v1474 = vld [vmem:[%s3 + $0x658] sm:$0xff]
      %v1475 = vld [vmem:[%s3 + $0x660] sm:$0xff]
      %v1476 = vld [vmem:[%s3 + $0x668] sm:$0xff]
      %v1477 = vld [vmem:[%s3 + $0x670] sm:$0xff]
      %v1478 = vld [vmem:[%s3 + $0x678] sm:$0xff]
      %v1479 = vld [vmem:[%s3 + $0x680] sm:$0xff]
      %v1480 = vld [vmem:[%s3 + $0x688] sm:$0xff]
      %v1481 = vld [vmem:[%s3 + $0x690] sm:$0xff]
      %v1482 = vld [vmem:[%s3 + $0x698] sm:$0xff]
      %v1483 = vld [vmem:[%s3 + $0x6a0] sm:$0xff]
      %v1484 = vld [vmem:[%s3 + $0x6a8] sm:$0xff]
      %v1485 = vld [vmem:[%s3 + $0x6b0] sm:$0xff]
      %v1486 = vld [vmem:[%s3 + $0x6b8] sm:$0xff]
      %v1487 = vld [vmem:[%s3 + $0x6c0] sm:$0xff]
      %v1488 = vld [vmem:[%s3 + $0x6c8] sm:$0xff]
      %v1489 = vld [vmem:[%s3 + $0x6d0] sm:$0xff]
      %v1490 = vld [vmem:[%s3 + $0x6d8] sm:$0xff]
      %v1491 = vld [vmem:[%s3 + $0x6e0] sm:$0xff]
      %v1492 = vld [vmem:[%s3 + $0x6e8] sm:$0xff]
      %v1493 = vld [vmem:[%s3 + $0x6f0] sm:$0xff]
      %v1494 = vld [vmem:[%s3 + $0x6f8] sm:$0xff]
      %v1495 = vld [vmem:[%s3 + $0x700] sm:$0xff]
      %v1496 = vld [vmem:[%s3 + $0x708] sm:$0xff]
      %v1497 = vld [vmem:[%s3 + $0x710] sm:$0xff]
      %v1498 = vld [vmem:[%s3 + $0x718] sm:$0xff]
      %v1499 = vld [vmem:[%s3 + $0x720] sm:$0xff]
      %v1500 = vld [vmem:[%s3 + $0x728] sm:$0xff]
      %v1501 = vld [vmem:[%s3 + $0x730] sm:$0xff]
      %v1502 = vld [vmem:[%s3 + $0x738] sm:$0xff]
      %v1503 = vld [vmem:[%s3 + $0x740] sm:$0xff]
      %v1504 = vld [vmem:[%s3 + $0x748] sm:$0xff]
      %v1505 = vld [vmem:[%s3 + $0x750] sm:$0xff]
      %v1506 = vld [vmem:[%s3 + $0x758] sm:$0xff]
      %v1507 = vld [vmem:[%s3 + $0x760] sm:$0xff]
      %v1508 = vld [vmem:[%s3 + $0x768] sm:$0xff]
      %v1509 = vld [vmem:[%s3 + $0x770] sm:$0xff]
      %v1510 = vld [vmem:[%s3 + $0x778] sm:$0xff]
      %v1511 = vld [vmem:[%s3 + $0x780] sm:$0xff]
      %v1512 = vld [vmem:[%s3 + $0x788] sm:$0xff]
      %v1513 = vld [vmem:[%s3 + $0x790] sm:$0xff]
      %v1514 = vld [vmem:[%s3 + $0x798] sm:$0xff]
      %v1515 = vld [vmem:[%s3 + $0x7a0] sm:$0xff]
      %v1516 = vld [vmem:[%s3 + $0x7a8] sm:$0xff]
      %v1517 = vld [vmem:[%s3 + $0x7b0] sm:$0xff]
      %v1518 = vld [vmem:[%s3 + $0x7b8] sm:$0xff]
      %v1519 = vld [vmem:[%s3 + $0x7c0] sm:$0xff]
      %v1520 = vld [vmem:[%s3 + $0x7c8] sm:$0xff]
      %v1521 = vld [vmem:[%s3 + $0x7d0] sm:$0xff]
      %v1522 = vld [vmem:[%s3 + $0x7d8] sm:$0xff]
      %v1523 = vld [vmem:[%s3 + $0x7e0] sm:$0xff]
      %v1524 = vld [vmem:[%s3 + $0x7e8] sm:$0xff]
      %v1525 = vld [vmem:[%s3 + $0x7f0] sm:$0xff]
      %v1526 = vld [vmem:[%s3 + $0x7f8] sm:$0xff]
      %1527 = vmatprep.subr.mxu0 %v1392
      %1528 = vmatpush1.msra.mxu0 %v1391
      %1529 = vmatprep.subr.mxu0 %v1384
      %1530 = vmatpush1.msra.mxu0 %v1383
      %1531 = vmatprep.subr.mxu0 %v1376
      %1532 = vmatpush1.msra.mxu0 %v1375
      %1533 = vmatprep.subr.mxu0 %v1368
      %1534 = vmatpush1.msra.mxu0 %v1367
      %1535 = vmatprep.subr.mxu0 %v1360
      %1536 = vmatpush1.msra.mxu0 %v1359
      %1537 = vmatprep.subr.mxu0 %v1352
      %1538 = vmatpush1.msra.mxu0 %v1351
      %1539 = vmatprep.subr.mxu0 %v1344
      %1540 = vmatpush1.msra.mxu0 %v1343
      %1541 = vmatprep.subr.mxu0 %v1336
      %1542 = vmatpush1.msra.mxu0 %v1335
      %1543 = vmatprep.subr.mxu0 %v1328
      %1544 = vmatpush1.msra.mxu0 %v1327
      %1545 = vmatprep.subr.mxu0 %v1320
      %1546 = vmatpush1.msra.mxu0 %v1319
      %1547 = vmatprep.subr.mxu0 %v1312
      %1548 = vmatpush1.msra.mxu0 %v1311
      %1549 = vmatprep.subr.mxu0 %v1304
      %1550 = vmatpush1.msra.mxu0 %v1303
      %1551 = vmatprep.subr.mxu0 %v1296
      %1552 = vmatpush1.msra.mxu0 %v1295
      %1553 = vmatprep.subr.mxu0 %v1288
      %1554 = vmatpush1.msra.mxu0 %v1287
      %1555 = vmatprep.subr.mxu0 %v1280
      %1556 = vmatpush1.msra.mxu0 %v1279
      %1557 = vmatprep.subr.mxu0 %v1272
      %1558 = vmatpush1.msra.mxu0 %v1271
      %1559 = vmatprep.subr.mxu0 %v1520
      %1560 = vmatpush2.msra.mxu0 %v1519
      %1561 = vmatprep.subr.mxu0 %v1512
      %1562 = vmatpush2.msra.mxu0 %v1511
      %1563 = vmatprep.subr.mxu0 %v1504
      %1564 = vmatpush2.msra.mxu0 %v1503
      %1565 = vmatprep.subr.mxu0 %v1496
      %1566 = vmatpush2.msra.mxu0 %v1495
      %1567 = vmatprep.subr.mxu0 %v1488
      %1568 = vmatpush2.msra.mxu0 %v1487
      %1569 = vmatprep.subr.mxu0 %v1480
      %1570 = vmatpush2.msra.mxu0 %v1479
      %1571 = vmatprep.subr.mxu0 %v1472
      %1572 = vmatpush2.msra.mxu0 %v1471
      %1573 = vmatprep.subr.mxu0 %v1464
      %1574 = vmatpush2.msra.mxu0 %v1463
      %1575 = vmatprep.subr.mxu0 %v1456
      %1576 = vmatpush2.msra.mxu0 %v1455
      %1577 = vmatprep.subr.mxu0 %v1448
      %1578 = vmatpush2.msra.mxu0 %v1447
      %1579 = vmatprep.subr.mxu0 %v1440
      %1580 = vmatpush2.msra.mxu0 %v1439
      %1581 = vmatprep.subr.mxu0 %v1432
      %1582 = vmatpush2.msra.mxu0 %v1431
      %1583 = vmatprep.subr.mxu0 %v1424
      %1584 = vmatpush2.msra.mxu0 %v1423
      %1585 = vmatprep.subr.mxu0 %v1416
      %1586 = vmatpush2.msra.mxu0 %v1415
      %1587 = vmatprep.subr.mxu0 %v1408
      %1588 = vmatpush2.msra.mxu0 %v1407
      %1589 = vmatprep.subr.mxu0 %v1400
      %1590 = vmatpush2.msra.mxu0 %v1399
      %1591 = vmatprep.mubr.f32.mxu0 %v203
      %1592 = vmatmul.mubr.f32.gmra.mxu0 %v202
      %v1593 = vpop.f32.mrf.mxu0
      %v1594 = vadd.f32 0.0, %v1593
      %v1595 = vpop.f32.mrf.mxu0
      %v1596 = vadd.f32 0.0, %v1595
      %1597 = vdwg.mxu0
      %1598 = vmatprep.subr.mxu0 %v1394
      %1599 = vmatpush1.msra.mxu0 %v1393
      %1600 = vmatprep.subr.mxu0 %v1386
      %1601 = vmatpush1.msra.mxu0 %v1385
      %1602 = vmatprep.subr.mxu0 %v1378
      %1603 = vmatpush1.msra.mxu0 %v1377
      %1604 = vmatprep.subr.mxu0 %v1370
      %1605 = vmatpush1.msra.mxu0 %v1369
      %1606 = vmatprep.subr.mxu0 %v1362
      %1607 = vmatpush1.msra.mxu0 %v1361
      %1608 = vmatprep.subr.mxu0 %v1354
      %1609 = vmatpush1.msra.mxu0 %v1353
      %1610 = vmatprep.subr.mxu0 %v1346
      %1611 = vmatpush1.msra.mxu0 %v1345
      %1612 = vmatprep.subr.mxu0 %v1338
      %1613 = vmatpush1.msra.mxu0 %v1337
      %1614 = vmatprep.subr.mxu0 %v1330
      %1615 = vmatpush1.msra.mxu0 %v1329
      %1616 = vmatprep.subr.mxu0 %v1322
      %1617 = vmatpush1.msra.mxu0 %v1321
      %1618 = vmatprep.subr.mxu0 %v1314
      %1619 = vmatpush1.msra.mxu0 %v1313
      %1620 = vmatprep.subr.mxu0 %v1306
      %1621 = vmatpush1.msra.mxu0 %v1305
      %1622 = vmatprep.subr.mxu0 %v1298
      %1623 = vmatpush1.msra.mxu0 %v1297
      %1624 = vmatprep.subr.mxu0 %v1290
      %1625 = vmatpush1.msra.mxu0 %v1289
      %1626 = vmatprep.subr.mxu0 %v1282
      %1627 = vmatpush1.msra.mxu0 %v1281
      %1628 = vmatprep.subr.mxu0 %v1274
      %1629 = vmatpush1.msra.mxu0 %v1273
      %1630 = vmatprep.subr.mxu0 %v1522
      %1631 = vmatpush2.msra.mxu0 %v1521
      %1632 = vmatprep.subr.mxu0 %v1514
      %1633 = vmatpush2.msra.mxu0 %v1513
      %1634 = vmatprep.subr.mxu0 %v1506
      %1635 = vmatpush2.msra.mxu0 %v1505
      %1636 = vmatprep.subr.mxu0 %v1498
      %1637 = vmatpush2.msra.mxu0 %v1497
      %1638 = vmatprep.subr.mxu0 %v1490
      %1639 = vmatpush2.msra.mxu0 %v1489
      %1640 = vmatprep.subr.mxu0 %v1482
      %1641 = vmatpush2.msra.mxu0 %v1481
      %1642 = vmatprep.subr.mxu0 %v1474
      %1643 = vmatpush2.msra.mxu0 %v1473
      %1644 = vmatprep.subr.mxu0 %v1466
      %1645 = vmatpush2.msra.mxu0 %v1465
      %1646 = vmatprep.subr.mxu0 %v1458
      %1647 = vmatpush2.msra.mxu0 %v1457
      %1648 = vmatprep.subr.mxu0 %v1450
      %1649 = vmatpush2.msra.mxu0 %v1449
      %1650 = vmatprep.subr.mxu0 %v1442
      %1651 = vmatpush2.msra.mxu0 %v1441
      %1652 = vmatprep.subr.mxu0 %v1434
      %1653 = vmatpush2.msra.mxu0 %v1433
      %1654 = vmatprep.subr.mxu0 %v1426
      %1655 = vmatpush2.msra.mxu0 %v1425
      %1656 = vmatprep.subr.mxu0 %v1418
      %1657 = vmatpush2.msra.mxu0 %v1417
      %1658 = vmatprep.subr.mxu0 %v1410
      %1659 = vmatpush2.msra.mxu0 %v1409
      %1660 = vmatprep.subr.mxu0 %v1402
      %1661 = vmatpush2.msra.mxu0 %v1401
      %1662 = vmatprep.mubr.f32.mxu0 %v203
      %1663 = vmatmul.mubr.f32.gmra.mxu0 %v202
      %v1664 = vpop.f32.mrf.mxu0
      %v1665 = vadd.f32 0.0, %v1664
      %v1666 = vpop.f32.mrf.mxu0
      %v1667 = vadd.f32 0.0, %v1666
      %1668 = vdwg.mxu0
      %1669 = vmatprep.subr.mxu0 %v1396
      %1670 = vmatpush1.msra.mxu0 %v1395
      %1671 = vmatprep.subr.mxu0 %v1388
      %1672 = vmatpush1.msra.mxu0 %v1387
      %1673 = vmatprep.subr.mxu0 %v1380
      %1674 = vmatpush1.msra.mxu0 %v1379
      %1675 = vmatprep.subr.mxu0 %v1372
      %1676 = vmatpush1.msra.mxu0 %v1371
      %1677 = vmatprep.subr.mxu0 %v1364
      %1678 = vmatpush1.msra.mxu0 %v1363
      %1679 = vmatprep.subr.mxu0 %v1356
      %1680 = vmatpush1.msra.mxu0 %v1355
      %1681 = vmatprep.subr.mxu0 %v1348
      %1682 = vmatpush1.msra.mxu0 %v1347
      %1683 = vmatprep.subr.mxu0 %v1340
      %1684 = vmatpush1.msra.mxu0 %v1339
      %1685 = vmatprep.subr.mxu0 %v1332
      %1686 = vmatpush1.msra.mxu0 %v1331
      %1687 = vmatprep.subr.mxu0 %v1324
      %1688 = vmatpush1.msra.mxu0 %v1323
      %1689 = vmatprep.subr.mxu0 %v1316
      %1690 = vmatpush1.msra.mxu0 %v1315
      %1691 = vmatprep.subr.mxu0 %v1308
      %1692 = vmatpush1.msra.mxu0 %v1307
      %1693 = vmatprep.subr.mxu0 %v1300
      %1694 = vmatpush1.msra.mxu0 %v1299
      %1695 = vmatprep.subr.mxu0 %v1292
      %1696 = vmatpush1.msra.mxu0 %v1291
      %1697 = vmatprep.subr.mxu0 %v1284
      %1698 = vmatpush1.msra.mxu0 %v1283
      %1699 = vmatprep.subr.mxu0 %v1276
      %1700 = vmatpush1.msra.mxu0 %v1275
      %1701 = vmatprep.subr.mxu0 %v1524
      %1702 = vmatpush2.msra.mxu0 %v1523
      %1703 = vmatprep.subr.mxu0 %v1516
      %1704 = vmatpush2.msra.mxu0 %v1515
      %1705 = vmatprep.subr.mxu0 %v1508
      %1706 = vmatpush2.msra.mxu0 %v1507
      %1707 = vmatprep.subr.mxu0 %v1500
      %1708 = vmatpush2.msra.mxu0 %v1499
      %1709 = vmatprep.subr.mxu0 %v1492
      %1710 = vmatpush2.msra.mxu0 %v1491
      %1711 = vmatprep.subr.mxu0 %v1484
      %1712 = vmatpush2.msra.mxu0 %v1483
      %1713 = vmatprep.subr.mxu0 %v1476
      %1714 = vmatpush2.msra.mxu0 %v1475
      %1715 = vmatprep.subr.mxu0 %v1468
      %1716 = vmatpush2.msra.mxu0 %v1467
      %1717 = vmatprep.subr.mxu0 %v1460
      %1718 = vmatpush2.msra.mxu0 %v1459
      %1719 = vmatprep.subr.mxu0 %v1452
      %1720 = vmatpush2.msra.mxu0 %v1451
      %1721 = vmatprep.subr.mxu0 %v1444
      %1722 = vmatpush2.msra.mxu0 %v1443
      %1723 = vmatprep.subr.mxu0 %v1436
      %1724 = vmatpush2.msra.mxu0 %v1435
      %1725 = vmatprep.subr.mxu0 %v1428
      %1726 = vmatpush2.msra.mxu0 %v1427
      %1727 = vmatprep.subr.mxu0 %v1420
      %1728 = vmatpush2.msra.mxu0 %v1419
      %1729 = vmatprep.subr.mxu0 %v1412
      %1730 = vmatpush2.msra.mxu0 %v1411
      %1731 = vmatprep.subr.mxu0 %v1404
      %1732 = vmatpush2.msra.mxu0 %v1403
      %1733 = vmatprep.mubr.f32.mxu0 %v203
      %1734 = vmatmul.mubr.f32.gmra.mxu0 %v202
      %v1735 = vpop.f32.mrf.mxu0
      %v1736 = vadd.f32 0.0, %v1735
      %v1737 = vpop.f32.mrf.mxu0
      %v1738 = vadd.f32 0.0, %v1737
      %1739 = vdwg.mxu0
      %1740 = vmatprep.subr.mxu0 %v1398
      %1741 = vmatpush1.msra.mxu0 %v1397
      %1742 = vmatprep.subr.mxu0 %v1390
      %1743 = vmatpush1.msra.mxu0 %v1389
      %1744 = vmatprep.subr.mxu0 %v1382
      %1745 = vmatpush1.msra.mxu0 %v1381
      %1746 = vmatprep.subr.mxu0 %v1374
      %1747 = vmatpush1.msra.mxu0 %v1373
      %1748 = vmatprep.subr.mxu0 %v1366
      %1749 = vmatpush1.msra.mxu0 %v1365
      %1750 = vmatprep.subr.mxu0 %v1358
      %1751 = vmatpush1.msra.mxu0 %v1357
      %1752 = vmatprep.subr.mxu0 %v1350
      %1753 = vmatpush1.msra.mxu0 %v1349
      %1754 = vmatprep.subr.mxu0 %v1342
      %1755 = vmatpush1.msra.mxu0 %v1341
      %1756 = vmatprep.subr.mxu0 %v1334
      %1757 = vmatpush1.msra.mxu0 %v1333
      %1758 = vmatprep.subr.mxu0 %v1326
      %1759 = vmatpush1.msra.mxu0 %v1325
      %1760 = vmatprep.subr.mxu0 %v1318
      %1761 = vmatpush1.msra.mxu0 %v1317
      %1762 = vmatprep.subr.mxu0 %v1310
      %1763 = vmatpush1.msra.mxu0 %v1309
      %1764 = vmatprep.subr.mxu0 %v1302
      %1765 = vmatpush1.msra.mxu0 %v1301
      %1766 = vmatprep.subr.mxu0 %v1294
      %1767 = vmatpush1.msra.mxu0 %v1293
      %1768 = vmatprep.subr.mxu0 %v1286
      %1769 = vmatpush1.msra.mxu0 %v1285
      %1770 = vmatprep.subr.mxu0 %v1278
      %1771 = vmatpush1.msra.mxu0 %v1277
      %1772 = vmatprep.subr.mxu0 %v1526
      %1773 = vmatpush2.msra.mxu0 %v1525
      %1774 = vmatprep.subr.mxu0 %v1518
      %1775 = vmatpush2.msra.mxu0 %v1517
      %1776 = vmatprep.subr.mxu0 %v1510
      %1777 = vmatpush2.msra.mxu0 %v1509
      %1778 = vmatprep.subr.mxu0 %v1502
      %1779 = vmatpush2.msra.mxu0 %v1501
      %1780 = vmatprep.subr.mxu0 %v1494
      %1781 = vmatpush2.msra.mxu0 %v1493
      %1782 = vmatprep.subr.mxu0 %v1486
      %1783 = vmatpush2.msra.mxu0 %v1485
      %1784 = vmatprep.subr.mxu0 %v1478
      %1785 = vmatpush2.msra.mxu0 %v1477
      %1786 = vmatprep.subr.mxu0 %v1470
      %1787 = vmatpush2.msra.mxu0 %v1469
      %1788 = vmatprep.subr.mxu0 %v1462
      %1789 = vmatpush2.msra.mxu0 %v1461
      %1790 = vmatprep.subr.mxu0 %v1454
      %1791 = vmatpush2.msra.mxu0 %v1453
      %1792 = vmatprep.subr.mxu0 %v1446
      %1793 = vmatpush2.msra.mxu0 %v1445
      %1794 = vmatprep.subr.mxu0 %v1438
      %1795 = vmatpush2.msra.mxu0 %v1437
      %1796 = vmatprep.subr.mxu0 %v1430
      %1797 = vmatpush2.msra.mxu0 %v1429
      %1798 = vmatprep.subr.mxu0 %v1422
      %1799 = vmatpush2.msra.mxu0 %v1421
      %1800 = vmatprep.subr.mxu0 %v1414
      %1801 = vmatpush2.msra.mxu0 %v1413
      %1802 = vmatprep.subr.mxu0 %v1406
      %1803 = vmatpush2.msra.mxu0 %v1405
      %1804 = vmatprep.mubr.f32.mxu0 %v203
      %1805 = vmatmul.mubr.f32.gmra.mxu0 %v202
      %v1806 = vpop.f32.mrf.mxu0
      %v1807 = vadd.f32 0.0, %v1806
      %v1808 = vpop.f32.mrf.mxu0
      %v1809 = vadd.f32 0.0, %v1808
      %1810 = vdwg.mxu0
      %v1811 = vadd.f32 %v1054, %v1594
      %v1812 = vadd.f32 %v1056, %v1596
      %v1813 = vadd.f32 %v1125, %v1665
      %v1814 = vadd.f32 %v1127, %v1667
      %v1815 = vadd.f32 %v1196, %v1736
      %v1816 = vadd.f32 %v1198, %v1738
      %v1817 = vadd.f32 %v1267, %v1807
      %v1818 = vadd.f32 %v1269, %v1809
      %v1819 = vld [vmem:[%s4] sm:$0xff]
      %v1821 = vlaneseq
      %v1822 = vshrl.u32 %v1821, 7
      %v1823 = vsub.s32 0, %v1822
      %v1824 = vrot.slane %v1819, %v1823
      %v1825 = vlaneseq
      %v1826 = vshrl.u32 %v1825, 7
      %v1827 = vsub.s32 1, %v1826
      %v1828 = vrot.slane %v1819, %v1827
      %v1829 = vlaneseq
      %v1830 = vshrl.u32 %v1829, 7
      %v1831 = vsub.s32 2, %v1830
      %v1832 = vrot.slane %v1819, %v1831
      %v1833 = vlaneseq
      %v1834 = vshrl.u32 %v1833, 7
      %v1835 = vsub.s32 3, %v1834
      %v1836 = vrot.slane %v1819, %v1835
      %v1837 = vlaneseq
      %v1838 = vshrl.u32 %v1837, 7
      %v1839 = vsub.s32 4, %v1838
      %v1840 = vrot.slane %v1819, %v1839
      %v1841 = vlaneseq
      %v1842 = vshrl.u32 %v1841, 7
      %v1843 = vsub.s32 5, %v1842
      %v1844 = vrot.slane %v1819, %v1843
      %v1845 = vlaneseq
      %v1846 = vshrl.u32 %v1845, 7
      %v1847 = vsub.s32 6, %v1846
      %v1848 = vrot.slane %v1819, %v1847
      %v1849 = vlaneseq
      %v1850 = vshrl.u32 %v1849, 7
      %v1851 = vsub.s32 7, %v1850
      %v1852 = vrot.slane %v1819, %v1851
      %v1861 = vadd.f32 %v1811, %v1824
      %v1862 = vadd.f32 %v1812, %v1828
      %v1863 = vadd.f32 %v1813, %v1832
      %v1864 = vadd.f32 %v1814, %v1836
      %v1865 = vadd.f32 %v1815, %v1840
      %v1866 = vadd.f32 %v1816, %v1844
      %v1867 = vadd.f32 %v1817, %v1848
      %v1868 = vadd.f32 %v1818, %v1852
      %v1869 = vxor.u32 %v1861, 2147483648
      %v1870 = vxor.u32 %v1862, 2147483648
      %v1871 = vmul.f32 %v1869, 1.442695
      %v1872 = vpow.pop %v1871
      %v1873 = vmul.f32 %v1870, 1.442695
      %v1874 = vpow.pop %v1873
      %v1875 = vadd.f32 %v1872, 1.0
      %v1876 = vadd.f32 %v1874, 1.0
      %v1877 = vrcp.pop %v1875
      %v1878 = vmul.f32 1.0, %v1877
      %v1879 = vrcp.pop %v1876
      %v1880 = vmul.f32 1.0, %v1879
      %v1881 = vxor.u32 %v1863, 2147483648
      %v1882 = vxor.u32 %v1864, 2147483648
      %v1883 = vmul.f32 %v1881, 1.442695
      %v1884 = vpow.pop %v1883
      %v1885 = vmul.f32 %v1882, 1.442695
      %v1886 = vpow.pop %v1885
      %v1887 = vadd.f32 %v1884, 1.0
      %v1888 = vadd.f32 %v1886, 1.0
      %v1889 = vrcp.pop %v1887
      %v1890 = vmul.f32 1.0, %v1889
      %v1891 = vrcp.pop %v1888
      %v1892 = vmul.f32 1.0, %v1891
      %v1893 = vtanh.pop %v1865
      %v1894 = vtanh.pop %v1866
      %v1895 = vxor.u32 %v1867, 2147483648
      %v1896 = vxor.u32 %v1868, 2147483648
      %v1897 = vmul.f32 %v1895, 1.442695
      %v1898 = vpow.pop %v1897
      %v1899 = vmul.f32 %v1896, 1.442695
      %v1900 = vpow.pop %v1899
      %v1901 = vadd.f32 %v1898, 1.0
      %v1902 = vadd.f32 %v1900, 1.0
      %v1903 = vrcp.pop %v1901
      %v1904 = vmul.f32 1.0, %v1903
      %v1905 = vrcp.pop %v1902
      %v1906 = vmul.f32 1.0, %v1905
      %v1907 = vmul.f32 %v1890, %v204
      %v1908 = vmul.f32 %v1892, %v205
      %v1909 = vmul.f32 %v1878, %v1893
      %v1910 = vmul.f32 %v1880, %v1894
      %v1911 = vadd.f32 %v1907, %v1909
      %v1912 = vadd.f32 %v1908, %v1910
      %v1913 = vtanh.pop %v1911
      %v1914 = vtanh.pop %v1912
      %v1915 = vmul.f32 %v1904, %v1913
      %v1916 = vmul.f32 %v1906, %v1914
      %v1917 = vld [vmem:[%s5] sm:$0xff]
      %v1918 = vld [vmem:[%s5 + $0x8] sm:$0xff]
      %v1919 = vld [vmem:[%s5 + $0x10] sm:$0xff]
      %v1920 = vld [vmem:[%s5 + $0x18] sm:$0xff]
      %v1921 = vld [vmem:[%s5 + $0x20] sm:$0xff]
      %v1922 = vld [vmem:[%s5 + $0x28] sm:$0xff]
      %v1923 = vld [vmem:[%s5 + $0x30] sm:$0xff]
      %v1924 = vld [vmem:[%s5 + $0x38] sm:$0xff]
      %v1925 = vld [vmem:[%s5 + $0x40] sm:$0xff]
      %v1926 = vld [vmem:[%s5 + $0x48] sm:$0xff]
      %v1927 = vld [vmem:[%s5 + $0x50] sm:$0xff]
      %v1928 = vld [vmem:[%s5 + $0x58] sm:$0xff]
      %v1929 = vld [vmem:[%s5 + $0x60] sm:$0xff]
      %v1930 = vld [vmem:[%s5 + $0x68] sm:$0xff]
      %v1931 = vld [vmem:[%s5 + $0x70] sm:$0xff]
      %v1932 = vld [vmem:[%s5 + $0x78] sm:$0xff]
      %v1933 = vld [vmem:[%s5 + $0x80] sm:$0xff]
      %v1934 = vld [vmem:[%s5 + $0x88] sm:$0xff]
      %v1935 = vld [vmem:[%s5 + $0x90] sm:$0xff]
      %v1936 = vld [vmem:[%s5 + $0x98] sm:$0xff]
      %v1937 = vld [vmem:[%s5 + $0xa0] sm:$0xff]
      %v1938 = vld [vmem:[%s5 + $0xa8] sm:$0xff]
      %v1939 = vld [vmem:[%s5 + $0xb0] sm:$0xff]
      %v1940 = vld [vmem:[%s5 + $0xb8] sm:$0xff]
      %v1941 = vld [vmem:[%s5 + $0xc0] sm:$0xff]
      %v1942 = vld [vmem:[%s5 + $0xc8] sm:$0xff]
      %v1943 = vld [vmem:[%s5 + $0xd0] sm:$0xff]
      %v1944 = vld [vmem:[%s5 + $0xd8] sm:$0xff]
      %v1945 = vld [vmem:[%s5 + $0xe0] sm:$0xff]
      %v1946 = vld [vmem:[%s5 + $0xe8] sm:$0xff]
      %v1947 = vld [vmem:[%s5 + $0xf0] sm:$0xff]
      %v1948 = vld [vmem:[%s5 + $0xf8] sm:$0xff]
      %v1949 = vld [vmem:[%s5 + $0x100] sm:$0xff]
      %v1950 = vld [vmem:[%s5 + $0x108] sm:$0xff]
      %v1951 = vld [vmem:[%s5 + $0x110] sm:$0xff]
      %v1952 = vld [vmem:[%s5 + $0x118] sm:$0xff]
      %v1953 = vld [vmem:[%s5 + $0x120] sm:$0xff]
      %v1954 = vld [vmem:[%s5 + $0x128] sm:$0xff]
      %v1955 = vld [vmem:[%s5 + $0x130] sm:$0xff]
      %v1956 = vld [vmem:[%s5 + $0x138] sm:$0xff]
      %v1957 = vld [vmem:[%s5 + $0x140] sm:$0xff]
      %v1958 = vld [vmem:[%s5 + $0x148] sm:$0xff]
      %v1959 = vld [vmem:[%s5 + $0x150] sm:$0xff]
      %v1960 = vld [vmem:[%s5 + $0x158] sm:$0xff]
      %v1961 = vld [vmem:[%s5 + $0x160] sm:$0xff]
      %v1962 = vld [vmem:[%s5 + $0x168] sm:$0xff]
      %v1963 = vld [vmem:[%s5 + $0x170] sm:$0xff]
      %v1964 = vld [vmem:[%s5 + $0x178] sm:$0xff]
      %v1965 = vld [vmem:[%s5 + $0x180] sm:$0xff]
      %v1966 = vld [vmem:[%s5 + $0x188] sm:$0xff]
      %v1967 = vld [vmem:[%s5 + $0x190] sm:$0xff]
      %v1968 = vld [vmem:[%s5 + $0x198] sm:$0xff]
      %v1969 = vld [vmem:[%s5 + $0x1a0] sm:$0xff]
      %v1970 = vld [vmem:[%s5 + $0x1a8] sm:$0xff]
      %v1971 = vld [vmem:[%s5 + $0x1b0] sm:$0xff]
      %v1972 = vld [vmem:[%s5 + $0x1b8] sm:$0xff]
      %v1973 = vld [vmem:[%s5 + $0x1c0] sm:$0xff]
      %v1974 = vld [vmem:[%s5 + $0x1c8] sm:$0xff]
      %v1975 = vld [vmem:[%s5 + $0x1d0] sm:$0xff]
      %v1976 = vld [vmem:[%s5 + $0x1d8] sm:$0xff]
      %v1977 = vld [vmem:[%s5 + $0x1e0] sm:$0xff]
      %v1978 = vld [vmem:[%s5 + $0x1e8] sm:$0xff]
      %v1979 = vld [vmem:[%s5 + $0x1f0] sm:$0xff]
      %v1980 = vld [vmem:[%s5 + $0x1f8] sm:$0xff]
      %v1981 = vld [vmem:[%s5 + $0x200] sm:$0xff]
      %v1982 = vld [vmem:[%s5 + $0x208] sm:$0xff]
      %v1983 = vld [vmem:[%s5 + $0x210] sm:$0xff]
      %v1984 = vld [vmem:[%s5 + $0x218] sm:$0xff]
      %v1985 = vld [vmem:[%s5 + $0x220] sm:$0xff]
      %v1986 = vld [vmem:[%s5 + $0x228] sm:$0xff]
      %v1987 = vld [vmem:[%s5 + $0x230] sm:$0xff]
      %v1988 = vld [vmem:[%s5 + $0x238] sm:$0xff]
      %v1989 = vld [vmem:[%s5 + $0x240] sm:$0xff]
      %v1990 = vld [vmem:[%s5 + $0x248] sm:$0xff]
      %v1991 = vld [vmem:[%s5 + $0x250] sm:$0xff]
      %v1992 = vld [vmem:[%s5 + $0x258] sm:$0xff]
      %v1993 = vld [vmem:[%s5 + $0x260] sm:$0xff]
      %v1994 = vld [vmem:[%s5 + $0x268] sm:$0xff]
      %v1995 = vld [vmem:[%s5 + $0x270] sm:$0xff]
      %v1996 = vld [vmem:[%s5 + $0x278] sm:$0xff]
      %v1997 = vld [vmem:[%s5 + $0x280] sm:$0xff]
      %v1998 = vld [vmem:[%s5 + $0x288] sm:$0xff]
      %v1999 = vld [vmem:[%s5 + $0x290] sm:$0xff]
      %v2000 = vld [vmem:[%s5 + $0x298] sm:$0xff]
      %v2001 = vld [vmem:[%s5 + $0x2a0] sm:$0xff]
      %v2002 = vld [vmem:[%s5 + $0x2a8] sm:$0xff]
      %v2003 = vld [vmem:[%s5 + $0x2b0] sm:$0xff]
      %v2004 = vld [vmem:[%s5 + $0x2b8] sm:$0xff]
      %v2005 = vld [vmem:[%s5 + $0x2c0] sm:$0xff]
      %v2006 = vld [vmem:[%s5 + $0x2c8] sm:$0xff]
      %v2007 = vld [vmem:[%s5 + $0x2d0] sm:$0xff]
      %v2008 = vld [vmem:[%s5 + $0x2d8] sm:$0xff]
      %v2009 = vld [vmem:[%s5 + $0x2e0] sm:$0xff]
      %v2010 = vld [vmem:[%s5 + $0x2e8] sm:$0xff]
      %v2011 = vld [vmem:[%s5 + $0x2f0] sm:$0xff]
      %v2012 = vld [vmem:[%s5 + $0x2f8] sm:$0xff]
      %v2013 = vld [vmem:[%s5 + $0x300] sm:$0xff]
      %v2014 = vld [vmem:[%s5 + $0x308] sm:$0xff]
      %v2015 = vld [vmem:[%s5 + $0x310] sm:$0xff]
      %v2016 = vld [vmem:[%s5 + $0x318] sm:$0xff]
      %v2017 = vld [vmem:[%s5 + $0x320] sm:$0xff]
      %v2018 = vld [vmem:[%s5 + $0x328] sm:$0xff]
      %v2019 = vld [vmem:[%s5 + $0x330] sm:$0xff]
      %v2020 = vld [vmem:[%s5 + $0x338] sm:$0xff]
      %v2021 = vld [vmem:[%s5 + $0x340] sm:$0xff]
      %v2022 = vld [vmem:[%s5 + $0x348] sm:$0xff]
      %v2023 = vld [vmem:[%s5 + $0x350] sm:$0xff]
      %v2024 = vld [vmem:[%s5 + $0x358] sm:$0xff]
      %v2025 = vld [vmem:[%s5 + $0x360] sm:$0xff]
      %v2026 = vld [vmem:[%s5 + $0x368] sm:$0xff]
      %v2027 = vld [vmem:[%s5 + $0x370] sm:$0xff]
      %v2028 = vld [vmem:[%s5 + $0x378] sm:$0xff]
      %v2029 = vld [vmem:[%s5 + $0x380] sm:$0xff]
      %v2030 = vld [vmem:[%s5 + $0x388] sm:$0xff]
      %v2031 = vld [vmem:[%s5 + $0x390] sm:$0xff]
      %v2032 = vld [vmem:[%s5 + $0x398] sm:$0xff]
      %v2033 = vld [vmem:[%s5 + $0x3a0] sm:$0xff]
      %v2034 = vld [vmem:[%s5 + $0x3a8] sm:$0xff]
      %v2035 = vld [vmem:[%s5 + $0x3b0] sm:$0xff]
      %v2036 = vld [vmem:[%s5 + $0x3b8] sm:$0xff]
      %v2037 = vld [vmem:[%s5 + $0x3c0] sm:$0xff]
      %v2038 = vld [vmem:[%s5 + $0x3c8] sm:$0xff]
      %v2039 = vld [vmem:[%s5 + $0x3d0] sm:$0xff]
      %v2040 = vld [vmem:[%s5 + $0x3d8] sm:$0xff]
      %v2041 = vld [vmem:[%s5 + $0x3e0] sm:$0xff]
      %v2042 = vld [vmem:[%s5 + $0x3e8] sm:$0xff]
      %v2043 = vld [vmem:[%s5 + $0x3f0] sm:$0xff]
      %v2044 = vld [vmem:[%s5 + $0x3f8] sm:$0xff]
      %v2045 = vld [vmem:[%s5 + $0x400] sm:$0xff]
      %v2046 = vld [vmem:[%s5 + $0x408] sm:$0xff]
      %v2047 = vld [vmem:[%s5 + $0x410] sm:$0xff]
      %v2048 = vld [vmem:[%s5 + $0x418] sm:$0xff]
      %v2049 = vld [vmem:[%s5 + $0x420] sm:$0xff]
      %v2050 = vld [vmem:[%s5 + $0x428] sm:$0xff]
      %v2051 = vld [vmem:[%s5 + $0x430] sm:$0xff]
      %v2052 = vld [vmem:[%s5 + $0x438] sm:$0xff]
      %v2053 = vld [vmem:[%s5 + $0x440] sm:$0xff]
      %v2054 = vld [vmem:[%s5 + $0x448] sm:$0xff]
      %v2055 = vld [vmem:[%s5 + $0x450] sm:$0xff]
      %v2056 = vld [vmem:[%s5 + $0x458] sm:$0xff]
      %v2057 = vld [vmem:[%s5 + $0x460] sm:$0xff]
      %v2058 = vld [vmem:[%s5 + $0x468] sm:$0xff]
      %v2059 = vld [vmem:[%s5 + $0x470] sm:$0xff]
      %v2060 = vld [vmem:[%s5 + $0x478] sm:$0xff]
      %v2061 = vld [vmem:[%s5 + $0x480] sm:$0xff]
      %v2062 = vld [vmem:[%s5 + $0x488] sm:$0xff]
      %v2063 = vld [vmem:[%s5 + $0x490] sm:$0xff]
      %v2064 = vld [vmem:[%s5 + $0x498] sm:$0xff]
      %v2065 = vld [vmem:[%s5 + $0x4a0] sm:$0xff]
      %v2066 = vld [vmem:[%s5 + $0x4a8] sm:$0xff]
      %v2067 = vld [vmem:[%s5 + $0x4b0] sm:$0xff]
      %v2068 = vld [vmem:[%s5 + $0x4b8] sm:$0xff]
      %v2069 = vld [vmem:[%s5 + $0x4c0] sm:$0xff]
      %v2070 = vld [vmem:[%s5 + $0x4c8] sm:$0xff]
      %v2071 = vld [vmem:[%s5 + $0x4d0] sm:$0xff]
      %v2072 = vld [vmem:[%s5 + $0x4d8] sm:$0xff]
      %v2073 = vld [vmem:[%s5 + $0x4e0] sm:$0xff]
      %v2074 = vld [vmem:[%s5 + $0x4e8] sm:$0xff]
      %v2075 = vld [vmem:[%s5 + $0x4f0] sm:$0xff]
      %v2076 = vld [vmem:[%s5 + $0x4f8] sm:$0xff]
      %v2077 = vld [vmem:[%s5 + $0x500] sm:$0xff]
      %v2078 = vld [vmem:[%s5 + $0x508] sm:$0xff]
      %v2079 = vld [vmem:[%s5 + $0x510] sm:$0xff]
      %v2080 = vld [vmem:[%s5 + $0x518] sm:$0xff]
      %v2081 = vld [vmem:[%s5 + $0x520] sm:$0xff]
      %v2082 = vld [vmem:[%s5 + $0x528] sm:$0xff]
      %v2083 = vld [vmem:[%s5 + $0x530] sm:$0xff]
      %v2084 = vld [vmem:[%s5 + $0x538] sm:$0xff]
      %v2085 = vld [vmem:[%s5 + $0x540] sm:$0xff]
      %v2086 = vld [vmem:[%s5 + $0x548] sm:$0xff]
      %v2087 = vld [vmem:[%s5 + $0x550] sm:$0xff]
      %v2088 = vld [vmem:[%s5 + $0x558] sm:$0xff]
      %v2089 = vld [vmem:[%s5 + $0x560] sm:$0xff]
      %v2090 = vld [vmem:[%s5 + $0x568] sm:$0xff]
      %v2091 = vld [vmem:[%s5 + $0x570] sm:$0xff]
      %v2092 = vld [vmem:[%s5 + $0x578] sm:$0xff]
      %v2093 = vld [vmem:[%s5 + $0x580] sm:$0xff]
      %v2094 = vld [vmem:[%s5 + $0x588] sm:$0xff]
      %v2095 = vld [vmem:[%s5 + $0x590] sm:$0xff]
      %v2096 = vld [vmem:[%s5 + $0x598] sm:$0xff]
      %v2097 = vld [vmem:[%s5 + $0x5a0] sm:$0xff]
      %v2098 = vld [vmem:[%s5 + $0x5a8] sm:$0xff]
      %v2099 = vld [vmem:[%s5 + $0x5b0] sm:$0xff]
      %v2100 = vld [vmem:[%s5 + $0x5b8] sm:$0xff]
      %v2101 = vld [vmem:[%s5 + $0x5c0] sm:$0xff]
      %v2102 = vld [vmem:[%s5 + $0x5c8] sm:$0xff]
      %v2103 = vld [vmem:[%s5 + $0x5d0] sm:$0xff]
      %v2104 = vld [vmem:[%s5 + $0x5d8] sm:$0xff]
      %v2105 = vld [vmem:[%s5 + $0x5e0] sm:$0xff]
      %v2106 = vld [vmem:[%s5 + $0x5e8] sm:$0xff]
      %v2107 = vld [vmem:[%s5 + $0x5f0] sm:$0xff]
      %v2108 = vld [vmem:[%s5 + $0x5f8] sm:$0xff]
      %v2109 = vld [vmem:[%s5 + $0x600] sm:$0xff]
      %v2110 = vld [vmem:[%s5 + $0x608] sm:$0xff]
      %v2111 = vld [vmem:[%s5 + $0x610] sm:$0xff]
      %v2112 = vld [vmem:[%s5 + $0x618] sm:$0xff]
      %v2113 = vld [vmem:[%s5 + $0x620] sm:$0xff]
      %v2114 = vld [vmem:[%s5 + $0x628] sm:$0xff]
      %v2115 = vld [vmem:[%s5 + $0x630] sm:$0xff]
      %v2116 = vld [vmem:[%s5 + $0x638] sm:$0xff]
      %v2117 = vld [vmem:[%s5 + $0x640] sm:$0xff]
      %v2118 = vld [vmem:[%s5 + $0x648] sm:$0xff]
      %v2119 = vld [vmem:[%s5 + $0x650] sm:$0xff]
      %v2120 = vld [vmem:[%s5 + $0x658] sm:$0xff]
      %v2121 = vld [vmem:[%s5 + $0x660] sm:$0xff]
      %v2122 = vld [vmem:[%s5 + $0x668] sm:$0xff]
      %v2123 = vld [vmem:[%s5 + $0x670] sm:$0xff]
      %v2124 = vld [vmem:[%s5 + $0x678] sm:$0xff]
      %v2125 = vld [vmem:[%s5 + $0x680] sm:$0xff]
      %v2126 = vld [vmem:[%s5 + $0x688] sm:$0xff]
      %v2127 = vld [vmem:[%s5 + $0x690] sm:$0xff]
      %v2128 = vld [vmem:[%s5 + $0x698] sm:$0xff]
      %v2129 = vld [vmem:[%s5 + $0x6a0] sm:$0xff]
      %v2130 = vld [vmem:[%s5 + $0x6a8] sm:$0xff]
      %v2131 = vld [vmem:[%s5 + $0x6b0] sm:$0xff]
      %v2132 = vld [vmem:[%s5 + $0x6b8] sm:$0xff]
      %v2133 = vld [vmem:[%s5 + $0x6c0] sm:$0xff]
      %v2134 = vld [vmem:[%s5 + $0x6c8] sm:$0xff]
      %v2135 = vld [vmem:[%s5 + $0x6d0] sm:$0xff]
      %v2136 = vld [vmem:[%s5 + $0x6d8] sm:$0xff]
      %v2137 = vld [vmem:[%s5 + $0x6e0] sm:$0xff]
      %v2138 = vld [vmem:[%s5 + $0x6e8] sm:$0xff]
      %v2139 = vld [vmem:[%s5 + $0x6f0] sm:$0xff]
      %v2140 = vld [vmem:[%s5 + $0x6f8] sm:$0xff]
      %v2141 = vld [vmem:[%s5 + $0x700] sm:$0xff]
      %v2142 = vld [vmem:[%s5 + $0x708] sm:$0xff]
      %v2143 = vld [vmem:[%s5 + $0x710] sm:$0xff]
      %v2144 = vld [vmem:[%s5 + $0x718] sm:$0xff]
      %v2145 = vld [vmem:[%s5 + $0x720] sm:$0xff]
      %v2146 = vld [vmem:[%s5 + $0x728] sm:$0xff]
      %v2147 = vld [vmem:[%s5 + $0x730] sm:$0xff]
      %v2148 = vld [vmem:[%s5 + $0x738] sm:$0xff]
      %v2149 = vld [vmem:[%s5 + $0x740] sm:$0xff]
      %v2150 = vld [vmem:[%s5 + $0x748] sm:$0xff]
      %v2151 = vld [vmem:[%s5 + $0x750] sm:$0xff]
      %v2152 = vld [vmem:[%s5 + $0x758] sm:$0xff]
      %v2153 = vld [vmem:[%s5 + $0x760] sm:$0xff]
      %v2154 = vld [vmem:[%s5 + $0x768] sm:$0xff]
      %v2155 = vld [vmem:[%s5 + $0x770] sm:$0xff]
      %v2156 = vld [vmem:[%s5 + $0x778] sm:$0xff]
      %v2157 = vld [vmem:[%s5 + $0x780] sm:$0xff]
      %v2158 = vld [vmem:[%s5 + $0x788] sm:$0xff]
      %v2159 = vld [vmem:[%s5 + $0x790] sm:$0xff]
      %v2160 = vld [vmem:[%s5 + $0x798] sm:$0xff]
      %v2161 = vld [vmem:[%s5 + $0x7a0] sm:$0xff]
      %v2162 = vld [vmem:[%s5 + $0x7a8] sm:$0xff]
      %v2163 = vld [vmem:[%s5 + $0x7b0] sm:$0xff]
      %v2164 = vld [vmem:[%s5 + $0x7b8] sm:$0xff]
      %v2165 = vld [vmem:[%s5 + $0x7c0] sm:$0xff]
      %v2166 = vld [vmem:[%s5 + $0x7c8] sm:$0xff]
      %v2167 = vld [vmem:[%s5 + $0x7d0] sm:$0xff]
      %v2168 = vld [vmem:[%s5 + $0x7d8] sm:$0xff]
      %v2169 = vld [vmem:[%s5 + $0x7e0] sm:$0xff]
      %v2170 = vld [vmem:[%s5 + $0x7e8] sm:$0xff]
      %v2171 = vld [vmem:[%s5 + $0x7f0] sm:$0xff]
      %v2172 = vld [vmem:[%s5 + $0x7f8] sm:$0xff]
      %v2173 = vld [vmem:[%s6] sm:$0xff]
      %v2174 = vld [vmem:[%s6 + $0x8] sm:$0xff]
      %v2175 = vld [vmem:[%s6 + $0x10] sm:$0xff]
      %v2176 = vld [vmem:[%s6 + $0x18] sm:$0xff]
      %v2177 = vld [vmem:[%s6 + $0x20] sm:$0xff]
      %v2178 = vld [vmem:[%s6 + $0x28] sm:$0xff]
      %v2179 = vld [vmem:[%s6 + $0x30] sm:$0xff]
      %v2180 = vld [vmem:[%s6 + $0x38] sm:$0xff]
      %v2181 = vld [vmem:[%s6 + $0x40] sm:$0xff]
      %v2182 = vld [vmem:[%s6 + $0x48] sm:$0xff]
      %v2183 = vld [vmem:[%s6 + $0x50] sm:$0xff]
      %v2184 = vld [vmem:[%s6 + $0x58] sm:$0xff]
      %v2185 = vld [vmem:[%s6 + $0x60] sm:$0xff]
      %v2186 = vld [vmem:[%s6 + $0x68] sm:$0xff]
      %v2187 = vld [vmem:[%s6 + $0x70] sm:$0xff]
      %v2188 = vld [vmem:[%s6 + $0x78] sm:$0xff]
      %v2189 = vld [vmem:[%s6 + $0x80] sm:$0xff]
      %v2190 = vld [vmem:[%s6 + $0x88] sm:$0xff]
      %v2191 = vld [vmem:[%s6 + $0x90] sm:$0xff]
      %v2192 = vld [vmem:[%s6 + $0x98] sm:$0xff]
      %v2193 = vld [vmem:[%s6 + $0xa0] sm:$0xff]
      %v2194 = vld [vmem:[%s6 + $0xa8] sm:$0xff]
      %v2195 = vld [vmem:[%s6 + $0xb0] sm:$0xff]
      %v2196 = vld [vmem:[%s6 + $0xb8] sm:$0xff]
      %v2197 = vld [vmem:[%s6 + $0xc0] sm:$0xff]
      %v2198 = vld [vmem:[%s6 + $0xc8] sm:$0xff]
      %v2199 = vld [vmem:[%s6 + $0xd0] sm:$0xff]
      %v2200 = vld [vmem:[%s6 + $0xd8] sm:$0xff]
      %v2201 = vld [vmem:[%s6 + $0xe0] sm:$0xff]
      %v2202 = vld [vmem:[%s6 + $0xe8] sm:$0xff]
      %v2203 = vld [vmem:[%s6 + $0xf0] sm:$0xff]
      %v2204 = vld [vmem:[%s6 + $0xf8] sm:$0xff]
      %v2205 = vld [vmem:[%s6 + $0x100] sm:$0xff]
      %v2206 = vld [vmem:[%s6 + $0x108] sm:$0xff]
      %v2207 = vld [vmem:[%s6 + $0x110] sm:$0xff]
      %v2208 = vld [vmem:[%s6 + $0x118] sm:$0xff]
      %v2209 = vld [vmem:[%s6 + $0x120] sm:$0xff]
      %v2210 = vld [vmem:[%s6 + $0x128] sm:$0xff]
      %v2211 = vld [vmem:[%s6 + $0x130] sm:$0xff]
      %v2212 = vld [vmem:[%s6 + $0x138] sm:$0xff]
      %v2213 = vld [vmem:[%s6 + $0x140] sm:$0xff]
      %v2214 = vld [vmem:[%s6 + $0x148] sm:$0xff]
      %v2215 = vld [vmem:[%s6 + $0x150] sm:$0xff]
      %v2216 = vld [vmem:[%s6 + $0x158] sm:$0xff]
      %v2217 = vld [vmem:[%s6 + $0x160] sm:$0xff]
      %v2218 = vld [vmem:[%s6 + $0x168] sm:$0xff]
      %v2219 = vld [vmem:[%s6 + $0x170] sm:$0xff]
      %v2220 = vld [vmem:[%s6 + $0x178] sm:$0xff]
      %v2221 = vld [vmem:[%s6 + $0x180] sm:$0xff]
      %v2222 = vld [vmem:[%s6 + $0x188] sm:$0xff]
      %v2223 = vld [vmem:[%s6 + $0x190] sm:$0xff]
      %v2224 = vld [vmem:[%s6 + $0x198] sm:$0xff]
      %v2225 = vld [vmem:[%s6 + $0x1a0] sm:$0xff]
      %v2226 = vld [vmem:[%s6 + $0x1a8] sm:$0xff]
      %v2227 = vld [vmem:[%s6 + $0x1b0] sm:$0xff]
      %v2228 = vld [vmem:[%s6 + $0x1b8] sm:$0xff]
      %v2229 = vld [vmem:[%s6 + $0x1c0] sm:$0xff]
      %v2230 = vld [vmem:[%s6 + $0x1c8] sm:$0xff]
      %v2231 = vld [vmem:[%s6 + $0x1d0] sm:$0xff]
      %v2232 = vld [vmem:[%s6 + $0x1d8] sm:$0xff]
      %v2233 = vld [vmem:[%s6 + $0x1e0] sm:$0xff]
      %v2234 = vld [vmem:[%s6 + $0x1e8] sm:$0xff]
      %v2235 = vld [vmem:[%s6 + $0x1f0] sm:$0xff]
      %v2236 = vld [vmem:[%s6 + $0x1f8] sm:$0xff]
      %v2237 = vld [vmem:[%s6 + $0x200] sm:$0xff]
      %v2238 = vld [vmem:[%s6 + $0x208] sm:$0xff]
      %v2239 = vld [vmem:[%s6 + $0x210] sm:$0xff]
      %v2240 = vld [vmem:[%s6 + $0x218] sm:$0xff]
      %v2241 = vld [vmem:[%s6 + $0x220] sm:$0xff]
      %v2242 = vld [vmem:[%s6 + $0x228] sm:$0xff]
      %v2243 = vld [vmem:[%s6 + $0x230] sm:$0xff]
      %v2244 = vld [vmem:[%s6 + $0x238] sm:$0xff]
      %v2245 = vld [vmem:[%s6 + $0x240] sm:$0xff]
      %v2246 = vld [vmem:[%s6 + $0x248] sm:$0xff]
      %v2247 = vld [vmem:[%s6 + $0x250] sm:$0xff]
      %v2248 = vld [vmem:[%s6 + $0x258] sm:$0xff]
      %v2249 = vld [vmem:[%s6 + $0x260] sm:$0xff]
      %v2250 = vld [vmem:[%s6 + $0x268] sm:$0xff]
      %v2251 = vld [vmem:[%s6 + $0x270] sm:$0xff]
      %v2252 = vld [vmem:[%s6 + $0x278] sm:$0xff]
      %v2253 = vld [vmem:[%s6 + $0x280] sm:$0xff]
      %v2254 = vld [vmem:[%s6 + $0x288] sm:$0xff]
      %v2255 = vld [vmem:[%s6 + $0x290] sm:$0xff]
      %v2256 = vld [vmem:[%s6 + $0x298] sm:$0xff]
      %v2257 = vld [vmem:[%s6 + $0x2a0] sm:$0xff]
      %v2258 = vld [vmem:[%s6 + $0x2a8] sm:$0xff]
      %v2259 = vld [vmem:[%s6 + $0x2b0] sm:$0xff]
      %v2260 = vld [vmem:[%s6 + $0x2b8] sm:$0xff]
      %v2261 = vld [vmem:[%s6 + $0x2c0] sm:$0xff]
      %v2262 = vld [vmem:[%s6 + $0x2c8] sm:$0xff]
      %v2263 = vld [vmem:[%s6 + $0x2d0] sm:$0xff]
      %v2264 = vld [vmem:[%s6 + $0x2d8] sm:$0xff]
      %v2265 = vld [vmem:[%s6 + $0x2e0] sm:$0xff]
      %v2266 = vld [vmem:[%s6 + $0x2e8] sm:$0xff]
      %v2267 = vld [vmem:[%s6 + $0x2f0] sm:$0xff]
      %v2268 = vld [vmem:[%s6 + $0x2f8] sm:$0xff]
      %v2269 = vld [vmem:[%s6 + $0x300] sm:$0xff]
      %v2270 = vld [vmem:[%s6 + $0x308] sm:$0xff]
      %v2271 = vld [vmem:[%s6 + $0x310] sm:$0xff]
      %v2272 = vld [vmem:[%s6 + $0x318] sm:$0xff]
      %v2273 = vld [vmem:[%s6 + $0x320] sm:$0xff]
      %v2274 = vld [vmem:[%s6 + $0x328] sm:$0xff]
      %v2275 = vld [vmem:[%s6 + $0x330] sm:$0xff]
      %v2276 = vld [vmem:[%s6 + $0x338] sm:$0xff]
      %v2277 = vld [vmem:[%s6 + $0x340] sm:$0xff]
      %v2278 = vld [vmem:[%s6 + $0x348] sm:$0xff]
      %v2279 = vld [vmem:[%s6 + $0x350] sm:$0xff]
      %v2280 = vld [vmem:[%s6 + $0x358] sm:$0xff]
      %v2281 = vld [vmem:[%s6 + $0x360] sm:$0xff]
      %v2282 = vld [vmem:[%s6 + $0x368] sm:$0xff]
      %v2283 = vld [vmem:[%s6 + $0x370] sm:$0xff]
      %v2284 = vld [vmem:[%s6 + $0x378] sm:$0xff]
      %v2285 = vld [vmem:[%s6 + $0x380] sm:$0xff]
      %v2286 = vld [vmem:[%s6 + $0x388] sm:$0xff]
      %v2287 = vld [vmem:[%s6 + $0x390] sm:$0xff]
      %v2288 = vld [vmem:[%s6 + $0x398] sm:$0xff]
      %v2289 = vld [vmem:[%s6 + $0x3a0] sm:$0xff]
      %v2290 = vld [vmem:[%s6 + $0x3a8] sm:$0xff]
      %v2291 = vld [vmem:[%s6 + $0x3b0] sm:$0xff]
      %v2292 = vld [vmem:[%s6 + $0x3b8] sm:$0xff]
      %v2293 = vld [vmem:[%s6 + $0x3c0] sm:$0xff]
      %v2294 = vld [vmem:[%s6 + $0x3c8] sm:$0xff]
      %v2295 = vld [vmem:[%s6 + $0x3d0] sm:$0xff]
      %v2296 = vld [vmem:[%s6 + $0x3d8] sm:$0xff]
      %v2297 = vld [vmem:[%s6 + $0x3e0] sm:$0xff]
      %v2298 = vld [vmem:[%s6 + $0x3e8] sm:$0xff]
      %v2299 = vld [vmem:[%s6 + $0x3f0] sm:$0xff]
      %v2300 = vld [vmem:[%s6 + $0x3f8] sm:$0xff]
      %v2301 = vld [vmem:[%s6 + $0x400] sm:$0xff]
      %v2302 = vld [vmem:[%s6 + $0x408] sm:$0xff]
      %v2303 = vld [vmem:[%s6 + $0x410] sm:$0xff]
      %v2304 = vld [vmem:[%s6 + $0x418] sm:$0xff]
      %v2305 = vld [vmem:[%s6 + $0x420] sm:$0xff]
      %v2306 = vld [vmem:[%s6 + $0x428] sm:$0xff]
      %v2307 = vld [vmem:[%s6 + $0x430] sm:$0xff]
      %v2308 = vld [vmem:[%s6 + $0x438] sm:$0xff]
      %v2309 = vld [vmem:[%s6 + $0x440] sm:$0xff]
      %v2310 = vld [vmem:[%s6 + $0x448] sm:$0xff]
      %v2311 = vld [vmem:[%s6 + $0x450] sm:$0xff]
      %v2312 = vld [vmem:[%s6 + $0x458] sm:$0xff]
      %v2313 = vld [vmem:[%s6 + $0x460] sm:$0xff]
      %v2314 = vld [vmem:[%s6 + $0x468] sm:$0xff]
      %v2315 = vld [vmem:[%s6 + $0x470] sm:$0xff]
      %v2316 = vld [vmem:[%s6 + $0x478] sm:$0xff]
      %v2317 = vld [vmem:[%s6 + $0x480] sm:$0xff]
      %v2318 = vld [vmem:[%s6 + $0x488] sm:$0xff]
      %v2319 = vld [vmem:[%s6 + $0x490] sm:$0xff]
      %v2320 = vld [vmem:[%s6 + $0x498] sm:$0xff]
      %v2321 = vld [vmem:[%s6 + $0x4a0] sm:$0xff]
      %v2322 = vld [vmem:[%s6 + $0x4a8] sm:$0xff]
      %v2323 = vld [vmem:[%s6 + $0x4b0] sm:$0xff]
      %v2324 = vld [vmem:[%s6 + $0x4b8] sm:$0xff]
      %v2325 = vld [vmem:[%s6 + $0x4c0] sm:$0xff]
      %v2326 = vld [vmem:[%s6 + $0x4c8] sm:$0xff]
      %v2327 = vld [vmem:[%s6 + $0x4d0] sm:$0xff]
      %v2328 = vld [vmem:[%s6 + $0x4d8] sm:$0xff]
      %v2329 = vld [vmem:[%s6 + $0x4e0] sm:$0xff]
      %v2330 = vld [vmem:[%s6 + $0x4e8] sm:$0xff]
      %v2331 = vld [vmem:[%s6 + $0x4f0] sm:$0xff]
      %v2332 = vld [vmem:[%s6 + $0x4f8] sm:$0xff]
      %v2333 = vld [vmem:[%s6 + $0x500] sm:$0xff]
      %v2334 = vld [vmem:[%s6 + $0x508] sm:$0xff]
      %v2335 = vld [vmem:[%s6 + $0x510] sm:$0xff]
      %v2336 = vld [vmem:[%s6 + $0x518] sm:$0xff]
      %v2337 = vld [vmem:[%s6 + $0x520] sm:$0xff]
      %v2338 = vld [vmem:[%s6 + $0x528] sm:$0xff]
      %v2339 = vld [vmem:[%s6 + $0x530] sm:$0xff]
      %v2340 = vld [vmem:[%s6 + $0x538] sm:$0xff]
      %v2341 = vld [vmem:[%s6 + $0x540] sm:$0xff]
      %v2342 = vld [vmem:[%s6 + $0x548] sm:$0xff]
      %v2343 = vld [vmem:[%s6 + $0x550] sm:$0xff]
      %v2344 = vld [vmem:[%s6 + $0x558] sm:$0xff]
      %v2345 = vld [vmem:[%s6 + $0x560] sm:$0xff]
      %v2346 = vld [vmem:[%s6 + $0x568] sm:$0xff]
      %v2347 = vld [vmem:[%s6 + $0x570] sm:$0xff]
      %v2348 = vld [vmem:[%s6 + $0x578] sm:$0xff]
      %v2349 = vld [vmem:[%s6 + $0x580] sm:$0xff]
      %v2350 = vld [vmem:[%s6 + $0x588] sm:$0xff]
      %v2351 = vld [vmem:[%s6 + $0x590] sm:$0xff]
      %v2352 = vld [vmem:[%s6 + $0x598] sm:$0xff]
      %v2353 = vld [vmem:[%s6 + $0x5a0] sm:$0xff]
      %v2354 = vld [vmem:[%s6 + $0x5a8] sm:$0xff]
      %v2355 = vld [vmem:[%s6 + $0x5b0] sm:$0xff]
      %v2356 = vld [vmem:[%s6 + $0x5b8] sm:$0xff]
      %v2357 = vld [vmem:[%s6 + $0x5c0] sm:$0xff]
      %v2358 = vld [vmem:[%s6 + $0x5c8] sm:$0xff]
      %v2359 = vld [vmem:[%s6 + $0x5d0] sm:$0xff]
      %v2360 = vld [vmem:[%s6 + $0x5d8] sm:$0xff]
      %v2361 = vld [vmem:[%s6 + $0x5e0] sm:$0xff]
      %v2362 = vld [vmem:[%s6 + $0x5e8] sm:$0xff]
      %v2363 = vld [vmem:[%s6 + $0x5f0] sm:$0xff]
      %v2364 = vld [vmem:[%s6 + $0x5f8] sm:$0xff]
      %v2365 = vld [vmem:[%s6 + $0x600] sm:$0xff]
      %v2366 = vld [vmem:[%s6 + $0x608] sm:$0xff]
      %v2367 = vld [vmem:[%s6 + $0x610] sm:$0xff]
      %v2368 = vld [vmem:[%s6 + $0x618] sm:$0xff]
      %v2369 = vld [vmem:[%s6 + $0x620] sm:$0xff]
      %v2370 = vld [vmem:[%s6 + $0x628] sm:$0xff]
      %v2371 = vld [vmem:[%s6 + $0x630] sm:$0xff]
      %v2372 = vld [vmem:[%s6 + $0x638] sm:$0xff]
      %v2373 = vld [vmem:[%s6 + $0x640] sm:$0xff]
      %v2374 = vld [vmem:[%s6 + $0x648] sm:$0xff]
      %v2375 = vld [vmem:[%s6 + $0x650] sm:$0xff]
      %v2376 = vld [vmem:[%s6 + $0x658] sm:$0xff]
      %v2377 = vld [vmem:[%s6 + $0x660] sm:$0xff]
      %v2378 = vld [vmem:[%s6 + $0x668] sm:$0xff]
      %v2379 = vld [vmem:[%s6 + $0x670] sm:$0xff]
      %v2380 = vld [vmem:[%s6 + $0x678] sm:$0xff]
      %v2381 = vld [vmem:[%s6 + $0x680] sm:$0xff]
      %v2382 = vld [vmem:[%s6 + $0x688] sm:$0xff]
      %v2383 = vld [vmem:[%s6 + $0x690] sm:$0xff]
      %v2384 = vld [vmem:[%s6 + $0x698] sm:$0xff]
      %v2385 = vld [vmem:[%s6 + $0x6a0] sm:$0xff]
      %v2386 = vld [vmem:[%s6 + $0x6a8] sm:$0xff]
      %v2387 = vld [vmem:[%s6 + $0x6b0] sm:$0xff]
      %v2388 = vld [vmem:[%s6 + $0x6b8] sm:$0xff]
      %v2389 = vld [vmem:[%s6 + $0x6c0] sm:$0xff]
      %v2390 = vld [vmem:[%s6 + $0x6c8] sm:$0xff]
      %v2391 = vld [vmem:[%s6 + $0x6d0] sm:$0xff]
      %v2392 = vld [vmem:[%s6 + $0x6d8] sm:$0xff]
      %v2393 = vld [vmem:[%s6 + $0x6e0] sm:$0xff]
      %v2394 = vld [vmem:[%s6 + $0x6e8] sm:$0xff]
      %v2395 = vld [vmem:[%s6 + $0x6f0] sm:$0xff]
      %v2396 = vld [vmem:[%s6 + $0x6f8] sm:$0xff]
      %v2397 = vld [vmem:[%s6 + $0x700] sm:$0xff]
      %v2398 = vld [vmem:[%s6 + $0x708] sm:$0xff]
      %v2399 = vld [vmem:[%s6 + $0x710] sm:$0xff]
      %v2400 = vld [vmem:[%s6 + $0x718] sm:$0xff]
      %v2401 = vld [vmem:[%s6 + $0x720] sm:$0xff]
      %v2402 = vld [vmem:[%s6 + $0x728] sm:$0xff]
      %v2403 = vld [vmem:[%s6 + $0x730] sm:$0xff]
      %v2404 = vld [vmem:[%s6 + $0x738] sm:$0xff]
      %v2405 = vld [vmem:[%s6 + $0x740] sm:$0xff]
      %v2406 = vld [vmem:[%s6 + $0x748] sm:$0xff]
      %v2407 = vld [vmem:[%s6 + $0x750] sm:$0xff]
      %v2408 = vld [vmem:[%s6 + $0x758] sm:$0xff]
      %v2409 = vld [vmem:[%s6 + $0x760] sm:$0xff]
      %v2410 = vld [vmem:[%s6 + $0x768] sm:$0xff]
      %v2411 = vld [vmem:[%s6 + $0x770] sm:$0xff]
      %v2412 = vld [vmem:[%s6 + $0x778] sm:$0xff]
      %v2413 = vld [vmem:[%s6 + $0x780] sm:$0xff]
      %v2414 = vld [vmem:[%s6 + $0x788] sm:$0xff]
      %v2415 = vld [vmem:[%s6 + $0x790] sm:$0xff]
      %v2416 = vld [vmem:[%s6 + $0x798] sm:$0xff]
      %v2417 = vld [vmem:[%s6 + $0x7a0] sm:$0xff]
      %v2418 = vld [vmem:[%s6 + $0x7a8] sm:$0xff]
      %v2419 = vld [vmem:[%s6 + $0x7b0] sm:$0xff]
      %v2420 = vld [vmem:[%s6 + $0x7b8] sm:$0xff]
      %v2421 = vld [vmem:[%s6 + $0x7c0] sm:$0xff]
      %v2422 = vld [vmem:[%s6 + $0x7c8] sm:$0xff]
      %v2423 = vld [vmem:[%s6 + $0x7d0] sm:$0xff]
      %v2424 = vld [vmem:[%s6 + $0x7d8] sm:$0xff]
      %v2425 = vld [vmem:[%s6 + $0x7e0] sm:$0xff]
      %v2426 = vld [vmem:[%s6 + $0x7e8] sm:$0xff]
      %v2427 = vld [vmem:[%s6 + $0x7f0] sm:$0xff]
      %v2428 = vld [vmem:[%s6 + $0x7f8] sm:$0xff]
      %2429 = vmatprep.subr.mxu0 %v2294
      %2430 = vmatpush1.msra.mxu0 %v2293
      %2431 = vmatprep.subr.mxu0 %v2286
      %2432 = vmatpush1.msra.mxu0 %v2285
      %2433 = vmatprep.subr.mxu0 %v2278
      %2434 = vmatpush1.msra.mxu0 %v2277
      %2435 = vmatprep.subr.mxu0 %v2270
      %2436 = vmatpush1.msra.mxu0 %v2269
      %2437 = vmatprep.subr.mxu0 %v2262
      %2438 = vmatpush1.msra.mxu0 %v2261
      %2439 = vmatprep.subr.mxu0 %v2254
      %2440 = vmatpush1.msra.mxu0 %v2253
      %2441 = vmatprep.subr.mxu0 %v2246
      %2442 = vmatpush1.msra.mxu0 %v2245
      %2443 = vmatprep.subr.mxu0 %v2238
      %2444 = vmatpush1.msra.mxu0 %v2237
      %2445 = vmatprep.subr.mxu0 %v2230
      %2446 = vmatpush1.msra.mxu0 %v2229
      %2447 = vmatprep.subr.mxu0 %v2222
      %2448 = vmatpush1.msra.mxu0 %v2221
      %2449 = vmatprep.subr.mxu0 %v2214
      %2450 = vmatpush1.msra.mxu0 %v2213
      %2451 = vmatprep.subr.mxu0 %v2206
      %2452 = vmatpush1.msra.mxu0 %v2205
      %2453 = vmatprep.subr.mxu0 %v2198
      %2454 = vmatpush1.msra.mxu0 %v2197
      %2455 = vmatprep.subr.mxu0 %v2190
      %2456 = vmatpush1.msra.mxu0 %v2189
      %2457 = vmatprep.subr.mxu0 %v2182
      %2458 = vmatpush1.msra.mxu0 %v2181
      %2459 = vmatprep.subr.mxu0 %v2174
      %2460 = vmatpush1.msra.mxu0 %v2173
      %2461 = vmatprep.subr.mxu0 %v2422
      %2462 = vmatpush2.msra.mxu0 %v2421
      %2463 = vmatprep.subr.mxu0 %v2414
      %2464 = vmatpush2.msra.mxu0 %v2413
      %2465 = vmatprep.subr.mxu0 %v2406
      %2466 = vmatpush2.msra.mxu0 %v2405
      %2467 = vmatprep.subr.mxu0 %v2398
      %2468 = vmatpush2.msra.mxu0 %v2397
      %2469 = vmatprep.subr.mxu0 %v2390
      %2470 = vmatpush2.msra.mxu0 %v2389
      %2471 = vmatprep.subr.mxu0 %v2382
      %2472 = vmatpush2.msra.mxu0 %v2381
      %2473 = vmatprep.subr.mxu0 %v2374
      %2474 = vmatpush2.msra.mxu0 %v2373
      %2475 = vmatprep.subr.mxu0 %v2366
      %2476 = vmatpush2.msra.mxu0 %v2365
      %2477 = vmatprep.subr.mxu0 %v2358
      %2478 = vmatpush2.msra.mxu0 %v2357
      %2479 = vmatprep.subr.mxu0 %v2350
      %2480 = vmatpush2.msra.mxu0 %v2349
      %2481 = vmatprep.subr.mxu0 %v2342
      %2482 = vmatpush2.msra.mxu0 %v2341
      %2483 = vmatprep.subr.mxu0 %v2334
      %2484 = vmatpush2.msra.mxu0 %v2333
      %2485 = vmatprep.subr.mxu0 %v2326
      %2486 = vmatpush2.msra.mxu0 %v2325
      %2487 = vmatprep.subr.mxu0 %v2318
      %2488 = vmatpush2.msra.mxu0 %v2317
      %2489 = vmatprep.subr.mxu0 %v2310
      %2490 = vmatpush2.msra.mxu0 %v2309
      %2491 = vmatprep.subr.mxu0 %v2302
      %2492 = vmatpush2.msra.mxu0 %v2301
      %2493 = vmatprep.mubr.f32.mxu0 %v207
      %2494 = vmatmul.mubr.f32.gmra.mxu0 %v206
      %v2495 = vpop.f32.mrf.mxu0
      %v2496 = vadd.f32 0.0, %v2495
      %v2497 = vpop.f32.mrf.mxu0
      %v2498 = vadd.f32 0.0, %v2497
      %2499 = vdwg.mxu0
      %2500 = vmatprep.subr.mxu0 %v2296
      %2501 = vmatpush1.msra.mxu0 %v2295
      %2502 = vmatprep.subr.mxu0 %v2288
      %2503 = vmatpush1.msra.mxu0 %v2287
      %2504 = vmatprep.subr.mxu0 %v2280
      %2505 = vmatpush1.msra.mxu0 %v2279
      %2506 = vmatprep.subr.mxu0 %v2272
      %2507 = vmatpush1.msra.mxu0 %v2271
      %2508 = vmatprep.subr.mxu0 %v2264
      %2509 = vmatpush1.msra.mxu0 %v2263
      %2510 = vmatprep.subr.mxu0 %v2256
      %2511 = vmatpush1.msra.mxu0 %v2255
      %2512 = vmatprep.subr.mxu0 %v2248
      %2513 = vmatpush1.msra.mxu0 %v2247
      %2514 = vmatprep.subr.mxu0 %v2240
      %2515 = vmatpush1.msra.mxu0 %v2239
      %2516 = vmatprep.subr.mxu0 %v2232
      %2517 = vmatpush1.msra.mxu0 %v2231
      %2518 = vmatprep.subr.mxu0 %v2224
      %2519 = vmatpush1.msra.mxu0 %v2223
      %2520 = vmatprep.subr.mxu0 %v2216
      %2521 = vmatpush1.msra.mxu0 %v2215
      %2522 = vmatprep.subr.mxu0 %v2208
      %2523 = vmatpush1.msra.mxu0 %v2207
      %2524 = vmatprep.subr.mxu0 %v2200
      %2525 = vmatpush1.msra.mxu0 %v2199
      %2526 = vmatprep.subr.mxu0 %v2192
      %2527 = vmatpush1.msra.mxu0 %v2191
      %2528 = vmatprep.subr.mxu0 %v2184
      %2529 = vmatpush1.msra.mxu0 %v2183
      %2530 = vmatprep.subr.mxu0 %v2176
      %2531 = vmatpush1.msra.mxu0 %v2175
      %2532 = vmatprep.subr.mxu0 %v2424
      %2533 = vmatpush2.msra.mxu0 %v2423
      %2534 = vmatprep.subr.mxu0 %v2416
      %2535 = vmatpush2.msra.mxu0 %v2415
      %2536 = vmatprep.subr.mxu0 %v2408
      %2537 = vmatpush2.msra.mxu0 %v2407
      %2538 = vmatprep.subr.mxu0 %v2400
      %2539 = vmatpush2.msra.mxu0 %v2399
      %2540 = vmatprep.subr.mxu0 %v2392
      %2541 = vmatpush2.msra.mxu0 %v2391
      %2542 = vmatprep.subr.mxu0 %v2384
      %2543 = vmatpush2.msra.mxu0 %v2383
      %2544 = vmatprep.subr.mxu0 %v2376
      %2545 = vmatpush2.msra.mxu0 %v2375
      %2546 = vmatprep.subr.mxu0 %v2368
      %2547 = vmatpush2.msra.mxu0 %v2367
      %2548 = vmatprep.subr.mxu0 %v2360
      %2549 = vmatpush2.msra.mxu0 %v2359
      %2550 = vmatprep.subr.mxu0 %v2352
      %2551 = vmatpush2.msra.mxu0 %v2351
      %2552 = vmatprep.subr.mxu0 %v2344
      %2553 = vmatpush2.msra.mxu0 %v2343
      %2554 = vmatprep.subr.mxu0 %v2336
      %2555 = vmatpush2.msra.mxu0 %v2335
      %2556 = vmatprep.subr.mxu0 %v2328
      %2557 = vmatpush2.msra.mxu0 %v2327
      %2558 = vmatprep.subr.mxu0 %v2320
      %2559 = vmatpush2.msra.mxu0 %v2319
      %2560 = vmatprep.subr.mxu0 %v2312
      %2561 = vmatpush2.msra.mxu0 %v2311
      %2562 = vmatprep.subr.mxu0 %v2304
      %2563 = vmatpush2.msra.mxu0 %v2303
      %2564 = vmatprep.mubr.f32.mxu0 %v207
      %2565 = vmatmul.mubr.f32.gmra.mxu0 %v206
      %v2566 = vpop.f32.mrf.mxu0
      %v2567 = vadd.f32 0.0, %v2566
      %v2568 = vpop.f32.mrf.mxu0
      %v2569 = vadd.f32 0.0, %v2568
      %2570 = vdwg.mxu0
      %2571 = vmatprep.subr.mxu0 %v2298
      %2572 = vmatpush1.msra.mxu0 %v2297
      %2573 = vmatprep.subr.mxu0 %v2290
      %2574 = vmatpush1.msra.mxu0 %v2289
      %2575 = vmatprep.subr.mxu0 %v2282
      %2576 = vmatpush1.msra.mxu0 %v2281
      %2577 = vmatprep.subr.mxu0 %v2274
      %2578 = vmatpush1.msra.mxu0 %v2273
      %2579 = vmatprep.subr.mxu0 %v2266
      %2580 = vmatpush1.msra.mxu0 %v2265
      %2581 = vmatprep.subr.mxu0 %v2258
      %2582 = vmatpush1.msra.mxu0 %v2257
      %2583 = vmatprep.subr.mxu0 %v2250
      %2584 = vmatpush1.msra.mxu0 %v2249
      %2585 = vmatprep.subr.mxu0 %v2242
      %2586 = vmatpush1.msra.mxu0 %v2241
      %2587 = vmatprep.subr.mxu0 %v2234
      %2588 = vmatpush1.msra.mxu0 %v2233
      %2589 = vmatprep.subr.mxu0 %v2226
      %2590 = vmatpush1.msra.mxu0 %v2225
      %2591 = vmatprep.subr.mxu0 %v2218
      %2592 = vmatpush1.msra.mxu0 %v2217
      %2593 = vmatprep.subr.mxu0 %v2210
      %2594 = vmatpush1.msra.mxu0 %v2209
      %2595 = vmatprep.subr.mxu0 %v2202
      %2596 = vmatpush1.msra.mxu0 %v2201
      %2597 = vmatprep.subr.mxu0 %v2194
      %2598 = vmatpush1.msra.mxu0 %v2193
      %2599 = vmatprep.subr.mxu0 %v2186
      %2600 = vmatpush1.msra.mxu0 %v2185
      %2601 = vmatprep.subr.mxu0 %v2178
      %2602 = vmatpush1.msra.mxu0 %v2177
      %2603 = vmatprep.subr.mxu0 %v2426
      %2604 = vmatpush2.msra.mxu0 %v2425
      %2605 = vmatprep.subr.mxu0 %v2418
      %2606 = vmatpush2.msra.mxu0 %v2417
      %2607 = vmatprep.subr.mxu0 %v2410
      %2608 = vmatpush2.msra.mxu0 %v2409
      %2609 = vmatprep.subr.mxu0 %v2402
      %2610 = vmatpush2.msra.mxu0 %v2401
      %2611 = vmatprep.subr.mxu0 %v2394
      %2612 = vmatpush2.msra.mxu0 %v2393
      %2613 = vmatprep.subr.mxu0 %v2386
      %2614 = vmatpush2.msra.mxu0 %v2385
      %2615 = vmatprep.subr.mxu0 %v2378
      %2616 = vmatpush2.msra.mxu0 %v2377
      %2617 = vmatprep.subr.mxu0 %v2370
      %2618 = vmatpush2.msra.mxu0 %v2369
      %2619 = vmatprep.subr.mxu0 %v2362
      %2620 = vmatpush2.msra.mxu0 %v2361
      %2621 = vmatprep.subr.mxu0 %v2354
      %2622 = vmatpush2.msra.mxu0 %v2353
      %2623 = vmatprep.subr.mxu0 %v2346
      %2624 = vmatpush2.msra.mxu0 %v2345
      %2625 = vmatprep.subr.mxu0 %v2338
      %2626 = vmatpush2.msra.mxu0 %v2337
      %2627 = vmatprep.subr.mxu0 %v2330
      %2628 = vmatpush2.msra.mxu0 %v2329
      %2629 = vmatprep.subr.mxu0 %v2322
      %2630 = vmatpush2.msra.mxu0 %v2321
      %2631 = vmatprep.subr.mxu0 %v2314
      %2632 = vmatpush2.msra.mxu0 %v2313
      %2633 = vmatprep.subr.mxu0 %v2306
      %2634 = vmatpush2.msra.mxu0 %v2305
      %2635 = vmatprep.mubr.f32.mxu0 %v207
      %2636 = vmatmul.mubr.f32.gmra.mxu0 %v206
      %v2637 = vpop.f32.mrf.mxu0
      %v2638 = vadd.f32 0.0, %v2637
      %v2639 = vpop.f32.mrf.mxu0
      %v2640 = vadd.f32 0.0, %v2639
      %2641 = vdwg.mxu0
      %2642 = vmatprep.subr.mxu0 %v2300
      %2643 = vmatpush1.msra.mxu0 %v2299
      %2644 = vmatprep.subr.mxu0 %v2292
      %2645 = vmatpush1.msra.mxu0 %v2291
      %2646 = vmatprep.subr.mxu0 %v2284
      %2647 = vmatpush1.msra.mxu0 %v2283
      %2648 = vmatprep.subr.mxu0 %v2276
      %2649 = vmatpush1.msra.mxu0 %v2275
      %2650 = vmatprep.subr.mxu0 %v2268
      %2651 = vmatpush1.msra.mxu0 %v2267
      %2652 = vmatprep.subr.mxu0 %v2260
      %2653 = vmatpush1.msra.mxu0 %v2259
      %2654 = vmatprep.subr.mxu0 %v2252
      %2655 = vmatpush1.msra.mxu0 %v2251
      %2656 = vmatprep.subr.mxu0 %v2244
      %2657 = vmatpush1.msra.mxu0 %v2243
      %2658 = vmatprep.subr.mxu0 %v2236
      %2659 = vmatpush1.msra.mxu0 %v2235
      %2660 = vmatprep.subr.mxu0 %v2228
      %2661 = vmatpush1.msra.mxu0 %v2227
      %2662 = vmatprep.subr.mxu0 %v2220
      %2663 = vmatpush1.msra.mxu0 %v2219
      %2664 = vmatprep.subr.mxu0 %v2212
      %2665 = vmatpush1.msra.mxu0 %v2211
      %2666 = vmatprep.subr.mxu0 %v2204
      %2667 = vmatpush1.msra.mxu0 %v2203
      %2668 = vmatprep.subr.mxu0 %v2196
      %2669 = vmatpush1.msra.mxu0 %v2195
      %2670 = vmatprep.subr.mxu0 %v2188
      %2671 = vmatpush1.msra.mxu0 %v2187
      %2672 = vmatprep.subr.mxu0 %v2180
      %2673 = vmatpush1.msra.mxu0 %v2179
      %2674 = vmatprep.subr.mxu0 %v2428
      %2675 = vmatpush2.msra.mxu0 %v2427
      %2676 = vmatprep.subr.mxu0 %v2420
      %2677 = vmatpush2.msra.mxu0 %v2419
      %2678 = vmatprep.subr.mxu0 %v2412
      %2679 = vmatpush2.msra.mxu0 %v2411
      %2680 = vmatprep.subr.mxu0 %v2404
      %2681 = vmatpush2.msra.mxu0 %v2403
      %2682 = vmatprep.subr.mxu0 %v2396
      %2683 = vmatpush2.msra.mxu0 %v2395
      %2684 = vmatprep.subr.mxu0 %v2388
      %2685 = vmatpush2.msra.mxu0 %v2387
      %2686 = vmatprep.subr.mxu0 %v2380
      %2687 = vmatpush2.msra.mxu0 %v2379
      %2688 = vmatprep.subr.mxu0 %v2372
      %2689 = vmatpush2.msra.mxu0 %v2371
      %2690 = vmatprep.subr.mxu0 %v2364
      %2691 = vmatpush2.msra.mxu0 %v2363
      %2692 = vmatprep.subr.mxu0 %v2356
      %2693 = vmatpush2.msra.mxu0 %v2355
      %2694 = vmatprep.subr.mxu0 %v2348
      %2695 = vmatpush2.msra.mxu0 %v2347
      %2696 = vmatprep.subr.mxu0 %v2340
      %2697 = vmatpush2.msra.mxu0 %v2339
      %2698 = vmatprep.subr.mxu0 %v2332
      %2699 = vmatpush2.msra.mxu0 %v2331
      %2700 = vmatprep.subr.mxu0 %v2324
      %2701 = vmatpush2.msra.mxu0 %v2323
      %2702 = vmatprep.subr.mxu0 %v2316
      %2703 = vmatpush2.msra.mxu0 %v2315
      %2704 = vmatprep.subr.mxu0 %v2308
      %2705 = vmatpush2.msra.mxu0 %v2307
      %2706 = vmatprep.mubr.f32.mxu0 %v207
      %2707 = vmatmul.mubr.f32.gmra.mxu0 %v206
      %v2708 = vpop.f32.mrf.mxu0
      %v2709 = vadd.f32 0.0, %v2708
      %v2710 = vpop.f32.mrf.mxu0
      %v2711 = vadd.f32 0.0, %v2710
      %2712 = vdwg.mxu0
      %2713 = vmatprep.subr.mxu0 %v2038
      %2714 = vmatpush1.msra.mxu0 %v2037
      %2715 = vmatprep.subr.mxu0 %v2030
      %2716 = vmatpush1.msra.mxu0 %v2029
      %2717 = vmatprep.subr.mxu0 %v2022
      %2718 = vmatpush1.msra.mxu0 %v2021
      %2719 = vmatprep.subr.mxu0 %v2014
      %2720 = vmatpush1.msra.mxu0 %v2013
      %2721 = vmatprep.subr.mxu0 %v2006
      %2722 = vmatpush1.msra.mxu0 %v2005
      %2723 = vmatprep.subr.mxu0 %v1998
      %2724 = vmatpush1.msra.mxu0 %v1997
      %2725 = vmatprep.subr.mxu0 %v1990
      %2726 = vmatpush1.msra.mxu0 %v1989
      %2727 = vmatprep.subr.mxu0 %v1982
      %2728 = vmatpush1.msra.mxu0 %v1981
      %2729 = vmatprep.subr.mxu0 %v1974
      %2730 = vmatpush1.msra.mxu0 %v1973
      %2731 = vmatprep.subr.mxu0 %v1966
      %2732 = vmatpush1.msra.mxu0 %v1965
      %2733 = vmatprep.subr.mxu0 %v1958
      %2734 = vmatpush1.msra.mxu0 %v1957
      %2735 = vmatprep.subr.mxu0 %v1950
      %2736 = vmatpush1.msra.mxu0 %v1949
      %2737 = vmatprep.subr.mxu0 %v1942
      %2738 = vmatpush1.msra.mxu0 %v1941
      %2739 = vmatprep.subr.mxu0 %v1934
      %2740 = vmatpush1.msra.mxu0 %v1933
      %2741 = vmatprep.subr.mxu0 %v1926
      %2742 = vmatpush1.msra.mxu0 %v1925
      %2743 = vmatprep.subr.mxu0 %v1918
      %2744 = vmatpush1.msra.mxu0 %v1917
      %2745 = vmatprep.subr.mxu0 %v2166
      %2746 = vmatpush2.msra.mxu0 %v2165
      %2747 = vmatprep.subr.mxu0 %v2158
      %2748 = vmatpush2.msra.mxu0 %v2157
      %2749 = vmatprep.subr.mxu0 %v2150
      %2750 = vmatpush2.msra.mxu0 %v2149
      %2751 = vmatprep.subr.mxu0 %v2142
      %2752 = vmatpush2.msra.mxu0 %v2141
      %2753 = vmatprep.subr.mxu0 %v2134
      %2754 = vmatpush2.msra.mxu0 %v2133
      %2755 = vmatprep.subr.mxu0 %v2126
      %2756 = vmatpush2.msra.mxu0 %v2125
      %2757 = vmatprep.subr.mxu0 %v2118
      %2758 = vmatpush2.msra.mxu0 %v2117
      %2759 = vmatprep.subr.mxu0 %v2110
      %2760 = vmatpush2.msra.mxu0 %v2109
      %2761 = vmatprep.subr.mxu0 %v2102
      %2762 = vmatpush2.msra.mxu0 %v2101
      %2763 = vmatprep.subr.mxu0 %v2094
      %2764 = vmatpush2.msra.mxu0 %v2093
      %2765 = vmatprep.subr.mxu0 %v2086
      %2766 = vmatpush2.msra.mxu0 %v2085
      %2767 = vmatprep.subr.mxu0 %v2078
      %2768 = vmatpush2.msra.mxu0 %v2077
      %2769 = vmatprep.subr.mxu0 %v2070
      %2770 = vmatpush2.msra.mxu0 %v2069
      %2771 = vmatprep.subr.mxu0 %v2062
      %2772 = vmatpush2.msra.mxu0 %v2061
      %2773 = vmatprep.subr.mxu0 %v2054
      %2774 = vmatpush2.msra.mxu0 %v2053
      %2775 = vmatprep.subr.mxu0 %v2046
      %2776 = vmatpush2.msra.mxu0 %v2045
      %2777 = vmatprep.mubr.f32.mxu0 %v1916
      %2778 = vmatmul.mubr.f32.gmra.mxu0 %v1915
      %v2779 = vpop.f32.mrf.mxu0
      %v2780 = vadd.f32 %v2496, %v2779
      %v2781 = vpop.f32.mrf.mxu0
      %v2782 = vadd.f32 %v2498, %v2781
      %2783 = vdwg.mxu0
      %2784 = vmatprep.subr.mxu0 %v2040
      %2785 = vmatpush1.msra.mxu0 %v2039
      %2786 = vmatprep.subr.mxu0 %v2032
      %2787 = vmatpush1.msra.mxu0 %v2031
      %2788 = vmatprep.subr.mxu0 %v2024
      %2789 = vmatpush1.msra.mxu0 %v2023
      %2790 = vmatprep.subr.mxu0 %v2016
      %2791 = vmatpush1.msra.mxu0 %v2015
      %2792 = vmatprep.subr.mxu0 %v2008
      %2793 = vmatpush1.msra.mxu0 %v2007
      %2794 = vmatprep.subr.mxu0 %v2000
      %2795 = vmatpush1.msra.mxu0 %v1999
      %2796 = vmatprep.subr.mxu0 %v1992
      %2797 = vmatpush1.msra.mxu0 %v1991
      %2798 = vmatprep.subr.mxu0 %v1984
      %2799 = vmatpush1.msra.mxu0 %v1983
      %2800 = vmatprep.subr.mxu0 %v1976
      %2801 = vmatpush1.msra.mxu0 %v1975
      %2802 = vmatprep.subr.mxu0 %v1968
      %2803 = vmatpush1.msra.mxu0 %v1967
      %2804 = vmatprep.subr.mxu0 %v1960
      %2805 = vmatpush1.msra.mxu0 %v1959
      %2806 = vmatprep.subr.mxu0 %v1952
      %2807 = vmatpush1.msra.mxu0 %v1951
      %2808 = vmatprep.subr.mxu0 %v1944
      %2809 = vmatpush1.msra.mxu0 %v1943
      %2810 = vmatprep.subr.mxu0 %v1936
      %2811 = vmatpush1.msra.mxu0 %v1935
      %2812 = vmatprep.subr.mxu0 %v1928
      %2813 = vmatpush1.msra.mxu0 %v1927
      %2814 = vmatprep.subr.mxu0 %v1920
      %2815 = vmatpush1.msra.mxu0 %v1919
      %2816 = vmatprep.subr.mxu0 %v2168
      %2817 = vmatpush2.msra.mxu0 %v2167
      %2818 = vmatprep.subr.mxu0 %v2160
      %2819 = vmatpush2.msra.mxu0 %v2159
      %2820 = vmatprep.subr.mxu0 %v2152
      %2821 = vmatpush2.msra.mxu0 %v2151
      %2822 = vmatprep.subr.mxu0 %v2144
      %2823 = vmatpush2.msra.mxu0 %v2143
      %2824 = vmatprep.subr.mxu0 %v2136
      %2825 = vmatpush2.msra.mxu0 %v2135
      %2826 = vmatprep.subr.mxu0 %v2128
      %2827 = vmatpush2.msra.mxu0 %v2127
      %2828 = vmatprep.subr.mxu0 %v2120
      %2829 = vmatpush2.msra.mxu0 %v2119
      %2830 = vmatprep.subr.mxu0 %v2112
      %2831 = vmatpush2.msra.mxu0 %v2111
      %2832 = vmatprep.subr.mxu0 %v2104
      %2833 = vmatpush2.msra.mxu0 %v2103
      %2834 = vmatprep.subr.mxu0 %v2096
      %2835 = vmatpush2.msra.mxu0 %v2095
      %2836 = vmatprep.subr.mxu0 %v2088
      %2837 = vmatpush2.msra.mxu0 %v2087
      %2838 = vmatprep.subr.mxu0 %v2080
      %2839 = vmatpush2.msra.mxu0 %v2079
      %2840 = vmatprep.subr.mxu0 %v2072
      %2841 = vmatpush2.msra.mxu0 %v2071
      %2842 = vmatprep.subr.mxu0 %v2064
      %2843 = vmatpush2.msra.mxu0 %v2063
      %2844 = vmatprep.subr.mxu0 %v2056
      %2845 = vmatpush2.msra.mxu0 %v2055
      %2846 = vmatprep.subr.mxu0 %v2048
      %2847 = vmatpush2.msra.mxu0 %v2047
      %2848 = vmatprep.mubr.f32.mxu0 %v1916
      %2849 = vmatmul.mubr.f32.gmra.mxu0 %v1915
      %v2850 = vpop.f32.mrf.mxu0
      %v2851 = vadd.f32 %v2567, %v2850
      %v2852 = vpop.f32.mrf.mxu0
      %v2853 = vadd.f32 %v2569, %v2852
      %2854 = vdwg.mxu0
      %2855 = vmatprep.subr.mxu0 %v2042
      %2856 = vmatpush1.msra.mxu0 %v2041
      %2857 = vmatprep.subr.mxu0 %v2034
      %2858 = vmatpush1.msra.mxu0 %v2033
      %2859 = vmatprep.subr.mxu0 %v2026
      %2860 = vmatpush1.msra.mxu0 %v2025
      %2861 = vmatprep.subr.mxu0 %v2018
      %2862 = vmatpush1.msra.mxu0 %v2017
      %2863 = vmatprep.subr.mxu0 %v2010
      %2864 = vmatpush1.msra.mxu0 %v2009
      %2865 = vmatprep.subr.mxu0 %v2002
      %2866 = vmatpush1.msra.mxu0 %v2001
      %2867 = vmatprep.subr.mxu0 %v1994
      %2868 = vmatpush1.msra.mxu0 %v1993
      %2869 = vmatprep.subr.mxu0 %v1986
      %2870 = vmatpush1.msra.mxu0 %v1985
      %2871 = vmatprep.subr.mxu0 %v1978
      %2872 = vmatpush1.msra.mxu0 %v1977
      %2873 = vmatprep.subr.mxu0 %v1970
      %2874 = vmatpush1.msra.mxu0 %v1969
      %2875 = vmatprep.subr.mxu0 %v1962
      %2876 = vmatpush1.msra.mxu0 %v1961
      %2877 = vmatprep.subr.mxu0 %v1954
      %2878 = vmatpush1.msra.mxu0 %v1953
      %2879 = vmatprep.subr.mxu0 %v1946
      %2880 = vmatpush1.msra.mxu0 %v1945
      %2881 = vmatprep.subr.mxu0 %v1938
      %2882 = vmatpush1.msra.mxu0 %v1937
      %2883 = vmatprep.subr.mxu0 %v1930
      %2884 = vmatpush1.msra.mxu0 %v1929
      %2885 = vmatprep.subr.mxu0 %v1922
      %2886 = vmatpush1.msra.mxu0 %v1921
      %2887 = vmatprep.subr.mxu0 %v2170
      %2888 = vmatpush2.msra.mxu0 %v2169
      %2889 = vmatprep.subr.mxu0 %v2162
      %2890 = vmatpush2.msra.mxu0 %v2161
      %2891 = vmatprep.subr.mxu0 %v2154
      %2892 = vmatpush2.msra.mxu0 %v2153
      %2893 = vmatprep.subr.mxu0 %v2146
      %2894 = vmatpush2.msra.mxu0 %v2145
      %2895 = vmatprep.subr.mxu0 %v2138
      %2896 = vmatpush2.msra.mxu0 %v2137
      %2897 = vmatprep.subr.mxu0 %v2130
      %2898 = vmatpush2.msra.mxu0 %v2129
      %2899 = vmatprep.subr.mxu0 %v2122
      %2900 = vmatpush2.msra.mxu0 %v2121
      %2901 = vmatprep.subr.mxu0 %v2114
      %2902 = vmatpush2.msra.mxu0 %v2113
      %2903 = vmatprep.subr.mxu0 %v2106
      %2904 = vmatpush2.msra.mxu0 %v2105
      %2905 = vmatprep.subr.mxu0 %v2098
      %2906 = vmatpush2.msra.mxu0 %v2097
      %2907 = vmatprep.subr.mxu0 %v2090
      %2908 = vmatpush2.msra.mxu0 %v2089
      %2909 = vmatprep.subr.mxu0 %v2082
      %2910 = vmatpush2.msra.mxu0 %v2081
      %2911 = vmatprep.subr.mxu0 %v2074
      %2912 = vmatpush2.msra.mxu0 %v2073
      %2913 = vmatprep.subr.mxu0 %v2066
      %2914 = vmatpush2.msra.mxu0 %v2065
      %2915 = vmatprep.subr.mxu0 %v2058
      %2916 = vmatpush2.msra.mxu0 %v2057
      %2917 = vmatprep.subr.mxu0 %v2050
      %2918 = vmatpush2.msra.mxu0 %v2049
      %2919 = vmatprep.mubr.f32.mxu0 %v1916
      %2920 = vmatmul.mubr.f32.gmra.mxu0 %v1915
      %v2921 = vpop.f32.mrf.mxu0
      %v2922 = vadd.f32 %v2638, %v2921
      %v2923 = vpop.f32.mrf.mxu0
      %v2924 = vadd.f32 %v2640, %v2923
      %2925 = vdwg.mxu0
      %2926 = vmatprep.subr.mxu0 %v2044
      %2927 = vmatpush1.msra.mxu0 %v2043
      %2928 = vmatprep.subr.mxu0 %v2036
      %2929 = vmatpush1.msra.mxu0 %v2035
      %2930 = vmatprep.subr.mxu0 %v2028
      %2931 = vmatpush1.msra.mxu0 %v2027
      %2932 = vmatprep.subr.mxu0 %v2020
      %2933 = vmatpush1.msra.mxu0 %v2019
      %2934 = vmatprep.subr.mxu0 %v2012
      %2935 = vmatpush1.msra.mxu0 %v2011
      %2936 = vmatprep.subr.mxu0 %v2004
      %2937 = vmatpush1.msra.mxu0 %v2003
      %2938 = vmatprep.subr.mxu0 %v1996
      %2939 = vmatpush1.msra.mxu0 %v1995
      %2940 = vmatprep.subr.mxu0 %v1988
      %2941 = vmatpush1.msra.mxu0 %v1987
      %2942 = vmatprep.subr.mxu0 %v1980
      %2943 = vmatpush1.msra.mxu0 %v1979
      %2944 = vmatprep.subr.mxu0 %v1972
      %2945 = vmatpush1.msra.mxu0 %v1971
      %2946 = vmatprep.subr.mxu0 %v1964
      %2947 = vmatpush1.msra.mxu0 %v1963
      %2948 = vmatprep.subr.mxu0 %v1956
      %2949 = vmatpush1.msra.mxu0 %v1955
      %2950 = vmatprep.subr.mxu0 %v1948
      %2951 = vmatpush1.msra.mxu0 %v1947
      %2952 = vmatprep.subr.mxu0 %v1940
      %2953 = vmatpush1.msra.mxu0 %v1939
      %2954 = vmatprep.subr.mxu0 %v1932
      %2955 = vmatpush1.msra.mxu0 %v1931
      %2956 = vmatprep.subr.mxu0 %v1924
      %2957 = vmatpush1.msra.mxu0 %v1923
      %2958 = vmatprep.subr.mxu0 %v2172
      %2959 = vmatpush2.msra.mxu0 %v2171
      %2960 = vmatprep.subr.mxu0 %v2164
      %2961 = vmatpush2.msra.mxu0 %v2163
      %2962 = vmatprep.subr.mxu0 %v2156
      %2963 = vmatpush2.msra.mxu0 %v2155
      %2964 = vmatprep.subr.mxu0 %v2148
      %2965 = vmatpush2.msra.mxu0 %v2147
      %2966 = vmatprep.subr.mxu0 %v2140
      %2967 = vmatpush2.msra.mxu0 %v2139
      %2968 = vmatprep.subr.mxu0 %v2132
      %2969 = vmatpush2.msra.mxu0 %v2131
      %2970 = vmatprep.subr.mxu0 %v2124
      %2971 = vmatpush2.msra.mxu0 %v2123
      %2972 = vmatprep.subr.mxu0 %v2116
      %2973 = vmatpush2.msra.mxu0 %v2115
      %2974 = vmatprep.subr.mxu0 %v2108
      %2975 = vmatpush2.msra.mxu0 %v2107
      %2976 = vmatprep.subr.mxu0 %v2100
      %2977 = vmatpush2.msra.mxu0 %v2099
      %2978 = vmatprep.subr.mxu0 %v2092
      %2979 = vmatpush2.msra.mxu0 %v2091
      %2980 = vmatprep.subr.mxu0 %v2084
      %2981 = vmatpush2.msra.mxu0 %v2083
      %2982 = vmatprep.subr.mxu0 %v2076
      %2983 = vmatpush2.msra.mxu0 %v2075
      %2984 = vmatprep.subr.mxu0 %v2068
      %2985 = vmatpush2.msra.mxu0 %v2067
      %2986 = vmatprep.subr.mxu0 %v2060
      %2987 = vmatpush2.msra.mxu0 %v2059
      %2988 = vmatprep.subr.mxu0 %v2052
      %2989 = vmatpush2.msra.mxu0 %v2051
      %2990 = vmatprep.mubr.f32.mxu0 %v1916
      %2991 = vmatmul.mubr.f32.gmra.mxu0 %v1915
      %v2992 = vpop.f32.mrf.mxu0
      %v2993 = vadd.f32 %v2709, %v2992
      %v2994 = vpop.f32.mrf.mxu0
      %v2995 = vadd.f32 %v2711, %v2994
      %2996 = vdwg.mxu0
      %v2997 = vld [vmem:[%s7] sm:$0xff]
      %v2999 = vlaneseq
      %v3000 = vshrl.u32 %v2999, 7
      %v3001 = vsub.s32 0, %v3000
      %v3002 = vrot.slane %v2997, %v3001
      %v3003 = vlaneseq
      %v3004 = vshrl.u32 %v3003, 7
      %v3005 = vsub.s32 1, %v3004
      %v3006 = vrot.slane %v2997, %v3005
      %v3007 = vlaneseq
      %v3008 = vshrl.u32 %v3007, 7
      %v3009 = vsub.s32 2, %v3008
      %v3010 = vrot.slane %v2997, %v3009
      %v3011 = vlaneseq
      %v3012 = vshrl.u32 %v3011, 7
      %v3013 = vsub.s32 3, %v3012
      %v3014 = vrot.slane %v2997, %v3013
      %v3015 = vlaneseq
      %v3016 = vshrl.u32 %v3015, 7
      %v3017 = vsub.s32 4, %v3016
      %v3018 = vrot.slane %v2997, %v3017
      %v3019 = vlaneseq
      %v3020 = vshrl.u32 %v3019, 7
      %v3021 = vsub.s32 5, %v3020
      %v3022 = vrot.slane %v2997, %v3021
      %v3023 = vlaneseq
      %v3024 = vshrl.u32 %v3023, 7
      %v3025 = vsub.s32 6, %v3024
      %v3026 = vrot.slane %v2997, %v3025
      %v3027 = vlaneseq
      %v3028 = vshrl.u32 %v3027, 7
      %v3029 = vsub.s32 7, %v3028
      %v3030 = vrot.slane %v2997, %v3029
      %v3039 = vadd.f32 %v2780, %v3002
      %v3040 = vadd.f32 %v2782, %v3006
      %v3041 = vadd.f32 %v2851, %v3010
      %v3042 = vadd.f32 %v2853, %v3014
      %v3043 = vadd.f32 %v2922, %v3018
      %v3044 = vadd.f32 %v2924, %v3022
      %v3045 = vadd.f32 %v2993, %v3026
      %v3046 = vadd.f32 %v2995, %v3030
      %v3047 = vxor.u32 %v3039, 2147483648
      %v3048 = vxor.u32 %v3040, 2147483648
      %v3049 = vmul.f32 %v3047, 1.442695
      %v3050 = vpow.pop %v3049
      %v3051 = vmul.f32 %v3048, 1.442695
      %v3052 = vpow.pop %v3051
      %v3053 = vadd.f32 %v3050, 1.0
      %v3054 = vadd.f32 %v3052, 1.0
      %v3055 = vrcp.pop %v3053
      %v3056 = vmul.f32 1.0, %v3055
      %v3057 = vrcp.pop %v3054
      %v3058 = vmul.f32 1.0, %v3057
      %v3059 = vxor.u32 %v3041, 2147483648
      %v3060 = vxor.u32 %v3042, 2147483648
      %v3061 = vmul.f32 %v3059, 1.442695
      %v3062 = vpow.pop %v3061
      %v3063 = vmul.f32 %v3060, 1.442695
      %v3064 = vpow.pop %v3063
      %v3065 = vadd.f32 %v3062, 1.0
      %v3066 = vadd.f32 %v3064, 1.0
      %v3067 = vrcp.pop %v3065
      %v3068 = vmul.f32 1.0, %v3067
      %v3069 = vrcp.pop %v3066
      %v3070 = vmul.f32 1.0, %v3069
      %v3071 = vtanh.pop %v3043
      %v3072 = vtanh.pop %v3044
      %v3073 = vxor.u32 %v3045, 2147483648
      %v3074 = vxor.u32 %v3046, 2147483648
      %v3075 = vmul.f32 %v3073, 1.442695
      %v3076 = vpow.pop %v3075
      %v3077 = vmul.f32 %v3074, 1.442695
      %v3078 = vpow.pop %v3077
      %v3079 = vadd.f32 %v3076, 1.0
      %v3080 = vadd.f32 %v3078, 1.0
      %v3081 = vrcp.pop %v3079
      %v3082 = vmul.f32 1.0, %v3081
      %v3083 = vrcp.pop %v3080
      %v3084 = vmul.f32 1.0, %v3083
      %v3085 = vmul.f32 %v3068, %v208
      %v3086 = vmul.f32 %v3070, %v209
      %v3087 = vmul.f32 %v3056, %v3071
      %v3088 = vmul.f32 %v3058, %v3072
      %v3089 = vadd.f32 %v3085, %v3087
      %v3090 = vadd.f32 %v3086, %v3088
      %v3091 = vtanh.pop %v3089
      %v3092 = vtanh.pop %v3090
      %v3093 = vmul.f32 %v3082, %v3091
      %v3094 = vmul.f32 %v3084, %v3092
      %v3095 = vld [vmem:[%s8] sm:$0xff]
      %v3096 = vld [vmem:[%s8 + $0x8] sm:$0xff]
      %v3097 = vld [vmem:[%s8 + $0x10] sm:$0xff]
      %v3098 = vld [vmem:[%s8 + $0x18] sm:$0xff]
      %v3099 = vld [vmem:[%s8 + $0x20] sm:$0xff]
      %v3100 = vld [vmem:[%s8 + $0x28] sm:$0xff]
      %v3101 = vld [vmem:[%s8 + $0x30] sm:$0xff]
      %v3102 = vld [vmem:[%s8 + $0x38] sm:$0xff]
      %v3103 = vld [vmem:[%s8 + $0x40] sm:$0xff]
      %v3104 = vld [vmem:[%s8 + $0x48] sm:$0xff]
      %v3105 = vld [vmem:[%s8 + $0x50] sm:$0xff]
      %v3106 = vld [vmem:[%s8 + $0x58] sm:$0xff]
      %v3107 = vld [vmem:[%s8 + $0x60] sm:$0xff]
      %v3108 = vld [vmem:[%s8 + $0x68] sm:$0xff]
      %v3109 = vld [vmem:[%s8 + $0x70] sm:$0xff]
      %v3110 = vld [vmem:[%s8 + $0x78] sm:$0xff]
      %v3111 = vld [vmem:[%s8 + $0x80] sm:$0xff]
      %v3112 = vld [vmem:[%s8 + $0x88] sm:$0xff]
      %v3113 = vld [vmem:[%s8 + $0x90] sm:$0xff]
      %v3114 = vld [vmem:[%s8 + $0x98] sm:$0xff]
      %v3115 = vld [vmem:[%s8 + $0xa0] sm:$0xff]
      %v3116 = vld [vmem:[%s8 + $0xa8] sm:$0xff]
      %v3117 = vld [vmem:[%s8 + $0xb0] sm:$0xff]
      %v3118 = vld [vmem:[%s8 + $0xb8] sm:$0xff]
      %v3119 = vld [vmem:[%s8 + $0xc0] sm:$0xff]
      %v3120 = vld [vmem:[%s8 + $0xc8] sm:$0xff]
      %v3121 = vld [vmem:[%s8 + $0xd0] sm:$0xff]
      %v3122 = vld [vmem:[%s8 + $0xd8] sm:$0xff]
      %v3123 = vld [vmem:[%s8 + $0xe0] sm:$0xff]
      %v3124 = vld [vmem:[%s8 + $0xe8] sm:$0xff]
      %v3125 = vld [vmem:[%s8 + $0xf0] sm:$0xff]
      %v3126 = vld [vmem:[%s8 + $0xf8] sm:$0xff]
      %v3127 = vld [vmem:[%s8 + $0x100] sm:$0xff]
      %v3128 = vld [vmem:[%s8 + $0x108] sm:$0xff]
      %v3129 = vld [vmem:[%s8 + $0x110] sm:$0xff]
      %v3130 = vld [vmem:[%s8 + $0x118] sm:$0xff]
      %v3131 = vld [vmem:[%s8 + $0x120] sm:$0xff]
      %v3132 = vld [vmem:[%s8 + $0x128] sm:$0xff]
      %v3133 = vld [vmem:[%s8 + $0x130] sm:$0xff]
      %v3134 = vld [vmem:[%s8 + $0x138] sm:$0xff]
      %v3135 = vld [vmem:[%s8 + $0x140] sm:$0xff]
      %v3136 = vld [vmem:[%s8 + $0x148] sm:$0xff]
      %v3137 = vld [vmem:[%s8 + $0x150] sm:$0xff]
      %v3138 = vld [vmem:[%s8 + $0x158] sm:$0xff]
      %v3139 = vld [vmem:[%s8 + $0x160] sm:$0xff]
      %v3140 = vld [vmem:[%s8 + $0x168] sm:$0xff]
      %v3141 = vld [vmem:[%s8 + $0x170] sm:$0xff]
      %v3142 = vld [vmem:[%s8 + $0x178] sm:$0xff]
      %v3143 = vld [vmem:[%s8 + $0x180] sm:$0xff]
      %v3144 = vld [vmem:[%s8 + $0x188] sm:$0xff]
      %v3145 = vld [vmem:[%s8 + $0x190] sm:$0xff]
      %v3146 = vld [vmem:[%s8 + $0x198] sm:$0xff]
      %v3147 = vld [vmem:[%s8 + $0x1a0] sm:$0xff]
      %v3148 = vld [vmem:[%s8 + $0x1a8] sm:$0xff]
      %v3149 = vld [vmem:[%s8 + $0x1b0] sm:$0xff]
      %v3150 = vld [vmem:[%s8 + $0x1b8] sm:$0xff]
      %v3151 = vld [vmem:[%s8 + $0x1c0] sm:$0xff]
      %v3152 = vld [vmem:[%s8 + $0x1c8] sm:$0xff]
      %v3153 = vld [vmem:[%s8 + $0x1d0] sm:$0xff]
      %v3154 = vld [vmem:[%s8 + $0x1d8] sm:$0xff]
      %v3155 = vld [vmem:[%s8 + $0x1e0] sm:$0xff]
      %v3156 = vld [vmem:[%s8 + $0x1e8] sm:$0xff]
      %v3157 = vld [vmem:[%s8 + $0x1f0] sm:$0xff]
      %v3158 = vld [vmem:[%s8 + $0x1f8] sm:$0xff]
      %v3159 = vld [vmem:[%s8 + $0x200] sm:$0xff]
      %v3160 = vld [vmem:[%s8 + $0x208] sm:$0xff]
      %v3161 = vld [vmem:[%s8 + $0x210] sm:$0xff]
      %v3162 = vld [vmem:[%s8 + $0x218] sm:$0xff]
      %v3163 = vld [vmem:[%s8 + $0x220] sm:$0xff]
      %v3164 = vld [vmem:[%s8 + $0x228] sm:$0xff]
      %v3165 = vld [vmem:[%s8 + $0x230] sm:$0xff]
      %v3166 = vld [vmem:[%s8 + $0x238] sm:$0xff]
      %v3167 = vld [vmem:[%s8 + $0x240] sm:$0xff]
      %v3168 = vld [vmem:[%s8 + $0x248] sm:$0xff]
      %v3169 = vld [vmem:[%s8 + $0x250] sm:$0xff]
      %v3170 = vld [vmem:[%s8 + $0x258] sm:$0xff]
      %v3171 = vld [vmem:[%s8 + $0x260] sm:$0xff]
      %v3172 = vld [vmem:[%s8 + $0x268] sm:$0xff]
      %v3173 = vld [vmem:[%s8 + $0x270] sm:$0xff]
      %v3174 = vld [vmem:[%s8 + $0x278] sm:$0xff]
      %v3175 = vld [vmem:[%s8 + $0x280] sm:$0xff]
      %v3176 = vld [vmem:[%s8 + $0x288] sm:$0xff]
      %v3177 = vld [vmem:[%s8 + $0x290] sm:$0xff]
      %v3178 = vld [vmem:[%s8 + $0x298] sm:$0xff]
      %v3179 = vld [vmem:[%s8 + $0x2a0] sm:$0xff]
      %v3180 = vld [vmem:[%s8 + $0x2a8] sm:$0xff]
      %v3181 = vld [vmem:[%s8 + $0x2b0] sm:$0xff]
      %v3182 = vld [vmem:[%s8 + $0x2b8] sm:$0xff]
      %v3183 = vld [vmem:[%s8 + $0x2c0] sm:$0xff]
      %v3184 = vld [vmem:[%s8 + $0x2c8] sm:$0xff]
      %v3185 = vld [vmem:[%s8 + $0x2d0] sm:$0xff]
      %v3186 = vld [vmem:[%s8 + $0x2d8] sm:$0xff]
      %v3187 = vld [vmem:[%s8 + $0x2e0] sm:$0xff]
      %v3188 = vld [vmem:[%s8 + $0x2e8] sm:$0xff]
      %v3189 = vld [vmem:[%s8 + $0x2f0] sm:$0xff]
      %v3190 = vld [vmem:[%s8 + $0x2f8] sm:$0xff]
      %v3191 = vld [vmem:[%s8 + $0x300] sm:$0xff]
      %v3192 = vld [vmem:[%s8 + $0x308] sm:$0xff]
      %v3193 = vld [vmem:[%s8 + $0x310] sm:$0xff]
      %v3194 = vld [vmem:[%s8 + $0x318] sm:$0xff]
      %v3195 = vld [vmem:[%s8 + $0x320] sm:$0xff]
      %v3196 = vld [vmem:[%s8 + $0x328] sm:$0xff]
      %v3197 = vld [vmem:[%s8 + $0x330] sm:$0xff]
      %v3198 = vld [vmem:[%s8 + $0x338] sm:$0xff]
      %v3199 = vld [vmem:[%s8 + $0x340] sm:$0xff]
      %v3200 = vld [vmem:[%s8 + $0x348] sm:$0xff]
      %v3201 = vld [vmem:[%s8 + $0x350] sm:$0xff]
      %v3202 = vld [vmem:[%s8 + $0x358] sm:$0xff]
      %v3203 = vld [vmem:[%s8 + $0x360] sm:$0xff]
      %v3204 = vld [vmem:[%s8 + $0x368] sm:$0xff]
      %v3205 = vld [vmem:[%s8 + $0x370] sm:$0xff]
      %v3206 = vld [vmem:[%s8 + $0x378] sm:$0xff]
      %v3207 = vld [vmem:[%s8 + $0x380] sm:$0xff]
      %v3208 = vld [vmem:[%s8 + $0x388] sm:$0xff]
      %v3209 = vld [vmem:[%s8 + $0x390] sm:$0xff]
      %v3210 = vld [vmem:[%s8 + $0x398] sm:$0xff]
      %v3211 = vld [vmem:[%s8 + $0x3a0] sm:$0xff]
      %v3212 = vld [vmem:[%s8 + $0x3a8] sm:$0xff]
      %v3213 = vld [vmem:[%s8 + $0x3b0] sm:$0xff]
      %v3214 = vld [vmem:[%s8 + $0x3b8] sm:$0xff]
      %v3215 = vld [vmem:[%s8 + $0x3c0] sm:$0xff]
      %v3216 = vld [vmem:[%s8 + $0x3c8] sm:$0xff]
      %v3217 = vld [vmem:[%s8 + $0x3d0] sm:$0xff]
      %v3218 = vld [vmem:[%s8 + $0x3d8] sm:$0xff]
      %v3219 = vld [vmem:[%s8 + $0x3e0] sm:$0xff]
      %v3220 = vld [vmem:[%s8 + $0x3e8] sm:$0xff]
      %v3221 = vld [vmem:[%s8 + $0x3f0] sm:$0xff]
      %v3222 = vld [vmem:[%s8 + $0x3f8] sm:$0xff]
      %v3223 = vld [vmem:[%s8 + $0x400] sm:$0xff]
      %v3224 = vld [vmem:[%s8 + $0x408] sm:$0xff]
      %v3225 = vld [vmem:[%s8 + $0x410] sm:$0xff]
      %v3226 = vld [vmem:[%s8 + $0x418] sm:$0xff]
      %v3227 = vld [vmem:[%s8 + $0x420] sm:$0xff]
      %v3228 = vld [vmem:[%s8 + $0x428] sm:$0xff]
      %v3229 = vld [vmem:[%s8 + $0x430] sm:$0xff]
      %v3230 = vld [vmem:[%s8 + $0x438] sm:$0xff]
      %v3231 = vld [vmem:[%s8 + $0x440] sm:$0xff]
      %v3232 = vld [vmem:[%s8 + $0x448] sm:$0xff]
      %v3233 = vld [vmem:[%s8 + $0x450] sm:$0xff]
      %v3234 = vld [vmem:[%s8 + $0x458] sm:$0xff]
      %v3235 = vld [vmem:[%s8 + $0x460] sm:$0xff]
      %v3236 = vld [vmem:[%s8 + $0x468] sm:$0xff]
      %v3237 = vld [vmem:[%s8 + $0x470] sm:$0xff]
      %v3238 = vld [vmem:[%s8 + $0x478] sm:$0xff]
      %v3239 = vld [vmem:[%s8 + $0x480] sm:$0xff]
      %v3240 = vld [vmem:[%s8 + $0x488] sm:$0xff]
      %v3241 = vld [vmem:[%s8 + $0x490] sm:$0xff]
      %v3242 = vld [vmem:[%s8 + $0x498] sm:$0xff]
      %v3243 = vld [vmem:[%s8 + $0x4a0] sm:$0xff]
      %v3244 = vld [vmem:[%s8 + $0x4a8] sm:$0xff]
      %v3245 = vld [vmem:[%s8 + $0x4b0] sm:$0xff]
      %v3246 = vld [vmem:[%s8 + $0x4b8] sm:$0xff]
      %v3247 = vld [vmem:[%s8 + $0x4c0] sm:$0xff]
      %v3248 = vld [vmem:[%s8 + $0x4c8] sm:$0xff]
      %v3249 = vld [vmem:[%s8 + $0x4d0] sm:$0xff]
      %v3250 = vld [vmem:[%s8 + $0x4d8] sm:$0xff]
      %v3251 = vld [vmem:[%s8 + $0x4e0] sm:$0xff]
      %v3252 = vld [vmem:[%s8 + $0x4e8] sm:$0xff]
      %v3253 = vld [vmem:[%s8 + $0x4f0] sm:$0xff]
      %v3254 = vld [vmem:[%s8 + $0x4f8] sm:$0xff]
      %v3255 = vld [vmem:[%s8 + $0x500] sm:$0xff]
      %v3256 = vld [vmem:[%s8 + $0x508] sm:$0xff]
      %v3257 = vld [vmem:[%s8 + $0x510] sm:$0xff]
      %v3258 = vld [vmem:[%s8 + $0x518] sm:$0xff]
      %v3259 = vld [vmem:[%s8 + $0x520] sm:$0xff]
      %v3260 = vld [vmem:[%s8 + $0x528] sm:$0xff]
      %v3261 = vld [vmem:[%s8 + $0x530] sm:$0xff]
      %v3262 = vld [vmem:[%s8 + $0x538] sm:$0xff]
      %v3263 = vld [vmem:[%s8 + $0x540] sm:$0xff]
      %v3264 = vld [vmem:[%s8 + $0x548] sm:$0xff]
      %v3265 = vld [vmem:[%s8 + $0x550] sm:$0xff]
      %v3266 = vld [vmem:[%s8 + $0x558] sm:$0xff]
      %v3267 = vld [vmem:[%s8 + $0x560] sm:$0xff]
      %v3268 = vld [vmem:[%s8 + $0x568] sm:$0xff]
      %v3269 = vld [vmem:[%s8 + $0x570] sm:$0xff]
      %v3270 = vld [vmem:[%s8 + $0x578] sm:$0xff]
      %v3271 = vld [vmem:[%s8 + $0x580] sm:$0xff]
      %v3272 = vld [vmem:[%s8 + $0x588] sm:$0xff]
      %v3273 = vld [vmem:[%s8 + $0x590] sm:$0xff]
      %v3274 = vld [vmem:[%s8 + $0x598] sm:$0xff]
      %v3275 = vld [vmem:[%s8 + $0x5a0] sm:$0xff]
      %v3276 = vld [vmem:[%s8 + $0x5a8] sm:$0xff]
      %v3277 = vld [vmem:[%s8 + $0x5b0] sm:$0xff]
      %v3278 = vld [vmem:[%s8 + $0x5b8] sm:$0xff]
      %v3279 = vld [vmem:[%s8 + $0x5c0] sm:$0xff]
      %v3280 = vld [vmem:[%s8 + $0x5c8] sm:$0xff]
      %v3281 = vld [vmem:[%s8 + $0x5d0] sm:$0xff]
      %v3282 = vld [vmem:[%s8 + $0x5d8] sm:$0xff]
      %v3283 = vld [vmem:[%s8 + $0x5e0] sm:$0xff]
      %v3284 = vld [vmem:[%s8 + $0x5e8] sm:$0xff]
      %v3285 = vld [vmem:[%s8 + $0x5f0] sm:$0xff]
      %v3286 = vld [vmem:[%s8 + $0x5f8] sm:$0xff]
      %v3287 = vld [vmem:[%s8 + $0x600] sm:$0xff]
      %v3288 = vld [vmem:[%s8 + $0x608] sm:$0xff]
      %v3289 = vld [vmem:[%s8 + $0x610] sm:$0xff]
      %v3290 = vld [vmem:[%s8 + $0x618] sm:$0xff]
      %v3291 = vld [vmem:[%s8 + $0x620] sm:$0xff]
      %v3292 = vld [vmem:[%s8 + $0x628] sm:$0xff]
      %v3293 = vld [vmem:[%s8 + $0x630] sm:$0xff]
      %v3294 = vld [vmem:[%s8 + $0x638] sm:$0xff]
      %v3295 = vld [vmem:[%s8 + $0x640] sm:$0xff]
      %v3296 = vld [vmem:[%s8 + $0x648] sm:$0xff]
      %v3297 = vld [vmem:[%s8 + $0x650] sm:$0xff]
      %v3298 = vld [vmem:[%s8 + $0x658] sm:$0xff]
      %v3299 = vld [vmem:[%s8 + $0x660] sm:$0xff]
      %v3300 = vld [vmem:[%s8 + $0x668] sm:$0xff]
      %v3301 = vld [vmem:[%s8 + $0x670] sm:$0xff]
      %v3302 = vld [vmem:[%s8 + $0x678] sm:$0xff]
      %v3303 = vld [vmem:[%s8 + $0x680] sm:$0xff]
      %v3304 = vld [vmem:[%s8 + $0x688] sm:$0xff]
      %v3305 = vld [vmem:[%s8 + $0x690] sm:$0xff]
      %v3306 = vld [vmem:[%s8 + $0x698] sm:$0xff]
      %v3307 = vld [vmem:[%s8 + $0x6a0] sm:$0xff]
      %v3308 = vld [vmem:[%s8 + $0x6a8] sm:$0xff]
      %v3309 = vld [vmem:[%s8 + $0x6b0] sm:$0xff]
      %v3310 = vld [vmem:[%s8 + $0x6b8] sm:$0xff]
      %v3311 = vld [vmem:[%s8 + $0x6c0] sm:$0xff]
      %v3312 = vld [vmem:[%s8 + $0x6c8] sm:$0xff]
      %v3313 = vld [vmem:[%s8 + $0x6d0] sm:$0xff]
      %v3314 = vld [vmem:[%s8 + $0x6d8] sm:$0xff]
      %v3315 = vld [vmem:[%s8 + $0x6e0] sm:$0xff]
      %v3316 = vld [vmem:[%s8 + $0x6e8] sm:$0xff]
      %v3317 = vld [vmem:[%s8 + $0x6f0] sm:$0xff]
      %v3318 = vld [vmem:[%s8 + $0x6f8] sm:$0xff]
      %v3319 = vld [vmem:[%s8 + $0x700] sm:$0xff]
      %v3320 = vld [vmem:[%s8 + $0x708] sm:$0xff]
      %v3321 = vld [vmem:[%s8 + $0x710] sm:$0xff]
      %v3322 = vld [vmem:[%s8 + $0x718] sm:$0xff]
      %v3323 = vld [vmem:[%s8 + $0x720] sm:$0xff]
      %v3324 = vld [vmem:[%s8 + $0x728] sm:$0xff]
      %v3325 = vld [vmem:[%s8 + $0x730] sm:$0xff]
      %v3326 = vld [vmem:[%s8 + $0x738] sm:$0xff]
      %v3327 = vld [vmem:[%s8 + $0x740] sm:$0xff]
      %v3328 = vld [vmem:[%s8 + $0x748] sm:$0xff]
      %v3329 = vld [vmem:[%s8 + $0x750] sm:$0xff]
      %v3330 = vld [vmem:[%s8 + $0x758] sm:$0xff]
      %v3331 = vld [vmem:[%s8 + $0x760] sm:$0xff]
      %v3332 = vld [vmem:[%s8 + $0x768] sm:$0xff]
      %v3333 = vld [vmem:[%s8 + $0x770] sm:$0xff]
      %v3334 = vld [vmem:[%s8 + $0x778] sm:$0xff]
      %v3335 = vld [vmem:[%s8 + $0x780] sm:$0xff]
      %v3336 = vld [vmem:[%s8 + $0x788] sm:$0xff]
      %v3337 = vld [vmem:[%s8 + $0x790] sm:$0xff]
      %v3338 = vld [vmem:[%s8 + $0x798] sm:$0xff]
      %v3339 = vld [vmem:[%s8 + $0x7a0] sm:$0xff]
      %v3340 = vld [vmem:[%s8 + $0x7a8] sm:$0xff]
      %v3341 = vld [vmem:[%s8 + $0x7b0] sm:$0xff]
      %v3342 = vld [vmem:[%s8 + $0x7b8] sm:$0xff]
      %v3343 = vld [vmem:[%s8 + $0x7c0] sm:$0xff]
      %v3344 = vld [vmem:[%s8 + $0x7c8] sm:$0xff]
      %v3345 = vld [vmem:[%s8 + $0x7d0] sm:$0xff]
      %v3346 = vld [vmem:[%s8 + $0x7d8] sm:$0xff]
      %v3347 = vld [vmem:[%s8 + $0x7e0] sm:$0xff]
      %v3348 = vld [vmem:[%s8 + $0x7e8] sm:$0xff]
      %v3349 = vld [vmem:[%s8 + $0x7f0] sm:$0xff]
      %v3350 = vld [vmem:[%s8 + $0x7f8] sm:$0xff]
      %v3351 = vld [vmem:[#allocation2] sm:$0xff]
      %v3352 = vld [vmem:[#allocation2 + $0x8] sm:$0xff]
      %v3353 = vld [vmem:[#allocation2 + $0x10] sm:$0xff]
      %v3354 = vld [vmem:[#allocation2 + $0x18] sm:$0xff]
      %v3355 = vld [vmem:[#allocation2 + $0x20] sm:$0xff]
      %v3356 = vld [vmem:[#allocation2 + $0x28] sm:$0xff]
      %v3357 = vld [vmem:[#allocation2 + $0x30] sm:$0xff]
      %v3358 = vld [vmem:[#allocation2 + $0x38] sm:$0xff]
      %v3359 = vld [vmem:[#allocation2 + $0x40] sm:$0xff]
      %v3360 = vld [vmem:[#allocation2 + $0x48] sm:$0xff]
      %v3361 = vld [vmem:[#allocation2 + $0x50] sm:$0xff]
      %v3362 = vld [vmem:[#allocation2 + $0x58] sm:$0xff]
      %v3363 = vld [vmem:[#allocation2 + $0x60] sm:$0xff]
      %v3364 = vld [vmem:[#allocation2 + $0x68] sm:$0xff]
      %v3365 = vld [vmem:[#allocation2 + $0x70] sm:$0xff]
      %v3366 = vld [vmem:[#allocation2 + $0x78] sm:$0xff]
      %v3367 = vld [vmem:[#allocation2 + $0x80] sm:$0xff]
      %v3368 = vld [vmem:[#allocation2 + $0x88] sm:$0xff]
      %v3369 = vld [vmem:[#allocation2 + $0x90] sm:$0xff]
      %v3370 = vld [vmem:[#allocation2 + $0x98] sm:$0xff]
      %v3371 = vld [vmem:[#allocation2 + $0xa0] sm:$0xff]
      %v3372 = vld [vmem:[#allocation2 + $0xa8] sm:$0xff]
      %v3373 = vld [vmem:[#allocation2 + $0xb0] sm:$0xff]
      %v3374 = vld [vmem:[#allocation2 + $0xb8] sm:$0xff]
      %v3375 = vld [vmem:[#allocation2 + $0xc0] sm:$0xff]
      %v3376 = vld [vmem:[#allocation2 + $0xc8] sm:$0xff]
      %v3377 = vld [vmem:[#allocation2 + $0xd0] sm:$0xff]
      %v3378 = vld [vmem:[#allocation2 + $0xd8] sm:$0xff]
      %v3379 = vld [vmem:[#allocation2 + $0xe0] sm:$0xff]
      %v3380 = vld [vmem:[#allocation2 + $0xe8] sm:$0xff]
      %v3381 = vld [vmem:[#allocation2 + $0xf0] sm:$0xff]
      %v3382 = vld [vmem:[#allocation2 + $0xf8] sm:$0xff]
      %v3383 = vld [vmem:[#allocation2 + $0x100] sm:$0xff]
      %v3384 = vld [vmem:[#allocation2 + $0x108] sm:$0xff]
      %v3385 = vld [vmem:[#allocation2 + $0x110] sm:$0xff]
      %v3386 = vld [vmem:[#allocation2 + $0x118] sm:$0xff]
      %v3387 = vld [vmem:[#allocation2 + $0x120] sm:$0xff]
      %v3388 = vld [vmem:[#allocation2 + $0x128] sm:$0xff]
      %v3389 = vld [vmem:[#allocation2 + $0x130] sm:$0xff]
      %v3390 = vld [vmem:[#allocation2 + $0x138] sm:$0xff]
      %v3391 = vld [vmem:[#allocation2 + $0x140] sm:$0xff]
      %v3392 = vld [vmem:[#allocation2 + $0x148] sm:$0xff]
      %v3393 = vld [vmem:[#allocation2 + $0x150] sm:$0xff]
      %v3394 = vld [vmem:[#allocation2 + $0x158] sm:$0xff]
      %v3395 = vld [vmem:[#allocation2 + $0x160] sm:$0xff]
      %v3396 = vld [vmem:[#allocation2 + $0x168] sm:$0xff]
      %v3397 = vld [vmem:[#allocation2 + $0x170] sm:$0xff]
      %v3398 = vld [vmem:[#allocation2 + $0x178] sm:$0xff]
      %v3399 = vld [vmem:[#allocation2 + $0x180] sm:$0xff]
      %v3400 = vld [vmem:[#allocation2 + $0x188] sm:$0xff]
      %v3401 = vld [vmem:[#allocation2 + $0x190] sm:$0xff]
      %v3402 = vld [vmem:[#allocation2 + $0x198] sm:$0xff]
      %v3403 = vld [vmem:[#allocation2 + $0x1a0] sm:$0xff]
      %v3404 = vld [vmem:[#allocation2 + $0x1a8] sm:$0xff]
      %v3405 = vld [vmem:[#allocation2 + $0x1b0] sm:$0xff]
      %v3406 = vld [vmem:[#allocation2 + $0x1b8] sm:$0xff]
      %v3407 = vld [vmem:[#allocation2 + $0x1c0] sm:$0xff]
      %v3408 = vld [vmem:[#allocation2 + $0x1c8] sm:$0xff]
      %v3409 = vld [vmem:[#allocation2 + $0x1d0] sm:$0xff]
      %v3410 = vld [vmem:[#allocation2 + $0x1d8] sm:$0xff]
      %v3411 = vld [vmem:[#allocation2 + $0x1e0] sm:$0xff]
      %v3412 = vld [vmem:[#allocation2 + $0x1e8] sm:$0xff]
      %v3413 = vld [vmem:[#allocation2 + $0x1f0] sm:$0xff]
      %v3414 = vld [vmem:[#allocation2 + $0x1f8] sm:$0xff]
      %v3415 = vld [vmem:[#allocation2 + $0x200] sm:$0xff]
      %v3416 = vld [vmem:[#allocation2 + $0x208] sm:$0xff]
      %v3417 = vld [vmem:[#allocation2 + $0x210] sm:$0xff]
      %v3418 = vld [vmem:[#allocation2 + $0x218] sm:$0xff]
      %v3419 = vld [vmem:[#allocation2 + $0x220] sm:$0xff]
      %v3420 = vld [vmem:[#allocation2 + $0x228] sm:$0xff]
      %v3421 = vld [vmem:[#allocation2 + $0x230] sm:$0xff]
      %v3422 = vld [vmem:[#allocation2 + $0x238] sm:$0xff]
      %v3423 = vld [vmem:[#allocation2 + $0x240] sm:$0xff]
      %v3424 = vld [vmem:[#allocation2 + $0x248] sm:$0xff]
      %v3425 = vld [vmem:[#allocation2 + $0x250] sm:$0xff]
      %v3426 = vld [vmem:[#allocation2 + $0x258] sm:$0xff]
      %v3427 = vld [vmem:[#allocation2 + $0x260] sm:$0xff]
      %v3428 = vld [vmem:[#allocation2 + $0x268] sm:$0xff]
      %v3429 = vld [vmem:[#allocation2 + $0x270] sm:$0xff]
      %v3430 = vld [vmem:[#allocation2 + $0x278] sm:$0xff]
      %v3431 = vld [vmem:[#allocation2 + $0x280] sm:$0xff]
      %v3432 = vld [vmem:[#allocation2 + $0x288] sm:$0xff]
      %v3433 = vld [vmem:[#allocation2 + $0x290] sm:$0xff]
      %v3434 = vld [vmem:[#allocation2 + $0x298] sm:$0xff]
      %v3435 = vld [vmem:[#allocation2 + $0x2a0] sm:$0xff]
      %v3436 = vld [vmem:[#allocation2 + $0x2a8] sm:$0xff]
      %v3437 = vld [vmem:[#allocation2 + $0x2b0] sm:$0xff]
      %v3438 = vld [vmem:[#allocation2 + $0x2b8] sm:$0xff]
      %v3439 = vld [vmem:[#allocation2 + $0x2c0] sm:$0xff]
      %v3440 = vld [vmem:[#allocation2 + $0x2c8] sm:$0xff]
      %v3441 = vld [vmem:[#allocation2 + $0x2d0] sm:$0xff]
      %v3442 = vld [vmem:[#allocation2 + $0x2d8] sm:$0xff]
      %v3443 = vld [vmem:[#allocation2 + $0x2e0] sm:$0xff]
      %v3444 = vld [vmem:[#allocation2 + $0x2e8] sm:$0xff]
      %v3445 = vld [vmem:[#allocation2 + $0x2f0] sm:$0xff]
      %v3446 = vld [vmem:[#allocation2 + $0x2f8] sm:$0xff]
      %v3447 = vld [vmem:[#allocation2 + $0x300] sm:$0xff]
      %v3448 = vld [vmem:[#allocation2 + $0x308] sm:$0xff]
      %v3449 = vld [vmem:[#allocation2 + $0x310] sm:$0xff]
      %v3450 = vld [vmem:[#allocation2 + $0x318] sm:$0xff]
      %v3451 = vld [vmem:[#allocation2 + $0x320] sm:$0xff]
      %v3452 = vld [vmem:[#allocation2 + $0x328] sm:$0xff]
      %v3453 = vld [vmem:[#allocation2 + $0x330] sm:$0xff]
      %v3454 = vld [vmem:[#allocation2 + $0x338] sm:$0xff]
      %v3455 = vld [vmem:[#allocation2 + $0x340] sm:$0xff]
      %v3456 = vld [vmem:[#allocation2 + $0x348] sm:$0xff]
      %v3457 = vld [vmem:[#allocation2 + $0x350] sm:$0xff]
      %v3458 = vld [vmem:[#allocation2 + $0x358] sm:$0xff]
      %v3459 = vld [vmem:[#allocation2 + $0x360] sm:$0xff]
      %v3460 = vld [vmem:[#allocation2 + $0x368] sm:$0xff]
      %v3461 = vld [vmem:[#allocation2 + $0x370] sm:$0xff]
      %v3462 = vld [vmem:[#allocation2 + $0x378] sm:$0xff]
      %v3463 = vld [vmem:[#allocation2 + $0x380] sm:$0xff]
      %v3464 = vld [vmem:[#allocation2 + $0x388] sm:$0xff]
      %v3465 = vld [vmem:[#allocation2 + $0x390] sm:$0xff]
      %v3466 = vld [vmem:[#allocation2 + $0x398] sm:$0xff]
      %v3467 = vld [vmem:[#allocation2 + $0x3a0] sm:$0xff]
      %v3468 = vld [vmem:[#allocation2 + $0x3a8] sm:$0xff]
      %v3469 = vld [vmem:[#allocation2 + $0x3b0] sm:$0xff]
      %v3470 = vld [vmem:[#allocation2 + $0x3b8] sm:$0xff]
      %v3471 = vld [vmem:[#allocation2 + $0x3c0] sm:$0xff]
      %v3472 = vld [vmem:[#allocation2 + $0x3c8] sm:$0xff]
      %v3473 = vld [vmem:[#allocation2 + $0x3d0] sm:$0xff]
      %v3474 = vld [vmem:[#allocation2 + $0x3d8] sm:$0xff]
      %v3475 = vld [vmem:[#allocation2 + $0x3e0] sm:$0xff]
      %v3476 = vld [vmem:[#allocation2 + $0x3e8] sm:$0xff]
      %v3477 = vld [vmem:[#allocation2 + $0x3f0] sm:$0xff]
      %v3478 = vld [vmem:[#allocation2 + $0x3f8] sm:$0xff]
      %v3479 = vld [vmem:[#allocation2 + $0x400] sm:$0xff]
      %v3480 = vld [vmem:[#allocation2 + $0x408] sm:$0xff]
      %v3481 = vld [vmem:[#allocation2 + $0x410] sm:$0xff]
      %v3482 = vld [vmem:[#allocation2 + $0x418] sm:$0xff]
      %v3483 = vld [vmem:[#allocation2 + $0x420] sm:$0xff]
      %v3484 = vld [vmem:[#allocation2 + $0x428] sm:$0xff]
      %v3485 = vld [vmem:[#allocation2 + $0x430] sm:$0xff]
      %v3486 = vld [vmem:[#allocation2 + $0x438] sm:$0xff]
      %v3487 = vld [vmem:[#allocation2 + $0x440] sm:$0xff]
      %v3488 = vld [vmem:[#allocation2 + $0x448] sm:$0xff]
      %v3489 = vld [vmem:[#allocation2 + $0x450] sm:$0xff]
      %v3490 = vld [vmem:[#allocation2 + $0x458] sm:$0xff]
      %v3491 = vld [vmem:[#allocation2 + $0x460] sm:$0xff]
      %v3492 = vld [vmem:[#allocation2 + $0x468] sm:$0xff]
      %v3493 = vld [vmem:[#allocation2 + $0x470] sm:$0xff]
      %v3494 = vld [vmem:[#allocation2 + $0x478] sm:$0xff]
      %v3495 = vld [vmem:[#allocation2 + $0x480] sm:$0xff]
      %v3496 = vld [vmem:[#allocation2 + $0x488] sm:$0xff]
      %v3497 = vld [vmem:[#allocation2 + $0x490] sm:$0xff]
      %v3498 = vld [vmem:[#allocation2 + $0x498] sm:$0xff]
      %v3499 = vld [vmem:[#allocation2 + $0x4a0] sm:$0xff]
      %v3500 = vld [vmem:[#allocation2 + $0x4a8] sm:$0xff]
      %v3501 = vld [vmem:[#allocation2 + $0x4b0] sm:$0xff]
      %v3502 = vld [vmem:[#allocation2 + $0x4b8] sm:$0xff]
      %v3503 = vld [vmem:[#allocation2 + $0x4c0] sm:$0xff]
      %v3504 = vld [vmem:[#allocation2 + $0x4c8] sm:$0xff]
      %v3505 = vld [vmem:[#allocation2 + $0x4d0] sm:$0xff]
      %v3506 = vld [vmem:[#allocation2 + $0x4d8] sm:$0xff]
      %v3507 = vld [vmem:[#allocation2 + $0x4e0] sm:$0xff]
      %v3508 = vld [vmem:[#allocation2 + $0x4e8] sm:$0xff]
      %v3509 = vld [vmem:[#allocation2 + $0x4f0] sm:$0xff]
      %v3510 = vld [vmem:[#allocation2 + $0x4f8] sm:$0xff]
      %v3511 = vld [vmem:[#allocation2 + $0x500] sm:$0xff]
      %v3512 = vld [vmem:[#allocation2 + $0x508] sm:$0xff]
      %v3513 = vld [vmem:[#allocation2 + $0x510] sm:$0xff]
      %v3514 = vld [vmem:[#allocation2 + $0x518] sm:$0xff]
      %v3515 = vld [vmem:[#allocation2 + $0x520] sm:$0xff]
      %v3516 = vld [vmem:[#allocation2 + $0x528] sm:$0xff]
      %v3517 = vld [vmem:[#allocation2 + $0x530] sm:$0xff]
      %v3518 = vld [vmem:[#allocation2 + $0x538] sm:$0xff]
      %v3519 = vld [vmem:[#allocation2 + $0x540] sm:$0xff]
      %v3520 = vld [vmem:[#allocation2 + $0x548] sm:$0xff]
      %v3521 = vld [vmem:[#allocation2 + $0x550] sm:$0xff]
      %v3522 = vld [vmem:[#allocation2 + $0x558] sm:$0xff]
      %v3523 = vld [vmem:[#allocation2 + $0x560] sm:$0xff]
      %v3524 = vld [vmem:[#allocation2 + $0x568] sm:$0xff]
      %v3525 = vld [vmem:[#allocation2 + $0x570] sm:$0xff]
      %v3526 = vld [vmem:[#allocation2 + $0x578] sm:$0xff]
      %v3527 = vld [vmem:[#allocation2 + $0x580] sm:$0xff]
      %v3528 = vld [vmem:[#allocation2 + $0x588] sm:$0xff]
      %v3529 = vld [vmem:[#allocation2 + $0x590] sm:$0xff]
      %v3530 = vld [vmem:[#allocation2 + $0x598] sm:$0xff]
      %v3531 = vld [vmem:[#allocation2 + $0x5a0] sm:$0xff]
      %v3532 = vld [vmem:[#allocation2 + $0x5a8] sm:$0xff]
      %v3533 = vld [vmem:[#allocation2 + $0x5b0] sm:$0xff]
      %v3534 = vld [vmem:[#allocation2 + $0x5b8] sm:$0xff]
      %v3535 = vld [vmem:[#allocation2 + $0x5c0] sm:$0xff]
      %v3536 = vld [vmem:[#allocation2 + $0x5c8] sm:$0xff]
      %v3537 = vld [vmem:[#allocation2 + $0x5d0] sm:$0xff]
      %v3538 = vld [vmem:[#allocation2 + $0x5d8] sm:$0xff]
      %v3539 = vld [vmem:[#allocation2 + $0x5e0] sm:$0xff]
      %v3540 = vld [vmem:[#allocation2 + $0x5e8] sm:$0xff]
      %v3541 = vld [vmem:[#allocation2 + $0x5f0] sm:$0xff]
      %v3542 = vld [vmem:[#allocation2 + $0x5f8] sm:$0xff]
      %v3543 = vld [vmem:[#allocation2 + $0x600] sm:$0xff]
      %v3544 = vld [vmem:[#allocation2 + $0x608] sm:$0xff]
      %v3545 = vld [vmem:[#allocation2 + $0x610] sm:$0xff]
      %v3546 = vld [vmem:[#allocation2 + $0x618] sm:$0xff]
      %v3547 = vld [vmem:[#allocation2 + $0x620] sm:$0xff]
      %v3548 = vld [vmem:[#allocation2 + $0x628] sm:$0xff]
      %v3549 = vld [vmem:[#allocation2 + $0x630] sm:$0xff]
      %v3550 = vld [vmem:[#allocation2 + $0x638] sm:$0xff]
      %v3551 = vld [vmem:[#allocation2 + $0x640] sm:$0xff]
      %v3552 = vld [vmem:[#allocation2 + $0x648] sm:$0xff]
      %v3553 = vld [vmem:[#allocation2 + $0x650] sm:$0xff]
      %v3554 = vld [vmem:[#allocation2 + $0x658] sm:$0xff]
      %v3555 = vld [vmem:[#allocation2 + $0x660] sm:$0xff]
      %v3556 = vld [vmem:[#allocation2 + $0x668] sm:$0xff]
      %v3557 = vld [vmem:[#allocation2 + $0x670] sm:$0xff]
      %v3558 = vld [vmem:[#allocation2 + $0x678] sm:$0xff]
      %v3559 = vld [vmem:[#allocation2 + $0x680] sm:$0xff]
      %v3560 = vld [vmem:[#allocation2 + $0x688] sm:$0xff]
      %v3561 = vld [vmem:[#allocation2 + $0x690] sm:$0xff]
      %v3562 = vld [vmem:[#allocation2 + $0x698] sm:$0xff]
      %v3563 = vld [vmem:[#allocation2 + $0x6a0] sm:$0xff]
      %v3564 = vld [vmem:[#allocation2 + $0x6a8] sm:$0xff]
      %v3565 = vld [vmem:[#allocation2 + $0x6b0] sm:$0xff]
      %v3566 = vld [vmem:[#allocation2 + $0x6b8] sm:$0xff]
      %v3567 = vld [vmem:[#allocation2 + $0x6c0] sm:$0xff]
      %v3568 = vld [vmem:[#allocation2 + $0x6c8] sm:$0xff]
      %v3569 = vld [vmem:[#allocation2 + $0x6d0] sm:$0xff]
      %v3570 = vld [vmem:[#allocation2 + $0x6d8] sm:$0xff]
      %v3571 = vld [vmem:[#allocation2 + $0x6e0] sm:$0xff]
      %v3572 = vld [vmem:[#allocation2 + $0x6e8] sm:$0xff]
      %v3573 = vld [vmem:[#allocation2 + $0x6f0] sm:$0xff]
      %v3574 = vld [vmem:[#allocation2 + $0x6f8] sm:$0xff]
      %v3575 = vld [vmem:[#allocation2 + $0x700] sm:$0xff]
      %v3576 = vld [vmem:[#allocation2 + $0x708] sm:$0xff]
      %v3577 = vld [vmem:[#allocation2 + $0x710] sm:$0xff]
      %v3578 = vld [vmem:[#allocation2 + $0x718] sm:$0xff]
      %v3579 = vld [vmem:[#allocation2 + $0x720] sm:$0xff]
      %v3580 = vld [vmem:[#allocation2 + $0x728] sm:$0xff]
      %v3581 = vld [vmem:[#allocation2 + $0x730] sm:$0xff]
      %v3582 = vld [vmem:[#allocation2 + $0x738] sm:$0xff]
      %v3583 = vld [vmem:[#allocation2 + $0x740] sm:$0xff]
      %v3584 = vld [vmem:[#allocation2 + $0x748] sm:$0xff]
      %v3585 = vld [vmem:[#allocation2 + $0x750] sm:$0xff]
      %v3586 = vld [vmem:[#allocation2 + $0x758] sm:$0xff]
      %v3587 = vld [vmem:[#allocation2 + $0x760] sm:$0xff]
      %v3588 = vld [vmem:[#allocation2 + $0x768] sm:$0xff]
      %v3589 = vld [vmem:[#allocation2 + $0x770] sm:$0xff]
      %v3590 = vld [vmem:[#allocation2 + $0x778] sm:$0xff]
      %v3591 = vld [vmem:[#allocation2 + $0x780] sm:$0xff]
      %v3592 = vld [vmem:[#allocation2 + $0x788] sm:$0xff]
      %v3593 = vld [vmem:[#allocation2 + $0x790] sm:$0xff]
      %v3594 = vld [vmem:[#allocation2 + $0x798] sm:$0xff]
      %v3595 = vld [vmem:[#allocation2 + $0x7a0] sm:$0xff]
      %v3596 = vld [vmem:[#allocation2 + $0x7a8] sm:$0xff]
      %v3597 = vld [vmem:[#allocation2 + $0x7b0] sm:$0xff]
      %v3598 = vld [vmem:[#allocation2 + $0x7b8] sm:$0xff]
      %v3599 = vld [vmem:[#allocation2 + $0x7c0] sm:$0xff]
      %v3600 = vld [vmem:[#allocation2 + $0x7c8] sm:$0xff]
      %v3601 = vld [vmem:[#allocation2 + $0x7d0] sm:$0xff]
      %v3602 = vld [vmem:[#allocation2 + $0x7d8] sm:$0xff]
      %v3603 = vld [vmem:[#allocation2 + $0x7e0] sm:$0xff]
      %v3604 = vld [vmem:[#allocation2 + $0x7e8] sm:$0xff]
      %v3605 = vld [vmem:[#allocation2 + $0x7f0] sm:$0xff]
      %v3606 = vld [vmem:[#allocation2 + $0x7f8] sm:$0xff]
      %3607 = vmatprep.subr.mxu0 %v3472
      %3608 = vmatpush1.msra.mxu0 %v3471
      %3609 = vmatprep.subr.mxu0 %v3464
      %3610 = vmatpush1.msra.mxu0 %v3463
      %3611 = vmatprep.subr.mxu0 %v3456
      %3612 = vmatpush1.msra.mxu0 %v3455
      %3613 = vmatprep.subr.mxu0 %v3448
      %3614 = vmatpush1.msra.mxu0 %v3447
      %3615 = vmatprep.subr.mxu0 %v3440
      %3616 = vmatpush1.msra.mxu0 %v3439
      %3617 = vmatprep.subr.mxu0 %v3432
      %3618 = vmatpush1.msra.mxu0 %v3431
      %3619 = vmatprep.subr.mxu0 %v3424
      %3620 = vmatpush1.msra.mxu0 %v3423
      %3621 = vmatprep.subr.mxu0 %v3416
      %3622 = vmatpush1.msra.mxu0 %v3415
      %3623 = vmatprep.subr.mxu0 %v3408
      %3624 = vmatpush1.msra.mxu0 %v3407
      %3625 = vmatprep.subr.mxu0 %v3400
      %3626 = vmatpush1.msra.mxu0 %v3399
      %3627 = vmatprep.subr.mxu0 %v3392
      %3628 = vmatpush1.msra.mxu0 %v3391
      %3629 = vmatprep.subr.mxu0 %v3384
      %3630 = vmatpush1.msra.mxu0 %v3383
      %3631 = vmatprep.subr.mxu0 %v3376
      %3632 = vmatpush1.msra.mxu0 %v3375
      %3633 = vmatprep.subr.mxu0 %v3368
      %3634 = vmatpush1.msra.mxu0 %v3367
      %3635 = vmatprep.subr.mxu0 %v3360
      %3636 = vmatpush1.msra.mxu0 %v3359
      %3637 = vmatprep.subr.mxu0 %v3352
      %3638 = vmatpush1.msra.mxu0 %v3351
      %3639 = vmatprep.subr.mxu0 %v3600
      %3640 = vmatpush2.msra.mxu0 %v3599
      %3641 = vmatprep.subr.mxu0 %v3592
      %3642 = vmatpush2.msra.mxu0 %v3591
      %3643 = vmatprep.subr.mxu0 %v3584
      %3644 = vmatpush2.msra.mxu0 %v3583
      %3645 = vmatprep.subr.mxu0 %v3576
      %3646 = vmatpush2.msra.mxu0 %v3575
      %3647 = vmatprep.subr.mxu0 %v3568
      %3648 = vmatpush2.msra.mxu0 %v3567
      %3649 = vmatprep.subr.mxu0 %v3560
      %3650 = vmatpush2.msra.mxu0 %v3559
      %3651 = vmatprep.subr.mxu0 %v3552
      %3652 = vmatpush2.msra.mxu0 %v3551
      %3653 = vmatprep.subr.mxu0 %v3544
      %3654 = vmatpush2.msra.mxu0 %v3543
      %3655 = vmatprep.subr.mxu0 %v3536
      %3656 = vmatpush2.msra.mxu0 %v3535
      %3657 = vmatprep.subr.mxu0 %v3528
      %3658 = vmatpush2.msra.mxu0 %v3527
      %3659 = vmatprep.subr.mxu0 %v3520
      %3660 = vmatpush2.msra.mxu0 %v3519
      %3661 = vmatprep.subr.mxu0 %v3512
      %3662 = vmatpush2.msra.mxu0 %v3511
      %3663 = vmatprep.subr.mxu0 %v3504
      %3664 = vmatpush2.msra.mxu0 %v3503
      %3665 = vmatprep.subr.mxu0 %v3496
      %3666 = vmatpush2.msra.mxu0 %v3495
      %3667 = vmatprep.subr.mxu0 %v3488
      %3668 = vmatpush2.msra.mxu0 %v3487
      %3669 = vmatprep.subr.mxu0 %v3480
      %3670 = vmatpush2.msra.mxu0 %v3479
      %3671 = vmatprep.mubr.f32.mxu0 %v211
      %3672 = vmatmul.mubr.f32.gmra.mxu0 %v210
      %v3673 = vpop.f32.mrf.mxu0
      %v3674 = vadd.f32 0.0, %v3673
      %v3675 = vpop.f32.mrf.mxu0
      %v3676 = vadd.f32 0.0, %v3675
      %3677 = vdwg.mxu0
      %3678 = vmatprep.subr.mxu0 %v3474
      %3679 = vmatpush1.msra.mxu0 %v3473
      %3680 = vmatprep.subr.mxu0 %v3466
      %3681 = vmatpush1.msra.mxu0 %v3465
      %3682 = vmatprep.subr.mxu0 %v3458
      %3683 = vmatpush1.msra.mxu0 %v3457
      %3684 = vmatprep.subr.mxu0 %v3450
      %3685 = vmatpush1.msra.mxu0 %v3449
      %3686 = vmatprep.subr.mxu0 %v3442
      %3687 = vmatpush1.msra.mxu0 %v3441
      %3688 = vmatprep.subr.mxu0 %v3434
      %3689 = vmatpush1.msra.mxu0 %v3433
      %3690 = vmatprep.subr.mxu0 %v3426
      %3691 = vmatpush1.msra.mxu0 %v3425
      %3692 = vmatprep.subr.mxu0 %v3418
      %3693 = vmatpush1.msra.mxu0 %v3417
      %3694 = vmatprep.subr.mxu0 %v3410
      %3695 = vmatpush1.msra.mxu0 %v3409
      %3696 = vmatprep.subr.mxu0 %v3402
      %3697 = vmatpush1.msra.mxu0 %v3401
      %3698 = vmatprep.subr.mxu0 %v3394
      %3699 = vmatpush1.msra.mxu0 %v3393
      %3700 = vmatprep.subr.mxu0 %v3386
      %3701 = vmatpush1.msra.mxu0 %v3385
      %3702 = vmatprep.subr.mxu0 %v3378
      %3703 = vmatpush1.msra.mxu0 %v3377
      %3704 = vmatprep.subr.mxu0 %v3370
      %3705 = vmatpush1.msra.mxu0 %v3369
      %3706 = vmatprep.subr.mxu0 %v3362
      %3707 = vmatpush1.msra.mxu0 %v3361
      %3708 = vmatprep.subr.mxu0 %v3354
      %3709 = vmatpush1.msra.mxu0 %v3353
      %3710 = vmatprep.subr.mxu0 %v3602
      %3711 = vmatpush2.msra.mxu0 %v3601
      %3712 = vmatprep.subr.mxu0 %v3594
      %3713 = vmatpush2.msra.mxu0 %v3593
      %3714 = vmatprep.subr.mxu0 %v3586
      %3715 = vmatpush2.msra.mxu0 %v3585
      %3716 = vmatprep.subr.mxu0 %v3578
      %3717 = vmatpush2.msra.mxu0 %v3577
      %3718 = vmatprep.subr.mxu0 %v3570
      %3719 = vmatpush2.msra.mxu0 %v3569
      %3720 = vmatprep.subr.mxu0 %v3562
      %3721 = vmatpush2.msra.mxu0 %v3561
      %3722 = vmatprep.subr.mxu0 %v3554
      %3723 = vmatpush2.msra.mxu0 %v3553
      %3724 = vmatprep.subr.mxu0 %v3546
      %3725 = vmatpush2.msra.mxu0 %v3545
      %3726 = vmatprep.subr.mxu0 %v3538
      %3727 = vmatpush2.msra.mxu0 %v3537
      %3728 = vmatprep.subr.mxu0 %v3530
      %3729 = vmatpush2.msra.mxu0 %v3529
      %3730 = vmatprep.subr.mxu0 %v3522
      %3731 = vmatpush2.msra.mxu0 %v3521
      %3732 = vmatprep.subr.mxu0 %v3514
      %3733 = vmatpush2.msra.mxu0 %v3513
      %3734 = vmatprep.subr.mxu0 %v3506
      %3735 = vmatpush2.msra.mxu0 %v3505
      %3736 = vmatprep.subr.mxu0 %v3498
      %3737 = vmatpush2.msra.mxu0 %v3497
      %3738 = vmatprep.subr.mxu0 %v3490
      %3739 = vmatpush2.msra.mxu0 %v3489
      %3740 = vmatprep.subr.mxu0 %v3482
      %3741 = vmatpush2.msra.mxu0 %v3481
      %3742 = vmatprep.mubr.f32.mxu0 %v211
      %3743 = vmatmul.mubr.f32.gmra.mxu0 %v210
      %v3744 = vpop.f32.mrf.mxu0
      %v3745 = vadd.f32 0.0, %v3744
      %v3746 = vpop.f32.mrf.mxu0
      %v3747 = vadd.f32 0.0, %v3746
      %3748 = vdwg.mxu0
      %3749 = vmatprep.subr.mxu0 %v3476
      %3750 = vmatpush1.msra.mxu0 %v3475
      %3751 = vmatprep.subr.mxu0 %v3468
      %3752 = vmatpush1.msra.mxu0 %v3467
      %3753 = vmatprep.subr.mxu0 %v3460
      %3754 = vmatpush1.msra.mxu0 %v3459
      %3755 = vmatprep.subr.mxu0 %v3452
      %3756 = vmatpush1.msra.mxu0 %v3451
      %3757 = vmatprep.subr.mxu0 %v3444
      %3758 = vmatpush1.msra.mxu0 %v3443
      %3759 = vmatprep.subr.mxu0 %v3436
      %3760 = vmatpush1.msra.mxu0 %v3435
      %3761 = vmatprep.subr.mxu0 %v3428
      %3762 = vmatpush1.msra.mxu0 %v3427
      %3763 = vmatprep.subr.mxu0 %v3420
      %3764 = vmatpush1.msra.mxu0 %v3419
      %3765 = vmatprep.subr.mxu0 %v3412
      %3766 = vmatpush1.msra.mxu0 %v3411
      %3767 = vmatprep.subr.mxu0 %v3404
      %3768 = vmatpush1.msra.mxu0 %v3403
      %3769 = vmatprep.subr.mxu0 %v3396
      %3770 = vmatpush1.msra.mxu0 %v3395
      %3771 = vmatprep.subr.mxu0 %v3388
      %3772 = vmatpush1.msra.mxu0 %v3387
      %3773 = vmatprep.subr.mxu0 %v3380
      %3774 = vmatpush1.msra.mxu0 %v3379
      %3775 = vmatprep.subr.mxu0 %v3372
      %3776 = vmatpush1.msra.mxu0 %v3371
      %3777 = vmatprep.subr.mxu0 %v3364
      %3778 = vmatpush1.msra.mxu0 %v3363
      %3779 = vmatprep.subr.mxu0 %v3356
      %3780 = vmatpush1.msra.mxu0 %v3355
      %3781 = vmatprep.subr.mxu0 %v3604
      %3782 = vmatpush2.msra.mxu0 %v3603
      %3783 = vmatprep.subr.mxu0 %v3596
      %3784 = vmatpush2.msra.mxu0 %v3595
      %3785 = vmatprep.subr.mxu0 %v3588
      %3786 = vmatpush2.msra.mxu0 %v3587
      %3787 = vmatprep.subr.mxu0 %v3580
      %3788 = vmatpush2.msra.mxu0 %v3579
      %3789 = vmatprep.subr.mxu0 %v3572
      %3790 = vmatpush2.msra.mxu0 %v3571
      %3791 = vmatprep.subr.mxu0 %v3564
      %3792 = vmatpush2.msra.mxu0 %v3563
      %3793 = vmatprep.subr.mxu0 %v3556
      %3794 = vmatpush2.msra.mxu0 %v3555
      %3795 = vmatprep.subr.mxu0 %v3548
      %3796 = vmatpush2.msra.mxu0 %v3547
      %3797 = vmatprep.subr.mxu0 %v3540
      %3798 = vmatpush2.msra.mxu0 %v3539
      %3799 = vmatprep.subr.mxu0 %v3532
      %3800 = vmatpush2.msra.mxu0 %v3531
      %3801 = vmatprep.subr.mxu0 %v3524
      %3802 = vmatpush2.msra.mxu0 %v3523
      %3803 = vmatprep.subr.mxu0 %v3516
      %3804 = vmatpush2.msra.mxu0 %v3515
      %3805 = vmatprep.subr.mxu0 %v3508
      %3806 = vmatpush2.msra.mxu0 %v3507
      %3807 = vmatprep.subr.mxu0 %v3500
      %3808 = vmatpush2.msra.mxu0 %v3499
      %3809 = vmatprep.subr.mxu0 %v3492
      %3810 = vmatpush2.msra.mxu0 %v3491
      %3811 = vmatprep.subr.mxu0 %v3484
      %3812 = vmatpush2.msra.mxu0 %v3483
      %3813 = vmatprep.mubr.f32.mxu0 %v211
      %3814 = vmatmul.mubr.f32.gmra.mxu0 %v210
      %v3815 = vpop.f32.mrf.mxu0
      %v3816 = vadd.f32 0.0, %v3815
      %v3817 = vpop.f32.mrf.mxu0
      %v3818 = vadd.f32 0.0, %v3817
      %3819 = vdwg.mxu0
      %3820 = vmatprep.subr.mxu0 %v3478
      %3821 = vmatpush1.msra.mxu0 %v3477
      %3822 = vmatprep.subr.mxu0 %v3470
      %3823 = vmatpush1.msra.mxu0 %v3469
      %3824 = vmatprep.subr.mxu0 %v3462
      %3825 = vmatpush1.msra.mxu0 %v3461
      %3826 = vmatprep.subr.mxu0 %v3454
      %3827 = vmatpush1.msra.mxu0 %v3453
      %3828 = vmatprep.subr.mxu0 %v3446
      %3829 = vmatpush1.msra.mxu0 %v3445
      %3830 = vmatprep.subr.mxu0 %v3438
      %3831 = vmatpush1.msra.mxu0 %v3437
      %3832 = vmatprep.subr.mxu0 %v3430
      %3833 = vmatpush1.msra.mxu0 %v3429
      %3834 = vmatprep.subr.mxu0 %v3422
      %3835 = vmatpush1.msra.mxu0 %v3421
      %3836 = vmatprep.subr.mxu0 %v3414
      %3837 = vmatpush1.msra.mxu0 %v3413
      %3838 = vmatprep.subr.mxu0 %v3406
      %3839 = vmatpush1.msra.mxu0 %v3405
      %3840 = vmatprep.subr.mxu0 %v3398
      %3841 = vmatpush1.msra.mxu0 %v3397
      %3842 = vmatprep.subr.mxu0 %v3390
      %3843 = vmatpush1.msra.mxu0 %v3389
      %3844 = vmatprep.subr.mxu0 %v3382
      %3845 = vmatpush1.msra.mxu0 %v3381
      %3846 = vmatprep.subr.mxu0 %v3374
      %3847 = vmatpush1.msra.mxu0 %v3373
      %3848 = vmatprep.subr.mxu0 %v3366
      %3849 = vmatpush1.msra.mxu0 %v3365
      %3850 = vmatprep.subr.mxu0 %v3358
      %3851 = vmatpush1.msra.mxu0 %v3357
      %3852 = vmatprep.subr.mxu0 %v3606
      %3853 = vmatpush2.msra.mxu0 %v3605
      %3854 = vmatprep.subr.mxu0 %v3598
      %3855 = vmatpush2.msra.mxu0 %v3597
      %3856 = vmatprep.subr.mxu0 %v3590
      %3857 = vmatpush2.msra.mxu0 %v3589
      %3858 = vmatprep.subr.mxu0 %v3582
      %3859 = vmatpush2.msra.mxu0 %v3581
      %3860 = vmatprep.subr.mxu0 %v3574
      %3861 = vmatpush2.msra.mxu0 %v3573
      %3862 = vmatprep.subr.mxu0 %v3566
      %3863 = vmatpush2.msra.mxu0 %v3565
      %3864 = vmatprep.subr.mxu0 %v3558
      %3865 = vmatpush2.msra.mxu0 %v3557
      %3866 = vmatprep.subr.mxu0 %v3550
      %3867 = vmatpush2.msra.mxu0 %v3549
      %3868 = vmatprep.subr.mxu0 %v3542
      %3869 = vmatpush2.msra.mxu0 %v3541
      %3870 = vmatprep.subr.mxu0 %v3534
      %3871 = vmatpush2.msra.mxu0 %v3533
      %3872 = vmatprep.subr.mxu0 %v3526
      %3873 = vmatpush2.msra.mxu0 %v3525
      %3874 = vmatprep.subr.mxu0 %v3518
      %3875 = vmatpush2.msra.mxu0 %v3517
      %3876 = vmatprep.subr.mxu0 %v3510
      %3877 = vmatpush2.msra.mxu0 %v3509
      %3878 = vmatprep.subr.mxu0 %v3502
      %3879 = vmatpush2.msra.mxu0 %v3501
      %3880 = vmatprep.subr.mxu0 %v3494
      %3881 = vmatpush2.msra.mxu0 %v3493
      %3882 = vmatprep.subr.mxu0 %v3486
      %3883 = vmatpush2.msra.mxu0 %v3485
      %3884 = vmatprep.mubr.f32.mxu0 %v211
      %3885 = vmatmul.mubr.f32.gmra.mxu0 %v210
      %v3886 = vpop.f32.mrf.mxu0
      %v3887 = vadd.f32 0.0, %v3886
      %v3888 = vpop.f32.mrf.mxu0
      %v3889 = vadd.f32 0.0, %v3888
      %3890 = vdwg.mxu0
      %3891 = vmatprep.subr.mxu0 %v3216
      %3892 = vmatpush1.msra.mxu0 %v3215
      %3893 = vmatprep.subr.mxu0 %v3208
      %3894 = vmatpush1.msra.mxu0 %v3207
      %3895 = vmatprep.subr.mxu0 %v3200
      %3896 = vmatpush1.msra.mxu0 %v3199
      %3897 = vmatprep.subr.mxu0 %v3192
      %3898 = vmatpush1.msra.mxu0 %v3191
      %3899 = vmatprep.subr.mxu0 %v3184
      %3900 = vmatpush1.msra.mxu0 %v3183
      %3901 = vmatprep.subr.mxu0 %v3176
      %3902 = vmatpush1.msra.mxu0 %v3175
      %3903 = vmatprep.subr.mxu0 %v3168
      %3904 = vmatpush1.msra.mxu0 %v3167
      %3905 = vmatprep.subr.mxu0 %v3160
      %3906 = vmatpush1.msra.mxu0 %v3159
      %3907 = vmatprep.subr.mxu0 %v3152
      %3908 = vmatpush1.msra.mxu0 %v3151
      %3909 = vmatprep.subr.mxu0 %v3144
      %3910 = vmatpush1.msra.mxu0 %v3143
      %3911 = vmatprep.subr.mxu0 %v3136
      %3912 = vmatpush1.msra.mxu0 %v3135
      %3913 = vmatprep.subr.mxu0 %v3128
      %3914 = vmatpush1.msra.mxu0 %v3127
      %3915 = vmatprep.subr.mxu0 %v3120
      %3916 = vmatpush1.msra.mxu0 %v3119
      %3917 = vmatprep.subr.mxu0 %v3112
      %3918 = vmatpush1.msra.mxu0 %v3111
      %3919 = vmatprep.subr.mxu0 %v3104
      %3920 = vmatpush1.msra.mxu0 %v3103
      %3921 = vmatprep.subr.mxu0 %v3096
      %3922 = vmatpush1.msra.mxu0 %v3095
      %3923 = vmatprep.subr.mxu0 %v3344
      %3924 = vmatpush2.msra.mxu0 %v3343
      %3925 = vmatprep.subr.mxu0 %v3336
      %3926 = vmatpush2.msra.mxu0 %v3335
      %3927 = vmatprep.subr.mxu0 %v3328
      %3928 = vmatpush2.msra.mxu0 %v3327
      %3929 = vmatprep.subr.mxu0 %v3320
      %3930 = vmatpush2.msra.mxu0 %v3319
      %3931 = vmatprep.subr.mxu0 %v3312
      %3932 = vmatpush2.msra.mxu0 %v3311
      %3933 = vmatprep.subr.mxu0 %v3304
      %3934 = vmatpush2.msra.mxu0 %v3303
      %3935 = vmatprep.subr.mxu0 %v3296
      %3936 = vmatpush2.msra.mxu0 %v3295
      %3937 = vmatprep.subr.mxu0 %v3288
      %3938 = vmatpush2.msra.mxu0 %v3287
      %3939 = vmatprep.subr.mxu0 %v3280
      %3940 = vmatpush2.msra.mxu0 %v3279
      %3941 = vmatprep.subr.mxu0 %v3272
      %3942 = vmatpush2.msra.mxu0 %v3271
      %3943 = vmatprep.subr.mxu0 %v3264
      %3944 = vmatpush2.msra.mxu0 %v3263
      %3945 = vmatprep.subr.mxu0 %v3256
      %3946 = vmatpush2.msra.mxu0 %v3255
      %3947 = vmatprep.subr.mxu0 %v3248
      %3948 = vmatpush2.msra.mxu0 %v3247
      %3949 = vmatprep.subr.mxu0 %v3240
      %3950 = vmatpush2.msra.mxu0 %v3239
      %3951 = vmatprep.subr.mxu0 %v3232
      %3952 = vmatpush2.msra.mxu0 %v3231
      %3953 = vmatprep.subr.mxu0 %v3224
      %3954 = vmatpush2.msra.mxu0 %v3223
      %3955 = vmatprep.mubr.f32.mxu0 %v3094
      %3956 = vmatmul.mubr.f32.gmra.mxu0 %v3093
      %v3957 = vpop.f32.mrf.mxu0
      %v3958 = vadd.f32 %v3674, %v3957
      %v3959 = vpop.f32.mrf.mxu0
      %v3960 = vadd.f32 %v3676, %v3959
      %3961 = vdwg.mxu0
      %3962 = vmatprep.subr.mxu0 %v3218
      %3963 = vmatpush1.msra.mxu0 %v3217
      %3964 = vmatprep.subr.mxu0 %v3210
      %3965 = vmatpush1.msra.mxu0 %v3209
      %3966 = vmatprep.subr.mxu0 %v3202
      %3967 = vmatpush1.msra.mxu0 %v3201
      %3968 = vmatprep.subr.mxu0 %v3194
      %3969 = vmatpush1.msra.mxu0 %v3193
      %3970 = vmatprep.subr.mxu0 %v3186
      %3971 = vmatpush1.msra.mxu0 %v3185
      %3972 = vmatprep.subr.mxu0 %v3178
      %3973 = vmatpush1.msra.mxu0 %v3177
      %3974 = vmatprep.subr.mxu0 %v3170
      %3975 = vmatpush1.msra.mxu0 %v3169
      %3976 = vmatprep.subr.mxu0 %v3162
      %3977 = vmatpush1.msra.mxu0 %v3161
      %3978 = vmatprep.subr.mxu0 %v3154
      %3979 = vmatpush1.msra.mxu0 %v3153
      %3980 = vmatprep.subr.mxu0 %v3146
      %3981 = vmatpush1.msra.mxu0 %v3145
      %3982 = vmatprep.subr.mxu0 %v3138
      %3983 = vmatpush1.msra.mxu0 %v3137
      %3984 = vmatprep.subr.mxu0 %v3130
      %3985 = vmatpush1.msra.mxu0 %v3129
      %3986 = vmatprep.subr.mxu0 %v3122
      %3987 = vmatpush1.msra.mxu0 %v3121
      %3988 = vmatprep.subr.mxu0 %v3114
      %3989 = vmatpush1.msra.mxu0 %v3113
      %3990 = vmatprep.subr.mxu0 %v3106
      %3991 = vmatpush1.msra.mxu0 %v3105
      %3992 = vmatprep.subr.mxu0 %v3098
      %3993 = vmatpush1.msra.mxu0 %v3097
      %3994 = vmatprep.subr.mxu0 %v3346
      %3995 = vmatpush2.msra.mxu0 %v3345
      %3996 = vmatprep.subr.mxu0 %v3338
      %3997 = vmatpush2.msra.mxu0 %v3337
      %3998 = vmatprep.subr.mxu0 %v3330
      %3999 = vmatpush2.msra.mxu0 %v3329
      %4000 = vmatprep.subr.mxu0 %v3322
      %4001 = vmatpush2.msra.mxu0 %v3321
      %4002 = vmatprep.subr.mxu0 %v3314
      %4003 = vmatpush2.msra.mxu0 %v3313
      %4004 = vmatprep.subr.mxu0 %v3306
      %4005 = vmatpush2.msra.mxu0 %v3305
      %4006 = vmatprep.subr.mxu0 %v3298
      %4007 = vmatpush2.msra.mxu0 %v3297
      %4008 = vmatprep.subr.mxu0 %v3290
      %4009 = vmatpush2.msra.mxu0 %v3289
      %4010 = vmatprep.subr.mxu0 %v3282
      %4011 = vmatpush2.msra.mxu0 %v3281
      %4012 = vmatprep.subr.mxu0 %v3274
      %4013 = vmatpush2.msra.mxu0 %v3273
      %4014 = vmatprep.subr.mxu0 %v3266
      %4015 = vmatpush2.msra.mxu0 %v3265
      %4016 = vmatprep.subr.mxu0 %v3258
      %4017 = vmatpush2.msra.mxu0 %v3257
      %4018 = vmatprep.subr.mxu0 %v3250
      %4019 = vmatpush2.msra.mxu0 %v3249
      %4020 = vmatprep.subr.mxu0 %v3242
      %4021 = vmatpush2.msra.mxu0 %v3241
      %4022 = vmatprep.subr.mxu0 %v3234
      %4023 = vmatpush2.msra.mxu0 %v3233
      %4024 = vmatprep.subr.mxu0 %v3226
      %4025 = vmatpush2.msra.mxu0 %v3225
      %4026 = vmatprep.mubr.f32.mxu0 %v3094
      %4027 = vmatmul.mubr.f32.gmra.mxu0 %v3093
      %v4028 = vpop.f32.mrf.mxu0
      %v4029 = vadd.f32 %v3745, %v4028
      %v4030 = vpop.f32.mrf.mxu0
      %v4031 = vadd.f32 %v3747, %v4030
      %4032 = vdwg.mxu0
      %4033 = vmatprep.subr.mxu0 %v3220
      %4034 = vmatpush1.msra.mxu0 %v3219
      %4035 = vmatprep.subr.mxu0 %v3212
      %4036 = vmatpush1.msra.mxu0 %v3211
      %4037 = vmatprep.subr.mxu0 %v3204
      %4038 = vmatpush1.msra.mxu0 %v3203
      %4039 = vmatprep.subr.mxu0 %v3196
      %4040 = vmatpush1.msra.mxu0 %v3195
      %4041 = vmatprep.subr.mxu0 %v3188
      %4042 = vmatpush1.msra.mxu0 %v3187
      %4043 = vmatprep.subr.mxu0 %v3180
      %4044 = vmatpush1.msra.mxu0 %v3179
      %4045 = vmatprep.subr.mxu0 %v3172
      %4046 = vmatpush1.msra.mxu0 %v3171
      %4047 = vmatprep.subr.mxu0 %v3164
      %4048 = vmatpush1.msra.mxu0 %v3163
      %4049 = vmatprep.subr.mxu0 %v3156
      %4050 = vmatpush1.msra.mxu0 %v3155
      %4051 = vmatprep.subr.mxu0 %v3148
      %4052 = vmatpush1.msra.mxu0 %v3147
      %4053 = vmatprep.subr.mxu0 %v3140
      %4054 = vmatpush1.msra.mxu0 %v3139
      %4055 = vmatprep.subr.mxu0 %v3132
      %4056 = vmatpush1.msra.mxu0 %v3131
      %4057 = vmatprep.subr.mxu0 %v3124
      %4058 = vmatpush1.msra.mxu0 %v3123
      %4059 = vmatprep.subr.mxu0 %v3116
      %4060 = vmatpush1.msra.mxu0 %v3115
      %4061 = vmatprep.subr.mxu0 %v3108
      %4062 = vmatpush1.msra.mxu0 %v3107
      %4063 = vmatprep.subr.mxu0 %v3100
      %4064 = vmatpush1.msra.mxu0 %v3099
      %4065 = vmatprep.subr.mxu0 %v3348
      %4066 = vmatpush2.msra.mxu0 %v3347
      %4067 = vmatprep.subr.mxu0 %v3340
      %4068 = vmatpush2.msra.mxu0 %v3339
      %4069 = vmatprep.subr.mxu0 %v3332
      %4070 = vmatpush2.msra.mxu0 %v3331
      %4071 = vmatprep.subr.mxu0 %v3324
      %4072 = vmatpush2.msra.mxu0 %v3323
      %4073 = vmatprep.subr.mxu0 %v3316
      %4074 = vmatpush2.msra.mxu0 %v3315
      %4075 = vmatprep.subr.mxu0 %v3308
      %4076 = vmatpush2.msra.mxu0 %v3307
      %4077 = vmatprep.subr.mxu0 %v3300
      %4078 = vmatpush2.msra.mxu0 %v3299
      %4079 = vmatprep.subr.mxu0 %v3292
      %4080 = vmatpush2.msra.mxu0 %v3291
      %4081 = vmatprep.subr.mxu0 %v3284
      %4082 = vmatpush2.msra.mxu0 %v3283
      %4083 = vmatprep.subr.mxu0 %v3276
      %4084 = vmatpush2.msra.mxu0 %v3275
      %4085 = vmatprep.subr.mxu0 %v3268
      %4086 = vmatpush2.msra.mxu0 %v3267
      %4087 = vmatprep.subr.mxu0 %v3260
      %4088 = vmatpush2.msra.mxu0 %v3259
      %4089 = vmatprep.subr.mxu0 %v3252
      %4090 = vmatpush2.msra.mxu0 %v3251
      %4091 = vmatprep.subr.mxu0 %v3244
      %4092 = vmatpush2.msra.mxu0 %v3243
      %4093 = vmatprep.subr.mxu0 %v3236
      %4094 = vmatpush2.msra.mxu0 %v3235
      %4095 = vmatprep.subr.mxu0 %v3228
      %4096 = vmatpush2.msra.mxu0 %v3227
      %4097 = vmatprep.mubr.f32.mxu0 %v3094
      %4098 = vmatmul.mubr.f32.gmra.mxu0 %v3093
      %v4099 = vpop.f32.mrf.mxu0
      %v4100 = vadd.f32 %v3816, %v4099
      %v4101 = vpop.f32.mrf.mxu0
      %v4102 = vadd.f32 %v3818, %v4101
      %4103 = vdwg.mxu0
      %4104 = vmatprep.subr.mxu0 %v3222
      %4105 = vmatpush1.msra.mxu0 %v3221
      %4106 = vmatprep.subr.mxu0 %v3214
      %4107 = vmatpush1.msra.mxu0 %v3213
      %4108 = vmatprep.subr.mxu0 %v3206
      %4109 = vmatpush1.msra.mxu0 %v3205
      %4110 = vmatprep.subr.mxu0 %v3198
      %4111 = vmatpush1.msra.mxu0 %v3197
      %4112 = vmatprep.subr.mxu0 %v3190
      %4113 = vmatpush1.msra.mxu0 %v3189
      %4114 = vmatprep.subr.mxu0 %v3182
      %4115 = vmatpush1.msra.mxu0 %v3181
      %4116 = vmatprep.subr.mxu0 %v3174
      %4117 = vmatpush1.msra.mxu0 %v3173
      %4118 = vmatprep.subr.mxu0 %v3166
      %4119 = vmatpush1.msra.mxu0 %v3165
      %4120 = vmatprep.subr.mxu0 %v3158
      %4121 = vmatpush1.msra.mxu0 %v3157
      %4122 = vmatprep.subr.mxu0 %v3150
      %4123 = vmatpush1.msra.mxu0 %v3149
      %4124 = vmatprep.subr.mxu0 %v3142
      %4125 = vmatpush1.msra.mxu0 %v3141
      %4126 = vmatprep.subr.mxu0 %v3134
      %4127 = vmatpush1.msra.mxu0 %v3133
      %4128 = vmatprep.subr.mxu0 %v3126
      %4129 = vmatpush1.msra.mxu0 %v3125
      %4130 = vmatprep.subr.mxu0 %v3118
      %4131 = vmatpush1.msra.mxu0 %v3117
      %4132 = vmatprep.subr.mxu0 %v3110
      %4133 = vmatpush1.msra.mxu0 %v3109
      %4134 = vmatprep.subr.mxu0 %v3102
      %4135 = vmatpush1.msra.mxu0 %v3101
      %4136 = vmatprep.subr.mxu0 %v3350
      %4137 = vmatpush2.msra.mxu0 %v3349
      %4138 = vmatprep.subr.mxu0 %v3342
      %4139 = vmatpush2.msra.mxu0 %v3341
      %4140 = vmatprep.subr.mxu0 %v3334
      %4141 = vmatpush2.msra.mxu0 %v3333
      %4142 = vmatprep.subr.mxu0 %v3326
      %4143 = vmatpush2.msra.mxu0 %v3325
      %4144 = vmatprep.subr.mxu0 %v3318
      %4145 = vmatpush2.msra.mxu0 %v3317
      %4146 = vmatprep.subr.mxu0 %v3310
      %4147 = vmatpush2.msra.mxu0 %v3309
      %4148 = vmatprep.subr.mxu0 %v3302
      %4149 = vmatpush2.msra.mxu0 %v3301
      %4150 = vmatprep.subr.mxu0 %v3294
      %4151 = vmatpush2.msra.mxu0 %v3293
      %4152 = vmatprep.subr.mxu0 %v3286
      %4153 = vmatpush2.msra.mxu0 %v3285
      %4154 = vmatprep.subr.mxu0 %v3278
      %4155 = vmatpush2.msra.mxu0 %v3277
      %4156 = vmatprep.subr.mxu0 %v3270
      %4157 = vmatpush2.msra.mxu0 %v3269
      %4158 = vmatprep.subr.mxu0 %v3262
      %4159 = vmatpush2.msra.mxu0 %v3261
      %4160 = vmatprep.subr.mxu0 %v3254
      %4161 = vmatpush2.msra.mxu0 %v3253
      %4162 = vmatprep.subr.mxu0 %v3246
      %4163 = vmatpush2.msra.mxu0 %v3245
      %4164 = vmatprep.subr.mxu0 %v3238
      %4165 = vmatpush2.msra.mxu0 %v3237
      %4166 = vmatprep.subr.mxu0 %v3230
      %4167 = vmatpush2.msra.mxu0 %v3229
      %4168 = vmatprep.mubr.f32.mxu0 %v3094
      %4169 = vmatmul.mubr.f32.gmra.mxu0 %v3093
      %v4170 = vpop.f32.mrf.mxu0
      %v4171 = vadd.f32 %v3887, %v4170
      %v4172 = vpop.f32.mrf.mxu0
      %v4173 = vadd.f32 %v3889, %v4172
      %4174 = vdwg.mxu0
      %v4175 = vld [vmem:[%s10] sm:$0xff]
      %v4177 = vlaneseq
      %v4178 = vshrl.u32 %v4177, 7
      %v4179 = vsub.s32 0, %v4178
      %v4180 = vrot.slane %v4175, %v4179
      %v4181 = vlaneseq
      %v4182 = vshrl.u32 %v4181, 7
      %v4183 = vsub.s32 1, %v4182
      %v4184 = vrot.slane %v4175, %v4183
      %v4185 = vlaneseq
      %v4186 = vshrl.u32 %v4185, 7
      %v4187 = vsub.s32 2, %v4186
      %v4188 = vrot.slane %v4175, %v4187
      %v4189 = vlaneseq
      %v4190 = vshrl.u32 %v4189, 7
      %v4191 = vsub.s32 3, %v4190
      %v4192 = vrot.slane %v4175, %v4191
      %v4193 = vlaneseq
      %v4194 = vshrl.u32 %v4193, 7
      %v4195 = vsub.s32 4, %v4194
      %v4196 = vrot.slane %v4175, %v4195
      %v4197 = vlaneseq
      %v4198 = vshrl.u32 %v4197, 7
      %v4199 = vsub.s32 5, %v4198
      %v4200 = vrot.slane %v4175, %v4199
      %v4201 = vlaneseq
      %v4202 = vshrl.u32 %v4201, 7
      %v4203 = vsub.s32 6, %v4202
      %v4204 = vrot.slane %v4175, %v4203
      %v4205 = vlaneseq
      %v4206 = vshrl.u32 %v4205, 7
      %v4207 = vsub.s32 7, %v4206
      %v4208 = vrot.slane %v4175, %v4207
      %v4217 = vadd.f32 %v3958, %v4180
      %v4218 = vadd.f32 %v3960, %v4184
      %v4219 = vadd.f32 %v4029, %v4188
      %v4220 = vadd.f32 %v4031, %v4192
      %v4221 = vadd.f32 %v4100, %v4196
      %v4222 = vadd.f32 %v4102, %v4200
      %v4223 = vadd.f32 %v4171, %v4204
      %v4224 = vadd.f32 %v4173, %v4208
      %v4225 = vxor.u32 %v4217, 2147483648
      %v4226 = vxor.u32 %v4218, 2147483648
      %v4227 = vmul.f32 %v4225, 1.442695
      %v4228 = vpow.pop %v4227
      %v4229 = vmul.f32 %v4226, 1.442695
      %v4230 = vpow.pop %v4229
      %v4231 = vadd.f32 %v4228, 1.0
      %v4232 = vadd.f32 %v4230, 1.0
      %v4233 = vrcp.pop %v4231
      %v4234 = vmul.f32 1.0, %v4233
      %v4235 = vrcp.pop %v4232
      %v4236 = vmul.f32 1.0, %v4235
      %v4237 = vxor.u32 %v4219, 2147483648
      %v4238 = vxor.u32 %v4220, 2147483648
      %v4239 = vmul.f32 %v4237, 1.442695
      %v4240 = vpow.pop %v4239
      %v4241 = vmul.f32 %v4238, 1.442695
      %v4242 = vpow.pop %v4241
      %v4243 = vadd.f32 %v4240, 1.0
      %v4244 = vadd.f32 %v4242, 1.0
      %v4245 = vrcp.pop %v4243
      %v4246 = vmul.f32 1.0, %v4245
      %v4247 = vrcp.pop %v4244
      %v4248 = vmul.f32 1.0, %v4247
      %v4249 = vtanh.pop %v4221
      %v4250 = vtanh.pop %v4222
      %v4251 = vxor.u32 %v4223, 2147483648
      %v4252 = vxor.u32 %v4224, 2147483648
      %v4253 = vmul.f32 %v4251, 1.442695
      %v4254 = vpow.pop %v4253
      %v4255 = vmul.f32 %v4252, 1.442695
      %v4256 = vpow.pop %v4255
      %v4257 = vadd.f32 %v4254, 1.0
      %v4258 = vadd.f32 %v4256, 1.0
      %v4259 = vrcp.pop %v4257
      %v4260 = vmul.f32 1.0, %v4259
      %v4261 = vrcp.pop %v4258
      %v4262 = vmul.f32 1.0, %v4261
      %v4263 = vmul.f32 %v4246, %v212
      %v4264 = vmul.f32 %v4248, %v213
      %v4265 = vmul.f32 %v4234, %v4249
      %v4266 = vmul.f32 %v4236, %v4250
      %v4267 = vadd.f32 %v4263, %v4265
      %v4268 = vadd.f32 %v4264, %v4266
      %v4269 = vtanh.pop %v4267
      %v4270 = vtanh.pop %v4268
      %v4271 = vmul.f32 %v4260, %v4269
      %v4272 = vmul.f32 %v4262, %v4270
      %v4273 = vld [vmem:[#allocation4] sm:$0xff]
      %v4274 = vld [vmem:[#allocation4 + $0x8] sm:$0xff]
      %v4275 = vld [vmem:[#allocation4 + $0x10] sm:$0xff]
      %v4276 = vld [vmem:[#allocation4 + $0x18] sm:$0xff]
      %v4277 = vld [vmem:[#allocation4 + $0x20] sm:$0xff]
      %v4278 = vld [vmem:[#allocation4 + $0x28] sm:$0xff]
      %v4279 = vld [vmem:[#allocation4 + $0x30] sm:$0xff]
      %v4280 = vld [vmem:[#allocation4 + $0x38] sm:$0xff]
      %v4281 = vld [vmem:[#allocation4 + $0x40] sm:$0xff]
      %v4282 = vld [vmem:[#allocation4 + $0x48] sm:$0xff]
      %v4283 = vld [vmem:[#allocation4 + $0x50] sm:$0xff]
      %v4284 = vld [vmem:[#allocation4 + $0x58] sm:$0xff]
      %v4285 = vld [vmem:[#allocation4 + $0x60] sm:$0xff]
      %v4286 = vld [vmem:[#allocation4 + $0x68] sm:$0xff]
      %v4287 = vld [vmem:[#allocation4 + $0x70] sm:$0xff]
      %v4288 = vld [vmem:[#allocation4 + $0x78] sm:$0xff]
      %v4289 = vld [vmem:[#allocation4 + $0x80] sm:$0xff]
      %v4290 = vld [vmem:[#allocation4 + $0x88] sm:$0xff]
      %v4291 = vld [vmem:[#allocation4 + $0x90] sm:$0xff]
      %v4292 = vld [vmem:[#allocation4 + $0x98] sm:$0xff]
      %v4293 = vld [vmem:[#allocation4 + $0xa0] sm:$0xff]
      %v4294 = vld [vmem:[#allocation4 + $0xa8] sm:$0xff]
      %v4295 = vld [vmem:[#allocation4 + $0xb0] sm:$0xff]
      %v4296 = vld [vmem:[#allocation4 + $0xb8] sm:$0xff]
      %v4297 = vld [vmem:[#allocation4 + $0xc0] sm:$0xff]
      %v4298 = vld [vmem:[#allocation4 + $0xc8] sm:$0xff]
      %v4299 = vld [vmem:[#allocation4 + $0xd0] sm:$0xff]
      %v4300 = vld [vmem:[#allocation4 + $0xd8] sm:$0xff]
      %v4301 = vld [vmem:[#allocation4 + $0xe0] sm:$0xff]
      %v4302 = vld [vmem:[#allocation4 + $0xe8] sm:$0xff]
      %v4303 = vld [vmem:[#allocation4 + $0xf0] sm:$0xff]
      %v4304 = vld [vmem:[#allocation4 + $0xf8] sm:$0xff]
      %v4305 = vld [vmem:[%s12] sm:$0x1]
      %v4307 = vlaneseq
      %v4308 = vshrl.u32 %v4307, 7
      %v4309 = vsub.s32 0, %v4308
      %v4310 = vrot.slane %v4305, %v4309
      %4312 = vmatprep.subr.mxu0 0.0
      %4313 = vmatpush1.msra.mxu0 %v4288
      %4314 = vmatprep.subr.mxu0 0.0
      %4315 = vmatpush1.msra.mxu0 %v4287
      %4316 = vmatprep.subr.mxu0 0.0
      %4317 = vmatpush1.msra.mxu0 %v4286
      %4318 = vmatprep.subr.mxu0 0.0
      %4319 = vmatpush1.msra.mxu0 %v4285
      %4320 = vmatprep.subr.mxu0 0.0
      %4321 = vmatpush1.msra.mxu0 %v4284
      %4322 = vmatprep.subr.mxu0 0.0
      %4323 = vmatpush1.msra.mxu0 %v4283
      %4324 = vmatprep.subr.mxu0 0.0
      %4325 = vmatpush1.msra.mxu0 %v4282
      %4326 = vmatprep.subr.mxu0 0.0
      %4327 = vmatpush1.msra.mxu0 %v4281
      %4328 = vmatprep.subr.mxu0 0.0
      %4329 = vmatpush1.msra.mxu0 %v4280
      %4330 = vmatprep.subr.mxu0 0.0
      %4331 = vmatpush1.msra.mxu0 %v4279
      %4332 = vmatprep.subr.mxu0 0.0
      %4333 = vmatpush1.msra.mxu0 %v4278
      %4334 = vmatprep.subr.mxu0 0.0
      %4335 = vmatpush1.msra.mxu0 %v4277
      %4336 = vmatprep.subr.mxu0 0.0
      %4337 = vmatpush1.msra.mxu0 %v4276
      %4338 = vmatprep.subr.mxu0 0.0
      %4339 = vmatpush1.msra.mxu0 %v4275
      %4340 = vmatprep.subr.mxu0 0.0
      %4341 = vmatpush1.msra.mxu0 %v4274
      %4342 = vmatprep.subr.mxu0 0.0
      %4343 = vmatpush1.msra.mxu0 %v4273
      %4344 = vmatprep.subr.mxu0 0.0
      %4345 = vmatpush2.msra.mxu0 %v4304
      %4346 = vmatprep.subr.mxu0 0.0
      %4347 = vmatpush2.msra.mxu0 %v4303
      %4348 = vmatprep.subr.mxu0 0.0
      %4349 = vmatpush2.msra.mxu0 %v4302
      %4350 = vmatprep.subr.mxu0 0.0
      %4351 = vmatpush2.msra.mxu0 %v4301
      %4352 = vmatprep.subr.mxu0 0.0
      %4353 = vmatpush2.msra.mxu0 %v4300
      %4354 = vmatprep.subr.mxu0 0.0
      %4355 = vmatpush2.msra.mxu0 %v4299
      %4356 = vmatprep.subr.mxu0 0.0
      %4357 = vmatpush2.msra.mxu0 %v4298
      %4358 = vmatprep.subr.mxu0 0.0
      %4359 = vmatpush2.msra.mxu0 %v4297
      %4360 = vmatprep.subr.mxu0 0.0
      %4361 = vmatpush2.msra.mxu0 %v4296
      %4362 = vmatprep.subr.mxu0 0.0
      %4363 = vmatpush2.msra.mxu0 %v4295
      %4364 = vmatprep.subr.mxu0 0.0
      %4365 = vmatpush2.msra.mxu0 %v4294
      %4366 = vmatprep.subr.mxu0 0.0
      %4367 = vmatpush2.msra.mxu0 %v4293
      %4368 = vmatprep.subr.mxu0 0.0
      %4369 = vmatpush2.msra.mxu0 %v4292
      %4370 = vmatprep.subr.mxu0 0.0
      %4371 = vmatpush2.msra.mxu0 %v4291
      %4372 = vmatprep.subr.mxu0 0.0
      %4373 = vmatpush2.msra.mxu0 %v4290
      %4374 = vmatprep.subr.mxu0 0.0
      %4375 = vmatpush2.msra.mxu0 %v4289
      %4376 = vmatprep.mubr.f32.mxu0 %v4272
      %4377 = vmatmul.mubr.f32.gmra.mxu0 %v4271
      %v4378 = vpop.f32.mrf.mxu0
      %v4379 = vadd.f32 %v4310, %v4378
      %v4380 = vpop.f32.mrf.mxu0
      %4381 = vdwg.mxu0
      %v4383 = vcombine.high %v4379, %v4379
      %v4385 = vunpack.c.l.s4 1966171168
      %v4386 = vunpack.c.0.s8 %v4385
      %v4387 = vlaneseq
      %v4388 = vshrl.u32 %v4387, 7
      %v4389 = vsub.s32 %v4386, %v4388
      %v4390 = vrot.slane %v4379, %v4389
      %v4392 = vunpack.c.l.s4 1966171168
      %v4393 = vunpack.c.0.s8 %v4392
      %v4394 = vlaneseq
      %v4395 = vshrl.u32 %v4394, 7
      %v4396 = vsub.s32 %v4393, %v4395
      %v4397 = vrot.slane %v4383, %v4396
      %v4398 = vcombine.high %v4390, %v4390
      %v4399 = vcombine.high %v4397, %v4397
      %v4401 = vunpack.c.l.s4 1966171168
      %v4402 = vunpack.c.0.s8 %v4401
      %v4403 = vlaneseq
      %v4404 = vshrl.u32 %v4403, 7
      %v4405 = vsub.s32 %v4402, %v4404
      %v4406 = vrot.slane %v4390, %v4405
      %v4408 = vunpack.c.l.s4 1966171168
      %v4409 = vunpack.c.0.s8 %v4408
      %v4410 = vlaneseq
      %v4411 = vshrl.u32 %v4410, 7
      %v4412 = vsub.s32 %v4409, %v4411
      %v4413 = vrot.slane %v4397, %v4412
      %v4415 = vunpack.c.l.s4 1966171168
      %v4416 = vunpack.c.0.s8 %v4415
      %v4417 = vlaneseq
      %v4418 = vshrl.u32 %v4417, 7
      %v4419 = vsub.s32 %v4416, %v4418
      %v4420 = vrot.slane %v4398, %v4419
      %v4422 = vunpack.c.l.s4 1966171168
      %v4423 = vunpack.c.0.s8 %v4422
      %v4424 = vlaneseq
      %v4425 = vshrl.u32 %v4424, 7
      %v4426 = vsub.s32 %v4423, %v4425
      %v4427 = vrot.slane %v4399, %v4426
      %v4428 = vcombine.high %v4406, %v4406
      %v4429 = vcombine.high %v4413, %v4413
      %v4430 = vcombine.high %v4420, %v4420
      %v4431 = vcombine.high %v4427, %v4427
      %v4440 = vld [vmem:[%s18] sm:$0xff]
      %v4441 = vld [vmem:[%s18 + $0x8] sm:$0xff]
      %v4442 = vld [vmem:[%s18 + $0x10] sm:$0xff]
      %v4443 = vld [vmem:[%s18 + $0x18] sm:$0xff]
      %v4444 = vld [vmem:[%s18 + $0x20] sm:$0xff]
      %v4445 = vld [vmem:[%s18 + $0x28] sm:$0xff]
      %v4446 = vld [vmem:[%s18 + $0x30] sm:$0xff]
      %v4447 = vld [vmem:[%s18 + $0x38] sm:$0xff]
      %v4448 = vld [vmem:[%s18 + $0x40] sm:$0xff]
      %v4449 = vld [vmem:[%s18 + $0x48] sm:$0xff]
      %v4450 = vld [vmem:[%s18 + $0x50] sm:$0xff]
      %v4451 = vld [vmem:[%s18 + $0x58] sm:$0xff]
      %v4452 = vld [vmem:[%s18 + $0x60] sm:$0xff]
      %v4453 = vld [vmem:[%s18 + $0x68] sm:$0xff]
      %v4454 = vld [vmem:[%s18 + $0x70] sm:$0xff]
      %v4455 = vld [vmem:[%s18 + $0x78] sm:$0xff]
      %v4456 = vld [vmem:[%s18 + $0x80] sm:$0xff]
      %v4457 = vld [vmem:[%s18 + $0x88] sm:$0xff]
      %v4458 = vld [vmem:[%s18 + $0x90] sm:$0xff]
      %v4459 = vld [vmem:[%s18 + $0x98] sm:$0xff]
      %v4460 = vld [vmem:[%s18 + $0xa0] sm:$0xff]
      %v4461 = vld [vmem:[%s18 + $0xa8] sm:$0xff]
      %v4462 = vld [vmem:[%s18 + $0xb0] sm:$0xff]
      %v4463 = vld [vmem:[%s18 + $0xb8] sm:$0xff]
      %v4464 = vld [vmem:[%s18 + $0xc0] sm:$0xff]
      %v4465 = vld [vmem:[%s18 + $0xc8] sm:$0xff]
      %v4466 = vld [vmem:[%s18 + $0xd0] sm:$0xff]
      %v4467 = vld [vmem:[%s18 + $0xd8] sm:$0xff]
      %v4468 = vld [vmem:[%s18 + $0xe0] sm:$0xff]
      %v4469 = vld [vmem:[%s18 + $0xe8] sm:$0xff]
      %v4470 = vld [vmem:[%s18 + $0xf0] sm:$0xff]
      %v4471 = vld [vmem:[%s18 + $0xf8] sm:$0xff]
      %v4472 = vld [vmem:[%s18 + $0x100] sm:$0xff]
      %v4473 = vld [vmem:[%s18 + $0x108] sm:$0xff]
      %v4474 = vld [vmem:[%s18 + $0x110] sm:$0xff]
      %v4475 = vld [vmem:[%s18 + $0x118] sm:$0xff]
      %v4476 = vld [vmem:[%s18 + $0x120] sm:$0xff]
      %v4477 = vld [vmem:[%s18 + $0x128] sm:$0xff]
      %v4478 = vld [vmem:[%s18 + $0x130] sm:$0xff]
      %v4479 = vld [vmem:[%s18 + $0x138] sm:$0xff]
      %v4480 = vld [vmem:[%s18 + $0x140] sm:$0xff]
      %v4481 = vld [vmem:[%s18 + $0x148] sm:$0xff]
      %v4482 = vld [vmem:[%s18 + $0x150] sm:$0xff]
      %v4483 = vld [vmem:[%s18 + $0x158] sm:$0xff]
      %v4484 = vld [vmem:[%s18 + $0x160] sm:$0xff]
      %v4485 = vld [vmem:[%s18 + $0x168] sm:$0xff]
      %v4486 = vld [vmem:[%s18 + $0x170] sm:$0xff]
      %v4487 = vld [vmem:[%s18 + $0x178] sm:$0xff]
      %v4488 = vld [vmem:[%s18 + $0x180] sm:$0xff]
      %v4489 = vld [vmem:[%s18 + $0x188] sm:$0xff]
      %v4490 = vld [vmem:[%s18 + $0x190] sm:$0xff]
      %v4491 = vld [vmem:[%s18 + $0x198] sm:$0xff]
      %v4492 = vld [vmem:[%s18 + $0x1a0] sm:$0xff]
      %v4493 = vld [vmem:[%s18 + $0x1a8] sm:$0xff]
      %v4494 = vld [vmem:[%s18 + $0x1b0] sm:$0xff]
      %v4495 = vld [vmem:[%s18 + $0x1b8] sm:$0xff]
      %v4496 = vld [vmem:[%s18 + $0x1c0] sm:$0xff]
      %v4497 = vld [vmem:[%s18 + $0x1c8] sm:$0xff]
      %v4498 = vld [vmem:[%s18 + $0x1d0] sm:$0xff]
      %v4499 = vld [vmem:[%s18 + $0x1d8] sm:$0xff]
      %v4500 = vld [vmem:[%s18 + $0x1e0] sm:$0xff]
      %v4501 = vld [vmem:[%s18 + $0x1e8] sm:$0xff]
      %v4502 = vld [vmem:[%s18 + $0x1f0] sm:$0xff]
      %v4503 = vld [vmem:[%s18 + $0x1f8] sm:$0xff]
      %v4504 = vld [vmem:[%s18 + $0x200] sm:$0xff]
      %v4505 = vld [vmem:[%s18 + $0x208] sm:$0xff]
      %v4506 = vld [vmem:[%s18 + $0x210] sm:$0xff]
      %v4507 = vld [vmem:[%s18 + $0x218] sm:$0xff]
      %v4508 = vld [vmem:[%s18 + $0x220] sm:$0xff]
      %v4509 = vld [vmem:[%s18 + $0x228] sm:$0xff]
      %v4510 = vld [vmem:[%s18 + $0x230] sm:$0xff]
      %v4511 = vld [vmem:[%s18 + $0x238] sm:$0xff]
      %v4512 = vld [vmem:[%s18 + $0x240] sm:$0xff]
      %v4513 = vld [vmem:[%s18 + $0x248] sm:$0xff]
      %v4514 = vld [vmem:[%s18 + $0x250] sm:$0xff]
      %v4515 = vld [vmem:[%s18 + $0x258] sm:$0xff]
      %v4516 = vld [vmem:[%s18 + $0x260] sm:$0xff]
      %v4517 = vld [vmem:[%s18 + $0x268] sm:$0xff]
      %v4518 = vld [vmem:[%s18 + $0x270] sm:$0xff]
      %v4519 = vld [vmem:[%s18 + $0x278] sm:$0xff]
      %v4520 = vld [vmem:[%s18 + $0x280] sm:$0xff]
      %v4521 = vld [vmem:[%s18 + $0x288] sm:$0xff]
      %v4522 = vld [vmem:[%s18 + $0x290] sm:$0xff]
      %v4523 = vld [vmem:[%s18 + $0x298] sm:$0xff]
      %v4524 = vld [vmem:[%s18 + $0x2a0] sm:$0xff]
      %v4525 = vld [vmem:[%s18 + $0x2a8] sm:$0xff]
      %v4526 = vld [vmem:[%s18 + $0x2b0] sm:$0xff]
      %v4527 = vld [vmem:[%s18 + $0x2b8] sm:$0xff]
      %v4528 = vld [vmem:[%s18 + $0x2c0] sm:$0xff]
      %v4529 = vld [vmem:[%s18 + $0x2c8] sm:$0xff]
      %v4530 = vld [vmem:[%s18 + $0x2d0] sm:$0xff]
      %v4531 = vld [vmem:[%s18 + $0x2d8] sm:$0xff]
      %v4532 = vld [vmem:[%s18 + $0x2e0] sm:$0xff]
      %v4533 = vld [vmem:[%s18 + $0x2e8] sm:$0xff]
      %v4534 = vld [vmem:[%s18 + $0x2f0] sm:$0xff]
      %v4535 = vld [vmem:[%s18 + $0x2f8] sm:$0xff]
      %v4536 = vld [vmem:[%s18 + $0x300] sm:$0xff]
      %v4537 = vld [vmem:[%s18 + $0x308] sm:$0xff]
      %v4538 = vld [vmem:[%s18 + $0x310] sm:$0xff]
      %v4539 = vld [vmem:[%s18 + $0x318] sm:$0xff]
      %v4540 = vld [vmem:[%s18 + $0x320] sm:$0xff]
      %v4541 = vld [vmem:[%s18 + $0x328] sm:$0xff]
      %v4542 = vld [vmem:[%s18 + $0x330] sm:$0xff]
      %v4543 = vld [vmem:[%s18 + $0x338] sm:$0xff]
      %v4544 = vld [vmem:[%s18 + $0x340] sm:$0xff]
      %v4545 = vld [vmem:[%s18 + $0x348] sm:$0xff]
      %v4546 = vld [vmem:[%s18 + $0x350] sm:$0xff]
      %v4547 = vld [vmem:[%s18 + $0x358] sm:$0xff]
      %v4548 = vld [vmem:[%s18 + $0x360] sm:$0xff]
      %v4549 = vld [vmem:[%s18 + $0x368] sm:$0xff]
      %v4550 = vld [vmem:[%s18 + $0x370] sm:$0xff]
      %v4551 = vld [vmem:[%s18 + $0x378] sm:$0xff]
      %v4552 = vld [vmem:[%s18 + $0x380] sm:$0xff]
      %v4553 = vld [vmem:[%s18 + $0x388] sm:$0xff]
      %v4554 = vld [vmem:[%s18 + $0x390] sm:$0xff]
      %v4555 = vld [vmem:[%s18 + $0x398] sm:$0xff]
      %v4556 = vld [vmem:[%s18 + $0x3a0] sm:$0xff]
      %v4557 = vld [vmem:[%s18 + $0x3a8] sm:$0xff]
      %v4558 = vld [vmem:[%s18 + $0x3b0] sm:$0xff]
      %v4559 = vld [vmem:[%s18 + $0x3b8] sm:$0xff]
      %v4560 = vld [vmem:[%s18 + $0x3c0] sm:$0xff]
      %v4561 = vld [vmem:[%s18 + $0x3c8] sm:$0xff]
      %v4562 = vld [vmem:[%s18 + $0x3d0] sm:$0xff]
      %v4563 = vld [vmem:[%s18 + $0x3d8] sm:$0xff]
      %v4564 = vld [vmem:[%s18 + $0x3e0] sm:$0xff]
      %v4565 = vld [vmem:[%s18 + $0x3e8] sm:$0xff]
      %v4566 = vld [vmem:[%s18 + $0x3f0] sm:$0xff]
      %v4567 = vld [vmem:[%s18 + $0x3f8] sm:$0xff]
      %4568 = vmatprep.subr.mxu0 0.0
      %4569 = vmatpush1.xpose.msra.mxu0 %v4455
      %4570 = vmatprep.subr.mxu0 0.0
      %4571 = vmatpush1.xpose.msra.mxu0 %v4454
      %4572 = vmatprep.subr.mxu0 0.0
      %4573 = vmatpush1.xpose.msra.mxu0 %v4453
      %4574 = vmatprep.subr.mxu0 0.0
      %4575 = vmatpush1.xpose.msra.mxu0 %v4452
      %4576 = vmatprep.subr.mxu0 0.0
      %4577 = vmatpush1.xpose.msra.mxu0 %v4451
      %4578 = vmatprep.subr.mxu0 0.0
      %4579 = vmatpush1.xpose.msra.mxu0 %v4450
      %4580 = vmatprep.subr.mxu0 0.0
      %4581 = vmatpush1.xpose.msra.mxu0 %v4449
      %4582 = vmatprep.subr.mxu0 0.0
      %4583 = vmatpush1.xpose.msra.mxu0 %v4448
      %4584 = vmatprep.subr.mxu0 0.0
      %4585 = vmatpush1.xpose.msra.mxu0 %v4447
      %4586 = vmatprep.subr.mxu0 0.0
      %4587 = vmatpush1.xpose.msra.mxu0 %v4446
      %4588 = vmatprep.subr.mxu0 0.0
      %4589 = vmatpush1.xpose.msra.mxu0 %v4445
      %4590 = vmatprep.subr.mxu0 0.0
      %4591 = vmatpush1.xpose.msra.mxu0 %v4444
      %4592 = vmatprep.subr.mxu0 0.0
      %4593 = vmatpush1.xpose.msra.mxu0 %v4443
      %4594 = vmatprep.subr.mxu0 0.0
      %4595 = vmatpush1.xpose.msra.mxu0 %v4442
      %4596 = vmatprep.subr.mxu0 0.0
      %4597 = vmatpush1.xpose.msra.mxu0 %v4441
      %4598 = vmatprep.subr.mxu0 0.0
      %4599 = vmatpush1.xpose.msra.mxu0 %v4440
      %4600 = vmatprep.subr.mxu0 0.0
      %4601 = vmatpush2.xpose.msra.mxu0 0.0
      %4602 = vmatprep.subr.mxu0 0.0
      %4603 = vmatpush2.xpose.msra.mxu0 0.0
      %4604 = vmatprep.subr.mxu0 0.0
      %4605 = vmatpush2.xpose.msra.mxu0 0.0
      %4606 = vmatprep.subr.mxu0 0.0
      %4607 = vmatpush2.xpose.msra.mxu0 0.0
      %4608 = vmatprep.subr.mxu0 0.0
      %4609 = vmatpush2.xpose.msra.mxu0 0.0
      %4610 = vmatprep.subr.mxu0 0.0
      %4611 = vmatpush2.xpose.msra.mxu0 0.0
      %4612 = vmatprep.subr.mxu0 0.0
      %4613 = vmatpush2.xpose.msra.mxu0 0.0
      %4614 = vmatprep.subr.mxu0 0.0
      %4615 = vmatpush2.xpose.msra.mxu0 0.0
      %4616 = vmatprep.subr.mxu0 0.0
      %4617 = vmatpush2.xpose.msra.mxu0 0.0
      %4618 = vmatprep.subr.mxu0 0.0
      %4619 = vmatpush2.xpose.msra.mxu0 0.0
      %4620 = vmatprep.subr.mxu0 0.0
      %4621 = vmatpush2.xpose.msra.mxu0 0.0
      %4622 = vmatprep.subr.mxu0 0.0
      %4623 = vmatpush2.xpose.msra.mxu0 0.0
      %4624 = vmatprep.subr.mxu0 0.0
      %4625 = vmatpush2.xpose.msra.mxu0 0.0
      %4626 = vmatprep.subr.mxu0 0.0
      %4627 = vmatpush2.xpose.msra.mxu0 0.0
      %4628 = vmatprep.subr.mxu0 0.0
      %4629 = vmatpush2.xpose.msra.mxu0 0.0
      %4630 = vmatprep.subr.mxu0 0.0
      %4631 = vmatpush2.xpose.msra.mxu0 0.0
      %4632 = vmatprep.mubr.f32.mxu0 0.0
      %4633 = vmatmul.mubr.f32.gmra.mxu0 %v4406
      %v4634 = vpop.f32.mrf.mxu0
      %v4635 = vadd.f32 0.0, %v4634
      %v4636 = vpop.f32.mrf.mxu0
      %4637 = vdwg.mxu0
      %4638 = vmatprep.subr.mxu0 0.0
      %4639 = vmatpush1.xpose.msra.mxu0 %v4471
      %4640 = vmatprep.subr.mxu0 0.0
      %4641 = vmatpush1.xpose.msra.mxu0 %v4470
      %4642 = vmatprep.subr.mxu0 0.0
      %4643 = vmatpush1.xpose.msra.mxu0 %v4469
      %4644 = vmatprep.subr.mxu0 0.0
      %4645 = vmatpush1.xpose.msra.mxu0 %v4468
      %4646 = vmatprep.subr.mxu0 0.0
      %4647 = vmatpush1.xpose.msra.mxu0 %v4467
      %4648 = vmatprep.subr.mxu0 0.0
      %4649 = vmatpush1.xpose.msra.mxu0 %v4466
      %4650 = vmatprep.subr.mxu0 0.0
      %4651 = vmatpush1.xpose.msra.mxu0 %v4465
      %4652 = vmatprep.subr.mxu0 0.0
      %4653 = vmatpush1.xpose.msra.mxu0 %v4464
      %4654 = vmatprep.subr.mxu0 0.0
      %4655 = vmatpush1.xpose.msra.mxu0 %v4463
      %4656 = vmatprep.subr.mxu0 0.0
      %4657 = vmatpush1.xpose.msra.mxu0 %v4462
      %4658 = vmatprep.subr.mxu0 0.0
      %4659 = vmatpush1.xpose.msra.mxu0 %v4461
      %4660 = vmatprep.subr.mxu0 0.0
      %4661 = vmatpush1.xpose.msra.mxu0 %v4460
      %4662 = vmatprep.subr.mxu0 0.0
      %4663 = vmatpush1.xpose.msra.mxu0 %v4459
      %4664 = vmatprep.subr.mxu0 0.0
      %4665 = vmatpush1.xpose.msra.mxu0 %v4458
      %4666 = vmatprep.subr.mxu0 0.0
      %4667 = vmatpush1.xpose.msra.mxu0 %v4457
      %4668 = vmatprep.subr.mxu0 0.0
      %4669 = vmatpush1.xpose.msra.mxu0 %v4456
      %4670 = vmatprep.subr.mxu0 0.0
      %4671 = vmatpush2.xpose.msra.mxu0 0.0
      %4672 = vmatprep.subr.mxu0 0.0
      %4673 = vmatpush2.xpose.msra.mxu0 0.0
      %4674 = vmatprep.subr.mxu0 0.0
      %4675 = vmatpush2.xpose.msra.mxu0 0.0
      %4676 = vmatprep.subr.mxu0 0.0
      %4677 = vmatpush2.xpose.msra.mxu0 0.0
      %4678 = vmatprep.subr.mxu0 0.0
      %4679 = vmatpush2.xpose.msra.mxu0 0.0
      %4680 = vmatprep.subr.mxu0 0.0
      %4681 = vmatpush2.xpose.msra.mxu0 0.0
      %4682 = vmatprep.subr.mxu0 0.0
      %4683 = vmatpush2.xpose.msra.mxu0 0.0
      %4684 = vmatprep.subr.mxu0 0.0
      %4685 = vmatpush2.xpose.msra.mxu0 0.0
      %4686 = vmatprep.subr.mxu0 0.0
      %4687 = vmatpush2.xpose.msra.mxu0 0.0
      %4688 = vmatprep.subr.mxu0 0.0
      %4689 = vmatpush2.xpose.msra.mxu0 0.0
      %4690 = vmatprep.subr.mxu0 0.0
      %4691 = vmatpush2.xpose.msra.mxu0 0.0
      %4692 = vmatprep.subr.mxu0 0.0
      %4693 = vmatpush2.xpose.msra.mxu0 0.0
      %4694 = vmatprep.subr.mxu0 0.0
      %4695 = vmatpush2.xpose.msra.mxu0 0.0
      %4696 = vmatprep.subr.mxu0 0.0
      %4697 = vmatpush2.xpose.msra.mxu0 0.0
      %4698 = vmatprep.subr.mxu0 0.0
      %4699 = vmatpush2.xpose.msra.mxu0 0.0
      %4700 = vmatprep.subr.mxu0 0.0
      %4701 = vmatpush2.xpose.msra.mxu0 0.0
      %4702 = vmatprep.mubr.f32.mxu0 0.0
      %4703 = vmatmul.mubr.f32.gmra.mxu0 %v4420
      %v4704 = vpop.f32.mrf.mxu0
      %v4705 = vadd.f32 0.0, %v4704
      %v4706 = vpop.f32.mrf.mxu0
      %4707 = vdwg.mxu0
      %4708 = vmatprep.subr.mxu0 0.0
      %4709 = vmatpush1.xpose.msra.mxu0 %v4487
      %4710 = vmatprep.subr.mxu0 0.0
      %4711 = vmatpush1.xpose.msra.mxu0 %v4486
      %4712 = vmatprep.subr.mxu0 0.0
      %4713 = vmatpush1.xpose.msra.mxu0 %v4485
      %4714 = vmatprep.subr.mxu0 0.0
      %4715 = vmatpush1.xpose.msra.mxu0 %v4484
      %4716 = vmatprep.subr.mxu0 0.0
      %4717 = vmatpush1.xpose.msra.mxu0 %v4483
      %4718 = vmatprep.subr.mxu0 0.0
      %4719 = vmatpush1.xpose.msra.mxu0 %v4482
      %4720 = vmatprep.subr.mxu0 0.0
      %4721 = vmatpush1.xpose.msra.mxu0 %v4481
      %4722 = vmatprep.subr.mxu0 0.0
      %4723 = vmatpush1.xpose.msra.mxu0 %v4480
      %4724 = vmatprep.subr.mxu0 0.0
      %4725 = vmatpush1.xpose.msra.mxu0 %v4479
      %4726 = vmatprep.subr.mxu0 0.0
      %4727 = vmatpush1.xpose.msra.mxu0 %v4478
      %4728 = vmatprep.subr.mxu0 0.0
      %4729 = vmatpush1.xpose.msra.mxu0 %v4477
      %4730 = vmatprep.subr.mxu0 0.0
      %4731 = vmatpush1.xpose.msra.mxu0 %v4476
      %4732 = vmatprep.subr.mxu0 0.0
      %4733 = vmatpush1.xpose.msra.mxu0 %v4475
      %4734 = vmatprep.subr.mxu0 0.0
      %4735 = vmatpush1.xpose.msra.mxu0 %v4474
      %4736 = vmatprep.subr.mxu0 0.0
      %4737 = vmatpush1.xpose.msra.mxu0 %v4473
      %4738 = vmatprep.subr.mxu0 0.0
      %4739 = vmatpush1.xpose.msra.mxu0 %v4472
      %4740 = vmatprep.subr.mxu0 0.0
      %4741 = vmatpush2.xpose.msra.mxu0 0.0
      %4742 = vmatprep.subr.mxu0 0.0
      %4743 = vmatpush2.xpose.msra.mxu0 0.0
      %4744 = vmatprep.subr.mxu0 0.0
      %4745 = vmatpush2.xpose.msra.mxu0 0.0
      %4746 = vmatprep.subr.mxu0 0.0
      %4747 = vmatpush2.xpose.msra.mxu0 0.0
      %4748 = vmatprep.subr.mxu0 0.0
      %4749 = vmatpush2.xpose.msra.mxu0 0.0
      %4750 = vmatprep.subr.mxu0 0.0
      %4751 = vmatpush2.xpose.msra.mxu0 0.0
      %4752 = vmatprep.subr.mxu0 0.0
      %4753 = vmatpush2.xpose.msra.mxu0 0.0
      %4754 = vmatprep.subr.mxu0 0.0
      %4755 = vmatpush2.xpose.msra.mxu0 0.0
      %4756 = vmatprep.subr.mxu0 0.0
      %4757 = vmatpush2.xpose.msra.mxu0 0.0
      %4758 = vmatprep.subr.mxu0 0.0
      %4759 = vmatpush2.xpose.msra.mxu0 0.0
      %4760 = vmatprep.subr.mxu0 0.0
      %4761 = vmatpush2.xpose.msra.mxu0 0.0
      %4762 = vmatprep.subr.mxu0 0.0
      %4763 = vmatpush2.xpose.msra.mxu0 0.0
      %4764 = vmatprep.subr.mxu0 0.0
      %4765 = vmatpush2.xpose.msra.mxu0 0.0
      %4766 = vmatprep.subr.mxu0 0.0
      %4767 = vmatpush2.xpose.msra.mxu0 0.0
      %4768 = vmatprep.subr.mxu0 0.0
      %4769 = vmatpush2.xpose.msra.mxu0 0.0
      %4770 = vmatprep.subr.mxu0 0.0
      %4771 = vmatpush2.xpose.msra.mxu0 0.0
      %4772 = vmatprep.mubr.f32.mxu0 0.0
      %4773 = vmatmul.mubr.f32.gmra.mxu0 %v4428
      %v4774 = vpop.f32.mrf.mxu0
      %v4775 = vadd.f32 0.0, %v4774
      %v4776 = vpop.f32.mrf.mxu0
      %4777 = vdwg.mxu0
      %4778 = vmatprep.subr.mxu0 0.0
      %4779 = vmatpush1.xpose.msra.mxu0 %v4503
      %4780 = vmatprep.subr.mxu0 0.0
      %4781 = vmatpush1.xpose.msra.mxu0 %v4502
      %4782 = vmatprep.subr.mxu0 0.0
      %4783 = vmatpush1.xpose.msra.mxu0 %v4501
      %4784 = vmatprep.subr.mxu0 0.0
      %4785 = vmatpush1.xpose.msra.mxu0 %v4500
      %4786 = vmatprep.subr.mxu0 0.0
      %4787 = vmatpush1.xpose.msra.mxu0 %v4499
      %4788 = vmatprep.subr.mxu0 0.0
      %4789 = vmatpush1.xpose.msra.mxu0 %v4498
      %4790 = vmatprep.subr.mxu0 0.0
      %4791 = vmatpush1.xpose.msra.mxu0 %v4497
      %4792 = vmatprep.subr.mxu0 0.0
      %4793 = vmatpush1.xpose.msra.mxu0 %v4496
      %4794 = vmatprep.subr.mxu0 0.0
      %4795 = vmatpush1.xpose.msra.mxu0 %v4495
      %4796 = vmatprep.subr.mxu0 0.0
      %4797 = vmatpush1.xpose.msra.mxu0 %v4494
      %4798 = vmatprep.subr.mxu0 0.0
      %4799 = vmatpush1.xpose.msra.mxu0 %v4493
      %4800 = vmatprep.subr.mxu0 0.0
      %4801 = vmatpush1.xpose.msra.mxu0 %v4492
      %4802 = vmatprep.subr.mxu0 0.0
      %4803 = vmatpush1.xpose.msra.mxu0 %v4491
      %4804 = vmatprep.subr.mxu0 0.0
      %4805 = vmatpush1.xpose.msra.mxu0 %v4490
      %4806 = vmatprep.subr.mxu0 0.0
      %4807 = vmatpush1.xpose.msra.mxu0 %v4489
      %4808 = vmatprep.subr.mxu0 0.0
      %4809 = vmatpush1.xpose.msra.mxu0 %v4488
      %4810 = vmatprep.subr.mxu0 0.0
      %4811 = vmatpush2.xpose.msra.mxu0 0.0
      %4812 = vmatprep.subr.mxu0 0.0
      %4813 = vmatpush2.xpose.msra.mxu0 0.0
      %4814 = vmatprep.subr.mxu0 0.0
      %4815 = vmatpush2.xpose.msra.mxu0 0.0
      %4816 = vmatprep.subr.mxu0 0.0
      %4817 = vmatpush2.xpose.msra.mxu0 0.0
      %4818 = vmatprep.subr.mxu0 0.0
      %4819 = vmatpush2.xpose.msra.mxu0 0.0
      %4820 = vmatprep.subr.mxu0 0.0
      %4821 = vmatpush2.xpose.msra.mxu0 0.0
      %4822 = vmatprep.subr.mxu0 0.0
      %4823 = vmatpush2.xpose.msra.mxu0 0.0
      %4824 = vmatprep.subr.mxu0 0.0
      %4825 = vmatpush2.xpose.msra.mxu0 0.0
      %4826 = vmatprep.subr.mxu0 0.0
      %4827 = vmatpush2.xpose.msra.mxu0 0.0
      %4828 = vmatprep.subr.mxu0 0.0
      %4829 = vmatpush2.xpose.msra.mxu0 0.0
      %4830 = vmatprep.subr.mxu0 0.0
      %4831 = vmatpush2.xpose.msra.mxu0 0.0
      %4832 = vmatprep.subr.mxu0 0.0
      %4833 = vmatpush2.xpose.msra.mxu0 0.0
      %4834 = vmatprep.subr.mxu0 0.0
      %4835 = vmatpush2.xpose.msra.mxu0 0.0
      %4836 = vmatprep.subr.mxu0 0.0
      %4837 = vmatpush2.xpose.msra.mxu0 0.0
      %4838 = vmatprep.subr.mxu0 0.0
      %4839 = vmatpush2.xpose.msra.mxu0 0.0
      %4840 = vmatprep.subr.mxu0 0.0
      %4841 = vmatpush2.xpose.msra.mxu0 0.0
      %4842 = vmatprep.mubr.f32.mxu0 0.0
      %4843 = vmatmul.mubr.f32.gmra.mxu0 %v4430
      %v4844 = vpop.f32.mrf.mxu0
      %v4845 = vadd.f32 0.0, %v4844
      %v4846 = vpop.f32.mrf.mxu0
      %4847 = vdwg.mxu0
      %4848 = vmatprep.subr.mxu0 0.0
      %4849 = vmatpush1.xpose.msra.mxu0 %v4519
      %4850 = vmatprep.subr.mxu0 0.0
      %4851 = vmatpush1.xpose.msra.mxu0 %v4518
      %4852 = vmatprep.subr.mxu0 0.0
      %4853 = vmatpush1.xpose.msra.mxu0 %v4517
      %4854 = vmatprep.subr.mxu0 0.0
      %4855 = vmatpush1.xpose.msra.mxu0 %v4516
      %4856 = vmatprep.subr.mxu0 0.0
      %4857 = vmatpush1.xpose.msra.mxu0 %v4515
      %4858 = vmatprep.subr.mxu0 0.0
      %4859 = vmatpush1.xpose.msra.mxu0 %v4514
      %4860 = vmatprep.subr.mxu0 0.0
      %4861 = vmatpush1.xpose.msra.mxu0 %v4513
      %4862 = vmatprep.subr.mxu0 0.0
      %4863 = vmatpush1.xpose.msra.mxu0 %v4512
      %4864 = vmatprep.subr.mxu0 0.0
      %4865 = vmatpush1.xpose.msra.mxu0 %v4511
      %4866 = vmatprep.subr.mxu0 0.0
      %4867 = vmatpush1.xpose.msra.mxu0 %v4510
      %4868 = vmatprep.subr.mxu0 0.0
      %4869 = vmatpush1.xpose.msra.mxu0 %v4509
      %4870 = vmatprep.subr.mxu0 0.0
      %4871 = vmatpush1.xpose.msra.mxu0 %v4508
      %4872 = vmatprep.subr.mxu0 0.0
      %4873 = vmatpush1.xpose.msra.mxu0 %v4507
      %4874 = vmatprep.subr.mxu0 0.0
      %4875 = vmatpush1.xpose.msra.mxu0 %v4506
      %4876 = vmatprep.subr.mxu0 0.0
      %4877 = vmatpush1.xpose.msra.mxu0 %v4505
      %4878 = vmatprep.subr.mxu0 0.0
      %4879 = vmatpush1.xpose.msra.mxu0 %v4504
      %4880 = vmatprep.subr.mxu0 0.0
      %4881 = vmatpush2.xpose.msra.mxu0 0.0
      %4882 = vmatprep.subr.mxu0 0.0
      %4883 = vmatpush2.xpose.msra.mxu0 0.0
      %4884 = vmatprep.subr.mxu0 0.0
      %4885 = vmatpush2.xpose.msra.mxu0 0.0
      %4886 = vmatprep.subr.mxu0 0.0
      %4887 = vmatpush2.xpose.msra.mxu0 0.0
      %4888 = vmatprep.subr.mxu0 0.0
      %4889 = vmatpush2.xpose.msra.mxu0 0.0
      %4890 = vmatprep.subr.mxu0 0.0
      %4891 = vmatpush2.xpose.msra.mxu0 0.0
      %4892 = vmatprep.subr.mxu0 0.0
      %4893 = vmatpush2.xpose.msra.mxu0 0.0
      %4894 = vmatprep.subr.mxu0 0.0
      %4895 = vmatpush2.xpose.msra.mxu0 0.0
      %4896 = vmatprep.subr.mxu0 0.0
      %4897 = vmatpush2.xpose.msra.mxu0 0.0
      %4898 = vmatprep.subr.mxu0 0.0
      %4899 = vmatpush2.xpose.msra.mxu0 0.0
      %4900 = vmatprep.subr.mxu0 0.0
      %4901 = vmatpush2.xpose.msra.mxu0 0.0
      %4902 = vmatprep.subr.mxu0 0.0
      %4903 = vmatpush2.xpose.msra.mxu0 0.0
      %4904 = vmatprep.subr.mxu0 0.0
      %4905 = vmatpush2.xpose.msra.mxu0 0.0
      %4906 = vmatprep.subr.mxu0 0.0
      %4907 = vmatpush2.xpose.msra.mxu0 0.0
      %4908 = vmatprep.subr.mxu0 0.0
      %4909 = vmatpush2.xpose.msra.mxu0 0.0
      %4910 = vmatprep.subr.mxu0 0.0
      %4911 = vmatpush2.xpose.msra.mxu0 0.0
      %4912 = vmatprep.mubr.f32.mxu0 0.0
      %4913 = vmatmul.mubr.f32.gmra.mxu0 %v4413
      %v4914 = vpop.f32.mrf.mxu0
      %v4915 = vadd.f32 0.0, %v4914
      %v4916 = vpop.f32.mrf.mxu0
      %4917 = vdwg.mxu0
      %4918 = vmatprep.subr.mxu0 0.0
      %4919 = vmatpush1.xpose.msra.mxu0 %v4535
      %4920 = vmatprep.subr.mxu0 0.0
      %4921 = vmatpush1.xpose.msra.mxu0 %v4534
      %4922 = vmatprep.subr.mxu0 0.0
      %4923 = vmatpush1.xpose.msra.mxu0 %v4533
      %4924 = vmatprep.subr.mxu0 0.0
      %4925 = vmatpush1.xpose.msra.mxu0 %v4532
      %4926 = vmatprep.subr.mxu0 0.0
      %4927 = vmatpush1.xpose.msra.mxu0 %v4531
      %4928 = vmatprep.subr.mxu0 0.0
      %4929 = vmatpush1.xpose.msra.mxu0 %v4530
      %4930 = vmatprep.subr.mxu0 0.0
      %4931 = vmatpush1.xpose.msra.mxu0 %v4529
      %4932 = vmatprep.subr.mxu0 0.0
      %4933 = vmatpush1.xpose.msra.mxu0 %v4528
      %4934 = vmatprep.subr.mxu0 0.0
      %4935 = vmatpush1.xpose.msra.mxu0 %v4527
      %4936 = vmatprep.subr.mxu0 0.0
      %4937 = vmatpush1.xpose.msra.mxu0 %v4526
      %4938 = vmatprep.subr.mxu0 0.0
      %4939 = vmatpush1.xpose.msra.mxu0 %v4525
      %4940 = vmatprep.subr.mxu0 0.0
      %4941 = vmatpush1.xpose.msra.mxu0 %v4524
      %4942 = vmatprep.subr.mxu0 0.0
      %4943 = vmatpush1.xpose.msra.mxu0 %v4523
      %4944 = vmatprep.subr.mxu0 0.0
      %4945 = vmatpush1.xpose.msra.mxu0 %v4522
      %4946 = vmatprep.subr.mxu0 0.0
      %4947 = vmatpush1.xpose.msra.mxu0 %v4521
      %4948 = vmatprep.subr.mxu0 0.0
      %4949 = vmatpush1.xpose.msra.mxu0 %v4520
      %4950 = vmatprep.subr.mxu0 0.0
      %4951 = vmatpush2.xpose.msra.mxu0 0.0
      %4952 = vmatprep.subr.mxu0 0.0
      %4953 = vmatpush2.xpose.msra.mxu0 0.0
      %4954 = vmatprep.subr.mxu0 0.0
      %4955 = vmatpush2.xpose.msra.mxu0 0.0
      %4956 = vmatprep.subr.mxu0 0.0
      %4957 = vmatpush2.xpose.msra.mxu0 0.0
      %4958 = vmatprep.subr.mxu0 0.0
      %4959 = vmatpush2.xpose.msra.mxu0 0.0
      %4960 = vmatprep.subr.mxu0 0.0
      %4961 = vmatpush2.xpose.msra.mxu0 0.0
      %4962 = vmatprep.subr.mxu0 0.0
      %4963 = vmatpush2.xpose.msra.mxu0 0.0
      %4964 = vmatprep.subr.mxu0 0.0
      %4965 = vmatpush2.xpose.msra.mxu0 0.0
      %4966 = vmatprep.subr.mxu0 0.0
      %4967 = vmatpush2.xpose.msra.mxu0 0.0
      %4968 = vmatprep.subr.mxu0 0.0
      %4969 = vmatpush2.xpose.msra.mxu0 0.0
      %4970 = vmatprep.subr.mxu0 0.0
      %4971 = vmatpush2.xpose.msra.mxu0 0.0
      %4972 = vmatprep.subr.mxu0 0.0
      %4973 = vmatpush2.xpose.msra.mxu0 0.0
      %4974 = vmatprep.subr.mxu0 0.0
      %4975 = vmatpush2.xpose.msra.mxu0 0.0
      %4976 = vmatprep.subr.mxu0 0.0
      %4977 = vmatpush2.xpose.msra.mxu0 0.0
      %4978 = vmatprep.subr.mxu0 0.0
      %4979 = vmatpush2.xpose.msra.mxu0 0.0
      %4980 = vmatprep.subr.mxu0 0.0
      %4981 = vmatpush2.xpose.msra.mxu0 0.0
      %4982 = vmatprep.mubr.f32.mxu0 0.0
      %4983 = vmatmul.mubr.f32.gmra.mxu0 %v4427
      %v4984 = vpop.f32.mrf.mxu0
      %v4985 = vadd.f32 0.0, %v4984
      %v4986 = vpop.f32.mrf.mxu0
      %4987 = vdwg.mxu0
      %4988 = vmatprep.subr.mxu0 0.0
      %4989 = vmatpush1.xpose.msra.mxu0 %v4551
      %4990 = vmatprep.subr.mxu0 0.0
      %4991 = vmatpush1.xpose.msra.mxu0 %v4550
      %4992 = vmatprep.subr.mxu0 0.0
      %4993 = vmatpush1.xpose.msra.mxu0 %v4549
      %4994 = vmatprep.subr.mxu0 0.0
      %4995 = vmatpush1.xpose.msra.mxu0 %v4548
      %4996 = vmatprep.subr.mxu0 0.0
      %4997 = vmatpush1.xpose.msra.mxu0 %v4547
      %4998 = vmatprep.subr.mxu0 0.0
      %4999 = vmatpush1.xpose.msra.mxu0 %v4546
      %5000 = vmatprep.subr.mxu0 0.0
      %5001 = vmatpush1.xpose.msra.mxu0 %v4545
      %5002 = vmatprep.subr.mxu0 0.0
      %5003 = vmatpush1.xpose.msra.mxu0 %v4544
      %5004 = vmatprep.subr.mxu0 0.0
      %5005 = vmatpush1.xpose.msra.mxu0 %v4543
      %5006 = vmatprep.subr.mxu0 0.0
      %5007 = vmatpush1.xpose.msra.mxu0 %v4542
      %5008 = vmatprep.subr.mxu0 0.0
      %5009 = vmatpush1.xpose.msra.mxu0 %v4541
      %5010 = vmatprep.subr.mxu0 0.0
      %5011 = vmatpush1.xpose.msra.mxu0 %v4540
      %5012 = vmatprep.subr.mxu0 0.0
      %5013 = vmatpush1.xpose.msra.mxu0 %v4539
      %5014 = vmatprep.subr.mxu0 0.0
      %5015 = vmatpush1.xpose.msra.mxu0 %v4538
      %5016 = vmatprep.subr.mxu0 0.0
      %5017 = vmatpush1.xpose.msra.mxu0 %v4537
      %5018 = vmatprep.subr.mxu0 0.0
      %5019 = vmatpush1.xpose.msra.mxu0 %v4536
      %5020 = vmatprep.subr.mxu0 0.0
      %5021 = vmatpush2.xpose.msra.mxu0 0.0
      %5022 = vmatprep.subr.mxu0 0.0
      %5023 = vmatpush2.xpose.msra.mxu0 0.0
      %5024 = vmatprep.subr.mxu0 0.0
      %5025 = vmatpush2.xpose.msra.mxu0 0.0
      %5026 = vmatprep.subr.mxu0 0.0
      %5027 = vmatpush2.xpose.msra.mxu0 0.0
      %5028 = vmatprep.subr.mxu0 0.0
      %5029 = vmatpush2.xpose.msra.mxu0 0.0
      %5030 = vmatprep.subr.mxu0 0.0
      %5031 = vmatpush2.xpose.msra.mxu0 0.0
      %5032 = vmatprep.subr.mxu0 0.0
      %5033 = vmatpush2.xpose.msra.mxu0 0.0
      %5034 = vmatprep.subr.mxu0 0.0
      %5035 = vmatpush2.xpose.msra.mxu0 0.0
      %5036 = vmatprep.subr.mxu0 0.0
      %5037 = vmatpush2.xpose.msra.mxu0 0.0
      %5038 = vmatprep.subr.mxu0 0.0
      %5039 = vmatpush2.xpose.msra.mxu0 0.0
      %5040 = vmatprep.subr.mxu0 0.0
      %5041 = vmatpush2.xpose.msra.mxu0 0.0
      %5042 = vmatprep.subr.mxu0 0.0
      %5043 = vmatpush2.xpose.msra.mxu0 0.0
      %5044 = vmatprep.subr.mxu0 0.0
      %5045 = vmatpush2.xpose.msra.mxu0 0.0
      %5046 = vmatprep.subr.mxu0 0.0
      %5047 = vmatpush2.xpose.msra.mxu0 0.0
      %5048 = vmatprep.subr.mxu0 0.0
      %5049 = vmatpush2.xpose.msra.mxu0 0.0
      %5050 = vmatprep.subr.mxu0 0.0
      %5051 = vmatpush2.xpose.msra.mxu0 0.0
      %5052 = vmatprep.mubr.f32.mxu0 0.0
      %5053 = vmatmul.mubr.f32.gmra.mxu0 %v4429
      %v5054 = vpop.f32.mrf.mxu0
      %v5055 = vadd.f32 0.0, %v5054
      %v5056 = vpop.f32.mrf.mxu0
      %5057 = vdwg.mxu0
      %5058 = vmatprep.subr.mxu0 0.0
      %5059 = vmatpush1.xpose.msra.mxu0 %v4567
      %5060 = vmatprep.subr.mxu0 0.0
      %5061 = vmatpush1.xpose.msra.mxu0 %v4566
      %5062 = vmatprep.subr.mxu0 0.0
      %5063 = vmatpush1.xpose.msra.mxu0 %v4565
      %5064 = vmatprep.subr.mxu0 0.0
      %5065 = vmatpush1.xpose.msra.mxu0 %v4564
      %5066 = vmatprep.subr.mxu0 0.0
      %5067 = vmatpush1.xpose.msra.mxu0 %v4563
      %5068 = vmatprep.subr.mxu0 0.0
      %5069 = vmatpush1.xpose.msra.mxu0 %v4562
      %5070 = vmatprep.subr.mxu0 0.0
      %5071 = vmatpush1.xpose.msra.mxu0 %v4561
      %5072 = vmatprep.subr.mxu0 0.0
      %5073 = vmatpush1.xpose.msra.mxu0 %v4560
      %5074 = vmatprep.subr.mxu0 0.0
      %5075 = vmatpush1.xpose.msra.mxu0 %v4559
      %5076 = vmatprep.subr.mxu0 0.0
      %5077 = vmatpush1.xpose.msra.mxu0 %v4558
      %5078 = vmatprep.subr.mxu0 0.0
      %5079 = vmatpush1.xpose.msra.mxu0 %v4557
      %5080 = vmatprep.subr.mxu0 0.0
      %5081 = vmatpush1.xpose.msra.mxu0 %v4556
      %5082 = vmatprep.subr.mxu0 0.0
      %5083 = vmatpush1.xpose.msra.mxu0 %v4555
      %5084 = vmatprep.subr.mxu0 0.0
      %5085 = vmatpush1.xpose.msra.mxu0 %v4554
      %5086 = vmatprep.subr.mxu0 0.0
      %5087 = vmatpush1.xpose.msra.mxu0 %v4553
      %5088 = vmatprep.subr.mxu0 0.0
      %5089 = vmatpush1.xpose.msra.mxu0 %v4552
      %5090 = vmatprep.subr.mxu0 0.0
      %5091 = vmatpush2.xpose.msra.mxu0 0.0
      %5092 = vmatprep.subr.mxu0 0.0
      %5093 = vmatpush2.xpose.msra.mxu0 0.0
      %5094 = vmatprep.subr.mxu0 0.0
      %5095 = vmatpush2.xpose.msra.mxu0 0.0
      %5096 = vmatprep.subr.mxu0 0.0
      %5097 = vmatpush2.xpose.msra.mxu0 0.0
      %5098 = vmatprep.subr.mxu0 0.0
      %5099 = vmatpush2.xpose.msra.mxu0 0.0
      %5100 = vmatprep.subr.mxu0 0.0
      %5101 = vmatpush2.xpose.msra.mxu0 0.0
      %5102 = vmatprep.subr.mxu0 0.0
      %5103 = vmatpush2.xpose.msra.mxu0 0.0
      %5104 = vmatprep.subr.mxu0 0.0
      %5105 = vmatpush2.xpose.msra.mxu0 0.0
      %5106 = vmatprep.subr.mxu0 0.0
      %5107 = vmatpush2.xpose.msra.mxu0 0.0
      %5108 = vmatprep.subr.mxu0 0.0
      %5109 = vmatpush2.xpose.msra.mxu0 0.0
      %5110 = vmatprep.subr.mxu0 0.0
      %5111 = vmatpush2.xpose.msra.mxu0 0.0
      %5112 = vmatprep.subr.mxu0 0.0
      %5113 = vmatpush2.xpose.msra.mxu0 0.0
      %5114 = vmatprep.subr.mxu0 0.0
      %5115 = vmatpush2.xpose.msra.mxu0 0.0
      %5116 = vmatprep.subr.mxu0 0.0
      %5117 = vmatpush2.xpose.msra.mxu0 0.0
      %5118 = vmatprep.subr.mxu0 0.0
      %5119 = vmatpush2.xpose.msra.mxu0 0.0
      %5120 = vmatprep.subr.mxu0 0.0
      %5121 = vmatpush2.xpose.msra.mxu0 0.0
      %5122 = vmatprep.mubr.f32.mxu0 0.0
      %5123 = vmatmul.mubr.f32.gmra.mxu0 %v4431
      %v5124 = vpop.f32.mrf.mxu0
      %v5125 = vadd.f32 0.0, %v5124
      %v5126 = vpop.f32.mrf.mxu0
      %5127 = vdwg.mxu0
      %v5136 = vrot.slane %v4705, 7
      %vm5137 = vcmask 1041409
      %v5138 = vsel %vm5137, %v5136, %v4635
      %v5139 = vrot.slane %v4775, 6
      %vm5140 = vcmask 1042434
      %v5141 = vsel %vm5140, %v5139, %v5138
      %v5142 = vrot.slane %v4845, 5
      %vm5143 = vcmask 1043459
      %v5144 = vsel %vm5143, %v5142, %v5141
      %v5145 = vrot.slane %v4915, 4
      %vm5146 = vcmask 1044484
      %v5147 = vsel %vm5146, %v5145, %v5144
      %v5148 = vrot.slane %v4985, 3
      %vm5149 = vcmask 1045509
      %v5150 = vsel %vm5149, %v5148, %v5147
      %v5151 = vrot.slane %v5055, 2
      %vm5152 = vcmask 1046534
      %v5153 = vsel %vm5152, %v5151, %v5150
      %v5154 = vrot.slane %v5125, 1
      %vm5155 = vcmask 1047559
      %v5156 = vsel %vm5155, %v5154, %v5153
      %5158 = vmax.xlane.f32.xlu0 %v5156
      %v5159 = vpop.xlane.xlu0 %5158
      %v5161 = vrot.slane %v5159, 1
      %v5162 = vrot.slane %v5159, 2
      %v5163 = vrot.slane %v5159, 3
      %v5164 = vrot.slane %v5159, 4
      %v5165 = vrot.slane %v5159, 5
      %v5166 = vrot.slane %v5159, 6
      %v5167 = vrot.slane %v5159, 7
      %v5176 = vsub.f32 %v4635, %v5159
      %v5177 = vsub.f32 %v4705, %v5161
      %v5178 = vsub.f32 %v4775, %v5162
      %v5179 = vsub.f32 %v4845, %v5163
      %v5180 = vsub.f32 %v4915, %v5164
      %v5181 = vsub.f32 %v4985, %v5165
      %v5182 = vsub.f32 %v5055, %v5166
      %v5183 = vsub.f32 %v5125, %v5167
      %v5184 = vmul.f32 %v5176, 1.442695
      %v5185 = vpow.pop %v5184
      %v5186 = vmul.f32 %v5177, 1.442695
      %v5187 = vpow.pop %v5186
      %v5188 = vmul.f32 %v5178, 1.442695
      %v5189 = vpow.pop %v5188
      %v5190 = vmul.f32 %v5179, 1.442695
      %v5191 = vpow.pop %v5190
      %v5192 = vmul.f32 %v5180, 1.442695
      %v5193 = vpow.pop %v5192
      %v5194 = vmul.f32 %v5181, 1.442695
      %v5195 = vpow.pop %v5194
      %v5196 = vmul.f32 %v5182, 1.442695
      %v5197 = vpow.pop %v5196
      %v5198 = vmul.f32 %v5183, 1.442695
      %v5199 = vpow.pop %v5198
      %v5208 = vrot.slane %v5187, 7
      %v5209 = vsel %vm5137, %v5208, %v5185
      %v5210 = vrot.slane %v5189, 6
      %v5211 = vsel %vm5140, %v5210, %v5209
      %v5212 = vrot.slane %v5191, 5
      %v5213 = vsel %vm5143, %v5212, %v5211
      %v5214 = vrot.slane %v5193, 4
      %v5215 = vsel %vm5146, %v5214, %v5213
      %v5216 = vrot.slane %v5195, 3
      %v5217 = vsel %vm5149, %v5216, %v5215
      %v5218 = vrot.slane %v5197, 2
      %v5219 = vsel %vm5152, %v5218, %v5217
      %v5220 = vrot.slane %v5199, 1
      %v5221 = vsel %vm5155, %v5220, %v5219
      %5223 = vadd.xlane.f32.xlu0 %v5221
      %v5224 = vpop.xlane.xlu0 %5223
      %v5225 = vrcp.pop %v5224
      %v5227 = vrot.slane %v5225, 1
      %v5228 = vrot.slane %v5225, 2
      %v5229 = vrot.slane %v5225, 3
      %v5230 = vrot.slane %v5225, 4
      %v5231 = vrot.slane %v5225, 5
      %v5232 = vrot.slane %v5225, 6
      %v5233 = vrot.slane %v5225, 7
      %v5242 = vmul.f32 %v5185, %v5225
      %v5243 = vmul.f32 %v5187, %v5227
      %v5244 = vmul.f32 %v5189, %v5228
      %v5245 = vmul.f32 %v5191, %v5229
      %v5246 = vmul.f32 %v5193, %v5230
      %v5247 = vmul.f32 %v5195, %v5231
      %v5248 = vmul.f32 %v5197, %v5232
      %v5249 = vmul.f32 %v5199, %v5233
      %v5250 = vld [vmem:[%s20] sm:$0xff]
      %v5252 = vrot.slane %v5250, 1
      %v5253 = vrot.slane %v5250, 2
      %v5254 = vrot.slane %v5250, 3
      %v5255 = vrot.slane %v5250, 4
      %v5256 = vrot.slane %v5250, 5
      %v5257 = vrot.slane %v5250, 6
      %v5258 = vrot.slane %v5250, 7
      %v5267 = vmul.f32 %v5242, %v5250
      %v5268 = vmul.f32 %v5243, %v5252
      %v5269 = vmul.f32 %v5244, %v5253
      %v5270 = vmul.f32 %v5245, %v5254
      %v5271 = vmul.f32 %v5246, %v5255
      %v5272 = vmul.f32 %v5247, %v5256
      %v5273 = vmul.f32 %v5248, %v5257
      %v5274 = vmul.f32 %v5249, %v5258
      %v5283 = vrot.slane %v5268, 7
      %v5284 = vsel %vm5137, %v5283, %v5267
      %v5285 = vrot.slane %v5269, 6
      %v5286 = vsel %vm5140, %v5285, %v5284
      %v5287 = vrot.slane %v5270, 5
      %v5288 = vsel %vm5143, %v5287, %v5286
      %v5289 = vrot.slane %v5271, 4
      %v5290 = vsel %vm5146, %v5289, %v5288
      %v5291 = vrot.slane %v5272, 3
      %v5292 = vsel %vm5149, %v5291, %v5290
      %v5293 = vrot.slane %v5273, 2
      %v5294 = vsel %vm5152, %v5293, %v5292
      %v5295 = vrot.slane %v5274, 1
      %v5296 = vsel %vm5155, %v5295, %v5294
      %5298 = vadd.xlane.f32.xlu0 %v5296
      %v5299 = vpop.xlane.xlu0 %5298
      %v5300 = vmax.f32 %v5299, 1e-12
      %v5301 = vrcp.pop %v5300
      %v5303 = vrot.slane %v5301, 1
      %v5304 = vrot.slane %v5301, 2
      %v5305 = vrot.slane %v5301, 3
      %v5306 = vrot.slane %v5301, 4
      %v5307 = vrot.slane %v5301, 5
      %v5308 = vrot.slane %v5301, 6
      %v5309 = vrot.slane %v5301, 7
      %v5318 = vmul.f32 %v5267, %v5301
      %v5319 = vmul.f32 %v5268, %v5303
      %v5320 = vmul.f32 %v5269, %v5304
      %v5321 = vmul.f32 %v5270, %v5305
      %v5322 = vmul.f32 %v5271, %v5306
      %v5323 = vmul.f32 %v5272, %v5307
      %v5324 = vmul.f32 %v5273, %v5308
      %v5325 = vmul.f32 %v5274, %v5309
      %v5326 = vld [vmem:[%s19] sm:$0xff]
      %v5327 = vld [vmem:[%s19 + $0x8] sm:$0xff]
      %v5328 = vld [vmem:[%s19 + $0x10] sm:$0xff]
      %v5329 = vld [vmem:[%s19 + $0x18] sm:$0xff]
      %v5330 = vld [vmem:[%s19 + $0x20] sm:$0xff]
      %v5331 = vld [vmem:[%s19 + $0x28] sm:$0xff]
      %v5332 = vld [vmem:[%s19 + $0x30] sm:$0xff]
      %v5333 = vld [vmem:[%s19 + $0x38] sm:$0xff]
      %v5334 = vld [vmem:[%s19 + $0x40] sm:$0xff]
      %v5335 = vld [vmem:[%s19 + $0x48] sm:$0xff]
      %v5336 = vld [vmem:[%s19 + $0x50] sm:$0xff]
      %v5337 = vld [vmem:[%s19 + $0x58] sm:$0xff]
      %v5338 = vld [vmem:[%s19 + $0x60] sm:$0xff]
      %v5339 = vld [vmem:[%s19 + $0x68] sm:$0xff]
      %v5340 = vld [vmem:[%s19 + $0x70] sm:$0xff]
      %v5341 = vld [vmem:[%s19 + $0x78] sm:$0xff]
      %v5342 = vld [vmem:[%s19 + $0x80] sm:$0xff]
      %v5343 = vld [vmem:[%s19 + $0x88] sm:$0xff]
      %v5344 = vld [vmem:[%s19 + $0x90] sm:$0xff]
      %v5345 = vld [vmem:[%s19 + $0x98] sm:$0xff]
      %v5346 = vld [vmem:[%s19 + $0xa0] sm:$0xff]
      %v5347 = vld [vmem:[%s19 + $0xa8] sm:$0xff]
      %v5348 = vld [vmem:[%s19 + $0xb0] sm:$0xff]
      %v5349 = vld [vmem:[%s19 + $0xb8] sm:$0xff]
      %v5350 = vld [vmem:[%s19 + $0xc0] sm:$0xff]
      %v5351 = vld [vmem:[%s19 + $0xc8] sm:$0xff]
      %v5352 = vld [vmem:[%s19 + $0xd0] sm:$0xff]
      %v5353 = vld [vmem:[%s19 + $0xd8] sm:$0xff]
      %v5354 = vld [vmem:[%s19 + $0xe0] sm:$0xff]
      %v5355 = vld [vmem:[%s19 + $0xe8] sm:$0xff]
      %v5356 = vld [vmem:[%s19 + $0xf0] sm:$0xff]
      %v5357 = vld [vmem:[%s19 + $0xf8] sm:$0xff]
      %v5358 = vld [vmem:[%s19 + $0x100] sm:$0xff]
      %v5359 = vld [vmem:[%s19 + $0x108] sm:$0xff]
      %v5360 = vld [vmem:[%s19 + $0x110] sm:$0xff]
      %v5361 = vld [vmem:[%s19 + $0x118] sm:$0xff]
      %v5362 = vld [vmem:[%s19 + $0x120] sm:$0xff]
      %v5363 = vld [vmem:[%s19 + $0x128] sm:$0xff]
      %v5364 = vld [vmem:[%s19 + $0x130] sm:$0xff]
      %v5365 = vld [vmem:[%s19 + $0x138] sm:$0xff]
      %v5366 = vld [vmem:[%s19 + $0x140] sm:$0xff]
      %v5367 = vld [vmem:[%s19 + $0x148] sm:$0xff]
      %v5368 = vld [vmem:[%s19 + $0x150] sm:$0xff]
      %v5369 = vld [vmem:[%s19 + $0x158] sm:$0xff]
      %v5370 = vld [vmem:[%s19 + $0x160] sm:$0xff]
      %v5371 = vld [vmem:[%s19 + $0x168] sm:$0xff]
      %v5372 = vld [vmem:[%s19 + $0x170] sm:$0xff]
      %v5373 = vld [vmem:[%s19 + $0x178] sm:$0xff]
      %v5374 = vld [vmem:[%s19 + $0x180] sm:$0xff]
      %v5375 = vld [vmem:[%s19 + $0x188] sm:$0xff]
      %v5376 = vld [vmem:[%s19 + $0x190] sm:$0xff]
      %v5377 = vld [vmem:[%s19 + $0x198] sm:$0xff]
      %v5378 = vld [vmem:[%s19 + $0x1a0] sm:$0xff]
      %v5379 = vld [vmem:[%s19 + $0x1a8] sm:$0xff]
      %v5380 = vld [vmem:[%s19 + $0x1b0] sm:$0xff]
      %v5381 = vld [vmem:[%s19 + $0x1b8] sm:$0xff]
      %v5382 = vld [vmem:[%s19 + $0x1c0] sm:$0xff]
      %v5383 = vld [vmem:[%s19 + $0x1c8] sm:$0xff]
      %v5384 = vld [vmem:[%s19 + $0x1d0] sm:$0xff]
      %v5385 = vld [vmem:[%s19 + $0x1d8] sm:$0xff]
      %v5386 = vld [vmem:[%s19 + $0x1e0] sm:$0xff]
      %v5387 = vld [vmem:[%s19 + $0x1e8] sm:$0xff]
      %v5388 = vld [vmem:[%s19 + $0x1f0] sm:$0xff]
      %v5389 = vld [vmem:[%s19 + $0x1f8] sm:$0xff]
      %v5390 = vld [vmem:[%s19 + $0x200] sm:$0xff]
      %v5391 = vld [vmem:[%s19 + $0x208] sm:$0xff]
      %v5392 = vld [vmem:[%s19 + $0x210] sm:$0xff]
      %v5393 = vld [vmem:[%s19 + $0x218] sm:$0xff]
      %v5394 = vld [vmem:[%s19 + $0x220] sm:$0xff]
      %v5395 = vld [vmem:[%s19 + $0x228] sm:$0xff]
      %v5396 = vld [vmem:[%s19 + $0x230] sm:$0xff]
      %v5397 = vld [vmem:[%s19 + $0x238] sm:$0xff]
      %v5398 = vld [vmem:[%s19 + $0x240] sm:$0xff]
      %v5399 = vld [vmem:[%s19 + $0x248] sm:$0xff]
      %v5400 = vld [vmem:[%s19 + $0x250] sm:$0xff]
      %v5401 = vld [vmem:[%s19 + $0x258] sm:$0xff]
      %v5402 = vld [vmem:[%s19 + $0x260] sm:$0xff]
      %v5403 = vld [vmem:[%s19 + $0x268] sm:$0xff]
      %v5404 = vld [vmem:[%s19 + $0x270] sm:$0xff]
      %v5405 = vld [vmem:[%s19 + $0x278] sm:$0xff]
      %v5406 = vld [vmem:[%s19 + $0x280] sm:$0xff]
      %v5407 = vld [vmem:[%s19 + $0x288] sm:$0xff]
      %v5408 = vld [vmem:[%s19 + $0x290] sm:$0xff]
      %v5409 = vld [vmem:[%s19 + $0x298] sm:$0xff]
      %v5410 = vld [vmem:[%s19 + $0x2a0] sm:$0xff]
      %v5411 = vld [vmem:[%s19 + $0x2a8] sm:$0xff]
      %v5412 = vld [vmem:[%s19 + $0x2b0] sm:$0xff]
      %v5413 = vld [vmem:[%s19 + $0x2b8] sm:$0xff]
      %v5414 = vld [vmem:[%s19 + $0x2c0] sm:$0xff]
      %v5415 = vld [vmem:[%s19 + $0x2c8] sm:$0xff]
      %v5416 = vld [vmem:[%s19 + $0x2d0] sm:$0xff]
      %v5417 = vld [vmem:[%s19 + $0x2d8] sm:$0xff]
      %v5418 = vld [vmem:[%s19 + $0x2e0] sm:$0xff]
      %v5419 = vld [vmem:[%s19 + $0x2e8] sm:$0xff]
      %v5420 = vld [vmem:[%s19 + $0x2f0] sm:$0xff]
      %v5421 = vld [vmem:[%s19 + $0x2f8] sm:$0xff]
      %v5422 = vld [vmem:[%s19 + $0x300] sm:$0xff]
      %v5423 = vld [vmem:[%s19 + $0x308] sm:$0xff]
      %v5424 = vld [vmem:[%s19 + $0x310] sm:$0xff]
      %v5425 = vld [vmem:[%s19 + $0x318] sm:$0xff]
      %v5426 = vld [vmem:[%s19 + $0x320] sm:$0xff]
      %v5427 = vld [vmem:[%s19 + $0x328] sm:$0xff]
      %v5428 = vld [vmem:[%s19 + $0x330] sm:$0xff]
      %v5429 = vld [vmem:[%s19 + $0x338] sm:$0xff]
      %v5430 = vld [vmem:[%s19 + $0x340] sm:$0xff]
      %v5431 = vld [vmem:[%s19 + $0x348] sm:$0xff]
      %v5432 = vld [vmem:[%s19 + $0x350] sm:$0xff]
      %v5433 = vld [vmem:[%s19 + $0x358] sm:$0xff]
      %v5434 = vld [vmem:[%s19 + $0x360] sm:$0xff]
      %v5435 = vld [vmem:[%s19 + $0x368] sm:$0xff]
      %v5436 = vld [vmem:[%s19 + $0x370] sm:$0xff]
      %v5437 = vld [vmem:[%s19 + $0x378] sm:$0xff]
      %v5438 = vld [vmem:[%s19 + $0x380] sm:$0xff]
      %v5439 = vld [vmem:[%s19 + $0x388] sm:$0xff]
      %v5440 = vld [vmem:[%s19 + $0x390] sm:$0xff]
      %v5441 = vld [vmem:[%s19 + $0x398] sm:$0xff]
      %v5442 = vld [vmem:[%s19 + $0x3a0] sm:$0xff]
      %v5443 = vld [vmem:[%s19 + $0x3a8] sm:$0xff]
      %v5444 = vld [vmem:[%s19 + $0x3b0] sm:$0xff]
      %v5445 = vld [vmem:[%s19 + $0x3b8] sm:$0xff]
      %v5446 = vld [vmem:[%s19 + $0x3c0] sm:$0xff]
      %v5447 = vld [vmem:[%s19 + $0x3c8] sm:$0xff]
      %v5448 = vld [vmem:[%s19 + $0x3d0] sm:$0xff]
      %v5449 = vld [vmem:[%s19 + $0x3d8] sm:$0xff]
      %v5450 = vld [vmem:[%s19 + $0x3e0] sm:$0xff]
      %v5451 = vld [vmem:[%s19 + $0x3e8] sm:$0xff]
      %v5452 = vld [vmem:[%s19 + $0x3f0] sm:$0xff]
      %v5453 = vld [vmem:[%s19 + $0x3f8] sm:$0xff]
      %5454 = vmatprep.subr.mxu0 0.0
      %5455 = vmatpush1.msra.mxu0 %v5341
      %5456 = vmatprep.subr.mxu0 0.0
      %5457 = vmatpush1.msra.mxu0 %v5340
      %5458 = vmatprep.subr.mxu0 0.0
      %5459 = vmatpush1.msra.mxu0 %v5339
      %5460 = vmatprep.subr.mxu0 0.0
      %5461 = vmatpush1.msra.mxu0 %v5338
      %5462 = vmatprep.subr.mxu0 0.0
      %5463 = vmatpush1.msra.mxu0 %v5337
      %5464 = vmatprep.subr.mxu0 0.0
      %5465 = vmatpush1.msra.mxu0 %v5336
      %5466 = vmatprep.subr.mxu0 0.0
      %5467 = vmatpush1.msra.mxu0 %v5335
      %5468 = vmatprep.subr.mxu0 0.0
      %5469 = vmatpush1.msra.mxu0 %v5334
      %5470 = vmatprep.subr.mxu0 0.0
      %5471 = vmatpush1.msra.mxu0 %v5333
      %5472 = vmatprep.subr.mxu0 0.0
      %5473 = vmatpush1.msra.mxu0 %v5332
      %5474 = vmatprep.subr.mxu0 0.0
      %5475 = vmatpush1.msra.mxu0 %v5331
      %5476 = vmatprep.subr.mxu0 0.0
      %5477 = vmatpush1.msra.mxu0 %v5330
      %5478 = vmatprep.subr.mxu0 0.0
      %5479 = vmatpush1.msra.mxu0 %v5329
      %5480 = vmatprep.subr.mxu0 0.0
      %5481 = vmatpush1.msra.mxu0 %v5328
      %5482 = vmatprep.subr.mxu0 0.0
      %5483 = vmatpush1.msra.mxu0 %v5327
      %5484 = vmatprep.subr.mxu0 0.0
      %5485 = vmatpush1.msra.mxu0 %v5326
      %5486 = vmatprep.subr.mxu0 0.0
      %5487 = vmatpush2.msra.mxu0 0.0
      %5488 = vmatprep.subr.mxu0 0.0
      %5489 = vmatpush2.msra.mxu0 0.0
      %5490 = vmatprep.subr.mxu0 0.0
      %5491 = vmatpush2.msra.mxu0 0.0
      %5492 = vmatprep.subr.mxu0 0.0
      %5493 = vmatpush2.msra.mxu0 0.0
      %5494 = vmatprep.subr.mxu0 0.0
      %5495 = vmatpush2.msra.mxu0 0.0
      %5496 = vmatprep.subr.mxu0 0.0
      %5497 = vmatpush2.msra.mxu0 0.0
      %5498 = vmatprep.subr.mxu0 0.0
      %5499 = vmatpush2.msra.mxu0 0.0
      %5500 = vmatprep.subr.mxu0 0.0
      %5501 = vmatpush2.msra.mxu0 0.0
      %5502 = vmatprep.subr.mxu0 0.0
      %5503 = vmatpush2.msra.mxu0 0.0
      %5504 = vmatprep.subr.mxu0 0.0
      %5505 = vmatpush2.msra.mxu0 0.0
      %5506 = vmatprep.subr.mxu0 0.0
      %5507 = vmatpush2.msra.mxu0 0.0
      %5508 = vmatprep.subr.mxu0 0.0
      %5509 = vmatpush2.msra.mxu0 0.0
      %5510 = vmatprep.subr.mxu0 0.0
      %5511 = vmatpush2.msra.mxu0 0.0
      %5512 = vmatprep.subr.mxu0 0.0
      %5513 = vmatpush2.msra.mxu0 0.0
      %5514 = vmatprep.subr.mxu0 0.0
      %5515 = vmatpush2.msra.mxu0 0.0
      %5516 = vmatprep.subr.mxu0 0.0
      %5517 = vmatpush2.msra.mxu0 0.0
      %5518 = vmatprep.mubr.f32.mxu0 0.0
      %5519 = vmatmul.mubr.f32.gmra.mxu0 %v5318
      %v5520 = vpop.f32.mrf.mxu0
      %v5521 = vadd.f32 0.0, %v5520
      %v5522 = vpop.f32.mrf.mxu0
      %5523 = vdwg.mxu0
      %5524 = vmatprep.subr.mxu0 0.0
      %5525 = vmatpush1.msra.mxu0 %v5357
      %5526 = vmatprep.subr.mxu0 0.0
      %5527 = vmatpush1.msra.mxu0 %v5356
      %5528 = vmatprep.subr.mxu0 0.0
      %5529 = vmatpush1.msra.mxu0 %v5355
      %5530 = vmatprep.subr.mxu0 0.0
      %5531 = vmatpush1.msra.mxu0 %v5354
      %5532 = vmatprep.subr.mxu0 0.0
      %5533 = vmatpush1.msra.mxu0 %v5353
      %5534 = vmatprep.subr.mxu0 0.0
      %5535 = vmatpush1.msra.mxu0 %v5352
      %5536 = vmatprep.subr.mxu0 0.0
      %5537 = vmatpush1.msra.mxu0 %v5351
      %5538 = vmatprep.subr.mxu0 0.0
      %5539 = vmatpush1.msra.mxu0 %v5350
      %5540 = vmatprep.subr.mxu0 0.0
      %5541 = vmatpush1.msra.mxu0 %v5349
      %5542 = vmatprep.subr.mxu0 0.0
      %5543 = vmatpush1.msra.mxu0 %v5348
      %5544 = vmatprep.subr.mxu0 0.0
      %5545 = vmatpush1.msra.mxu0 %v5347
      %5546 = vmatprep.subr.mxu0 0.0
      %5547 = vmatpush1.msra.mxu0 %v5346
      %5548 = vmatprep.subr.mxu0 0.0
      %5549 = vmatpush1.msra.mxu0 %v5345
      %5550 = vmatprep.subr.mxu0 0.0
      %5551 = vmatpush1.msra.mxu0 %v5344
      %5552 = vmatprep.subr.mxu0 0.0
      %5553 = vmatpush1.msra.mxu0 %v5343
      %5554 = vmatprep.subr.mxu0 0.0
      %5555 = vmatpush1.msra.mxu0 %v5342
      %5556 = vmatprep.subr.mxu0 0.0
      %5557 = vmatpush2.msra.mxu0 0.0
      %5558 = vmatprep.subr.mxu0 0.0
      %5559 = vmatpush2.msra.mxu0 0.0
      %5560 = vmatprep.subr.mxu0 0.0
      %5561 = vmatpush2.msra.mxu0 0.0
      %5562 = vmatprep.subr.mxu0 0.0
      %5563 = vmatpush2.msra.mxu0 0.0
      %5564 = vmatprep.subr.mxu0 0.0
      %5565 = vmatpush2.msra.mxu0 0.0
      %5566 = vmatprep.subr.mxu0 0.0
      %5567 = vmatpush2.msra.mxu0 0.0
      %5568 = vmatprep.subr.mxu0 0.0
      %5569 = vmatpush2.msra.mxu0 0.0
      %5570 = vmatprep.subr.mxu0 0.0
      %5571 = vmatpush2.msra.mxu0 0.0
      %5572 = vmatprep.subr.mxu0 0.0
      %5573 = vmatpush2.msra.mxu0 0.0
      %5574 = vmatprep.subr.mxu0 0.0
      %5575 = vmatpush2.msra.mxu0 0.0
      %5576 = vmatprep.subr.mxu0 0.0
      %5577 = vmatpush2.msra.mxu0 0.0
      %5578 = vmatprep.subr.mxu0 0.0
      %5579 = vmatpush2.msra.mxu0 0.0
      %5580 = vmatprep.subr.mxu0 0.0
      %5581 = vmatpush2.msra.mxu0 0.0
      %5582 = vmatprep.subr.mxu0 0.0
      %5583 = vmatpush2.msra.mxu0 0.0
      %5584 = vmatprep.subr.mxu0 0.0
      %5585 = vmatpush2.msra.mxu0 0.0
      %5586 = vmatprep.subr.mxu0 0.0
      %5587 = vmatpush2.msra.mxu0 0.0
      %5588 = vmatprep.mubr.f32.mxu0 0.0
      %5589 = vmatmul.mubr.f32.gmra.mxu0 %v5319
      %v5590 = vpop.f32.mrf.mxu0
      %v5591 = vadd.f32 0.0, %v5590
      %v5592 = vpop.f32.mrf.mxu0
      %5593 = vdwg.mxu0
      %5594 = vmatprep.subr.mxu0 0.0
      %5595 = vmatpush1.msra.mxu0 %v5373
      %5596 = vmatprep.subr.mxu0 0.0
      %5597 = vmatpush1.msra.mxu0 %v5372
      %5598 = vmatprep.subr.mxu0 0.0
      %5599 = vmatpush1.msra.mxu0 %v5371
      %5600 = vmatprep.subr.mxu0 0.0
      %5601 = vmatpush1.msra.mxu0 %v5370
      %5602 = vmatprep.subr.mxu0 0.0
      %5603 = vmatpush1.msra.mxu0 %v5369
      %5604 = vmatprep.subr.mxu0 0.0
      %5605 = vmatpush1.msra.mxu0 %v5368
      %5606 = vmatprep.subr.mxu0 0.0
      %5607 = vmatpush1.msra.mxu0 %v5367
      %5608 = vmatprep.subr.mxu0 0.0
      %5609 = vmatpush1.msra.mxu0 %v5366
      %5610 = vmatprep.subr.mxu0 0.0
      %5611 = vmatpush1.msra.mxu0 %v5365
      %5612 = vmatprep.subr.mxu0 0.0
      %5613 = vmatpush1.msra.mxu0 %v5364
      %5614 = vmatprep.subr.mxu0 0.0
      %5615 = vmatpush1.msra.mxu0 %v5363
      %5616 = vmatprep.subr.mxu0 0.0
      %5617 = vmatpush1.msra.mxu0 %v5362
      %5618 = vmatprep.subr.mxu0 0.0
      %5619 = vmatpush1.msra.mxu0 %v5361
      %5620 = vmatprep.subr.mxu0 0.0
      %5621 = vmatpush1.msra.mxu0 %v5360
      %5622 = vmatprep.subr.mxu0 0.0
      %5623 = vmatpush1.msra.mxu0 %v5359
      %5624 = vmatprep.subr.mxu0 0.0
      %5625 = vmatpush1.msra.mxu0 %v5358
      %5626 = vmatprep.subr.mxu0 0.0
      %5627 = vmatpush2.msra.mxu0 0.0
      %5628 = vmatprep.subr.mxu0 0.0
      %5629 = vmatpush2.msra.mxu0 0.0
      %5630 = vmatprep.subr.mxu0 0.0
      %5631 = vmatpush2.msra.mxu0 0.0
      %5632 = vmatprep.subr.mxu0 0.0
      %5633 = vmatpush2.msra.mxu0 0.0
      %5634 = vmatprep.subr.mxu0 0.0
      %5635 = vmatpush2.msra.mxu0 0.0
      %5636 = vmatprep.subr.mxu0 0.0
      %5637 = vmatpush2.msra.mxu0 0.0
      %5638 = vmatprep.subr.mxu0 0.0
      %5639 = vmatpush2.msra.mxu0 0.0
      %5640 = vmatprep.subr.mxu0 0.0
      %5641 = vmatpush2.msra.mxu0 0.0
      %5642 = vmatprep.subr.mxu0 0.0
      %5643 = vmatpush2.msra.mxu0 0.0
      %5644 = vmatprep.subr.mxu0 0.0
      %5645 = vmatpush2.msra.mxu0 0.0
      %5646 = vmatprep.subr.mxu0 0.0
      %5647 = vmatpush2.msra.mxu0 0.0
      %5648 = vmatprep.subr.mxu0 0.0
      %5649 = vmatpush2.msra.mxu0 0.0
      %5650 = vmatprep.subr.mxu0 0.0
      %5651 = vmatpush2.msra.mxu0 0.0
      %5652 = vmatprep.subr.mxu0 0.0
      %5653 = vmatpush2.msra.mxu0 0.0
      %5654 = vmatprep.subr.mxu0 0.0
      %5655 = vmatpush2.msra.mxu0 0.0
      %5656 = vmatprep.subr.mxu0 0.0
      %5657 = vmatpush2.msra.mxu0 0.0
      %5658 = vmatprep.mubr.f32.mxu0 0.0
      %5659 = vmatmul.mubr.f32.gmra.mxu0 %v5320
      %v5660 = vpop.f32.mrf.mxu0
      %v5661 = vadd.f32 0.0, %v5660
      %v5662 = vpop.f32.mrf.mxu0
      %5663 = vdwg.mxu0
      %5664 = vmatprep.subr.mxu0 0.0
      %5665 = vmatpush1.msra.mxu0 %v5389
      %5666 = vmatprep.subr.mxu0 0.0
      %5667 = vmatpush1.msra.mxu0 %v5388
      %5668 = vmatprep.subr.mxu0 0.0
      %5669 = vmatpush1.msra.mxu0 %v5387
      %5670 = vmatprep.subr.mxu0 0.0
      %5671 = vmatpush1.msra.mxu0 %v5386
      %5672 = vmatprep.subr.mxu0 0.0
      %5673 = vmatpush1.msra.mxu0 %v5385
      %5674 = vmatprep.subr.mxu0 0.0
      %5675 = vmatpush1.msra.mxu0 %v5384
      %5676 = vmatprep.subr.mxu0 0.0
      %5677 = vmatpush1.msra.mxu0 %v5383
      %5678 = vmatprep.subr.mxu0 0.0
      %5679 = vmatpush1.msra.mxu0 %v5382
      %5680 = vmatprep.subr.mxu0 0.0
      %5681 = vmatpush1.msra.mxu0 %v5381
      %5682 = vmatprep.subr.mxu0 0.0
      %5683 = vmatpush1.msra.mxu0 %v5380
      %5684 = vmatprep.subr.mxu0 0.0
      %5685 = vmatpush1.msra.mxu0 %v5379
      %5686 = vmatprep.subr.mxu0 0.0
      %5687 = vmatpush1.msra.mxu0 %v5378
      %5688 = vmatprep.subr.mxu0 0.0
      %5689 = vmatpush1.msra.mxu0 %v5377
      %5690 = vmatprep.subr.mxu0 0.0
      %5691 = vmatpush1.msra.mxu0 %v5376
      %5692 = vmatprep.subr.mxu0 0.0
      %5693 = vmatpush1.msra.mxu0 %v5375
      %5694 = vmatprep.subr.mxu0 0.0
      %5695 = vmatpush1.msra.mxu0 %v5374
      %5696 = vmatprep.subr.mxu0 0.0
      %5697 = vmatpush2.msra.mxu0 0.0
      %5698 = vmatprep.subr.mxu0 0.0
      %5699 = vmatpush2.msra.mxu0 0.0
      %5700 = vmatprep.subr.mxu0 0.0
      %5701 = vmatpush2.msra.mxu0 0.0
      %5702 = vmatprep.subr.mxu0 0.0
      %5703 = vmatpush2.msra.mxu0 0.0
      %5704 = vmatprep.subr.mxu0 0.0
      %5705 = vmatpush2.msra.mxu0 0.0
      %5706 = vmatprep.subr.mxu0 0.0
      %5707 = vmatpush2.msra.mxu0 0.0
      %5708 = vmatprep.subr.mxu0 0.0
      %5709 = vmatpush2.msra.mxu0 0.0
      %5710 = vmatprep.subr.mxu0 0.0
      %5711 = vmatpush2.msra.mxu0 0.0
      %5712 = vmatprep.subr.mxu0 0.0
      %5713 = vmatpush2.msra.mxu0 0.0
      %5714 = vmatprep.subr.mxu0 0.0
      %5715 = vmatpush2.msra.mxu0 0.0
      %5716 = vmatprep.subr.mxu0 0.0
      %5717 = vmatpush2.msra.mxu0 0.0
      %5718 = vmatprep.subr.mxu0 0.0
      %5719 = vmatpush2.msra.mxu0 0.0
      %5720 = vmatprep.subr.mxu0 0.0
      %5721 = vmatpush2.msra.mxu0 0.0
      %5722 = vmatprep.subr.mxu0 0.0
      %5723 = vmatpush2.msra.mxu0 0.0
      %5724 = vmatprep.subr.mxu0 0.0
      %5725 = vmatpush2.msra.mxu0 0.0
      %5726 = vmatprep.subr.mxu0 0.0
      %5727 = vmatpush2.msra.mxu0 0.0
      %5728 = vmatprep.mubr.f32.mxu0 0.0
      %5729 = vmatmul.mubr.f32.gmra.mxu0 %v5321
      %v5730 = vpop.f32.mrf.mxu0
      %v5731 = vadd.f32 0.0, %v5730
      %v5732 = vpop.f32.mrf.mxu0
      %5733 = vdwg.mxu0
      %5734 = vmatprep.subr.mxu0 0.0
      %5735 = vmatpush1.msra.mxu0 %v5405
      %5736 = vmatprep.subr.mxu0 0.0
      %5737 = vmatpush1.msra.mxu0 %v5404
      %5738 = vmatprep.subr.mxu0 0.0
      %5739 = vmatpush1.msra.mxu0 %v5403
      %5740 = vmatprep.subr.mxu0 0.0
      %5741 = vmatpush1.msra.mxu0 %v5402
      %5742 = vmatprep.subr.mxu0 0.0
      %5743 = vmatpush1.msra.mxu0 %v5401
      %5744 = vmatprep.subr.mxu0 0.0
      %5745 = vmatpush1.msra.mxu0 %v5400
      %5746 = vmatprep.subr.mxu0 0.0
      %5747 = vmatpush1.msra.mxu0 %v5399
      %5748 = vmatprep.subr.mxu0 0.0
      %5749 = vmatpush1.msra.mxu0 %v5398
      %5750 = vmatprep.subr.mxu0 0.0
      %5751 = vmatpush1.msra.mxu0 %v5397
      %5752 = vmatprep.subr.mxu0 0.0
      %5753 = vmatpush1.msra.mxu0 %v5396
      %5754 = vmatprep.subr.mxu0 0.0
      %5755 = vmatpush1.msra.mxu0 %v5395
      %5756 = vmatprep.subr.mxu0 0.0
      %5757 = vmatpush1.msra.mxu0 %v5394
      %5758 = vmatprep.subr.mxu0 0.0
      %5759 = vmatpush1.msra.mxu0 %v5393
      %5760 = vmatprep.subr.mxu0 0.0
      %5761 = vmatpush1.msra.mxu0 %v5392
      %5762 = vmatprep.subr.mxu0 0.0
      %5763 = vmatpush1.msra.mxu0 %v5391
      %5764 = vmatprep.subr.mxu0 0.0
      %5765 = vmatpush1.msra.mxu0 %v5390
      %5766 = vmatprep.subr.mxu0 0.0
      %5767 = vmatpush2.msra.mxu0 0.0
      %5768 = vmatprep.subr.mxu0 0.0
      %5769 = vmatpush2.msra.mxu0 0.0
      %5770 = vmatprep.subr.mxu0 0.0
      %5771 = vmatpush2.msra.mxu0 0.0
      %5772 = vmatprep.subr.mxu0 0.0
      %5773 = vmatpush2.msra.mxu0 0.0
      %5774 = vmatprep.subr.mxu0 0.0
      %5775 = vmatpush2.msra.mxu0 0.0
      %5776 = vmatprep.subr.mxu0 0.0
      %5777 = vmatpush2.msra.mxu0 0.0
      %5778 = vmatprep.subr.mxu0 0.0
      %5779 = vmatpush2.msra.mxu0 0.0
      %5780 = vmatprep.subr.mxu0 0.0
      %5781 = vmatpush2.msra.mxu0 0.0
      %5782 = vmatprep.subr.mxu0 0.0
      %5783 = vmatpush2.msra.mxu0 0.0
      %5784 = vmatprep.subr.mxu0 0.0
      %5785 = vmatpush2.msra.mxu0 0.0
      %5786 = vmatprep.subr.mxu0 0.0
      %5787 = vmatpush2.msra.mxu0 0.0
      %5788 = vmatprep.subr.mxu0 0.0
      %5789 = vmatpush2.msra.mxu0 0.0
      %5790 = vmatprep.subr.mxu0 0.0
      %5791 = vmatpush2.msra.mxu0 0.0
      %5792 = vmatprep.subr.mxu0 0.0
      %5793 = vmatpush2.msra.mxu0 0.0
      %5794 = vmatprep.subr.mxu0 0.0
      %5795 = vmatpush2.msra.mxu0 0.0
      %5796 = vmatprep.subr.mxu0 0.0
      %5797 = vmatpush2.msra.mxu0 0.0
      %5798 = vmatprep.mubr.f32.mxu0 0.0
      %5799 = vmatmul.mubr.f32.gmra.mxu0 %v5322
      %v5800 = vpop.f32.mrf.mxu0
      %v5801 = vadd.f32 0.0, %v5800
      %v5802 = vpop.f32.mrf.mxu0
      %5803 = vdwg.mxu0
      %5804 = vmatprep.subr.mxu0 0.0
      %5805 = vmatpush1.msra.mxu0 %v5421
      %5806 = vmatprep.subr.mxu0 0.0
      %5807 = vmatpush1.msra.mxu0 %v5420
      %5808 = vmatprep.subr.mxu0 0.0
      %5809 = vmatpush1.msra.mxu0 %v5419
      %5810 = vmatprep.subr.mxu0 0.0
      %5811 = vmatpush1.msra.mxu0 %v5418
      %5812 = vmatprep.subr.mxu0 0.0
      %5813 = vmatpush1.msra.mxu0 %v5417
      %5814 = vmatprep.subr.mxu0 0.0
      %5815 = vmatpush1.msra.mxu0 %v5416
      %5816 = vmatprep.subr.mxu0 0.0
      %5817 = vmatpush1.msra.mxu0 %v5415
      %5818 = vmatprep.subr.mxu0 0.0
      %5819 = vmatpush1.msra.mxu0 %v5414
      %5820 = vmatprep.subr.mxu0 0.0
      %5821 = vmatpush1.msra.mxu0 %v5413
      %5822 = vmatprep.subr.mxu0 0.0
      %5823 = vmatpush1.msra.mxu0 %v5412
      %5824 = vmatprep.subr.mxu0 0.0
      %5825 = vmatpush1.msra.mxu0 %v5411
      %5826 = vmatprep.subr.mxu0 0.0
      %5827 = vmatpush1.msra.mxu0 %v5410
      %5828 = vmatprep.subr.mxu0 0.0
      %5829 = vmatpush1.msra.mxu0 %v5409
      %5830 = vmatprep.subr.mxu0 0.0
      %5831 = vmatpush1.msra.mxu0 %v5408
      %5832 = vmatprep.subr.mxu0 0.0
      %5833 = vmatpush1.msra.mxu0 %v5407
      %5834 = vmatprep.subr.mxu0 0.0
      %5835 = vmatpush1.msra.mxu0 %v5406
      %5836 = vmatprep.subr.mxu0 0.0
      %5837 = vmatpush2.msra.mxu0 0.0
      %5838 = vmatprep.subr.mxu0 0.0
      %5839 = vmatpush2.msra.mxu0 0.0
      %5840 = vmatprep.subr.mxu0 0.0
      %5841 = vmatpush2.msra.mxu0 0.0
      %5842 = vmatprep.subr.mxu0 0.0
      %5843 = vmatpush2.msra.mxu0 0.0
      %5844 = vmatprep.subr.mxu0 0.0
      %5845 = vmatpush2.msra.mxu0 0.0
      %5846 = vmatprep.subr.mxu0 0.0
      %5847 = vmatpush2.msra.mxu0 0.0
      %5848 = vmatprep.subr.mxu0 0.0
      %5849 = vmatpush2.msra.mxu0 0.0
      %5850 = vmatprep.subr.mxu0 0.0
      %5851 = vmatpush2.msra.mxu0 0.0
      %5852 = vmatprep.subr.mxu0 0.0
      %5853 = vmatpush2.msra.mxu0 0.0
      %5854 = vmatprep.subr.mxu0 0.0
      %5855 = vmatpush2.msra.mxu0 0.0
      %5856 = vmatprep.subr.mxu0 0.0
      %5857 = vmatpush2.msra.mxu0 0.0
      %5858 = vmatprep.subr.mxu0 0.0
      %5859 = vmatpush2.msra.mxu0 0.0
      %5860 = vmatprep.subr.mxu0 0.0
      %5861 = vmatpush2.msra.mxu0 0.0
      %5862 = vmatprep.subr.mxu0 0.0
      %5863 = vmatpush2.msra.mxu0 0.0
      %5864 = vmatprep.subr.mxu0 0.0
      %5865 = vmatpush2.msra.mxu0 0.0
      %5866 = vmatprep.subr.mxu0 0.0
      %5867 = vmatpush2.msra.mxu0 0.0
      %5868 = vmatprep.mubr.f32.mxu0 0.0
      %5869 = vmatmul.mubr.f32.gmra.mxu0 %v5323
      %v5870 = vpop.f32.mrf.mxu0
      %v5871 = vadd.f32 0.0, %v5870
      %v5872 = vpop.f32.mrf.mxu0
      %5873 = vdwg.mxu0
      %5874 = vmatprep.subr.mxu0 0.0
      %5875 = vmatpush1.msra.mxu0 %v5437
      %5876 = vmatprep.subr.mxu0 0.0
      %5877 = vmatpush1.msra.mxu0 %v5436
      %5878 = vmatprep.subr.mxu0 0.0
      %5879 = vmatpush1.msra.mxu0 %v5435
      %5880 = vmatprep.subr.mxu0 0.0
      %5881 = vmatpush1.msra.mxu0 %v5434
      %5882 = vmatprep.subr.mxu0 0.0
      %5883 = vmatpush1.msra.mxu0 %v5433
      %5884 = vmatprep.subr.mxu0 0.0
      %5885 = vmatpush1.msra.mxu0 %v5432
      %5886 = vmatprep.subr.mxu0 0.0
      %5887 = vmatpush1.msra.mxu0 %v5431
      %5888 = vmatprep.subr.mxu0 0.0
      %5889 = vmatpush1.msra.mxu0 %v5430
      %5890 = vmatprep.subr.mxu0 0.0
      %5891 = vmatpush1.msra.mxu0 %v5429
      %5892 = vmatprep.subr.mxu0 0.0
      %5893 = vmatpush1.msra.mxu0 %v5428
      %5894 = vmatprep.subr.mxu0 0.0
      %5895 = vmatpush1.msra.mxu0 %v5427
      %5896 = vmatprep.subr.mxu0 0.0
      %5897 = vmatpush1.msra.mxu0 %v5426
      %5898 = vmatprep.subr.mxu0 0.0
      %5899 = vmatpush1.msra.mxu0 %v5425
      %5900 = vmatprep.subr.mxu0 0.0
      %5901 = vmatpush1.msra.mxu0 %v5424
      %5902 = vmatprep.subr.mxu0 0.0
      %5903 = vmatpush1.msra.mxu0 %v5423
      %5904 = vmatprep.subr.mxu0 0.0
      %5905 = vmatpush1.msra.mxu0 %v5422
      %5906 = vmatprep.subr.mxu0 0.0
      %5907 = vmatpush2.msra.mxu0 0.0
      %5908 = vmatprep.subr.mxu0 0.0
      %5909 = vmatpush2.msra.mxu0 0.0
      %5910 = vmatprep.subr.mxu0 0.0
      %5911 = vmatpush2.msra.mxu0 0.0
      %5912 = vmatprep.subr.mxu0 0.0
      %5913 = vmatpush2.msra.mxu0 0.0
      %5914 = vmatprep.subr.mxu0 0.0
      %5915 = vmatpush2.msra.mxu0 0.0
      %5916 = vmatprep.subr.mxu0 0.0
      %5917 = vmatpush2.msra.mxu0 0.0
      %5918 = vmatprep.subr.mxu0 0.0
      %5919 = vmatpush2.msra.mxu0 0.0
      %5920 = vmatprep.subr.mxu0 0.0
      %5921 = vmatpush2.msra.mxu0 0.0
      %5922 = vmatprep.subr.mxu0 0.0
      %5923 = vmatpush2.msra.mxu0 0.0
      %5924 = vmatprep.subr.mxu0 0.0
      %5925 = vmatpush2.msra.mxu0 0.0
      %5926 = vmatprep.subr.mxu0 0.0
      %5927 = vmatpush2.msra.mxu0 0.0
      %5928 = vmatprep.subr.mxu0 0.0
      %5929 = vmatpush2.msra.mxu0 0.0
      %5930 = vmatprep.subr.mxu0 0.0
      %5931 = vmatpush2.msra.mxu0 0.0
      %5932 = vmatprep.subr.mxu0 0.0
      %5933 = vmatpush2.msra.mxu0 0.0
      %5934 = vmatprep.subr.mxu0 0.0
      %5935 = vmatpush2.msra.mxu0 0.0
      %5936 = vmatprep.subr.mxu0 0.0
      %5937 = vmatpush2.msra.mxu0 0.0
      %5938 = vmatprep.mubr.f32.mxu0 0.0
      %5939 = vmatmul.mubr.f32.gmra.mxu0 %v5324
      %v5940 = vpop.f32.mrf.mxu0
      %v5941 = vadd.f32 0.0, %v5940
      %v5942 = vpop.f32.mrf.mxu0
      %5943 = vdwg.mxu0
      %5944 = vmatprep.subr.mxu0 0.0
      %5945 = vmatpush1.msra.mxu0 %v5453
      %5946 = vmatprep.subr.mxu0 0.0
      %5947 = vmatpush1.msra.mxu0 %v5452
      %5948 = vmatprep.subr.mxu0 0.0
      %5949 = vmatpush1.msra.mxu0 %v5451
      %5950 = vmatprep.subr.mxu0 0.0
      %5951 = vmatpush1.msra.mxu0 %v5450
      %5952 = vmatprep.subr.mxu0 0.0
      %5953 = vmatpush1.msra.mxu0 %v5449
      %5954 = vmatprep.subr.mxu0 0.0
      %5955 = vmatpush1.msra.mxu0 %v5448
      %5956 = vmatprep.subr.mxu0 0.0
      %5957 = vmatpush1.msra.mxu0 %v5447
      %5958 = vmatprep.subr.mxu0 0.0
      %5959 = vmatpush1.msra.mxu0 %v5446
      %5960 = vmatprep.subr.mxu0 0.0
      %5961 = vmatpush1.msra.mxu0 %v5445
      %5962 = vmatprep.subr.mxu0 0.0
      %5963 = vmatpush1.msra.mxu0 %v5444
      %5964 = vmatprep.subr.mxu0 0.0
      %5965 = vmatpush1.msra.mxu0 %v5443
      %5966 = vmatprep.subr.mxu0 0.0
      %5967 = vmatpush1.msra.mxu0 %v5442
      %5968 = vmatprep.subr.mxu0 0.0
      %5969 = vmatpush1.msra.mxu0 %v5441
      %5970 = vmatprep.subr.mxu0 0.0
      %5971 = vmatpush1.msra.mxu0 %v5440
      %5972 = vmatprep.subr.mxu0 0.0
      %5973 = vmatpush1.msra.mxu0 %v5439
      %5974 = vmatprep.subr.mxu0 0.0
      %5975 = vmatpush1.msra.mxu0 %v5438
      %5976 = vmatprep.subr.mxu0 0.0
      %5977 = vmatpush2.msra.mxu0 0.0
      %5978 = vmatprep.subr.mxu0 0.0
      %5979 = vmatpush2.msra.mxu0 0.0
      %5980 = vmatprep.subr.mxu0 0.0
      %5981 = vmatpush2.msra.mxu0 0.0
      %5982 = vmatprep.subr.mxu0 0.0
      %5983 = vmatpush2.msra.mxu0 0.0
      %5984 = vmatprep.subr.mxu0 0.0
      %5985 = vmatpush2.msra.mxu0 0.0
      %5986 = vmatprep.subr.mxu0 0.0
      %5987 = vmatpush2.msra.mxu0 0.0
      %5988 = vmatprep.subr.mxu0 0.0
      %5989 = vmatpush2.msra.mxu0 0.0
      %5990 = vmatprep.subr.mxu0 0.0
      %5991 = vmatpush2.msra.mxu0 0.0
      %5992 = vmatprep.subr.mxu0 0.0
      %5993 = vmatpush2.msra.mxu0 0.0
      %5994 = vmatprep.subr.mxu0 0.0
      %5995 = vmatpush2.msra.mxu0 0.0
      %5996 = vmatprep.subr.mxu0 0.0
      %5997 = vmatpush2.msra.mxu0 0.0
      %5998 = vmatprep.subr.mxu0 0.0
      %5999 = vmatpush2.msra.mxu0 0.0
      %6000 = vmatprep.subr.mxu0 0.0
      %6001 = vmatpush2.msra.mxu0 0.0
      %6002 = vmatprep.subr.mxu0 0.0
      %6003 = vmatpush2.msra.mxu0 0.0
      %6004 = vmatprep.subr.mxu0 0.0
      %6005 = vmatpush2.msra.mxu0 0.0
      %6006 = vmatprep.subr.mxu0 0.0
      %6007 = vmatpush2.msra.mxu0 0.0
      %6008 = vmatprep.mubr.f32.mxu0 0.0
      %6009 = vmatmul.mubr.f32.gmra.mxu0 %v5325
      %v6010 = vpop.f32.mrf.mxu0
      %v6011 = vadd.f32 0.0, %v6010
      %v6012 = vpop.f32.mrf.mxu0
      %6013 = vdwg.mxu0
      %v6014 = vld [vmem:[%s13] sm:$0xff]
      %v6015 = vld [vmem:[%s13 + $0x8] sm:$0xff]
      %v6016 = vld [vmem:[%s13 + $0x10] sm:$0xff]
      %v6017 = vld [vmem:[%s13 + $0x18] sm:$0xff]
      %v6018 = vld [vmem:[%s13 + $0x20] sm:$0xff]
      %v6019 = vld [vmem:[%s13 + $0x28] sm:$0xff]
      %v6020 = vld [vmem:[%s13 + $0x30] sm:$0xff]
      %v6021 = vld [vmem:[%s13 + $0x38] sm:$0xff]
      %v6022 = vld [vmem:[%s13 + $0x40] sm:$0xff]
      %v6023 = vld [vmem:[%s13 + $0x48] sm:$0xff]
      %v6024 = vld [vmem:[%s13 + $0x50] sm:$0xff]
      %v6025 = vld [vmem:[%s13 + $0x58] sm:$0xff]
      %v6026 = vld [vmem:[%s13 + $0x60] sm:$0xff]
      %v6027 = vld [vmem:[%s13 + $0x68] sm:$0xff]
      %v6028 = vld [vmem:[%s13 + $0x70] sm:$0xff]
      %v6029 = vld [vmem:[%s13 + $0x78] sm:$0xff]
      %v6030 = vld [vmem:[%s13 + $0x80] sm:$0xff]
      %v6031 = vld [vmem:[%s13 + $0x88] sm:$0xff]
      %v6032 = vld [vmem:[%s13 + $0x90] sm:$0xff]
      %v6033 = vld [vmem:[%s13 + $0x98] sm:$0xff]
      %v6034 = vld [vmem:[%s13 + $0xa0] sm:$0xff]
      %v6035 = vld [vmem:[%s13 + $0xa8] sm:$0xff]
      %v6036 = vld [vmem:[%s13 + $0xb0] sm:$0xff]
      %v6037 = vld [vmem:[%s13 + $0xb8] sm:$0xff]
      %v6038 = vld [vmem:[%s13 + $0xc0] sm:$0xff]
      %v6039 = vld [vmem:[%s13 + $0xc8] sm:$0xff]
      %v6040 = vld [vmem:[%s13 + $0xd0] sm:$0xff]
      %v6041 = vld [vmem:[%s13 + $0xd8] sm:$0xff]
      %v6042 = vld [vmem:[%s13 + $0xe0] sm:$0xff]
      %v6043 = vld [vmem:[%s13 + $0xe8] sm:$0xff]
      %v6044 = vld [vmem:[%s13 + $0xf0] sm:$0xff]
      %v6045 = vld [vmem:[%s13 + $0xf8] sm:$0xff]
      %v6046 = vld [vmem:[%s13 + $0x100] sm:$0xff]
      %v6047 = vld [vmem:[%s13 + $0x108] sm:$0xff]
      %v6048 = vld [vmem:[%s13 + $0x110] sm:$0xff]
      %v6049 = vld [vmem:[%s13 + $0x118] sm:$0xff]
      %v6050 = vld [vmem:[%s13 + $0x120] sm:$0xff]
      %v6051 = vld [vmem:[%s13 + $0x128] sm:$0xff]
      %v6052 = vld [vmem:[%s13 + $0x130] sm:$0xff]
      %v6053 = vld [vmem:[%s13 + $0x138] sm:$0xff]
      %v6054 = vld [vmem:[%s13 + $0x140] sm:$0xff]
      %v6055 = vld [vmem:[%s13 + $0x148] sm:$0xff]
      %v6056 = vld [vmem:[%s13 + $0x150] sm:$0xff]
      %v6057 = vld [vmem:[%s13 + $0x158] sm:$0xff]
      %v6058 = vld [vmem:[%s13 + $0x160] sm:$0xff]
      %v6059 = vld [vmem:[%s13 + $0x168] sm:$0xff]
      %v6060 = vld [vmem:[%s13 + $0x170] sm:$0xff]
      %v6061 = vld [vmem:[%s13 + $0x178] sm:$0xff]
      %v6062 = vld [vmem:[%s13 + $0x180] sm:$0xff]
      %v6063 = vld [vmem:[%s13 + $0x188] sm:$0xff]
      %v6064 = vld [vmem:[%s13 + $0x190] sm:$0xff]
      %v6065 = vld [vmem:[%s13 + $0x198] sm:$0xff]
      %v6066 = vld [vmem:[%s13 + $0x1a0] sm:$0xff]
      %v6067 = vld [vmem:[%s13 + $0x1a8] sm:$0xff]
      %v6068 = vld [vmem:[%s13 + $0x1b0] sm:$0xff]
      %v6069 = vld [vmem:[%s13 + $0x1b8] sm:$0xff]
      %v6070 = vld [vmem:[%s13 + $0x1c0] sm:$0xff]
      %v6071 = vld [vmem:[%s13 + $0x1c8] sm:$0xff]
      %v6072 = vld [vmem:[%s13 + $0x1d0] sm:$0xff]
      %v6073 = vld [vmem:[%s13 + $0x1d8] sm:$0xff]
      %v6074 = vld [vmem:[%s13 + $0x1e0] sm:$0xff]
      %v6075 = vld [vmem:[%s13 + $0x1e8] sm:$0xff]
      %v6076 = vld [vmem:[%s13 + $0x1f0] sm:$0xff]
      %v6077 = vld [vmem:[%s13 + $0x1f8] sm:$0xff]
      %v6078 = vld [vmem:[%s14] sm:$0xff]
      %v6079 = vld [vmem:[%s14 + $0x8] sm:$0xff]
      %v6080 = vld [vmem:[%s14 + $0x10] sm:$0xff]
      %v6081 = vld [vmem:[%s14 + $0x18] sm:$0xff]
      %v6082 = vld [vmem:[%s14 + $0x20] sm:$0xff]
      %v6083 = vld [vmem:[%s14 + $0x28] sm:$0xff]
      %v6084 = vld [vmem:[%s14 + $0x30] sm:$0xff]
      %v6085 = vld [vmem:[%s14 + $0x38] sm:$0xff]
      %v6086 = vld [vmem:[%s14 + $0x40] sm:$0xff]
      %v6087 = vld [vmem:[%s14 + $0x48] sm:$0xff]
      %v6088 = vld [vmem:[%s14 + $0x50] sm:$0xff]
      %v6089 = vld [vmem:[%s14 + $0x58] sm:$0xff]
      %v6090 = vld [vmem:[%s14 + $0x60] sm:$0xff]
      %v6091 = vld [vmem:[%s14 + $0x68] sm:$0xff]
      %v6092 = vld [vmem:[%s14 + $0x70] sm:$0xff]
      %v6093 = vld [vmem:[%s14 + $0x78] sm:$0xff]
      %v6094 = vld [vmem:[%s14 + $0x80] sm:$0xff]
      %v6095 = vld [vmem:[%s14 + $0x88] sm:$0xff]
      %v6096 = vld [vmem:[%s14 + $0x90] sm:$0xff]
      %v6097 = vld [vmem:[%s14 + $0x98] sm:$0xff]
      %v6098 = vld [vmem:[%s14 + $0xa0] sm:$0xff]
      %v6099 = vld [vmem:[%s14 + $0xa8] sm:$0xff]
      %v6100 = vld [vmem:[%s14 + $0xb0] sm:$0xff]
      %v6101 = vld [vmem:[%s14 + $0xb8] sm:$0xff]
      %v6102 = vld [vmem:[%s14 + $0xc0] sm:$0xff]
      %v6103 = vld [vmem:[%s14 + $0xc8] sm:$0xff]
      %v6104 = vld [vmem:[%s14 + $0xd0] sm:$0xff]
      %v6105 = vld [vmem:[%s14 + $0xd8] sm:$0xff]
      %v6106 = vld [vmem:[%s14 + $0xe0] sm:$0xff]
      %v6107 = vld [vmem:[%s14 + $0xe8] sm:$0xff]
      %v6108 = vld [vmem:[%s14 + $0xf0] sm:$0xff]
      %v6109 = vld [vmem:[%s14 + $0xf8] sm:$0xff]
      %v6118 = vrot.slane %v5591, 7
      %v6119 = vsel %vm5137, %v6118, %v5521
      %v6120 = vrot.slane %v5661, 6
      %v6121 = vsel %vm5140, %v6120, %v6119
      %v6122 = vrot.slane %v5731, 5
      %v6123 = vsel %vm5143, %v6122, %v6121
      %v6124 = vrot.slane %v5801, 4
      %v6125 = vsel %vm5146, %v6124, %v6123
      %v6126 = vrot.slane %v5871, 3
      %v6127 = vsel %vm5149, %v6126, %v6125
      %v6128 = vrot.slane %v5941, 2
      %v6129 = vsel %vm5152, %v6128, %v6127
      %v6130 = vrot.slane %v6011, 1
      %v6131 = vsel %vm5155, %v6130, %v6129
      %6133 = vmatprep.subr.mxu0 %v6109
      %6134 = vmatpush1.msra.mxu0 %v6108
      %6135 = vmatprep.subr.mxu0 %v6107
      %6136 = vmatpush1.msra.mxu0 %v6106
      %6137 = vmatprep.subr.mxu0 %v6105
      %6138 = vmatpush1.msra.mxu0 %v6104
      %6139 = vmatprep.subr.mxu0 %v6103
      %6140 = vmatpush1.msra.mxu0 %v6102
      %6141 = vmatprep.subr.mxu0 %v6101
      %6142 = vmatpush1.msra.mxu0 %v6100
      %6143 = vmatprep.subr.mxu0 %v6099
      %6144 = vmatpush1.msra.mxu0 %v6098
      %6145 = vmatprep.subr.mxu0 %v6097
      %6146 = vmatpush1.msra.mxu0 %v6096
      %6147 = vmatprep.subr.mxu0 %v6095
      %6148 = vmatpush1.msra.mxu0 %v6094
      %6149 = vmatprep.subr.mxu0 %v6093
      %6150 = vmatpush1.msra.mxu0 %v6092
      %6151 = vmatprep.subr.mxu0 %v6091
      %6152 = vmatpush1.msra.mxu0 %v6090
      %6153 = vmatprep.subr.mxu0 %v6089
      %6154 = vmatpush1.msra.mxu0 %v6088
      %6155 = vmatprep.subr.mxu0 %v6087
      %6156 = vmatpush1.msra.mxu0 %v6086
      %6157 = vmatprep.subr.mxu0 %v6085
      %6158 = vmatpush1.msra.mxu0 %v6084
      %6159 = vmatprep.subr.mxu0 %v6083
      %6160 = vmatpush1.msra.mxu0 %v6082
      %6161 = vmatprep.subr.mxu0 %v6081
      %6162 = vmatpush1.msra.mxu0 %v6080
      %6163 = vmatprep.subr.mxu0 %v6079
      %6164 = vmatpush1.msra.mxu0 %v6078
      %6165 = vmatprep.subr.mxu0 0.0
      %6166 = vmatpush2.msra.mxu0 0.0
      %6167 = vmatprep.subr.mxu0 0.0
      %6168 = vmatpush2.msra.mxu0 0.0
      %6169 = vmatprep.subr.mxu0 0.0
      %6170 = vmatpush2.msra.mxu0 0.0
      %6171 = vmatprep.subr.mxu0 0.0
      %6172 = vmatpush2.msra.mxu0 0.0
      %6173 = vmatprep.subr.mxu0 0.0
      %6174 = vmatpush2.msra.mxu0 0.0
      %6175 = vmatprep.subr.mxu0 0.0
      %6176 = vmatpush2.msra.mxu0 0.0
      %6177 = vmatprep.subr.mxu0 0.0
      %6178 = vmatpush2.msra.mxu0 0.0
      %6179 = vmatprep.subr.mxu0 0.0
      %6180 = vmatpush2.msra.mxu0 0.0
      %6181 = vmatprep.subr.mxu0 0.0
      %6182 = vmatpush2.msra.mxu0 0.0
      %6183 = vmatprep.subr.mxu0 0.0
      %6184 = vmatpush2.msra.mxu0 0.0
      %6185 = vmatprep.subr.mxu0 0.0
      %6186 = vmatpush2.msra.mxu0 0.0
      %6187 = vmatprep.subr.mxu0 0.0
      %6188 = vmatpush2.msra.mxu0 0.0
      %6189 = vmatprep.subr.mxu0 0.0
      %6190 = vmatpush2.msra.mxu0 0.0
      %6191 = vmatprep.subr.mxu0 0.0
      %6192 = vmatpush2.msra.mxu0 0.0
      %6193 = vmatprep.subr.mxu0 0.0
      %6194 = vmatpush2.msra.mxu0 0.0
      %6195 = vmatprep.subr.mxu0 0.0
      %6196 = vmatpush2.msra.mxu0 0.0
      %6197 = vmatprep.mubr.f32.mxu0 0.0
      %6198 = vmatmul.mubr.f32.gmra.mxu0 %v6131
      %v6199 = vpop.f32.mrf.mxu0
      %v6200 = vadd.f32 0.0, %v6199
      %v6201 = vpop.f32.mrf.mxu0
      %v6202 = vadd.f32 0.0, %v6201
      %6203 = vdwg.mxu0
      %6204 = vmatprep.subr.mxu0 %v6045
      %6205 = vmatpush1.msra.mxu0 %v6044
      %6206 = vmatprep.subr.mxu0 %v6043
      %6207 = vmatpush1.msra.mxu0 %v6042
      %6208 = vmatprep.subr.mxu0 %v6041
      %6209 = vmatpush1.msra.mxu0 %v6040
      %6210 = vmatprep.subr.mxu0 %v6039
      %6211 = vmatpush1.msra.mxu0 %v6038
      %6212 = vmatprep.subr.mxu0 %v6037
      %6213 = vmatpush1.msra.mxu0 %v6036
      %6214 = vmatprep.subr.mxu0 %v6035
      %6215 = vmatpush1.msra.mxu0 %v6034
      %6216 = vmatprep.subr.mxu0 %v6033
      %6217 = vmatpush1.msra.mxu0 %v6032
      %6218 = vmatprep.subr.mxu0 %v6031
      %6219 = vmatpush1.msra.mxu0 %v6030
      %6220 = vmatprep.subr.mxu0 %v6029
      %6221 = vmatpush1.msra.mxu0 %v6028
      %6222 = vmatprep.subr.mxu0 %v6027
      %6223 = vmatpush1.msra.mxu0 %v6026
      %6224 = vmatprep.subr.mxu0 %v6025
      %6225 = vmatpush1.msra.mxu0 %v6024
      %6226 = vmatprep.subr.mxu0 %v6023
      %6227 = vmatpush1.msra.mxu0 %v6022
      %6228 = vmatprep.subr.mxu0 %v6021
      %6229 = vmatpush1.msra.mxu0 %v6020
      %6230 = vmatprep.subr.mxu0 %v6019
      %6231 = vmatpush1.msra.mxu0 %v6018
      %6232 = vmatprep.subr.mxu0 %v6017
      %6233 = vmatpush1.msra.mxu0 %v6016
      %6234 = vmatprep.subr.mxu0 %v6015
      %6235 = vmatpush1.msra.mxu0 %v6014
      %6236 = vmatprep.subr.mxu0 %v6077
      %6237 = vmatpush2.msra.mxu0 %v6076
      %6238 = vmatprep.subr.mxu0 %v6075
      %6239 = vmatpush2.msra.mxu0 %v6074
      %6240 = vmatprep.subr.mxu0 %v6073
      %6241 = vmatpush2.msra.mxu0 %v6072
      %6242 = vmatprep.subr.mxu0 %v6071
      %6243 = vmatpush2.msra.mxu0 %v6070
      %6244 = vmatprep.subr.mxu0 %v6069
      %6245 = vmatpush2.msra.mxu0 %v6068
      %6246 = vmatprep.subr.mxu0 %v6067
      %6247 = vmatpush2.msra.mxu0 %v6066
      %6248 = vmatprep.subr.mxu0 %v6065
      %6249 = vmatpush2.msra.mxu0 %v6064
      %6250 = vmatprep.subr.mxu0 %v6063
      %6251 = vmatpush2.msra.mxu0 %v6062
      %6252 = vmatprep.subr.mxu0 %v6061
      %6253 = vmatpush2.msra.mxu0 %v6060
      %6254 = vmatprep.subr.mxu0 %v6059
      %6255 = vmatpush2.msra.mxu0 %v6058
      %6256 = vmatprep.subr.mxu0 %v6057
      %6257 = vmatpush2.msra.mxu0 %v6056
      %6258 = vmatprep.subr.mxu0 %v6055
      %6259 = vmatpush2.msra.mxu0 %v6054
      %6260 = vmatprep.subr.mxu0 %v6053
      %6261 = vmatpush2.msra.mxu0 %v6052
      %6262 = vmatprep.subr.mxu0 %v6051
      %6263 = vmatpush2.msra.mxu0 %v6050
      %6264 = vmatprep.subr.mxu0 %v6049
      %6265 = vmatpush2.msra.mxu0 %v6048
      %6266 = vmatprep.subr.mxu0 %v6047
      %6267 = vmatpush2.msra.mxu0 %v6046
      %6268 = vmatprep.mubr.f32.mxu0 %v4272
      %6269 = vmatmul.mubr.f32.gmra.mxu0 %v4271
      %v6270 = vpop.f32.mrf.mxu0
      %v6271 = vadd.f32 %v6200, %v6270
      %v6272 = vpop.f32.mrf.mxu0
      %v6273 = vadd.f32 %v6202, %v6272
      %6274 = vdwg.mxu0
      %v6275 = vld [vmem:[%s15] sm:$0x3]
      %v6277 = vlaneseq
      %v6278 = vshrl.u32 %v6277, 7
      %v6279 = vsub.s32 0, %v6278
      %v6280 = vrot.slane %v6275, %v6279
      %v6281 = vlaneseq
      %v6282 = vshrl.u32 %v6281, 7
      %v6283 = vsub.s32 1, %v6282
      %v6284 = vrot.slane %v6275, %v6283
      %v6287 = vadd.f32 %v6271, %v6280
      %v6288 = vadd.f32 %v6273, %v6284
      %v6289 = vmax.f32 %v6287, 0.0
      %v6290 = vmax.f32 %v6288, 0.0
      %v6291 = vld [vmem:[%s16] sm:$0xff]
      %v6292 = vld [vmem:[%s16 + $0x8] sm:$0xff]
      %v6293 = vld [vmem:[%s16 + $0x10] sm:$0xff]
      %v6294 = vld [vmem:[%s16 + $0x18] sm:$0xff]
      %v6295 = vld [vmem:[%s16 + $0x20] sm:$0xff]
      %v6296 = vld [vmem:[%s16 + $0x28] sm:$0xff]
      %v6297 = vld [vmem:[%s16 + $0x30] sm:$0xff]
      %v6298 = vld [vmem:[%s16 + $0x38] sm:$0xff]
      %v6299 = vld [vmem:[%s16 + $0x40] sm:$0xff]
      %v6300 = vld [vmem:[%s16 + $0x48] sm:$0xff]
      %v6301 = vld [vmem:[%s16 + $0x50] sm:$0xff]
      %v6302 = vld [vmem:[%s16 + $0x58] sm:$0xff]
      %v6303 = vld [vmem:[%s16 + $0x60] sm:$0xff]
      %v6304 = vld [vmem:[%s16 + $0x68] sm:$0xff]
      %v6305 = vld [vmem:[%s16 + $0x70] sm:$0xff]
      %v6306 = vld [vmem:[%s16 + $0x78] sm:$0xff]
      %v6307 = vld [vmem:[%s16 + $0x80] sm:$0xff]
      %v6308 = vld [vmem:[%s16 + $0x88] sm:$0xff]
      %v6309 = vld [vmem:[%s16 + $0x90] sm:$0xff]
      %v6310 = vld [vmem:[%s16 + $0x98] sm:$0xff]
      %v6311 = vld [vmem:[%s16 + $0xa0] sm:$0xff]
      %v6312 = vld [vmem:[%s16 + $0xa8] sm:$0xff]
      %v6313 = vld [vmem:[%s16 + $0xb0] sm:$0xff]
      %v6314 = vld [vmem:[%s16 + $0xb8] sm:$0xff]
      %v6315 = vld [vmem:[%s16 + $0xc0] sm:$0xff]
      %v6316 = vld [vmem:[%s16 + $0xc8] sm:$0xff]
      %v6317 = vld [vmem:[%s16 + $0xd0] sm:$0xff]
      %v6318 = vld [vmem:[%s16 + $0xd8] sm:$0xff]
      %v6319 = vld [vmem:[%s16 + $0xe0] sm:$0xff]
      %v6320 = vld [vmem:[%s16 + $0xe8] sm:$0xff]
      %v6321 = vld [vmem:[%s16 + $0xf0] sm:$0xff]
      %v6322 = vld [vmem:[%s16 + $0xf8] sm:$0xff]
      %v6323 = vld [vmem:[%s17] sm:$0x1]
      %v6325 = vlaneseq
      %v6326 = vshrl.u32 %v6325, 7
      %v6327 = vsub.s32 0, %v6326
      %v6328 = vrot.slane %v6323, %v6327
      %6330 = vmatprep.subr.mxu0 0.0
      %6331 = vmatpush1.msra.mxu0 %v6306
      %6332 = vmatprep.subr.mxu0 0.0
      %6333 = vmatpush1.msra.mxu0 %v6305
      %6334 = vmatprep.subr.mxu0 0.0
      %6335 = vmatpush1.msra.mxu0 %v6304
      %6336 = vmatprep.subr.mxu0 0.0
      %6337 = vmatpush1.msra.mxu0 %v6303
      %6338 = vmatprep.subr.mxu0 0.0
      %6339 = vmatpush1.msra.mxu0 %v6302
      %6340 = vmatprep.subr.mxu0 0.0
      %6341 = vmatpush1.msra.mxu0 %v6301
      %6342 = vmatprep.subr.mxu0 0.0
      %6343 = vmatpush1.msra.mxu0 %v6300
      %6344 = vmatprep.subr.mxu0 0.0
      %6345 = vmatpush1.msra.mxu0 %v6299
      %6346 = vmatprep.subr.mxu0 0.0
      %6347 = vmatpush1.msra.mxu0 %v6298
      %6348 = vmatprep.subr.mxu0 0.0
      %6349 = vmatpush1.msra.mxu0 %v6297
      %6350 = vmatprep.subr.mxu0 0.0
      %6351 = vmatpush1.msra.mxu0 %v6296
      %6352 = vmatprep.subr.mxu0 0.0
      %6353 = vmatpush1.msra.mxu0 %v6295
      %6354 = vmatprep.subr.mxu0 0.0
      %6355 = vmatpush1.msra.mxu0 %v6294
      %6356 = vmatprep.subr.mxu0 0.0
      %6357 = vmatpush1.msra.mxu0 %v6293
      %6358 = vmatprep.subr.mxu0 0.0
      %6359 = vmatpush1.msra.mxu0 %v6292
      %6360 = vmatprep.subr.mxu0 0.0
      %6361 = vmatpush1.msra.mxu0 %v6291
      %6362 = vmatprep.subr.mxu0 0.0
      %6363 = vmatpush2.msra.mxu0 %v6322
      %6364 = vmatprep.subr.mxu0 0.0
      %6365 = vmatpush2.msra.mxu0 %v6321
      %6366 = vmatprep.subr.mxu0 0.0
      %6367 = vmatpush2.msra.mxu0 %v6320
      %6368 = vmatprep.subr.mxu0 0.0
      %6369 = vmatpush2.msra.mxu0 %v6319
      %6370 = vmatprep.subr.mxu0 0.0
      %6371 = vmatpush2.msra.mxu0 %v6318
      %6372 = vmatprep.subr.mxu0 0.0
      %6373 = vmatpush2.msra.mxu0 %v6317
      %6374 = vmatprep.subr.mxu0 0.0
      %6375 = vmatpush2.msra.mxu0 %v6316
      %6376 = vmatprep.subr.mxu0 0.0
      %6377 = vmatpush2.msra.mxu0 %v6315
      %6378 = vmatprep.subr.mxu0 0.0
      %6379 = vmatpush2.msra.mxu0 %v6314
      %6380 = vmatprep.subr.mxu0 0.0
      %6381 = vmatpush2.msra.mxu0 %v6313
      %6382 = vmatprep.subr.mxu0 0.0
      %6383 = vmatpush2.msra.mxu0 %v6312
      %6384 = vmatprep.subr.mxu0 0.0
      %6385 = vmatpush2.msra.mxu0 %v6311
      %6386 = vmatprep.subr.mxu0 0.0
      %6387 = vmatpush2.msra.mxu0 %v6310
      %6388 = vmatprep.subr.mxu0 0.0
      %6389 = vmatpush2.msra.mxu0 %v6309
      %6390 = vmatprep.subr.mxu0 0.0
      %6391 = vmatpush2.msra.mxu0 %v6308
      %6392 = vmatprep.subr.mxu0 0.0
      %6393 = vmatpush2.msra.mxu0 %v6307
      %6394 = vmatprep.mubr.f32.mxu0 %v6290
      %6395 = vmatmul.mubr.f32.gmra.mxu0 %v6289
      %v6396 = vpop.f32.mrf.mxu0
      %v6397 = vadd.f32 %v6328, %v6396
      %v6398 = vpop.f32.mrf.mxu0
      %6399 = vdwg.mxu0
      %v6408 = vrot.slane %v5319, 7
      %v6409 = vsel %vm5137, %v6408, %v5318
      %v6410 = vrot.slane %v5320, 6
      %v6411 = vsel %vm5140, %v6410, %v6409
      %v6412 = vrot.slane %v5321, 5
      %v6413 = vsel %vm5143, %v6412, %v6411
      %v6414 = vrot.slane %v5322, 4
      %v6415 = vsel %vm5146, %v6414, %v6413
      %v6416 = vrot.slane %v5323, 3
      %v6417 = vsel %vm5149, %v6416, %v6415
      %v6418 = vrot.slane %v5324, 2
      %v6419 = vsel %vm5152, %v6418, %v6417
      %v6420 = vrot.slane %v5325, 1
      %v6421 = vsel %vm5155, %v6420, %v6419
      %s6423 = smul.u32 %s197, 8
      %s6424 = scalar_lea.vmem %s24, %s6423
      %6425 = vst [vmem:[%s6424] sm:$0xff] %v6421
      %s6426 = scalar_lea.vmem %s25, %s6423
      %6427 = vst [vmem:[%s6426] sm:$0xff] %v6397
      %v6428 = vsel %vm109, %v6397, -1e+30
      %6429 = vmax.xlane.f32.xlu0 %v6428
      %v6430 = vpop.xlane.xlu0 %6429
      %vm6431 = vcmp.ge.f32.partialorder %v6428, %v6430
      %v6432 = vsel %vm6431, %v108, 128
      %v6433 = vand.u32 %v6432, 65535
      %v6434 = vshra.s32 %v6432, 16
      %v6435 = vcvt.s32.f32 %v6433
      %v6436 = vcvt.s32.f32 %v6434
      %6437 = vmin.xlane.f32.xlu0 %v6436
      %v6438 = vpop.xlane.xlu0 %6437
      %vm6439 = vcmp.eq.f32.partialorder %v6436, %v6438
      %v6440 = vsel %vm6439, %v6435, inf
      %6441 = vmin.xlane.f32.xlu0 %v6440
      %v6442 = vpop.xlane.xlu0 %6441
      %v6443 = vcvt.f32.s32 %v6442
      %v6444 = vcvt.f32.s32 %v6438
      %v6445 = vshll.u32 %v6444, 16
      %v6446 = vadd.s32 %v6445, %v6443
      %vm6447 = vcmp.eq.s32.totalorder %v108, %v6446
      %v6448 = vsel %vm6447, 1, 0
      %v6449 = vcvt.s32.f32 %v6448
    $region110: #{speller_forward.1} parent=1 // loop_footer
      %s201 = sadd.s32 1, %s197
    $region111: #{speller_forward.1} parent=1 // loop_footer_branch
      %196 = sbr.rel target = $region107
    $region112: #{speller_forward.1} parent=1 // loop_exit
      _
    // Predicated region
    $region113: #{speller_forward.1} parent=1 // pred_check
      _
    $region114: #{speller_forward.1} parent=1 // pred_check_branch
      %6451 = sbr.rel (0) target = $region116
    $region115: #{speller_forward.1} parent=1 // pred_region
      _
    $region116: #{speller_forward.1} parent=1 // pred_fallthru
      _
    // Predicated region
    $region117: #{speller_forward.1} parent=1 // pred_check
      _
    $region118: #{speller_forward.1} parent=1 // pred_check_branch
      %6453 = sbr.rel (0) target = $region120
    $region119: #{speller_forward.1} parent=1 // pred_region
      _
    $region120: #{speller_forward.1} parent=1 // pred_fallthru
      _
    // Predicated region
    $region121: #{speller_forward.1} parent=1 // pred_check
      _
    $region122: #{speller_forward.1} parent=1 // pred_check_branch
      %6455 = sbr.rel (0) target = $region124
    $region123: #{speller_forward.1} parent=1 // pred_region
      _
    $region124: #{speller_forward.1} parent=1 // pred_fallthru
      _
    // Predicated region
    $region125: #{speller_forward.1} parent=1 // pred_check
      _
    $region126: #{speller_forward.1} parent=1 // pred_check_branch
      %6457 = sbr.rel (0) target = $region128
    $region127: #{speller_forward.1} parent=1 // pred_region
      _
    $region128: #{speller_forward.1} parent=1 // pred_fallthru
      _
    %6458 = vsyncpa [#allocation3], 1
    %6459 = vsyncpa [#allocation5], 1

</llo_original>
